<compile_context>
chip_gen: v6e
topology: v6e:2x2x1
jax: 0.10.0
libtpu: 0.0.40
codegen_flags: <defaults>
</compile_context>

<pallas_src>
import functools
import math

import jax
import jax.numpy as jnp
import numpy as np
from jax.experimental import pallas as pl
from jax.experimental.pallas import tpu as pltpu


_EDGE = (-1.0, -1.0, -1.0, -1.0, 8.0, -1.0, -1.0, -1.0, -1.0)  # fixed Laplacian
_PAD = 128                       # lane-aligned margin of the padded line buffers
_MOSAIC = pltpu.CompilerParams(vmem_limit_bytes=16 * 1024 * 1024)


def _block(shape):
    nd = len(shape)
    return pl.BlockSpec(shape, lambda i, _nd=nd: (0,) * _nd)


# ----------------------------- Pallas kernels -------------------------------

def _make_feature_kernel(height, width, n_chan, c_mid):
    """Fused grayscale -> edge stencil -> resize -> nc2 -> resize -> nc3 -> resize.

    Activations are (channels, H*W) with the flattened spatial axis in lanes.
    3x3 convs read 9 shifted slices of a zero-margined VMEM copy of the canvas;
    crop + bilinear-resize + re-embed steps are precomputed operator matrices
    applied with one matmul each.
    """
    size = height * width
    taps = tuple((kh - 1) * width + (kw - 1)
                 for kh in range(3) for kw in range(3))

    def kernel(img_ref, m1_ref, w2_ref, b2_ref, m2_ref, w3_ref, b3_ref,
               m3_ref, o_ref, pad1_ref, pad8_ref, col1_ref, col8_ref):
        f32 = jnp.float32
        pad1_ref[...] = jnp.zeros_like(pad1_ref)
        pad8_ref[...] = jnp.zeros_like(pad8_ref)

        # Grayscale (the reference indexes channel 0 as b, channel 2 as r).
        if n_chan == 3:
            gray = (0.114 * img_ref[0:1, :] + 0.587 * img_ref[1:2, :]
                    + 0.299 * img_ref[2:3, :])
        else:
            gray = img_ref[0:1, :].astype(f32)

        # Edge conv (3x3 valid, fixed kernel): VPU shift-and-add stencil.
        pad1_ref[:, _PAD:_PAD + size] = gray
        eimg = jnp.zeros((1, size), f32)
        for wgt, d in zip(_EDGE, taps):
            eimg = eimg + wgt * pad1_ref[:, _PAD + d:_PAD + d + size]

        # resize (H-2, W-2) -> (h1, w1), re-embedded into the canvas.
        edgec = jnp.dot(eimg, m1_ref[...], preferred_element_type=f32)

        # nc2: 3x3 'same' conv, 1 -> c_mid channels; im2col built in-kernel.
        pad1_ref[:, _PAD:_PAD + size] = edgec
        for t, d in enumerate(taps):
            col1_ref[t:t + 1, :] = pad1_ref[:, _PAD + d:_PAD + d + size]
        linec = (jnp.dot(w2_ref[...], col1_ref[...],
                         preferred_element_type=f32) + b2_ref[...])

        # resize (h1, w1) -> (h2, w2).
        linec = jnp.dot(linec, m2_ref[...], preferred_element_type=f32)

        # nc3: 3x3 'same' conv, c_mid -> 128 channels; one (128, 9*c_mid) matmul.
        pad8_ref[:, _PAD:_PAD + size] = linec
        for t, d in enumerate(taps):
            col8_ref[c_mid * t:c_mid * (t + 1), :] = (
                pad8_ref[:, _PAD + d:_PAD + d + size])
        shapec = (jnp.dot(w3_ref[...], col8_ref[...],
                          preferred_element_type=f32) + b3_ref[...])

        # resize (h2, w2) -> (2, 2): scene is (128, 4), lanes ordered h*2 + w.
        o_ref[...] = jnp.dot(shapec, m3_ref[...], preferred_element_type=f32)

    return kernel


def _fc_stack_kernel(x_ref, w1_ref, s1_ref, b1_ref, w2_ref, s2_ref, b2_ref,
                     w3_ref, s3_ref, b3_ref, w4_ref, s4_ref, b4_ref, o_ref):
    """fcn1..fcn4 (NormLinear) fused; activations never leave VMEM.

    NormLinear y = x @ (W / ||W||) + b is computed as (x @ W) * inv + b with
    the per-output inverse norms precomputed outside the kernel.  Weights are
    bf16 (MXU-native, half the DMA bytes); accumulation and element-wise math
    are f32.
    """
    h = x_ref[...]
    for w_ref, s_ref, b_ref in ((w1_ref, s1_ref, b1_ref),
                                (w2_ref, s2_ref, b2_ref),
                                (w3_ref, s3_ref, b3_ref),
                                (w4_ref, s4_ref, b4_ref)):
        y = jnp.dot(h.astype(jnp.bfloat16), w_ref[...],
                    preferred_element_type=jnp.float32)
        h = y * s_ref[...] + b_ref[...]
    o_ref[...] = h


# ------------------------------ call builders --------------------------------

def _feature_call(img_flat, prep, height, width):
    size = height * width
    c_mid, n_taps = prep["w2"].shape
    c_out = prep["w3f"].shape[0]
    n_scene = prep["m3"].shape[1]
    args = (img_flat, prep["m1"], prep["w2"], prep["b2"], prep["m2"],
            prep["w3f"], prep["b3"], prep["m3"])
    flops = 2 * size * (size + n_taps * c_mid + c_mid * size
                        + n_taps * c_mid * c_out + c_out * n_scene)
    nbytes = (sum(int(a.size) * a.dtype.itemsize for a in args)
              + c_out * n_scene * 4)
    kernel = _make_feature_kernel(height, width, img_flat.shape[0], c_mid)
    return pl.pallas_call(
        kernel,
        out_shape=jax.ShapeDtypeStruct((c_out, n_scene), jnp.float32),
        grid=(1,),
        in_specs=[_block(a.shape) for a in args],
        out_specs=_block((c_out, n_scene)),
        scratch_shapes=[
            pltpu.VMEM((1, size + 2 * _PAD), jnp.float32),      # padded 1-ch canvas
            pltpu.VMEM((c_mid, size + 2 * _PAD), jnp.float32),  # padded c_mid canvas
            pltpu.VMEM((n_taps, size), jnp.float32),            # im2col (nc2)
            pltpu.VMEM((n_taps * c_mid, size), jnp.float32),    # im2col (nc3)
        ],
        compiler_params=_MOSAIC,
        cost_estimate=pl.CostEstimate(flops=int(flops), transcendentals=0,
                                      bytes_accessed=int(nbytes)),
    )(*args)


def _fc_call(x, prep):
    args = (x,
            prep["fc1_w"], prep["fc1_s"], prep["fc1_b"],
            prep["fc2_w"], prep["fc2_s"], prep["fc2_b"],
            prep["fc3_w"], prep["fc3_s"], prep["fc3_b"],
            prep["fc4_w"], prep["fc4_s"], prep["fc4_b"])
    n_out = prep["fc4_b"].shape[1]
    flops = 2 * sum(int(prep[f"fc{i}_w"].shape[0]) * int(prep[f"fc{i}_w"].shape[1])
                    for i in (1, 2, 3, 4))
    nbytes = sum(int(a.size) * a.dtype.itemsize for a in args) + n_out * 4
    return pl.pallas_call(
        _fc_stack_kernel,
        out_shape=jax.ShapeDtypeStruct((1, n_out), jnp.float32),
        grid=(1,),
        in_specs=[_block(a.shape) for a in args],
        out_specs=_block((1, n_out)),
        compiler_params=_MOSAIC,
        cost_estimate=pl.CostEstimate(flops=int(flops), transcendentals=0,
                                      bytes_accessed=int(nbytes)),
    )(*args)


# --------------------------- params & prepacking -----------------------------

def init_params(key):
    """Torch-layout parameters (Conv2d: (out,in,kh,kw); Linear: (out,in))."""
    ks = jax.random.split(key, 12)
    p = {}
    # TODO(synk): `nested_convs` internals unavailable; modeled as a single
    # Conv2d(cin, cout, 3, padding=1, bias=True).  The reference zeroes conv
    # weights at init; small random weights keep the data path non-trivial.
    p["nc2_w"] = 0.10 * jax.random.normal(ks[0], (8, 1, 3, 3), jnp.float32)
    p["nc2_b"] = 0.10 * jax.random.normal(ks[1], (8,), jnp.float32)
    p["nc3_w"] = 0.05 * jax.random.normal(ks[2], (128, 8, 3, 3), jnp.float32)
    p["nc3_b"] = 0.05 * jax.random.normal(ks[3], (128,), jnp.float32)
    # TODO(synk): `NormLinear` internals unavailable; modeled as Linear whose
    # per-output-unit weight rows are L2-normalized, plus bias.
    p["fc1_w"] = 0.05 * jax.random.normal(ks[4], (512, 512), jnp.float32)
    p["fc1_b"] = 0.05 * jax.random.normal(ks[5], (512,), jnp.float32)
    p["fc2_w"] = 0.05 * jax.random.normal(ks[6], (512, 512), jnp.float32)
    p["fc2_b"] = 0.05 * jax.random.normal(ks[7], (512,), jnp.float32)
    p["fc3_w"] = 0.05 * jax.random.normal(ks[8], (512, 512), jnp.float32)
    p["fc3_b"] = 0.05 * jax.random.normal(ks[9], (512,), jnp.float32)
    p["fc4_w"] = 0.05 * jax.random.normal(ks[10], (2048, 512), jnp.float32)
    p["fc4_b"] = 0.05 * jax.random.normal(ks[11], (2048,), jnp.float32)
    return p


def _resize_matrix(n_out, n_in):
    """Linear (triangle-kernel) resize operator; antialiased when downscaling.

    TODO(synk): torchvision FV.resize's exact bilinear/antialias rounding may
    differ slightly; this matches jax.image.resize(..., 'linear') semantics.
    """
    if n_out == n_in:
        return np.eye(n_out, dtype=np.float32)
    scale = n_out / n_in
    k = min(scale, 1.0)
    centers = (np.arange(n_out)[:, None] + 0.5) / scale - 0.5
    w = np.maximum(0.0, 1.0 - np.abs(np.arange(n_in)[None, :] - centers) * k)
    w = w / w.sum(axis=1, keepdims=True)
    return w.astype(np.float32)


def prepare_params(params, img_shape):
    """One-time prepacking (run once, outside jit): crop/resize operator
    matrices for the flattened canvas, im2col-ordered conv weights, bf16 FC
    weights, and the NormLinear per-output inverse norms hoisted out of the
    kernel."""
    _, _, height, width = img_shape
    assert height >= 6 and width >= 6 and width + 1 <= _PAD
    size = height * width

    h0, w0 = height - 2, width - 2                       # edge conv (valid)
    h1, w1 = int(h0 // math.sqrt(2)), int(w0 // math.sqrt(2))
    h2, w2 = int(h1 // math.sqrt(2)), int(w1 // math.sqrt(2))

    c_mid = params["nc2_w"].shape[0]
    c_out = params["nc3_w"].shape[0]
    assert params["nc2_w"].shape[1] == 1
    assert c_out * 2 * 2 == params["fc1_w"].shape[1], (
        "sceneimg.ravel() must match fcn1 in-features (batch must be 1)")

    def crop(r0, c0, hh, ww):
        m = np.zeros((hh * ww, size), np.float32)
        for i in range(hh):
            for j in range(ww):
                m[i * ww + j, (r0 + i) * width + (c0 + j)] = 1.0
        return m

    def resize2d(ho, wo, hi, wi):
        return np.kron(_resize_matrix(ho, hi), _resize_matrix(wo, wi))

    # canvas -> crop stage output -> bilinear resize -> re-embed at (1, 1).
    m1 = crop(1, 1, h1, w1).T @ resize2d(h1, w1, h0, w0) @ crop(1, 1, h0, w0)
    m2 = crop(1, 1, h2, w2).T @ resize2d(h2, w2, h1, w1) @ crop(1, 1, h1, w1)
    m3 = resize2d(2, 2, h2, w2) @ crop(1, 1, h2, w2)

    w3f = jnp.transpose(params["nc3_w"], (0, 2, 3, 1)).reshape(c_out, 9 * c_mid)

    prep = {
        "m1": jnp.asarray(m1.T),                                    # (size, size)
        "m2": jnp.asarray(m2.T),                                    # (size, size)
        "m3": jnp.asarray(m3.T),                                    # (size, 4)
        "w2": params["nc2_w"].reshape(c_mid, 9).astype(jnp.float32),
        "b2": params["nc2_b"].reshape(c_mid, 1).astype(jnp.float32),
        "w3f": w3f.astype(jnp.float32),                             # (128, 72)
        "b3": params["nc3_b"].reshape(c_out, 1).astype(jnp.float32),
    }
    for i in (1, 2, 3, 4):
        wt = params[f"fc{i}_w"].astype(jnp.float32)                 # torch (out, in)
        inv = 1.0 / jnp.sqrt(jnp.sum(wt * wt, axis=1) + 1e-12)
        prep[f"fc{i}_w"] = wt.T.astype(jnp.bfloat16)                # (in, out)
        prep[f"fc{i}_s"] = inv.reshape(1, -1).astype(jnp.float32)
        prep[f"fc{i}_b"] = params[f"fc{i}_b"].reshape(1, -1).astype(jnp.float32)
    return prep


# --------------------------------- forward -----------------------------------

@jax.jit
def forward(img, prep):
    # img: (1, C, H, W) float32 NCHW (PyTorch convention); batch must be 1.
    n, c, height, width = img.shape
    assert n == 1
    img_flat = img[0].astype(jnp.float32).reshape(c, height * width)
    scene = _feature_call(img_flat, prep, height, width)    # (128, 4)
    # torch .ravel() on NCHW (1, 128, 2, 2) == row-major flatten of (C, S).
    flat = scene.reshape(1, scene.shape[0] * scene.shape[1])
    out = _fc_call(flat, prep)                              # (1, 2048)
    return out[0]


if __name__ == "__main__":
    key = jax.random.PRNGKey(0)
    k_img, k_par = jax.random.split(key)
    img = jax.random.normal(k_img, (1, 3, 16, 16), jnp.float32)
    params = init_params(k_par)
    prep = prepare_params(params, img.shape)
    out = forward(img, prep)
    out = jax.block_until_ready(out)
    assert out.shape == (2048,) and out.dtype == jnp.float32
    assert bool(jnp.all(jnp.isfinite(out)))
    print("KERNEL_OK")
</pallas_src>

<mosaic_0001>
module attributes {stable_mosaic.version = 11 : i64} {
  func.func @_fc_stack_kernel(%arg0: i32, %arg1: memref<1x512xf32, #tpu.memory_space<vmem>>, %arg2: memref<512x512xbf16, #tpu.memory_space<vmem>>, %arg3: memref<1x512xf32, #tpu.memory_space<vmem>>, %arg4: memref<1x512xf32, #tpu.memory_space<vmem>>, %arg5: memref<512x512xbf16, #tpu.memory_space<vmem>>, %arg6: memref<1x512xf32, #tpu.memory_space<vmem>>, %arg7: memref<1x512xf32, #tpu.memory_space<vmem>>, %arg8: memref<512x512xbf16, #tpu.memory_space<vmem>>, %arg9: memref<1x512xf32, #tpu.memory_space<vmem>>, %arg10: memref<1x512xf32, #tpu.memory_space<vmem>>, %arg11: memref<512x2048xbf16, #tpu.memory_space<vmem>>, %arg12: memref<1x2048xf32, #tpu.memory_space<vmem>>, %arg13: memref<1x2048xf32, #tpu.memory_space<vmem>>, %arg14: memref<1x2048xf32, #tpu.memory_space<vmem>>) attributes {dimension_semantics = [#tpu.dimension_semantics<arbitrary>], iteration_bounds = array<i64: 1>, scalar_prefetch = 0 : i64, scratch_operands = 0 : i64, tpu.core_type = #tpu.core_type<tc>, window_params = [{pipeline_mode = #tpu.pipeline_mode<synchronous>, transform_indices = @transform_0, window_bounds = array<i64: 1, 512>}, {pipeline_mode = #tpu.pipeline_mode<synchronous>, transform_indices = @transform_1, window_bounds = array<i64: 512, 512>}, {pipeline_mode = #tpu.pipeline_mode<synchronous>, transform_indices = @transform_2, window_bounds = array<i64: 1, 512>}, {pipeline_mode = #tpu.pipeline_mode<synchronous>, transform_indices = @transform_3, window_bounds = array<i64: 1, 512>}, {pipeline_mode = #tpu.pipeline_mode<synchronous>, transform_indices = @transform_4, window_bounds = array<i64: 512, 512>}, {pipeline_mode = #tpu.pipeline_mode<synchronous>, transform_indices = @transform_5, window_bounds = array<i64: 1, 512>}, {pipeline_mode = #tpu.pipeline_mode<synchronous>, transform_indices = @transform_6, window_bounds = array<i64: 1, 512>}, {pipeline_mode = #tpu.pipeline_mode<synchronous>, transform_indices = @transform_7, window_bounds = array<i64: 512, 512>}, {pipeline_mode = #tpu.pipeline_mode<synchronous>, transform_indices = @transform_8, window_bounds = array<i64: 1, 512>}, {pipeline_mode = #tpu.pipeline_mode<synchronous>, transform_indices = @transform_9, window_bounds = array<i64: 1, 512>}, {pipeline_mode = #tpu.pipeline_mode<synchronous>, transform_indices = @transform_10, window_bounds = array<i64: 512, 2048>}, {pipeline_mode = #tpu.pipeline_mode<synchronous>, transform_indices = @transform_11, window_bounds = array<i64: 1, 2048>}, {pipeline_mode = #tpu.pipeline_mode<synchronous>, transform_indices = @transform_12, window_bounds = array<i64: 1, 2048>}, {pipeline_mode = #tpu.pipeline_mode<synchronous>, transform_indices = @transform_13, window_bounds = array<i64: 1, 2048>}]} {
    %c0 = arith.constant 0 : index
    %c0_0 = arith.constant 0 : index
    %0 = vector.load %arg1[%c0, %c0_0] : memref<1x512xf32, #tpu.memory_space<vmem>>, vector<1x512xf32>
    %1 = arith.truncf %0 : vector<1x512xf32> to vector<1x512xbf16>
    %c0_1 = arith.constant 0 : index
    %c0_2 = arith.constant 0 : index
    %2 = vector.load %arg2[%c0_1, %c0_2] : memref<512x512xbf16, #tpu.memory_space<vmem>>, vector<512x512xbf16>
    %cst = arith.constant dense<0.000000e+00> : vector<1x512xf32>
    %3 = tpu.matmul %1, %2, %cst {dimension_numbers = #tpu.dot_dimension_numbers<[1], [0], [0], [1], [0, 0, 1, 1], [], []>} : vector<1x512xbf16>, vector<512x512xbf16>, vector<1x512xf32> -> vector<1x512xf32>
    %c0_3 = arith.constant 0 : index
    %c0_4 = arith.constant 0 : index
    %4 = vector.load %arg3[%c0_3, %c0_4] : memref<1x512xf32, #tpu.memory_space<vmem>>, vector<1x512xf32>
    %5 = arith.mulf %3, %4 : vector<1x512xf32>
    %c0_5 = arith.constant 0 : index
    %c0_6 = arith.constant 0 : index
    %6 = vector.load %arg4[%c0_5, %c0_6] : memref<1x512xf32, #tpu.memory_space<vmem>>, vector<1x512xf32>
    %7 = arith.addf %5, %6 : vector<1x512xf32>
    %8 = arith.truncf %7 : vector<1x512xf32> to vector<1x512xbf16>
    %c0_7 = arith.constant 0 : index
    %c0_8 = arith.constant 0 : index
    %9 = vector.load %arg5[%c0_7, %c0_8] : memref<512x512xbf16, #tpu.memory_space<vmem>>, vector<512x512xbf16>
    %cst_9 = arith.constant dense<0.000000e+00> : vector<1x512xf32>
    %10 = tpu.matmul %8, %9, %cst_9 {dimension_numbers = #tpu.dot_dimension_numbers<[1], [0], [0], [1], [0, 0, 1, 1], [], []>} : vector<1x512xbf16>, vector<512x512xbf16>, vector<1x512xf32> -> vector<1x512xf32>
    %c0_10 = arith.constant 0 : index
    %c0_11 = arith.constant 0 : index
    %11 = vector.load %arg6[%c0_10, %c0_11] : memref<1x512xf32, #tpu.memory_space<vmem>>, vector<1x512xf32>
    %12 = arith.mulf %10, %11 : vector<1x512xf32>
    %c0_12 = arith.constant 0 : index
    %c0_13 = arith.constant 0 : index
    %13 = vector.load %arg7[%c0_12, %c0_13] : memref<1x512xf32, #tpu.memory_space<vmem>>, vector<1x512xf32>
    %14 = arith.addf %12, %13 : vector<1x512xf32>
    %15 = arith.truncf %14 : vector<1x512xf32> to vector<1x512xbf16>
    %c0_14 = arith.constant 0 : index
    %c0_15 = arith.constant 0 : index
    %16 = vector.load %arg8[%c0_14, %c0_15] : memref<512x512xbf16, #tpu.memory_space<vmem>>, vector<512x512xbf16>
    %cst_16 = arith.constant dense<0.000000e+00> : vector<1x512xf32>
    %17 = tpu.matmul %15, %16, %cst_16 {dimension_numbers = #tpu.dot_dimension_numbers<[1], [0], [0], [1], [0, 0, 1, 1], [], []>} : vector<1x512xbf16>, vector<512x512xbf16>, vector<1x512xf32> -> vector<1x512xf32>
    %c0_17 = arith.constant 0 : index
    %c0_18 = arith.constant 0 : index
    %18 = vector.load %arg9[%c0_17, %c0_18] : memref<1x512xf32, #tpu.memory_space<vmem>>, vector<1x512xf32>
    %19 = arith.mulf %17, %18 : vector<1x512xf32>
    %c0_19 = arith.constant 0 : index
    %c0_20 = arith.constant 0 : index
    %20 = vector.load %arg10[%c0_19, %c0_20] : memref<1x512xf32, #tpu.memory_space<vmem>>, vector<1x512xf32>
    %21 = arith.addf %19, %20 : vector<1x512xf32>
    %22 = arith.truncf %21 : vector<1x512xf32> to vector<1x512xbf16>
    %c0_21 = arith.constant 0 : index
    %c0_22 = arith.constant 0 : index
    %23 = vector.load %arg11[%c0_21, %c0_22] : memref<512x2048xbf16, #tpu.memory_space<vmem>>, vector<512x2048xbf16>
    %cst_23 = arith.constant dense<0.000000e+00> : vector<1x2048xf32>
    %24 = tpu.matmul %22, %23, %cst_23 {dimension_numbers = #tpu.dot_dimension_numbers<[1], [0], [0], [1], [0, 0, 1, 1], [], []>} : vector<1x512xbf16>, vector<512x2048xbf16>, vector<1x2048xf32> -> vector<1x2048xf32>
    %c0_24 = arith.constant 0 : index
    %c0_25 = arith.constant 0 : index
    %25 = vector.load %arg12[%c0_24, %c0_25] : memref<1x2048xf32, #tpu.memory_space<vmem>>, vector<1x2048xf32>
    %26 = arith.mulf %24, %25 : vector<1x2048xf32>
    %c0_26 = arith.constant 0 : index
    %c0_27 = arith.constant 0 : index
    %27 = vector.load %arg13[%c0_26, %c0_27] : memref<1x2048xf32, #tpu.memory_space<vmem>>, vector<1x2048xf32>
    %28 = arith.addf %26, %27 : vector<1x2048xf32>
    %c0_28 = arith.constant 0 : index
    %c0_29 = arith.constant 0 : index
    %29 = vector.load %arg14[%c0_28, %c0_29] : memref<1x2048xf32, #tpu.memory_space<vmem>>, vector<1x2048xf32>
    tpu.vector_store %arg14[%c0_28, %c0_29], %28 {strides = array<i32>} : memref<1x2048xf32, #tpu.memory_space<vmem>>, vector<1x2048xf32>,
    return
  }
  func.func @transform_0(%arg0: i32) -> (i32, i32) {
    %c0_i32 = arith.constant 0 : i32
    %c0_i32_0 = arith.constant 0 : i32
    %c0_i32_1 = arith.constant 0 : i32
    return %c0_i32, %c0_i32_0 : i32, i32
  }
  func.func @transform_1(%arg0: i32) -> (i32, i32) {
    %c0_i32 = arith.constant 0 : i32
    %c0_i32_0 = arith.constant 0 : i32
    %c0_i32_1 = arith.constant 0 : i32
    return %c0_i32, %c0_i32_0 : i32, i32
  }
  func.func @transform_2(%arg0: i32) -> (i32, i32) {
    %c0_i32 = arith.constant 0 : i32
    %c0_i32_0 = arith.constant 0 : i32
    %c0_i32_1 = arith.constant 0 : i32
    return %c0_i32, %c0_i32_0 : i32, i32
  }
  func.func @transform_3(%arg0: i32) -> (i32, i32) {
    %c0_i32 = arith.constant 0 : i32
    %c0_i32_0 = arith.constant 0 : i32
    %c0_i32_1 = arith.constant 0 : i32
    return %c0_i32, %c0_i32_0 : i32, i32
  }
  func.func @transform_4(%arg0: i32) -> (i32, i32) {
    %c0_i32 = arith.constant 0 : i32
    %c0_i32_0 = arith.constant 0 : i32
    %c0_i32_1 = arith.constant 0 : i32
    return %c0_i32, %c0_i32_0 : i32, i32
  }
  func.func @transform_5(%arg0: i32) -> (i32, i32) {
    %c0_i32 = arith.constant 0 : i32
    %c0_i32_0 = arith.constant 0 : i32
    %c0_i32_1 = arith.constant 0 : i32
    return %c0_i32, %c0_i32_0 : i32, i32
  }
  func.func @transform_6(%arg0: i32) -> (i32, i32) {
    %c0_i32 = arith.constant 0 : i32
    %c0_i32_0 = arith.constant 0 : i32
    %c0_i32_1 = arith.constant 0 : i32
    return %c0_i32, %c0_i32_0 : i32, i32
  }
  func.func @transform_7(%arg0: i32) -> (i32, i32) {
    %c0_i32 = arith.constant 0 : i32
    %c0_i32_0 = arith.constant 0 : i32
    %c0_i32_1 = arith.constant 0 : i32
    return %c0_i32, %c0_i32_0 : i32, i32
  }
  func.func @transform_8(%arg0: i32) -> (i32, i32) {
    %c0_i32 = arith.constant 0 : i32
    %c0_i32_0 = arith.constant 0 : i32
    %c0_i32_1 = arith.constant 0 : i32
    return %c0_i32, %c0_i32_0 : i32, i32
  }
  func.func @transform_9(%arg0: i32) -> (i32, i32) {
    %c0_i32 = arith.constant 0 : i32
    %c0_i32_0 = arith.constant 0 : i32
    %c0_i32_1 = arith.constant 0 : i32
    return %c0_i32, %c0_i32_0 : i32, i32
  }
  func.func @transform_10(%arg0: i32) -> (i32, i32) {
    %c0_i32 = arith.constant 0 : i32
    %c0_i32_0 = arith.constant 0 : i32
    %c0_i32_1 = arith.constant 0 : i32
    return %c0_i32, %c0_i32_0 : i32, i32
  }
  func.func @transform_11(%arg0: i32) -> (i32, i32) {
    %c0_i32 = arith.constant 0 : i32
    %c0_i32_0 = arith.constant 0 : i32
    %c0_i32_1 = arith.constant 0 : i32
    return %c0_i32, %c0_i32_0 : i32, i32
  }
  func.func @transform_12(%arg0: i32) -> (i32, i32) {
    %c0_i32 = arith.constant 0 : i32
    %c0_i32_0 = arith.constant 0 : i32
    %c0_i32_1 = arith.constant 0 : i32
    return %c0_i32, %c0_i32_0 : i32, i32
  }
  func.func @transform_13(%arg0: i32) -> (i32, i32) {
    %c0_i32 = arith.constant 0 : i32
    %c0_i32_0 = arith.constant 0 : i32
    %c0_i32_1 = arith.constant 0 : i32
    return %c0_i32, %c0_i32_0 : i32, i32
  }
}

module attributes {stable_mosaic.version = 11 : i64} {
  func.func @kernel(%arg0: i32, %arg1: memref<3x256xf32, #tpu.memory_space<vmem>>, %arg2: memref<256x256xf32, #tpu.memory_space<vmem>>, %arg3: memref<8x9xf32, #tpu.memory_space<vmem>>, %arg4: memref<8x1xf32, #tpu.memory_space<vmem>>, %arg5: memref<256x256xf32, #tpu.memory_space<vmem>>, %arg6: memref<128x72xf32, #tpu.memory_space<vmem>>, %arg7: memref<128x1xf32, #tpu.memory_space<vmem>>, %arg8: memref<256x4xf32, #tpu.memory_space<vmem>>, %arg9: memref<128x4xf32, #tpu.memory_space<vmem>>, %arg10: memref<1x512xf32, #tpu.memory_space<vmem>>, %arg11: memref<8x512xf32, #tpu.memory_space<vmem>>, %arg12: memref<9x256xf32, #tpu.memory_space<vmem>>, %arg13: memref<72x256xf32, #tpu.memory_space<vmem>>) attributes {dimension_semantics = [#tpu.dimension_semantics<arbitrary>], iteration_bounds = array<i64: 1>, scalar_prefetch = 0 : i64, scratch_operands = 4 : i64, tpu.core_type = #tpu.core_type<tc>, window_params = [{pipeline_mode = #tpu.pipeline_mode<synchronous>, transform_indices = @transform_0, window_bounds = array<i64: 3, 256>}, {pipeline_mode = #tpu.pipeline_mode<synchronous>, transform_indices = @transform_1, window_bounds = array<i64: 256, 256>}, {pipeline_mode = #tpu.pipeline_mode<synchronous>, transform_indices = @transform_2, window_bounds = array<i64: 8, 9>}, {pipeline_mode = #tpu.pipeline_mode<synchronous>, transform_indices = @transform_3, window_bounds = array<i64: 8, 1>}, {pipeline_mode = #tpu.pipeline_mode<synchronous>, transform_indices = @transform_4, window_bounds = array<i64: 256, 256>}, {pipeline_mode = #tpu.pipeline_mode<synchronous>, transform_indices = @transform_5, window_bounds = array<i64: 128, 72>}, {pipeline_mode = #tpu.pipeline_mode<synchronous>, transform_indices = @transform_6, window_bounds = array<i64: 128, 1>}, {pipeline_mode = #tpu.pipeline_mode<synchronous>, transform_indices = @transform_7, window_bounds = array<i64: 256, 4>}, {pipeline_mode = #tpu.pipeline_mode<synchronous>, transform_indices = @transform_8, window_bounds = array<i64: 128, 4>}]} {
    %cst = arith.constant 0.000000e+00 : f32
    %0 = vector.broadcast %cst : f32 to vector<1x512xf32>
    %c0 = arith.constant 0 : index
    %c0_0 = arith.constant 0 : index
    %1 = vector.load %arg10[%c0, %c0_0] : memref<1x512xf32, #tpu.memory_space<vmem>>, vector<1x512xf32>
    tpu.vector_store %arg10[%c0, %c0_0], %0 {strides = array<i32>} : memref<1x512xf32, #tpu.memory_space<vmem>>, vector<1x512xf32>,
    %cst_1 = arith.constant 0.000000e+00 : f32
    %2 = vector.broadcast %cst_1 : f32 to vector<8x512xf32>
    %c0_2 = arith.constant 0 : index
    %c0_3 = arith.constant 0 : index
    %3 = vector.load %arg11[%c0_2, %c0_3] : memref<8x512xf32, #tpu.memory_space<vmem>>, vector<8x512xf32>
    tpu.vector_store %arg11[%c0_2, %c0_3], %2 {strides = array<i32>} : memref<8x512xf32, #tpu.memory_space<vmem>>, vector<8x512xf32>,
    %c0_4 = arith.constant 0 : index
    %c0_5 = arith.constant 0 : index
    %4 = vector.load %arg1[%c0_4, %c0_5] : memref<3x256xf32, #tpu.memory_space<vmem>>, vector<1x256xf32>
    %cst_6 = arith.constant 1.140000e-01 : f32
    %5 = vector.broadcast %cst_6 : f32 to vector<1x256xf32>
    %6 = arith.mulf %5, %4 : vector<1x256xf32>
    %c1 = arith.constant 1 : index
    %c0_7 = arith.constant 0 : index
    %7 = vector.load %arg1[%c1, %c0_7] : memref<3x256xf32, #tpu.memory_space<vmem>>, vector<1x256xf32>
    %cst_8 = arith.constant 5.870000e-01 : f32
    %8 = vector.broadcast %cst_8 : f32 to vector<1x256xf32>
    %9 = arith.mulf %8, %7 : vector<1x256xf32>
    %10 = arith.addf %6, %9 : vector<1x256xf32>
    %c2 = arith.constant 2 : index
    %c0_9 = arith.constant 0 : index
    %11 = vector.load %arg1[%c2, %c0_9] : memref<3x256xf32, #tpu.memory_space<vmem>>, vector<1x256xf32>
    %cst_10 = arith.constant 2.990000e-01 : f32
    %12 = vector.broadcast %cst_10 : f32 to vector<1x256xf32>
    %13 = arith.mulf %12, %11 : vector<1x256xf32>
    %14 = arith.addf %10, %13 : vector<1x256xf32>
    %c0_11 = arith.constant 0 : index
    %c128 = arith.constant 128 : index
    %15 = vector.load %arg10[%c0_11, %c128] : memref<1x512xf32, #tpu.memory_space<vmem>>, vector<1x256xf32>
    tpu.vector_store %arg10[%c0_11, %c128], %14 {strides = array<i32>} : memref<1x512xf32, #tpu.memory_space<vmem>>, vector<1x256xf32>,
    %cst_12 = arith.constant 0.000000e+00 : f32
    %16 = vector.broadcast %cst_12 : f32 to vector<1x256xf32>
    %c0_13 = arith.constant 0 : index
    %c111 = arith.constant 111 : index
    %17 = vector.load %arg10[%c0_13, %c111] : memref<1x512xf32, #tpu.memory_space<vmem>>, vector<1x256xf32>
    %cst_14 = arith.constant -1.000000e+00 : f32
    %18 = vector.broadcast %cst_14 : f32 to vector<1x256xf32>
    %19 = arith.mulf %18, %17 : vector<1x256xf32>
    %20 = arith.addf %16, %19 : vector<1x256xf32>
    %c0_15 = arith.constant 0 : index
    %c112 = arith.constant 112 : index
    %21 = vector.load %arg10[%c0_15, %c112] : memref<1x512xf32, #tpu.memory_space<vmem>>, vector<1x256xf32>
    %cst_16 = arith.constant -1.000000e+00 : f32
    %22 = vector.broadcast %cst_16 : f32 to vector<1x256xf32>
    %23 = arith.mulf %22, %21 : vector<1x256xf32>
    %24 = arith.addf %20, %23 : vector<1x256xf32>
    %c0_17 = arith.constant 0 : index
    %c113 = arith.constant 113 : index
    %25 = vector.load %arg10[%c0_17, %c113] : memref<1x512xf32, #tpu.memory_space<vmem>>, vector<1x256xf32>
    %cst_18 = arith.constant -1.000000e+00 : f32
    %26 = vector.broadcast %cst_18 : f32 to vector<1x256xf32>
    %27 = arith.mulf %26, %25 : vector<1x256xf32>
    %28 = arith.addf %24, %27 : vector<1x256xf32>
    %c0_19 = arith.constant 0 : index
    %c127 = arith.constant 127 : index
    %29 = vector.load %arg10[%c0_19, %c127] : memref<1x512xf32, #tpu.memory_space<vmem>>, vector<1x256xf32>
    %cst_20 = arith.constant -1.000000e+00 : f32
    %30 = vector.broadcast %cst_20 : f32 to vector<1x256xf32>
    %31 = arith.mulf %30, %29 : vector<1x256xf32>
    %32 = arith.addf %28, %31 : vector<1x256xf32>
    %c0_21 = arith.constant 0 : index
    %c128_22 = arith.constant 128 : index
    %33 = vector.load %arg10[%c0_21, %c128_22] : memref<1x512xf32, #tpu.memory_space<vmem>>, vector<1x256xf32>
    %cst_23 = arith.constant 8.000000e+00 : f32
    %34 = vector.broadcast %cst_23 : f32 to vector<1x256xf32>
    %35 = arith.mulf %34, %33 : vector<1x256xf32>
    %36 = arith.addf %32, %35 : vector<1x256xf32>
    %c0_24 = arith.constant 0 : index
    %c129 = arith.constant 129 : index
    %37 = vector.load %arg10[%c0_24, %c129] : memref<1x512xf32, #tpu.memory_space<vmem>>, vector<1x256xf32>
    %cst_25 = arith.constant -1.000000e+00 : f32
    %38 = vector.broadcast %cst_25 : f32 to vector<1x256xf32>
    %39 = arith.mulf %38, %37 : vector<1x256xf32>
    %40 = arith.addf %36, %39 : vector<1x256xf32>
    %c0_26 = arith.constant 0 : index
    %c143 = arith.constant 143 : index
    %41 = vector.load %arg10[%c0_26, %c143] : memref<1x512xf32, #tpu.memory_space<vmem>>, vector<1x256xf32>
    %cst_27 = arith.constant -1.000000e+00 : f32
    %42 = vector.broadcast %cst_27 : f32 to vector<1x256xf32>
    %43 = arith.mulf %42, %41 : vector<1x256xf32>
    %44 = arith.addf %40, %43 : vector<1x256xf32>
    %c0_28 = arith.constant 0 : index
    %c144 = arith.constant 144 : index
    %45 = vector.load %arg10[%c0_28, %c144] : memref<1x512xf32, #tpu.memory_space<vmem>>, vector<1x256xf32>
    %cst_29 = arith.constant -1.000000e+00 : f32
    %46 = vector.broadcast %cst_29 : f32 to vector<1x256xf32>
    %47 = arith.mulf %46, %45 : vector<1x256xf32>
    %48 = arith.addf %44, %47 : vector<1x256xf32>
    %c0_30 = arith.constant 0 : index
    %c145 = arith.constant 145 : index
    %49 = vector.load %arg10[%c0_30, %c145] : memref<1x512xf32, #tpu.memory_space<vmem>>, vector<1x256xf32>
    %cst_31 = arith.constant -1.000000e+00 : f32
    %50 = vector.broadcast %cst_31 : f32 to vector<1x256xf32>
    %51 = arith.mulf %50, %49 : vector<1x256xf32>
    %52 = arith.addf %48, %51 : vector<1x256xf32>
    %c0_32 = arith.constant 0 : index
    %c0_33 = arith.constant 0 : index
    %53 = vector.load %arg2[%c0_32, %c0_33] : memref<256x256xf32, #tpu.memory_space<vmem>>, vector<256x256xf32>
    %cst_34 = arith.constant dense<0.000000e+00> : vector<1x256xf32>
    %54 = tpu.matmul %52, %53, %cst_34 {dimension_numbers = #tpu.dot_dimension_numbers<[1], [0], [0], [1], [0, 0, 1, 1], [], []>} : vector<1x256xf32>, vector<256x256xf32>, vector<1x256xf32> -> vector<1x256xf32>
    %c0_35 = arith.constant 0 : index
    %c128_36 = arith.constant 128 : index
    %55 = vector.load %arg10[%c0_35, %c128_36] : memref<1x512xf32, #tpu.memory_space<vmem>>, vector<1x256xf32>
    tpu.vector_store %arg10[%c0_35, %c128_36], %54 {strides = array<i32>} : memref<1x512xf32, #tpu.memory_space<vmem>>, vector<1x256xf32>,
    %c0_37 = arith.constant 0 : index
    %c111_38 = arith.constant 111 : index
    %56 = vector.load %arg10[%c0_37, %c111_38] : memref<1x512xf32, #tpu.memory_space<vmem>>, vector<1x256xf32>
    %c0_39 = arith.constant 0 : index
    %c0_40 = arith.constant 0 : index
    %57 = vector.load %arg12[%c0_39, %c0_40] : memref<9x256xf32, #tpu.memory_space<vmem>>, vector<1x256xf32>
    tpu.vector_store %arg12[%c0_39, %c0_40], %56 {strides = array<i32>} : memref<9x256xf32, #tpu.memory_space<vmem>>, vector<1x256xf32>,
    %c0_41 = arith.constant 0 : index
    %c112_42 = arith.constant 112 : index
    %58 = vector.load %arg10[%c0_41, %c112_42] : memref<1x512xf32, #tpu.memory_space<vmem>>, vector<1x256xf32>
    %c1_43 = arith.constant 1 : index
    %c0_44 = arith.constant 0 : index
    %59 = vector.load %arg12[%c1_43, %c0_44] : memref<9x256xf32, #tpu.memory_space<vmem>>, vector<1x256xf32>
    tpu.vector_store %arg12[%c1_43, %c0_44], %58 {strides = array<i32>} : memref<9x256xf32, #tpu.memory_space<vmem>>, vector<1x256xf32>,
    %c0_45 = arith.constant 0 : index
    %c113_46 = arith.constant 113 : index
    %60 = vector.load %arg10[%c0_45, %c113_46] : memref<1x512xf32, #tpu.memory_space<vmem>>, vector<1x256xf32>
    %c2_47 = arith.constant 2 : index
    %c0_48 = arith.constant 0 : index
    %61 = vector.load %arg12[%c2_47, %c0_48] : memref<9x256xf32, #tpu.memory_space<vmem>>, vector<1x256xf32>
    tpu.vector_store %arg12[%c2_47, %c0_48], %60 {strides = array<i32>} : memref<9x256xf32, #tpu.memory_space<vmem>>, vector<1x256xf32>,
    %c0_49 = arith.constant 0 : index
    %c127_50 = arith.constant 127 : index
    %62 = vector.load %arg10[%c0_49, %c127_50] : memref<1x512xf32, #tpu.memory_space<vmem>>, vector<1x256xf32>
    %c3 = arith.constant 3 : index
    %c0_51 = arith.constant 0 : index
    %63 = vector.load %arg12[%c3, %c0_51] : memref<9x256xf32, #tpu.memory_space<vmem>>, vector<1x256xf32>
    tpu.vector_store %arg12[%c3, %c0_51], %62 {strides = array<i32>} : memref<9x256xf32, #tpu.memory_space<vmem>>, vector<1x256xf32>,
    %c0_52 = arith.constant 0 : index
    %c128_53 = arith.constant 128 : index
    %64 = vector.load %arg10[%c0_52, %c128_53] : memref<1x512xf32, #tpu.memory_space<vmem>>, vector<1x256xf32>
    %c4 = arith.constant 4 : index
    %c0_54 = arith.constant 0 : index
    %65 = vector.load %arg12[%c4, %c0_54] : memref<9x256xf32, #tpu.memory_space<vmem>>, vector<1x256xf32>
    tpu.vector_store %arg12[%c4, %c0_54], %64 {strides = array<i32>} : memref<9x256xf32, #tpu.memory_space<vmem>>, vector<1x256xf32>,
    %c0_55 = arith.constant 0 : index
    %c129_56 = arith.constant 129 : index
    %66 = vector.load %arg10[%c0_55, %c129_56] : memref<1x512xf32, #tpu.memory_space<vmem>>, vector<1x256xf32>
    %c5 = arith.constant 5 : index
    %c0_57 = arith.constant 0 : index
    %67 = vector.load %arg12[%c5, %c0_57] : memref<9x256xf32, #tpu.memory_space<vmem>>, vector<1x256xf32>
    tpu.vector_store %arg12[%c5, %c0_57], %66 {strides = array<i32>} : memref<9x256xf32, #tpu.memory_space<vmem>>, vector<1x256xf32>,
    %c0_58 = arith.constant 0 : index
    %c143_59 = arith.constant 143 : index
    %68 = vector.load %arg10[%c0_58, %c143_59] : memref<1x512xf32, #tpu.memory_space<vmem>>, vector<1x256xf32>
    %c6 = arith.constant 6 : index
    %c0_60 = arith.constant 0 : index
    %69 = vector.load %arg12[%c6, %c0_60] : memref<9x256xf32, #tpu.memory_space<vmem>>, vector<1x256xf32>
    tpu.vector_store %arg12[%c6, %c0_60], %68 {strides = array<i32>} : memref<9x256xf32, #tpu.memory_space<vmem>>, vector<1x256xf32>,
    %c0_61 = arith.constant 0 : index
    %c144_62 = arith.constant 144 : index
    %70 = vector.load %arg10[%c0_61, %c144_62] : memref<1x512xf32, #tpu.memory_space<vmem>>, vector<1x256xf32>
    %c7 = arith.constant 7 : index
    %c0_63 = arith.constant 0 : index
    %71 = vector.load %arg12[%c7, %c0_63] : memref<9x256xf32, #tpu.memory_space<vmem>>, vector<1x256xf32>
    tpu.vector_store %arg12[%c7, %c0_63], %70 {strides = array<i32>} : memref<9x256xf32, #tpu.memory_space<vmem>>, vector<1x256xf32>,
    %c0_64 = arith.constant 0 : index
    %c145_65 = arith.constant 145 : index
    %72 = vector.load %arg10[%c0_64, %c145_65] : memref<1x512xf32, #tpu.memory_space<vmem>>, vector<1x256xf32>
    %c8 = arith.constant 8 : index
    %c0_66 = arith.constant 0 : index
    %73 = vector.load %arg12[%c8, %c0_66] : memref<9x256xf32, #tpu.memory_space<vmem>>, vector<1x256xf32>
    tpu.vector_store %arg12[%c8, %c0_66], %72 {strides = array<i32>} : memref<9x256xf32, #tpu.memory_space<vmem>>, vector<1x256xf32>,
    %c0_67 = arith.constant 0 : index
    %c0_68 = arith.constant 0 : index
    %74 = vector.load %arg3[%c0_67, %c0_68] : memref<8x9xf32, #tpu.memory_space<vmem>>, vector<8x9xf32>
    %c0_69 = arith.constant 0 : index
    %c0_70 = arith.constant 0 : index
    %75 = vector.load %arg12[%c0_69, %c0_70] : memref<9x256xf32, #tpu.memory_space<vmem>>, vector<9x256xf32>
    %cst_71 = arith.constant dense<0.000000e+00> : vector<8x256xf32>
    %76 = tpu.matmul %74, %75, %cst_71 {dimension_numbers = #tpu.dot_dimension_numbers<[1], [0], [0], [1], [0, 0, 1, 1], [], []>} : vector<8x9xf32>, vector<9x256xf32>, vector<8x256xf32> -> vector<8x256xf32>
    %c0_72 = arith.constant 0 : index
    %c0_73 = arith.constant 0 : index
    %77 = vector.load %arg4[%c0_72, %c0_73] : memref<8x1xf32, #tpu.memory_space<vmem>>, vector<8x1xf32>
    %78 = vector.broadcast %77 : vector<8x1xf32> to vector<8x256xf32>
    %79 = arith.addf %76, %78 : vector<8x256xf32>
    %c0_74 = arith.constant 0 : index
    %c0_75 = arith.constant 0 : index
    %80 = vector.load %arg5[%c0_74, %c0_75] : memref<256x256xf32, #tpu.memory_space<vmem>>, vector<256x256xf32>
    %cst_76 = arith.constant dense<0.000000e+00> : vector<8x256xf32>
    %81 = tpu.matmul %79, %80, %cst_76 {dimension_numbers = #tpu.dot_dimension_numbers<[1], [0], [0], [1], [0, 0, 1, 1], [], []>} : vector<8x256xf32>, vector<256x256xf32>, vector<8x256xf32> -> vector<8x256xf32>
    %c0_77 = arith.constant 0 : index
    %c128_78 = arith.constant 128 : index
    %82 = vector.load %arg11[%c0_77, %c128_78] : memref<8x512xf32, #tpu.memory_space<vmem>>, vector<8x256xf32>
    tpu.vector_store %arg11[%c0_77, %c128_78], %81 {strides = array<i32>} : memref<8x512xf32, #tpu.memory_space<vmem>>, vector<8x256xf32>,
    %c0_79 = arith.constant 0 : index
    %c111_80 = arith.constant 111 : index
    %83 = vector.load %arg11[%c0_79, %c111_80] : memref<8x512xf32, #tpu.memory_space<vmem>>, vector<8x256xf32>
    %c0_81 = arith.constant 0 : index
    %c0_82 = arith.constant 0 : index
    %84 = vector.load %arg13[%c0_81, %c0_82] : memref<72x256xf32, #tpu.memory_space<vmem>>, vector<8x256xf32>
    tpu.vector_store %arg13[%c0_81, %c0_82], %83 {strides = array<i32>} : memref<72x256xf32, #tpu.memory_space<vmem>>, vector<8x256xf32>,
    %c0_83 = arith.constant 0 : index
    %c112_84 = arith.constant 112 : index
    %85 = vector.load %arg11[%c0_83, %c112_84] : memref<8x512xf32, #tpu.memory_space<vmem>>, vector<8x256xf32>
    %c8_85 = arith.constant 8 : index
    %c0_86 = arith.constant 0 : index
    %86 = vector.load %arg13[%c8_85, %c0_86] : memref<72x256xf32, #tpu.memory_space<vmem>>, vector<8x256xf32>
    tpu.vector_store %arg13[%c8_85, %c0_86], %85 {strides = array<i32>} : memref<72x256xf32, #tpu.memory_space<vmem>>, vector<8x256xf32>,
    %c0_87 = arith.constant 0 : index
    %c113_88 = arith.constant 113 : index
    %87 = vector.load %arg11[%c0_87, %c113_88] : memref<8x512xf32, #tpu.memory_space<vmem>>, vector<8x256xf32>
    %c16 = arith.constant 16 : index
    %c0_89 = arith.constant 0 : index
    %88 = vector.load %arg13[%c16, %c0_89] : memref<72x256xf32, #tpu.memory_space<vmem>>, vector<8x256xf32>
    tpu.vector_store %arg13[%c16, %c0_89], %87 {strides = array<i32>} : memref<72x256xf32, #tpu.memory_space<vmem>>, vector<8x256xf32>,
    %c0_90 = arith.constant 0 : index
    %c127_91 = arith.constant 127 : index
    %89 = vector.load %arg11[%c0_90, %c127_91] : memref<8x512xf32, #tpu.memory_space<vmem>>, vector<8x256xf32>
    %c24 = arith.constant 24 : index
    %c0_92 = arith.constant 0 : index
    %90 = vector.load %arg13[%c24, %c0_92] : memref<72x256xf32, #tpu.memory_space<vmem>>, vector<8x256xf32>
    tpu.vector_store %arg13[%c24, %c0_92], %89 {strides = array<i32>} : memref<72x256xf32, #tpu.memory_space<vmem>>, vector<8x256xf32>,
    %c0_93 = arith.constant 0 : index
    %c128_94 = arith.constant 128 : index
    %91 = vector.load %arg11[%c0_93, %c128_94] : memref<8x512xf32, #tpu.memory_space<vmem>>, vector<8x256xf32>
    %c32 = arith.constant 32 : index
    %c0_95 = arith.constant 0 : index
    %92 = vector.load %arg13[%c32, %c0_95] : memref<72x256xf32, #tpu.memory_space<vmem>>, vector<8x256xf32>
    tpu.vector_store %arg13[%c32, %c0_95], %91 {strides = array<i32>} : memref<72x256xf32, #tpu.memory_space<vmem>>, vector<8x256xf32>,
    %c0_96 = arith.constant 0 : index
    %c129_97 = arith.constant 129 : index
    %93 = vector.load %arg11[%c0_96, %c129_97] : memref<8x512xf32, #tpu.memory_space<vmem>>, vector<8x256xf32>
    %c40 = arith.constant 40 : index
    %c0_98 = arith.constant 0 : index
    %94 = vector.load %arg13[%c40, %c0_98] : memref<72x256xf32, #tpu.memory_space<vmem>>, vector<8x256xf32>
    tpu.vector_store %arg13[%c40, %c0_98], %93 {strides = array<i32>} : memref<72x256xf32, #tpu.memory_space<vmem>>, vector<8x256xf32>,
    %c0_99 = arith.constant 0 : index
    %c143_100 = arith.constant 143 : index
    %95 = vector.load %arg11[%c0_99, %c143_100] : memref<8x512xf32, #tpu.memory_space<vmem>>, vector<8x256xf32>
    %c48 = arith.constant 48 : index
    %c0_101 = arith.constant 0 : index
    %96 = vector.load %arg13[%c48, %c0_101] : memref<72x256xf32, #tpu.memory_space<vmem>>, vector<8x256xf32>
    tpu.vector_store %arg13[%c48, %c0_101], %95 {strides = array<i32>} : memref<72x256xf32, #tpu.memory_space<vmem>>, vector<8x256xf32>,
    %c0_102 = arith.constant 0 : index
    %c144_103 = arith.constant 144 : index
    %97 = vector.load %arg11[%c0_102, %c144_103] : memref<8x512xf32, #tpu.memory_space<vmem>>, vector<8x256xf32>
    %c56 = arith.constant 56 : index
    %c0_104 = arith.constant 0 : index
    %98 = vector.load %arg13[%c56, %c0_104] : memref<72x256xf32, #tpu.memory_space<vmem>>, vector<8x256xf32>
    tpu.vector_store %arg13[%c56, %c0_104], %97 {strides = array<i32>} : memref<72x256xf32, #tpu.memory_space<vmem>>, vector<8x256xf32>,
    %c0_105 = arith.constant 0 : index
    %c145_106 = arith.constant 145 : index
    %99 = vector.load %arg11[%c0_105, %c145_106] : memref<8x512xf32, #tpu.memory_space<vmem>>, vector<8x256xf32>
    %c64 = arith.constant 64 : index
    %c0_107 = arith.constant 0 : index
    %100 = vector.load %arg13[%c64, %c0_107] : memref<72x256xf32, #tpu.memory_space<vmem>>, vector<8x256xf32>
    tpu.vector_store %arg13[%c64, %c0_107], %99 {strides = array<i32>} : memref<72x256xf32, #tpu.memory_space<vmem>>, vector<8x256xf32>,
    %c0_108 = arith.constant 0 : index
    %c0_109 = arith.constant 0 : index
    %101 = vector.load %arg6[%c0_108, %c0_109] : memref<128x72xf32, #tpu.memory_space<vmem>>, vector<128x72xf32>
    %c0_110 = arith.constant 0 : index
    %c0_111 = arith.constant 0 : index
    %102 = vector.load %arg13[%c0_110, %c0_111] : memref<72x256xf32, #tpu.memory_space<vmem>>, vector<72x256xf32>
    %cst_112 = arith.constant dense<0.000000e+00> : vector<128x256xf32>
    %103 = tpu.matmul %101, %102, %cst_112 {dimension_numbers = #tpu.dot_dimension_numbers<[1], [0], [0], [1], [0, 0, 1, 1], [], []>} : vector<128x72xf32>, vector<72x256xf32>, vector<128x256xf32> -> vector<128x256xf32>
    %c0_113 = arith.constant 0 : index
    %c0_114 = arith.constant 0 : index
    %104 = vector.load %arg7[%c0_113, %c0_114] : memref<128x1xf32, #tpu.memory_space<vmem>>, vector<128x1xf32>
    %105 = vector.broadcast %104 : vector<128x1xf32> to vector<128x256xf32>
    %106 = arith.addf %103, %105 : vector<128x256xf32>
    %c0_115 = arith.constant 0 : index
    %c0_116 = arith.constant 0 : index
    %107 = vector.load %arg8[%c0_115, %c0_116] : memref<256x4xf32, #tpu.memory_space<vmem>>, vector<256x4xf32>
    %cst_117 = arith.constant dense<0.000000e+00> : vector<128x4xf32>
    %108 = tpu.matmul %106, %107, %cst_117 {dimension_numbers = #tpu.dot_dimension_numbers<[1], [0], [0], [1], [0, 0, 1, 1], [], []>} : vector<128x256xf32>, vector<256x4xf32>, vector<128x4xf32> -> vector<128x4xf32>
    %c0_118 = arith.constant 0 : index
    %c0_119 = arith.constant 0 : index
    %109 = vector.load %arg9[%c0_118, %c0_119] : memref<128x4xf32, #tpu.memory_space<vmem>>, vector<128x4xf32>
    tpu.vector_store %arg9[%c0_118, %c0_119], %108 {strides = array<i32>} : memref<128x4xf32, #tpu.memory_space<vmem>>, vector<128x4xf32>,
    return
  }
  func.func @transform_0(%arg0: i32) -> (i32, i32) {
    %c0_i32 = arith.constant 0 : i32
    %c0_i32_0 = arith.constant 0 : i32
    %c0_i32_1 = arith.constant 0 : i32
    return %c0_i32, %c0_i32_0 : i32, i32
  }
  func.func @transform_1(%arg0: i32) -> (i32, i32) {
    %c0_i32 = arith.constant 0 : i32
    %c0_i32_0 = arith.constant 0 : i32
    %c0_i32_1 = arith.constant 0 : i32
    return %c0_i32, %c0_i32_0 : i32, i32
  }
  func.func @transform_2(%arg0: i32) -> (i32, i32) {
    %c0_i32 = arith.constant 0 : i32
    %c0_i32_0 = arith.constant 0 : i32
    %c0_i32_1 = arith.constant 0 : i32
    return %c0_i32, %c0_i32_0 : i32, i32
  }
  func.func @transform_3(%arg0: i32) -> (i32, i32) {
    %c0_i32 = arith.constant 0 : i32
    %c0_i32_0 = arith.constant 0 : i32
    %c0_i32_1 = arith.constant 0 : i32
    return %c0_i32, %c0_i32_0 : i32, i32
  }
  func.func @transform_4(%arg0: i32) -> (i32, i32) {
    %c0_i32 = arith.constant 0 : i32
    %c0_i32_0 = arith.constant 0 : i32
    %c0_i32_1 = arith.constant 0 : i32
    return %c0_i32, %c0_i32_0 : i32, i32
  }
  func.func @transform_5(%arg0: i32) -> (i32, i32) {
    %c0_i32 = arith.constant 0 : i32
    %c0_i32_0 = arith.constant 0 : i32
    %c0_i32_1 = arith.constant 0 : i32
    return %c0_i32, %c0_i32_0 : i32, i32
  }
  func.func @transform_6(%arg0: i32) -> (i32, i32) {
    %c0_i32 = arith.constant 0 : i32
    %c0_i32_0 = arith.constant 0 : i32
    %c0_i32_1 = arith.constant 0 : i32
    return %c0_i32, %c0_i32_0 : i32, i32
  }
  func.func @transform_7(%arg0: i32) -> (i32, i32) {
    %c0_i32 = arith.constant 0 : i32
    %c0_i32_0 = arith.constant 0 : i32
    %c0_i32_1 = arith.constant 0 : i32
    return %c0_i32, %c0_i32_0 : i32, i32
  }
  func.func @transform_8(%arg0: i32) -> (i32, i32) {
    %c0_i32 = arith.constant 0 : i32
    %c0_i32_0 = arith.constant 0 : i32
    %c0_i32_1 = arith.constant 0 : i32
    return %c0_i32, %c0_i32_0 : i32, i32
  }
}

</mosaic_0001>

<llo_original>
// kernel: squeeze.2
$region0: #{squeeze.2}
  %s0 = inlined_call_operand.hbm [shape: f32[1,3,16,16], index: 0, kind: input, shape index: {}]
  %s1 = inlined_call_operand.vmem [shape: f32[3,256], index: 1, kind: output, shape index: {}]
  $region1: #{squeeze.2} parent=0
    #allocation0 [shape = 'u8[24576]{0}', space=vmem, size = 0x6000, scoped, tag = 'operand span for operand 0']
    #allocation1 [shape = 's32[1]{0}', space=sflag, size = 0x4, scoped, tag = 'scoped memory for squeeze.2']
    #allocation2 [shape = 'u8[8192]{0}', space=vmem, size = 0x2000, scoped, tag = 'scoped mem for output reshape']
    %2 = vsyncpa [#allocation1], 0
    %s4 = ssub.s32 768, 768
    %5 = vsyncadd [#allocation1], %s4
    %s7 = sshll.u32 [#allocation0], 4
    %s8 = int_to_ptr.vmem [resolvable:$true] %s7
    %10 = dma.hbm_to_vmem [thread:$0]  %s0, 768, %s8, [#allocation1]
    %11 = dma.done [#allocation1], 768
    %v12 = vld [vmem:[#allocation0] ss:$8 sm:$0xf]
    %s13 = smov 48
    %v14 = vld [vmem:[#allocation0] ss:$8 sm:%s13]
    %vm15 = vcmask 1045508
    %v16 = vsel %vm15, %v14, %v12
    %vm17 = vcmask 130048
    %18 = vst.msk [vmem:[#allocation2] ss:$8 sm:$0x3] %vm17, %v16
    %s19 = scalar_lea.vmem [#allocation2], 4294967281
    %20 = vst.msk [vmem:[%s19] ss:$8 sm:$0xc] %vm17, %v16
    %s21 = scalar_lea.vmem [#allocation2], 4294967266
    %22 = vst.msk [vmem:[%s21] ss:$8 sm:$0x30] %vm17, %v16
    %s23 = scalar_lea.vmem [#allocation0], 7
    %s24 = smov 3
    %v25 = vld [vmem:[%s23] ss:$16 sm:%s24]
    %s26 = scalar_lea.vmem [#allocation0], 87
    %s27 = smov 12
    %v28 = vld [vmem:[%s26] ss:$-24 sm:%s27]
    %vm29 = vcmask 1043458
    %v30 = vsel %vm29, %v28, %v25
    %s31 = scalar_lea.vmem [#allocation0], 4294967263
    %s32 = smov 48
    %v33 = vld [vmem:[%s31] ss:$16 sm:%s32]
    %vm34 = vcmask 1045508
    %v35 = vsel %vm34, %v33, %v30
    %36 = vrot.lane.b32.xlu0 %v35, 112
    %v37 = vpop.permute.xlu0 %36
    %vm38 = vcmask 1048448
    %39 = vst.msk [vmem:[#allocation2] sm:$0x7] %vm38, %v37
    %s40 = scalar_lea.vmem [#allocation2], 5
    %41 = vst.msk [vmem:[%s40] sm:$0x38] %vm38, %v37
    %s42 = scalar_lea.vmem [#allocation0], 6
    %s43 = smov 3
    %v44 = vld [vmem:[%s42] ss:$16 sm:%s43]
    %s45 = scalar_lea.vmem [#allocation0], 86
    %s46 = smov 12
    %v47 = vld [vmem:[%s45] ss:$-24 sm:%s46]
    %vm48 = vcmask 1043458
    %v49 = vsel %vm48, %v47, %v44
    %s50 = scalar_lea.vmem [#allocation0], 4294967262
    %s51 = smov 48
    %v52 = vld [vmem:[%s50] ss:$16 sm:%s51]
    %vm53 = vcmask 1045508
    %v54 = vsel %vm53, %v52, %v49
    %55 = vrot.lane.b32.xlu0 %v54, 96
    %v56 = vpop.permute.xlu0 %55
    %vm57 = vcmask 917248
    %58 = vst.msk [vmem:[#allocation2] sm:$0x7] %vm57, %v56
    %s59 = scalar_lea.vmem [#allocation2], 5
    %60 = vst.msk [vmem:[%s59] sm:$0x38] %vm57, %v56
    %s61 = scalar_lea.vmem [#allocation0], 5
    %s62 = smov 3
    %v63 = vld [vmem:[%s61] ss:$16 sm:%s62]
    %s64 = scalar_lea.vmem [#allocation0], 85
    %s65 = smov 12
    %v66 = vld [vmem:[%s64] ss:$-24 sm:%s65]
    %vm67 = vcmask 1043458
    %v68 = vsel %vm67, %v66, %v63
    %s69 = scalar_lea.vmem [#allocation0], 4294967261
    %s70 = smov 48
    %v71 = vld [vmem:[%s69] ss:$16 sm:%s70]
    %vm72 = vcmask 1045508
    %v73 = vsel %vm72, %v71, %v68
    %74 = vrot.lane.b32.xlu0 %v73, 80
    %v75 = vpop.permute.xlu0 %74
    %vm76 = vcmask 786048
    %77 = vst.msk [vmem:[#allocation2] sm:$0x7] %vm76, %v75
    %s78 = scalar_lea.vmem [#allocation2], 5
    %79 = vst.msk [vmem:[%s78] sm:$0x38] %vm76, %v75
    %s80 = scalar_lea.vmem [#allocation0], 4
    %s81 = smov 3
    %v82 = vld [vmem:[%s80] ss:$16 sm:%s81]
    %s83 = scalar_lea.vmem [#allocation0], 84
    %s84 = smov 12
    %v85 = vld [vmem:[%s83] ss:$-24 sm:%s84]
    %vm86 = vcmask 1043458
    %v87 = vsel %vm86, %v85, %v82
    %s88 = scalar_lea.vmem [#allocation0], 4294967260
    %s89 = smov 48
    %v90 = vld [vmem:[%s88] ss:$16 sm:%s89]
    %vm91 = vcmask 1045508
    %v92 = vsel %vm91, %v90, %v87
    %93 = vrot.lane.b32.xlu0 %v92, 64
    %v94 = vpop.permute.xlu0 %93
    %vm95 = vcmask 654848
    %96 = vst.msk [vmem:[#allocation2] sm:$0x7] %vm95, %v94
    %s97 = scalar_lea.vmem [#allocation2], 5
    %98 = vst.msk [vmem:[%s97] sm:$0x38] %vm95, %v94
    %s99 = scalar_lea.vmem [#allocation0], 3
    %s100 = smov 3
    %v101 = vld [vmem:[%s99] ss:$16 sm:%s100]
    %s102 = scalar_lea.vmem [#allocation0], 83
    %s103 = smov 12
    %v104 = vld [vmem:[%s102] ss:$-24 sm:%s103]
    %vm105 = vcmask 1043458
    %v106 = vsel %vm105, %v104, %v101
    %s107 = scalar_lea.vmem [#allocation0], 4294967259
    %s108 = smov 48
    %v109 = vld [vmem:[%s107] ss:$16 sm:%s108]
    %vm110 = vcmask 1045508
    %v111 = vsel %vm110, %v109, %v106
    %112 = vrot.lane.b32.xlu0 %v111, 48
    %v113 = vpop.permute.xlu0 %112
    %vm114 = vcmask 523648
    %115 = vst.msk [vmem:[#allocation2] sm:$0x7] %vm114, %v113
    %s116 = scalar_lea.vmem [#allocation2], 5
    %117 = vst.msk [vmem:[%s116] sm:$0x38] %vm114, %v113
    %s118 = scalar_lea.vmem [#allocation0], 2
    %s119 = smov 3
    %v120 = vld [vmem:[%s118] ss:$16 sm:%s119]
    %s121 = scalar_lea.vmem [#allocation0], 82
    %s122 = smov 12
    %v123 = vld [vmem:[%s121] ss:$-24 sm:%s122]
    %vm124 = vcmask 1043458
    %v125 = vsel %vm124, %v123, %v120
    %s126 = scalar_lea.vmem [#allocation0], 4294967258
    %s127 = smov 48
    %v128 = vld [vmem:[%s126] ss:$16 sm:%s127]
    %vm129 = vcmask 1045508
    %v130 = vsel %vm129, %v128, %v125
    %131 = vrot.lane.b32.xlu0 %v130, 32
    %v132 = vpop.permute.xlu0 %131
    %vm133 = vcmask 392448
    %134 = vst.msk [vmem:[#allocation2] sm:$0x7] %vm133, %v132
    %s135 = scalar_lea.vmem [#allocation2], 5
    %136 = vst.msk [vmem:[%s135] sm:$0x38] %vm133, %v132
    %s137 = scalar_lea.vmem [#allocation0], 1
    %s138 = smov 3
    %v139 = vld [vmem:[%s137] ss:$16 sm:%s138]
    %s140 = scalar_lea.vmem [#allocation0], 81
    %s141 = smov 12
    %v142 = vld [vmem:[%s140] ss:$-24 sm:%s141]
    %vm143 = vcmask 1043458
    %v144 = vsel %vm143, %v142, %v139
    %s145 = scalar_lea.vmem [#allocation0], 4294967257
    %s146 = smov 48
    %v147 = vld [vmem:[%s145] ss:$16 sm:%s146]
    %vm148 = vcmask 1045508
    %v149 = vsel %vm148, %v147, %v144
    %150 = vrot.lane.b32.xlu0 %v149, 16
    %v151 = vpop.permute.xlu0 %150
    %vm152 = vcmask 261248
    %153 = vst.msk [vmem:[#allocation2] sm:$0x7] %vm152, %v151
    %s154 = scalar_lea.vmem [#allocation2], 5
    %155 = vst.msk [vmem:[%s154] sm:$0x38] %vm152, %v151
    %s157 = sshll.u32 1, 4
    %s158 = ssub.s32 %s157, 1
    %v160 = vld [vmem:[#allocation2] sm:%s158]
    %s161 = sshll.u32 1, 4
    %s162 = ssub.s32 %s161, 1
    %163 = vst [vmem:[%s1] sm:%s162] %v160
    %s164 = scalar_lea.vmem [#allocation2], 8
    %v165 = vld [vmem:[%s164] sm:%s158]
    %s166 = sshll.u32 1, 4
    %s167 = ssub.s32 %s166, 1
    %s168 = scalar_lea.vmem %s1, 4
    %169 = vst [vmem:[%s168] sm:%s167] %v165
    %170 = vsyncpa [#allocation1], 1

// kernel: forward.2
$region0: #{forward.2}
  #allocation0 [shape = 'u32[]', space=smem, size = 0x4, offset = 0x4, fixed_abs, tag = 'smem constant byte address 0x4 - core index']
  #allocation1 [shape = 'u32[144,128]{1,0:T(1,128)}', space=vmem, size = 0x12000, scoped, tag = 'internal scratch']
  #allocation2 [shape = 'f32[1,512]{1,0:T(1,128)}', space=vmem, size = 0x800, scoped, tag = 'scratch operand']
  #allocation3 [shape = 'f32[8,512]{1,0:T(8,128)}', space=vmem, size = 0x4000, scoped, tag = 'scratch operand']
  #allocation4 [shape = 'f32[9,256]{1,0:T(8,128)}', space=vmem, size = 0x4000, scoped, tag = 'scratch operand']
  #allocation5 [shape = 'f32[72,256]{1,0:T(8,128)}', space=vmem, size = 0x12000, scoped, tag = 'scratch operand']
  %s0 = inlined_call_operand.vmem [shape: f32[3,256], index: 0, kind: input, shape index: {}]
  %s1 = inlined_call_operand.hbm [shape: f32[256,256], index: 1, kind: input, shape index: {}]
  %s2 = inlined_call_operand.hbm [shape: f32[8,9], index: 2, kind: input, shape index: {}]
  %s3 = inlined_call_operand.vmem [shape: f32[8,1], index: 3, kind: input, shape index: {}]
  %s4 = inlined_call_operand.hbm [shape: f32[256,256], index: 4, kind: input, shape index: {}]
  %s5 = inlined_call_operand.vmem [shape: f32[128,72], index: 5, kind: input, shape index: {}]
  %s6 = inlined_call_operand.vmem [shape: f32[128,1], index: 6, kind: input, shape index: {}]
  %s7 = inlined_call_operand.vmem [shape: f32[256,4], index: 7, kind: input, shape index: {}]
  %s8 = inlined_call_operand.vmem [shape: f32[128,4], index: 8, kind: output, shape index: {}]
  %s9 = sld [smem:[#allocation0]]
  $region54: #{forward.2} parent=0
    _
  %s11 = ssub.s32 1, %s9
  %s12 = scalar_select 0, %s11, %s9
  $region1: #{forward.2} parent=0
    #allocation6 [shape = 'u8[262144]{0}', space=vmem, size = 0x40000, scoped, tag = 'input window, operand 1, single buffered']
    #allocation7 [shape = 's32[1]{0}', space=sflag, size = 0x4, scoped, tag = 'scoped memory for forward.2']
    #allocation8 [shape = 'u8[4096]{0}', space=vmem, size = 0x1000, scoped, tag = 'input window, operand 2, single buffered']
    #allocation9 [shape = 's32[1]{0}', space=sflag, size = 0x4, scoped, tag = 'scoped memory for forward.2']
    #allocation10 [shape = 'u8[262144]{0}', space=vmem, size = 0x40000, scoped, tag = 'input window, operand 4, single buffered']
    %13 = vsyncpa [#allocation7], 0
    %14 = vsyncpa [#allocation9], 0
    // Predicated region
    $region2: #{forward.2} parent=1 // pred_check
      _
    $region3: #{forward.2} parent=1 // pred_check_branch
      %16 = sbr.rel (0) target = $region5
    $region4: #{forward.2} parent=1 // pred_region
      _
    $region5: #{forward.2} parent=1 // pred_fallthru
      _
    // Predicated region
    $region6: #{forward.2} parent=1 // pred_check
      _
    $region7: #{forward.2} parent=1 // pred_check_branch
      %18 = sbr.rel (0) target = $region9
    $region8: #{forward.2} parent=1 // pred_region
      %s20 = ssub.s32 8192, 8192
      %21 = vsyncadd [#allocation7], %s20
      %s22 = sshll.u32 [#allocation6], 4
      %s23 = int_to_ptr.vmem [resolvable:$true] %s22
      %28 = dma.hbm_to_vmem [thread:$0]  %s1, 8192, %s23, [#allocation7], 256, 256, 16
    $region9: #{forward.2} parent=1 // pred_fallthru
      _
    // Predicated region
    $region10: #{forward.2} parent=1 // pred_check
      _
    $region11: #{forward.2} parent=1 // pred_check_branch
      %30 = sbr.rel (0) target = $region13
    $region12: #{forward.2} parent=1 // pred_region
      %s32 = ssub.s32 128, 128
      %33 = vsyncadd [#allocation9], %s32
      %s35 = sshll.u32 [#allocation8], 4
      %s36 = int_to_ptr.vmem [resolvable:$true] %s35
      %38 = dma.hbm_to_vmem [thread:$0]  %s2, 128, %s36, [#allocation9]
    $region13: #{forward.2} parent=1 // pred_fallthru
      _
    // Predicated region
    $region14: #{forward.2} parent=1 // pred_check
      _
    $region15: #{forward.2} parent=1 // pred_check_branch
      %40 = sbr.rel (0) target = $region17
    $region16: #{forward.2} parent=1 // pred_region
      _
    $region17: #{forward.2} parent=1 // pred_fallthru
      _
    // Predicated region
    $region18: #{forward.2} parent=1 // pred_check
      _
    $region19: #{forward.2} parent=1 // pred_check_branch
      %42 = sbr.rel (0) target = $region21
    $region20: #{forward.2} parent=1 // pred_region
      %s44 = ssub.s32 8192, 8192
      %45 = vsyncadd [#allocation9], %s44
      %s46 = sshll.u32 [#allocation10], 4
      %s47 = int_to_ptr.vmem [resolvable:$true] %s46
      %52 = dma.hbm_to_vmem [thread:$0]  %s4, 8192, %s47, [#allocation9], 256, 256, 16
    $region21: #{forward.2} parent=1 // pred_fallthru
      _
    // Predicated region
    $region22: #{forward.2} parent=1 // pred_check
      _
    $region23: #{forward.2} parent=1 // pred_check_branch
      %54 = sbr.rel (0) target = $region25
    $region24: #{forward.2} parent=1 // pred_region
      _
    $region25: #{forward.2} parent=1 // pred_fallthru
      _
    // Predicated region
    $region26: #{forward.2} parent=1 // pred_check
      _
    $region27: #{forward.2} parent=1 // pred_check_branch
      %56 = sbr.rel (0) target = $region29
    $region28: #{forward.2} parent=1 // pred_region
      _
    $region29: #{forward.2} parent=1 // pred_fallthru
      _
    // Predicated region
    $region30: #{forward.2} parent=1 // pred_check
      _
    $region31: #{forward.2} parent=1 // pred_check_branch
      %58 = sbr.rel (0) target = $region33
    $region32: #{forward.2} parent=1 // pred_region
      _
    $region33: #{forward.2} parent=1 // pred_fallthru
      _
    // Predicated region
    $region34: #{forward.2} parent=1 // pred_check
      _
    $region35: #{forward.2} parent=1 // pred_check_branch
      %60 = sbr.rel (0) target = $region37
    $region36: #{forward.2} parent=1 // pred_region
      %61 = dma.done [#allocation7], 8192
    $region37: #{forward.2} parent=1 // pred_fallthru
      _
    // Predicated region
    $region38: #{forward.2} parent=1 // pred_check
      _
    $region39: #{forward.2} parent=1 // pred_check_branch
      %63 = sbr.rel (0) target = $region41
    $region40: #{forward.2} parent=1 // pred_region
      %64 = dma.done [#allocation9], 128
    $region41: #{forward.2} parent=1 // pred_fallthru
      _
    // Predicated region
    $region42: #{forward.2} parent=1 // pred_check
      _
    $region43: #{forward.2} parent=1 // pred_check_branch
      %66 = sbr.rel (0) target = $region45
    $region44: #{forward.2} parent=1 // pred_region
      %67 = dma.done [#allocation9], 8192
    $region45: #{forward.2} parent=1 // pred_fallthru
      _
    %v68 = vlaneseq
    %vm69 = vcmp.ge.s32.totalorder %v68, 0
    %vm70 = vcmp.lt.s32.totalorder %v68, 512
    %vm71 = vmand %vm69, %vm70
    %72 = vst.msk [vmem:[#allocation2] sm:$0xf] %vm71, 0.0
    %73 = vst [vmem:[#allocation3] sm:$0xff] 0.0
    %74 = vst [vmem:[#allocation3 + $0x8] sm:$0xff] 0.0
    %75 = vst [vmem:[#allocation3 + $0x10] sm:$0xff] 0.0
    %76 = vst [vmem:[#allocation3 + $0x18] sm:$0xff] 0.0
    %v77 = vld [vmem:[%s0] ss:$4 sm:$0x3]
    %v78 = vmul.f32 %v77, 0.114
    %s79 = scalar_lea.vmem %s0, 1
    %v80 = vld [vmem:[%s79] ss:$4 sm:$0x3]
    %v81 = vmul.f32 %v80, 0.587
    %v82 = vadd.f32 %v78, %v81
    %s83 = scalar_lea.vmem %s0, 2
    %v84 = vld [vmem:[%s83] ss:$4 sm:$0x3]
    %v85 = vmul.f32 %v84, 0.299
    %v86 = vadd.f32 %v82, %v85
    %vm87 = vcmp.lt.s32.totalorder %v68, 256
    %vm88 = vmand %vm69, %vm87
    %89 = vst.msk [vmem:[#allocation2 + $0x1] sm:$0x3] %vm88, %v86
    %v90 = vld [vmem:[#allocation2] sm:$0x7]
    %v91 = vmul.f32 %v90, -1.0
    %v92 = vadd.f32 %v91, 0.0
    %94 = vrot.lane.b32.xlu0 %v91, 127
    %v95 = vpop.permute.xlu0 %94
    %v96 = vrot.slane %v95, 1
    %vm97 = vcmask 1039360
    %v98 = vsel %vm97, %v95, %v96
    %v100 = vadd.f32 %v92, %v98
    %101 = vrot.lane.b32.xlu0 %v91, 126
    %v102 = vpop.permute.xlu0 %101
    %v103 = vrot.slane %v102, 1
    %vm104 = vcmask 1031168
    %v105 = vsel %vm104, %v102, %v103
    %v107 = vadd.f32 %v100, %v105
    %108 = vrot.lane.b32.xlu0 %v91, 112
    %v109 = vpop.permute.xlu0 %108
    %v110 = vrot.slane %v109, 1
    %vm111 = vcmask 916480
    %v112 = vsel %vm111, %v109, %v110
    %v114 = vadd.f32 %v107, %v112
    %v115 = vld [vmem:[#allocation2 + $0x1] sm:$0x3]
    %v116 = vmul.f32 %v115, 8.0
    %118 = vrot.lane.b32.xlu0 %v116, 111
    %v119 = vpop.permute.xlu0 %118
    %v120 = vrot.slane %v119, 7
    %vm121 = vcmask 908288
    %v122 = vsel %vm121, %v120, %v119
    %v124 = vadd.f32 %v114, %v122
    %v125 = vld [vmem:[#allocation2 + $0x1] sm:$0x7]
    %v126 = vmul.f32 %v125, -1.0
    %128 = vrot.lane.b32.xlu0 %v126, 110
    %v129 = vpop.permute.xlu0 %128
    %v130 = vrot.slane %v129, 7
    %vm131 = vcmask 900096
    %v132 = vsel %vm131, %v130, %v129
    %v134 = vadd.f32 %v124, %v132
    %135 = vrot.lane.b32.xlu0 %v126, 96
    %v136 = vpop.permute.xlu0 %135
    %v137 = vrot.slane %v136, 7
    %vm138 = vcmask 785408
    %v139 = vsel %vm138, %v137, %v136
    %v141 = vadd.f32 %v134, %v139
    %142 = vrot.lane.b32.xlu0 %v126, 95
    %v143 = vpop.permute.xlu0 %142
    %v144 = vrot.slane %v143, 7
    %vm145 = vcmask 777216
    %v146 = vsel %vm145, %v144, %v143
    %v148 = vadd.f32 %v141, %v146
    %149 = vrot.lane.b32.xlu0 %v126, 94
    %v150 = vpop.permute.xlu0 %149
    %v151 = vrot.slane %v150, 7
    %vm152 = vcmask 769024
    %v153 = vsel %vm152, %v151, %v150
    %v155 = vadd.f32 %v148, %v153
    %v156 = vld [vmem:[#allocation6] sm:$0xff]
    %v157 = vld [vmem:[#allocation6 + $0x8] sm:$0xff]
    %v158 = vld [vmem:[#allocation6 + $0x10] sm:$0xff]
    %v159 = vld [vmem:[#allocation6 + $0x18] sm:$0xff]
    %v160 = vld [vmem:[#allocation6 + $0x20] sm:$0xff]
    %v161 = vld [vmem:[#allocation6 + $0x28] sm:$0xff]
    %v162 = vld [vmem:[#allocation6 + $0x30] sm:$0xff]
    %v163 = vld [vmem:[#allocation6 + $0x38] sm:$0xff]
    %v164 = vld [vmem:[#allocation6 + $0x40] sm:$0xff]
    %v165 = vld [vmem:[#allocation6 + $0x48] sm:$0xff]
    %v166 = vld [vmem:[#allocation6 + $0x50] sm:$0xff]
    %v167 = vld [vmem:[#allocation6 + $0x58] sm:$0xff]
    %v168 = vld [vmem:[#allocation6 + $0x60] sm:$0xff]
    %v169 = vld [vmem:[#allocation6 + $0x68] sm:$0xff]
    %v170 = vld [vmem:[#allocation6 + $0x70] sm:$0xff]
    %v171 = vld [vmem:[#allocation6 + $0x78] sm:$0xff]
    %v172 = vld [vmem:[#allocation6 + $0x80] sm:$0xff]
    %v173 = vld [vmem:[#allocation6 + $0x88] sm:$0xff]
    %v174 = vld [vmem:[#allocation6 + $0x90] sm:$0xff]
    %v175 = vld [vmem:[#allocation6 + $0x98] sm:$0xff]
    %v176 = vld [vmem:[#allocation6 + $0xa0] sm:$0xff]
    %v177 = vld [vmem:[#allocation6 + $0xa8] sm:$0xff]
    %v178 = vld [vmem:[#allocation6 + $0xb0] sm:$0xff]
    %v179 = vld [vmem:[#allocation6 + $0xb8] sm:$0xff]
    %v180 = vld [vmem:[#allocation6 + $0xc0] sm:$0xff]
    %v181 = vld [vmem:[#allocation6 + $0xc8] sm:$0xff]
    %v182 = vld [vmem:[#allocation6 + $0xd0] sm:$0xff]
    %v183 = vld [vmem:[#allocation6 + $0xd8] sm:$0xff]
    %v184 = vld [vmem:[#allocation6 + $0xe0] sm:$0xff]
    %v185 = vld [vmem:[#allocation6 + $0xe8] sm:$0xff]
    %v186 = vld [vmem:[#allocation6 + $0xf0] sm:$0xff]
    %v187 = vld [vmem:[#allocation6 + $0xf8] sm:$0xff]
    %v188 = vld [vmem:[#allocation6 + $0x100] sm:$0xff]
    %v189 = vld [vmem:[#allocation6 + $0x108] sm:$0xff]
    %v190 = vld [vmem:[#allocation6 + $0x110] sm:$0xff]
    %v191 = vld [vmem:[#allocation6 + $0x118] sm:$0xff]
    %v192 = vld [vmem:[#allocation6 + $0x120] sm:$0xff]
    %v193 = vld [vmem:[#allocation6 + $0x128] sm:$0xff]
    %v194 = vld [vmem:[#allocation6 + $0x130] sm:$0xff]
    %v195 = vld [vmem:[#allocation6 + $0x138] sm:$0xff]
    %v196 = vld [vmem:[#allocation6 + $0x140] sm:$0xff]
    %v197 = vld [vmem:[#allocation6 + $0x148] sm:$0xff]
    %v198 = vld [vmem:[#allocation6 + $0x150] sm:$0xff]
    %v199 = vld [vmem:[#allocation6 + $0x158] sm:$0xff]
    %v200 = vld [vmem:[#allocation6 + $0x160] sm:$0xff]
    %v201 = vld [vmem:[#allocation6 + $0x168] sm:$0xff]
    %v202 = vld [vmem:[#allocation6 + $0x170] sm:$0xff]
    %v203 = vld [vmem:[#allocation6 + $0x178] sm:$0xff]
    %v204 = vld [vmem:[#allocation6 + $0x180] sm:$0xff]
    %v205 = vld [vmem:[#allocation6 + $0x188] sm:$0xff]
    %v206 = vld [vmem:[#allocation6 + $0x190] sm:$0xff]
    %v207 = vld [vmem:[#allocation6 + $0x198] sm:$0xff]
    %v208 = vld [vmem:[#allocation6 + $0x1a0] sm:$0xff]
    %v209 = vld [vmem:[#allocation6 + $0x1a8] sm:$0xff]
    %v210 = vld [vmem:[#allocation6 + $0x1b0] sm:$0xff]
    %v211 = vld [vmem:[#allocation6 + $0x1b8] sm:$0xff]
    %v212 = vld [vmem:[#allocation6 + $0x1c0] sm:$0xff]
    %v213 = vld [vmem:[#allocation6 + $0x1c8] sm:$0xff]
    %v214 = vld [vmem:[#allocation6 + $0x1d0] sm:$0xff]
    %v215 = vld [vmem:[#allocation6 + $0x1d8] sm:$0xff]
    %v216 = vld [vmem:[#allocation6 + $0x1e0] sm:$0xff]
    %v217 = vld [vmem:[#allocation6 + $0x1e8] sm:$0xff]
    %v218 = vld [vmem:[#allocation6 + $0x1f0] sm:$0xff]
    %v219 = vld [vmem:[#allocation6 + $0x1f8] sm:$0xff]
    %v221 = vlaneseq
    %v222 = vshrl.u32 %v221, 7
    %v223 = vsub.s32 0, %v222
    %v224 = vrot.slane %v155, %v223
    %v225 = vlaneseq
    %v226 = vshrl.u32 %v225, 7
    %v227 = vsub.s32 1, %v226
    %v228 = vrot.slane %v155, %v227
    %v229 = vlaneseq
    %v230 = vshrl.u32 %v229, 7
    %v231 = vsub.s32 2, %v230
    %v232 = vrot.slane %v155, %v231
    %233 = vrot.lane.b32.xlu0 %v224, 17
    %v234 = vpop.permute.xlu0 %233
    %235 = vrot.lane.b32.xlu0 %v228, 17
    %v236 = vpop.permute.xlu0 %235
    %237 = vrot.lane.b32.xlu0 %v232, 17
    %v238 = vpop.permute.xlu0 %237
    %vm239 = vcmask 138240
    %v240 = vsel %vm239, %v234, %v236
    %v241 = vsel %vm239, %v236, %v238
    %244 = vmatprep.subr.mxu0 %v187
    %245 = vmatpush1.msra.mxu0 %v186
    %246 = vmatprep.subr.mxu0 %v185
    %247 = vmatpush1.msra.mxu0 %v184
    %248 = vmatprep.subr.mxu0 %v183
    %249 = vmatpush1.msra.mxu0 %v182
    %250 = vmatprep.subr.mxu0 %v181
    %251 = vmatpush1.msra.mxu0 %v180
    %252 = vmatprep.subr.mxu0 %v179
    %253 = vmatpush1.msra.mxu0 %v178
    %254 = vmatprep.subr.mxu0 %v177
    %255 = vmatpush1.msra.mxu0 %v176
    %256 = vmatprep.subr.mxu0 %v175
    %257 = vmatpush1.msra.mxu0 %v174
    %258 = vmatprep.subr.mxu0 %v173
    %259 = vmatpush1.msra.mxu0 %v172
    %260 = vmatprep.subr.mxu0 %v171
    %261 = vmatpush1.msra.mxu0 %v170
    %262 = vmatprep.subr.mxu0 %v169
    %263 = vmatpush1.msra.mxu0 %v168
    %264 = vmatprep.subr.mxu0 %v167
    %265 = vmatpush1.msra.mxu0 %v166
    %266 = vmatprep.subr.mxu0 %v165
    %267 = vmatpush1.msra.mxu0 %v164
    %268 = vmatprep.subr.mxu0 %v163
    %269 = vmatpush1.msra.mxu0 %v162
    %270 = vmatprep.subr.mxu0 %v161
    %271 = vmatpush1.msra.mxu0 %v160
    %272 = vmatprep.subr.mxu0 %v159
    %273 = vmatpush1.msra.mxu0 %v158
    %274 = vmatprep.subr.mxu0 %v157
    %275 = vmatpush1.msra.mxu0 %v156
    %276 = vmatprep.subr.mxu0 %v219
    %277 = vmatpush2.msra.mxu0 %v218
    %278 = vmatprep.subr.mxu0 %v217
    %279 = vmatpush2.msra.mxu0 %v216
    %280 = vmatprep.subr.mxu0 %v215
    %281 = vmatpush2.msra.mxu0 %v214
    %282 = vmatprep.subr.mxu0 %v213
    %283 = vmatpush2.msra.mxu0 %v212
    %284 = vmatprep.subr.mxu0 %v211
    %285 = vmatpush2.msra.mxu0 %v210
    %286 = vmatprep.subr.mxu0 %v209
    %287 = vmatpush2.msra.mxu0 %v208
    %288 = vmatprep.subr.mxu0 %v207
    %289 = vmatpush2.msra.mxu0 %v206
    %290 = vmatprep.subr.mxu0 %v205
    %291 = vmatpush2.msra.mxu0 %v204
    %292 = vmatprep.subr.mxu0 %v203
    %293 = vmatpush2.msra.mxu0 %v202
    %294 = vmatprep.subr.mxu0 %v201
    %295 = vmatpush2.msra.mxu0 %v200
    %296 = vmatprep.subr.mxu0 %v199
    %297 = vmatpush2.msra.mxu0 %v198
    %298 = vmatprep.subr.mxu0 %v197
    %299 = vmatpush2.msra.mxu0 %v196
    %300 = vmatprep.subr.mxu0 %v195
    %301 = vmatpush2.msra.mxu0 %v194
    %302 = vmatprep.subr.mxu0 %v193
    %303 = vmatpush2.msra.mxu0 %v192
    %304 = vmatprep.subr.mxu0 %v191
    %305 = vmatpush2.msra.mxu0 %v190
    %306 = vmatprep.subr.mxu0 %v189
    %307 = vmatpush2.msra.mxu0 %v188
    %308 = vmatprep.mubr.f32.mxu0 %v241
    %309 = vmatmul.mubr.f32.gmra.mxu0 %v240
    %v310 = vpop.f32.mrf.mxu0
    %v311 = vadd.f32 0.0, %v310
    %v312 = vpop.f32.mrf.mxu0
    %v313 = vadd.f32 0.0, %v312
    %314 = vdwg.mxu0
    %v317 = vcombine.low %v311, %v313
    %v319 = vunpack.c.l.s4 1966171168
    %v320 = vunpack.c.0.s8 %v319
    %v321 = vlaneseq
    %v322 = vshrl.u32 %v321, 7
    %v323 = vsub.s32 %v320, %v322
    %v324 = vrot.slane %v317, %v323
    %v326 = vunpack.c.l.s4 1966171168
    %v327 = vunpack.c.0.s8 %v326
    %v328 = vlaneseq
    %v329 = vshrl.u32 %v328, 7
    %v330 = vsub.s32 %v327, %v329
    %v331 = vrot.slane %v324, %v330
    %333 = vst.msk [vmem:[#allocation2 + $0x1] sm:$0x3] %vm88, %v331
    %v334 = vld [vmem:[#allocation2] sm:$0x7]
    %336 = vrot.lane.b32.xlu0 %v334, 17
    %v337 = vpop.permute.xlu0 %336
    %v338 = vrot.slane %v337, 1
    %v339 = vsel %vm239, %v337, %v338
    %341 = vst.msk [vmem:[#allocation4] ss:$8 sm:$0x3] %vm88, %v339
    %342 = vst.msk [vmem:[#allocation4] ss:$8 sm:$0x0] %vm88, %v339
    %v343 = vld [vmem:[#allocation2] sm:$0x7]
    %345 = vrot.lane.b32.xlu0 %v343, 16
    %v346 = vpop.permute.xlu0 %345
    %v347 = vrot.slane %v346, 1
    %vm348 = vcmask 130048
    %v349 = vsel %vm348, %v346, %v347
    %s351 = scalar_lea.vmem [#allocation4], 1
    %352 = vst.msk [vmem:[%s351] ss:$8 sm:$0x3] %vm88, %v349
    %353 = vst.msk [vmem:[%s351] ss:$8 sm:$0x0] %vm88, %v349
    %v354 = vld [vmem:[#allocation2] sm:$0x7]
    %356 = vrot.lane.b32.xlu0 %v354, 15
    %v357 = vpop.permute.xlu0 %356
    %v358 = vrot.slane %v357, 1
    %vm359 = vcmask 121856
    %v360 = vsel %vm359, %v357, %v358
    %s362 = scalar_lea.vmem [#allocation4], 2
    %363 = vst.msk [vmem:[%s362] ss:$8 sm:$0x3] %vm88, %v360
    %364 = vst.msk [vmem:[%s362] ss:$8 sm:$0x0] %vm88, %v360
    %v365 = vld [vmem:[#allocation2] sm:$0x7]
    %367 = vrot.lane.b32.xlu0 %v365, 1
    %v368 = vpop.permute.xlu0 %367
    %v369 = vrot.slane %v368, 1
    %vm370 = vcmask 7168
    %v371 = vsel %vm370, %v368, %v369
    %s373 = scalar_lea.vmem [#allocation4], 3
    %374 = vst.msk [vmem:[%s373] ss:$8 sm:$0x3] %vm88, %v371
    %375 = vst.msk [vmem:[%s373] ss:$8 sm:$0x0] %vm88, %v371
    %v376 = vld [vmem:[#allocation2 + $0x1] sm:$0x3]
    %s377 = scalar_lea.vmem [#allocation4], 4
    %378 = vst.msk [vmem:[%s377] ss:$8 sm:$0x3] %vm88, %v376
    %379 = vst.msk [vmem:[%s377] ss:$8 sm:$0x0] %vm88, %v376
    %v380 = vld [vmem:[#allocation2 + $0x1] sm:$0x7]
    %382 = vrot.lane.b32.xlu0 %v380, 127
    %v383 = vpop.permute.xlu0 %382
    %v384 = vrot.slane %v383, 1
    %v385 = vsel %vm97, %v383, %v384
    %s387 = scalar_lea.vmem [#allocation4], 5
    %388 = vst.msk [vmem:[%s387] ss:$8 sm:$0x3] %vm88, %v385
    %389 = vst.msk [vmem:[%s387] ss:$8 sm:$0x0] %vm88, %v385
    %v390 = vld [vmem:[#allocation2 + $0x1] sm:$0x7]
    %392 = vrot.lane.b32.xlu0 %v390, 113
    %v393 = vpop.permute.xlu0 %392
    %v394 = vrot.slane %v393, 1
    %vm395 = vcmask 924672
    %v396 = vsel %vm395, %v393, %v394
    %s398 = scalar_lea.vmem [#allocation4], 6
    %399 = vst.msk [vmem:[%s398] ss:$8 sm:$0x3] %vm88, %v396
    %400 = vst.msk [vmem:[%s398] ss:$8 sm:$0x0] %vm88, %v396
    %v401 = vld [vmem:[#allocation2 + $0x1] sm:$0x7]
    %403 = vrot.lane.b32.xlu0 %v401, 112
    %v404 = vpop.permute.xlu0 %403
    %v405 = vrot.slane %v404, 1
    %v406 = vsel %vm111, %v404, %v405
    %s408 = scalar_lea.vmem [#allocation4], 7
    %409 = vst.msk [vmem:[%s408] ss:$8 sm:$0x3] %vm88, %v406
    %410 = vst.msk [vmem:[%s408] ss:$8 sm:$0x0] %vm88, %v406
    %v411 = vld [vmem:[#allocation2 + $0x1] sm:$0x7]
    %413 = vrot.lane.b32.xlu0 %v411, 111
    %v414 = vpop.permute.xlu0 %413
    %v415 = vrot.slane %v414, 1
    %v416 = vsel %vm121, %v414, %v415
    %s418 = scalar_lea.vmem [#allocation4], 16
    %419 = vst.msk [vmem:[%s418] ss:$8 sm:$0x3] %vm88, %v416
    %420 = vst.msk [vmem:[%s418] ss:$8 sm:$0x0] %vm88, %v416
    %v421 = vld [vmem:[#allocation8] sm:$0xff]
    %v422 = vld [vmem:[#allocation4] sm:$0xff]
    %v423 = vld [vmem:[#allocation4 + $0x8] sm:$0xff]
    %v424 = vld [vmem:[#allocation4 + $0x10] sm:$0x1]
    %v425 = vld [vmem:[#allocation4 + $0x18] sm:$0x1]
    %v426 = vld [vmem:[%s3] sm:$0xff]
    %428 = vset.pattern.permute.xlu0 0
    %429 = vperm.xlu0 %428, %v426
    %v430 = vpop.permute.xlu0 %429
    %vm432 = vcmask 72704
    %v434 = vsel %vm432, %v421, 0
    %vm436 = vcmask 1040384
    %v438 = vsel %vm436, %v424, 0
    %v441 = vsel %vm436, %v425, 0
    %443 = vmatprep.subr.mxu0 0.0
    %444 = vmatpush1.msra.mxu0 0.0
    %445 = vmatprep.subr.mxu0 0.0
    %446 = vmatpush1.msra.mxu0 0.0
    %447 = vmatprep.subr.mxu0 0.0
    %448 = vmatpush1.msra.mxu0 0.0
    %449 = vmatprep.subr.mxu0 0.0
    %450 = vmatpush1.msra.mxu0 0.0
    %451 = vmatprep.subr.mxu0 0.0
    %452 = vmatpush1.msra.mxu0 0.0
    %453 = vmatprep.subr.mxu0 0.0
    %454 = vmatpush1.msra.mxu0 0.0
    %455 = vmatprep.subr.mxu0 0.0
    %456 = vmatpush1.msra.mxu0 0.0
    %457 = vmatprep.subr.mxu0 0.0
    %458 = vmatpush1.msra.mxu0 0.0
    %459 = vmatprep.subr.mxu0 0.0
    %460 = vmatpush1.msra.mxu0 0.0
    %461 = vmatprep.subr.mxu0 0.0
    %462 = vmatpush1.msra.mxu0 0.0
    %463 = vmatprep.subr.mxu0 0.0
    %464 = vmatpush1.msra.mxu0 0.0
    %465 = vmatprep.subr.mxu0 0.0
    %466 = vmatpush1.msra.mxu0 0.0
    %467 = vmatprep.subr.mxu0 0.0
    %468 = vmatpush1.msra.mxu0 0.0
    %469 = vmatprep.subr.mxu0 0.0
    %470 = vmatpush1.msra.mxu0 0.0
    %471 = vmatprep.subr.mxu0 %v441
    %472 = vmatpush1.msra.mxu0 %v438
    %473 = vmatprep.subr.mxu0 %v423
    %474 = vmatpush1.msra.mxu0 %v422
    %475 = vmatprep.subr.mxu0 0.0
    %476 = vmatpush2.msra.mxu0 0.0
    %477 = vmatprep.subr.mxu0 0.0
    %478 = vmatpush2.msra.mxu0 0.0
    %479 = vmatprep.subr.mxu0 0.0
    %480 = vmatpush2.msra.mxu0 0.0
    %481 = vmatprep.subr.mxu0 0.0
    %482 = vmatpush2.msra.mxu0 0.0
    %483 = vmatprep.subr.mxu0 0.0
    %484 = vmatpush2.msra.mxu0 0.0
    %485 = vmatprep.subr.mxu0 0.0
    %486 = vmatpush2.msra.mxu0 0.0
    %487 = vmatprep.subr.mxu0 0.0
    %488 = vmatpush2.msra.mxu0 0.0
    %489 = vmatprep.subr.mxu0 0.0
    %490 = vmatpush2.msra.mxu0 0.0
    %491 = vmatprep.subr.mxu0 0.0
    %492 = vmatpush2.msra.mxu0 0.0
    %493 = vmatprep.subr.mxu0 0.0
    %494 = vmatpush2.msra.mxu0 0.0
    %495 = vmatprep.subr.mxu0 0.0
    %496 = vmatpush2.msra.mxu0 0.0
    %497 = vmatprep.subr.mxu0 0.0
    %498 = vmatpush2.msra.mxu0 0.0
    %499 = vmatprep.subr.mxu0 0.0
    %500 = vmatpush2.msra.mxu0 0.0
    %501 = vmatprep.subr.mxu0 0.0
    %502 = vmatpush2.msra.mxu0 0.0
    %503 = vmatprep.subr.mxu0 0.0
    %504 = vmatpush2.msra.mxu0 0.0
    %505 = vmatprep.subr.mxu0 0.0
    %506 = vmatpush2.msra.mxu0 0.0
    %507 = vmatprep.mubr.f32.mxu0 0.0
    %508 = vmatmul.mubr.f32.gmra.mxu0 %v434
    %v509 = vpop.f32.mrf.mxu0
    %v510 = vadd.f32 %v430, %v509
    %v511 = vpop.f32.mrf.mxu0
    %v512 = vadd.f32 %v430, %v511
    %513 = vdwg.mxu0
    %v514 = vld [vmem:[#allocation10] sm:$0xff]
    %v515 = vld [vmem:[#allocation10 + $0x8] sm:$0xff]
    %v516 = vld [vmem:[#allocation10 + $0x10] sm:$0xff]
    %v517 = vld [vmem:[#allocation10 + $0x18] sm:$0xff]
    %v518 = vld [vmem:[#allocation10 + $0x20] sm:$0xff]
    %v519 = vld [vmem:[#allocation10 + $0x28] sm:$0xff]
    %v520 = vld [vmem:[#allocation10 + $0x30] sm:$0xff]
    %v521 = vld [vmem:[#allocation10 + $0x38] sm:$0xff]
    %v522 = vld [vmem:[#allocation10 + $0x40] sm:$0xff]
    %v523 = vld [vmem:[#allocation10 + $0x48] sm:$0xff]
    %v524 = vld [vmem:[#allocation10 + $0x50] sm:$0xff]
    %v525 = vld [vmem:[#allocation10 + $0x58] sm:$0xff]
    %v526 = vld [vmem:[#allocation10 + $0x60] sm:$0xff]
    %v527 = vld [vmem:[#allocation10 + $0x68] sm:$0xff]
    %v528 = vld [vmem:[#allocation10 + $0x70] sm:$0xff]
    %v529 = vld [vmem:[#allocation10 + $0x78] sm:$0xff]
    %v530 = vld [vmem:[#allocation10 + $0x80] sm:$0xff]
    %v531 = vld [vmem:[#allocation10 + $0x88] sm:$0xff]
    %v532 = vld [vmem:[#allocation10 + $0x90] sm:$0xff]
    %v533 = vld [vmem:[#allocation10 + $0x98] sm:$0xff]
    %v534 = vld [vmem:[#allocation10 + $0xa0] sm:$0xff]
    %v535 = vld [vmem:[#allocation10 + $0xa8] sm:$0xff]
    %v536 = vld [vmem:[#allocation10 + $0xb0] sm:$0xff]
    %v537 = vld [vmem:[#allocation10 + $0xb8] sm:$0xff]
    %v538 = vld [vmem:[#allocation10 + $0xc0] sm:$0xff]
    %v539 = vld [vmem:[#allocation10 + $0xc8] sm:$0xff]
    %v540 = vld [vmem:[#allocation10 + $0xd0] sm:$0xff]
    %v541 = vld [vmem:[#allocation10 + $0xd8] sm:$0xff]
    %v542 = vld [vmem:[#allocation10 + $0xe0] sm:$0xff]
    %v543 = vld [vmem:[#allocation10 + $0xe8] sm:$0xff]
    %v544 = vld [vmem:[#allocation10 + $0xf0] sm:$0xff]
    %v545 = vld [vmem:[#allocation10 + $0xf8] sm:$0xff]
    %v546 = vld [vmem:[#allocation10 + $0x100] sm:$0xff]
    %v547 = vld [vmem:[#allocation10 + $0x108] sm:$0xff]
    %v548 = vld [vmem:[#allocation10 + $0x110] sm:$0xff]
    %v549 = vld [vmem:[#allocation10 + $0x118] sm:$0xff]
    %v550 = vld [vmem:[#allocation10 + $0x120] sm:$0xff]
    %v551 = vld [vmem:[#allocation10 + $0x128] sm:$0xff]
    %v552 = vld [vmem:[#allocation10 + $0x130] sm:$0xff]
    %v553 = vld [vmem:[#allocation10 + $0x138] sm:$0xff]
    %v554 = vld [vmem:[#allocation10 + $0x140] sm:$0xff]
    %v555 = vld [vmem:[#allocation10 + $0x148] sm:$0xff]
    %v556 = vld [vmem:[#allocation10 + $0x150] sm:$0xff]
    %v557 = vld [vmem:[#allocation10 + $0x158] sm:$0xff]
    %v558 = vld [vmem:[#allocation10 + $0x160] sm:$0xff]
    %v559 = vld [vmem:[#allocation10 + $0x168] sm:$0xff]
    %v560 = vld [vmem:[#allocation10 + $0x170] sm:$0xff]
    %v561 = vld [vmem:[#allocation10 + $0x178] sm:$0xff]
    %v562 = vld [vmem:[#allocation10 + $0x180] sm:$0xff]
    %v563 = vld [vmem:[#allocation10 + $0x188] sm:$0xff]
    %v564 = vld [vmem:[#allocation10 + $0x190] sm:$0xff]
    %v565 = vld [vmem:[#allocation10 + $0x198] sm:$0xff]
    %v566 = vld [vmem:[#allocation10 + $0x1a0] sm:$0xff]
    %v567 = vld [vmem:[#allocation10 + $0x1a8] sm:$0xff]
    %v568 = vld [vmem:[#allocation10 + $0x1b0] sm:$0xff]
    %v569 = vld [vmem:[#allocation10 + $0x1b8] sm:$0xff]
    %v570 = vld [vmem:[#allocation10 + $0x1c0] sm:$0xff]
    %v571 = vld [vmem:[#allocation10 + $0x1c8] sm:$0xff]
    %v572 = vld [vmem:[#allocation10 + $0x1d0] sm:$0xff]
    %v573 = vld [vmem:[#allocation10 + $0x1d8] sm:$0xff]
    %v574 = vld [vmem:[#allocation10 + $0x1e0] sm:$0xff]
    %v575 = vld [vmem:[#allocation10 + $0x1e8] sm:$0xff]
    %v576 = vld [vmem:[#allocation10 + $0x1f0] sm:$0xff]
    %v577 = vld [vmem:[#allocation10 + $0x1f8] sm:$0xff]
    %578 = vmatprep.subr.mxu0 %v545
    %579 = vmatpush1.msra.mxu0 %v544
    %580 = vmatprep.subr.mxu0 %v543
    %581 = vmatpush1.msra.mxu0 %v542
    %582 = vmatprep.subr.mxu0 %v541
    %583 = vmatpush1.msra.mxu0 %v540
    %584 = vmatprep.subr.mxu0 %v539
    %585 = vmatpush1.msra.mxu0 %v538
    %586 = vmatprep.subr.mxu0 %v537
    %587 = vmatpush1.msra.mxu0 %v536
    %588 = vmatprep.subr.mxu0 %v535
    %589 = vmatpush1.msra.mxu0 %v534
    %590 = vmatprep.subr.mxu0 %v533
    %591 = vmatpush1.msra.mxu0 %v532
    %592 = vmatprep.subr.mxu0 %v531
    %593 = vmatpush1.msra.mxu0 %v530
    %594 = vmatprep.subr.mxu0 %v529
    %595 = vmatpush1.msra.mxu0 %v528
    %596 = vmatprep.subr.mxu0 %v527
    %597 = vmatpush1.msra.mxu0 %v526
    %598 = vmatprep.subr.mxu0 %v525
    %599 = vmatpush1.msra.mxu0 %v524
    %600 = vmatprep.subr.mxu0 %v523
    %601 = vmatpush1.msra.mxu0 %v522
    %602 = vmatprep.subr.mxu0 %v521
    %603 = vmatpush1.msra.mxu0 %v520
    %604 = vmatprep.subr.mxu0 %v519
    %605 = vmatpush1.msra.mxu0 %v518
    %606 = vmatprep.subr.mxu0 %v517
    %607 = vmatpush1.msra.mxu0 %v516
    %608 = vmatprep.subr.mxu0 %v515
    %609 = vmatpush1.msra.mxu0 %v514
    %610 = vmatprep.subr.mxu0 %v577
    %611 = vmatpush2.msra.mxu0 %v576
    %612 = vmatprep.subr.mxu0 %v575
    %613 = vmatpush2.msra.mxu0 %v574
    %614 = vmatprep.subr.mxu0 %v573
    %615 = vmatpush2.msra.mxu0 %v572
    %616 = vmatprep.subr.mxu0 %v571
    %617 = vmatpush2.msra.mxu0 %v570
    %618 = vmatprep.subr.mxu0 %v569
    %619 = vmatpush2.msra.mxu0 %v568
    %620 = vmatprep.subr.mxu0 %v567
    %621 = vmatpush2.msra.mxu0 %v566
    %622 = vmatprep.subr.mxu0 %v565
    %623 = vmatpush2.msra.mxu0 %v564
    %624 = vmatprep.subr.mxu0 %v563
    %625 = vmatpush2.msra.mxu0 %v562
    %626 = vmatprep.subr.mxu0 %v561
    %627 = vmatpush2.msra.mxu0 %v560
    %628 = vmatprep.subr.mxu0 %v559
    %629 = vmatpush2.msra.mxu0 %v558
    %630 = vmatprep.subr.mxu0 %v557
    %631 = vmatpush2.msra.mxu0 %v556
    %632 = vmatprep.subr.mxu0 %v555
    %633 = vmatpush2.msra.mxu0 %v554
    %634 = vmatprep.subr.mxu0 %v553
    %635 = vmatpush2.msra.mxu0 %v552
    %636 = vmatprep.subr.mxu0 %v551
    %637 = vmatpush2.msra.mxu0 %v550
    %638 = vmatprep.subr.mxu0 %v549
    %639 = vmatpush2.msra.mxu0 %v548
    %640 = vmatprep.subr.mxu0 %v547
    %641 = vmatpush2.msra.mxu0 %v546
    %642 = vmatprep.mubr.f32.mxu0 %v512
    %643 = vmatmul.mubr.f32.gmra.mxu0 %v510
    %v644 = vpop.f32.mrf.mxu0
    %v645 = vadd.f32 0.0, %v644
    %v646 = vpop.f32.mrf.mxu0
    %v647 = vadd.f32 0.0, %v646
    %648 = vdwg.mxu0
    %649 = vst [vmem:[#allocation3 + $0x8] sm:$0xff] %v645
    %650 = vst [vmem:[#allocation3 + $0x10] sm:$0xff] %v647
    %v651 = vld [vmem:[#allocation3] sm:$0xff]
    %v652 = vld [vmem:[#allocation3 + $0x8] sm:$0xff]
    %v653 = vld [vmem:[#allocation3 + $0x10] sm:$0xff]
    %657 = vrot.lane.b32.xlu0 %v651, 17
    %v658 = vpop.permute.xlu0 %657
    %659 = vrot.lane.b32.xlu0 %v652, 17
    %v660 = vpop.permute.xlu0 %659
    %661 = vrot.lane.b32.xlu0 %v653, 17
    %v662 = vpop.permute.xlu0 %661
    %v663 = vsel %vm239, %v658, %v660
    %v664 = vsel %vm239, %v660, %v662
    %667 = vst [vmem:[#allocation5] sm:$0xff] %v663
    %668 = vst [vmem:[#allocation5 + $0x8] sm:$0xff] %v664
    %v669 = vld [vmem:[#allocation3] sm:$0xff]
    %v670 = vld [vmem:[#allocation3 + $0x8] sm:$0xff]
    %v671 = vld [vmem:[#allocation3 + $0x10] sm:$0xff]
    %675 = vrot.lane.b32.xlu0 %v669, 16
    %v676 = vpop.permute.xlu0 %675
    %677 = vrot.lane.b32.xlu0 %v670, 16
    %v678 = vpop.permute.xlu0 %677
    %679 = vrot.lane.b32.xlu0 %v671, 16
    %v680 = vpop.permute.xlu0 %679
    %v681 = vsel %vm348, %v676, %v678
    %v682 = vsel %vm348, %v678, %v680
    %685 = vst [vmem:[#allocation5 + $0x10] sm:$0xff] %v681
    %686 = vst [vmem:[#allocation5 + $0x18] sm:$0xff] %v682
    %v687 = vld [vmem:[#allocation3] sm:$0xff]
    %v688 = vld [vmem:[#allocation3 + $0x8] sm:$0xff]
    %v689 = vld [vmem:[#allocation3 + $0x10] sm:$0xff]
    %693 = vrot.lane.b32.xlu0 %v687, 15
    %v694 = vpop.permute.xlu0 %693
    %695 = vrot.lane.b32.xlu0 %v688, 15
    %v696 = vpop.permute.xlu0 %695
    %697 = vrot.lane.b32.xlu0 %v689, 15
    %v698 = vpop.permute.xlu0 %697
    %v699 = vsel %vm359, %v694, %v696
    %v700 = vsel %vm359, %v696, %v698
    %703 = vst [vmem:[#allocation5 + $0x20] sm:$0xff] %v699
    %704 = vst [vmem:[#allocation5 + $0x28] sm:$0xff] %v700
    %v705 = vld [vmem:[#allocation3] sm:$0xff]
    %v706 = vld [vmem:[#allocation3 + $0x8] sm:$0xff]
    %v707 = vld [vmem:[#allocation3 + $0x10] sm:$0xff]
    %711 = vrot.lane.b32.xlu0 %v705, 1
    %v712 = vpop.permute.xlu0 %711
    %713 = vrot.lane.b32.xlu0 %v706, 1
    %v714 = vpop.permute.xlu0 %713
    %715 = vrot.lane.b32.xlu0 %v707, 1
    %v716 = vpop.permute.xlu0 %715
    %v717 = vsel %vm370, %v712, %v714
    %v718 = vsel %vm370, %v714, %v716
    %721 = vst [vmem:[#allocation5 + $0x30] sm:$0xff] %v717
    %722 = vst [vmem:[#allocation5 + $0x38] sm:$0xff] %v718
    %v723 = vld [vmem:[#allocation3 + $0x8] sm:$0xff]
    %v724 = vld [vmem:[#allocation3 + $0x10] sm:$0xff]
    %725 = vst [vmem:[#allocation5 + $0x40] sm:$0xff] %v723
    %726 = vst [vmem:[#allocation5 + $0x48] sm:$0xff] %v724
    %v727 = vld [vmem:[#allocation3 + $0x8] sm:$0xff]
    %v728 = vld [vmem:[#allocation3 + $0x10] sm:$0xff]
    %v729 = vld [vmem:[#allocation3 + $0x18] sm:$0xff]
    %733 = vrot.lane.b32.xlu0 %v727, 127
    %v734 = vpop.permute.xlu0 %733
    %735 = vrot.lane.b32.xlu0 %v728, 127
    %v736 = vpop.permute.xlu0 %735
    %737 = vrot.lane.b32.xlu0 %v729, 127
    %v738 = vpop.permute.xlu0 %737
    %v739 = vsel %vm97, %v734, %v736
    %v740 = vsel %vm97, %v736, %v738
    %743 = vst [vmem:[#allocation5 + $0x50] sm:$0xff] %v739
    %744 = vst [vmem:[#allocation5 + $0x58] sm:$0xff] %v740
    %v745 = vld [vmem:[#allocation3 + $0x8] sm:$0xff]
    %v746 = vld [vmem:[#allocation3 + $0x10] sm:$0xff]
    %v747 = vld [vmem:[#allocation3 + $0x18] sm:$0xff]
    %751 = vrot.lane.b32.xlu0 %v745, 113
    %v752 = vpop.permute.xlu0 %751
    %753 = vrot.lane.b32.xlu0 %v746, 113
    %v754 = vpop.permute.xlu0 %753
    %755 = vrot.lane.b32.xlu0 %v747, 113
    %v756 = vpop.permute.xlu0 %755
    %v757 = vsel %vm395, %v752, %v754
    %v758 = vsel %vm395, %v754, %v756
    %761 = vst [vmem:[#allocation5 + $0x60] sm:$0xff] %v757
    %762 = vst [vmem:[#allocation5 + $0x68] sm:$0xff] %v758
    %v763 = vld [vmem:[#allocation3 + $0x8] sm:$0xff]
    %v764 = vld [vmem:[#allocation3 + $0x10] sm:$0xff]
    %v765 = vld [vmem:[#allocation3 + $0x18] sm:$0xff]
    %769 = vrot.lane.b32.xlu0 %v763, 112
    %v770 = vpop.permute.xlu0 %769
    %771 = vrot.lane.b32.xlu0 %v764, 112
    %v772 = vpop.permute.xlu0 %771
    %773 = vrot.lane.b32.xlu0 %v765, 112
    %v774 = vpop.permute.xlu0 %773
    %v775 = vsel %vm111, %v770, %v772
    %v776 = vsel %vm111, %v772, %v774
    %779 = vst [vmem:[#allocation5 + $0x70] sm:$0xff] %v775
    %780 = vst [vmem:[#allocation5 + $0x78] sm:$0xff] %v776
    %v781 = vld [vmem:[#allocation3 + $0x8] sm:$0xff]
    %v782 = vld [vmem:[#allocation3 + $0x10] sm:$0xff]
    %v783 = vld [vmem:[#allocation3 + $0x18] sm:$0xff]
    %787 = vrot.lane.b32.xlu0 %v781, 111
    %v788 = vpop.permute.xlu0 %787
    %789 = vrot.lane.b32.xlu0 %v782, 111
    %v790 = vpop.permute.xlu0 %789
    %791 = vrot.lane.b32.xlu0 %v783, 111
    %v792 = vpop.permute.xlu0 %791
    %v793 = vsel %vm121, %v788, %v790
    %v794 = vsel %vm121, %v790, %v792
    %797 = vst [vmem:[#allocation5 + $0x80] sm:$0xff] %v793
    %798 = vst [vmem:[#allocation5 + $0x88] sm:$0xff] %v794
    %v799 = vld [vmem:[%s5] sm:$0xff]
    %v800 = vld [vmem:[%s5 + $0x8] sm:$0xff]
    %v801 = vld [vmem:[%s5 + $0x10] sm:$0xff]
    %v802 = vld [vmem:[%s5 + $0x18] sm:$0xff]
    %v803 = vld [vmem:[%s5 + $0x20] sm:$0xff]
    %v804 = vld [vmem:[%s5 + $0x28] sm:$0xff]
    %v805 = vld [vmem:[%s5 + $0x30] sm:$0xff]
    %v806 = vld [vmem:[%s5 + $0x38] sm:$0xff]
    %v807 = vld [vmem:[%s5 + $0x40] sm:$0xff]
    %v808 = vld [vmem:[%s5 + $0x48] sm:$0xff]
    %v809 = vld [vmem:[%s5 + $0x50] sm:$0xff]
    %v810 = vld [vmem:[%s5 + $0x58] sm:$0xff]
    %v811 = vld [vmem:[%s5 + $0x60] sm:$0xff]
    %v812 = vld [vmem:[%s5 + $0x68] sm:$0xff]
    %v813 = vld [vmem:[%s5 + $0x70] sm:$0xff]
    %v814 = vld [vmem:[%s5 + $0x78] sm:$0xff]
    %v815 = vld [vmem:[#allocation5] sm:$0xff]
    %v816 = vld [vmem:[#allocation5 + $0x8] sm:$0xff]
    %v817 = vld [vmem:[#allocation5 + $0x10] sm:$0xff]
    %v818 = vld [vmem:[#allocation5 + $0x18] sm:$0xff]
    %v819 = vld [vmem:[#allocation5 + $0x20] sm:$0xff]
    %v820 = vld [vmem:[#allocation5 + $0x28] sm:$0xff]
    %v821 = vld [vmem:[#allocation5 + $0x30] sm:$0xff]
    %v822 = vld [vmem:[#allocation5 + $0x38] sm:$0xff]
    %v823 = vld [vmem:[#allocation5 + $0x40] sm:$0xff]
    %v824 = vld [vmem:[#allocation5 + $0x48] sm:$0xff]
    %v825 = vld [vmem:[#allocation5 + $0x50] sm:$0xff]
    %v826 = vld [vmem:[#allocation5 + $0x58] sm:$0xff]
    %v827 = vld [vmem:[#allocation5 + $0x60] sm:$0xff]
    %v828 = vld [vmem:[#allocation5 + $0x68] sm:$0xff]
    %v829 = vld [vmem:[#allocation5 + $0x70] sm:$0xff]
    %v830 = vld [vmem:[#allocation5 + $0x78] sm:$0xff]
    %v831 = vld [vmem:[#allocation5 + $0x80] sm:$0xff]
    %v832 = vld [vmem:[#allocation5 + $0x88] sm:$0xff]
    %v833 = vld [vmem:[%s6] sm:$0xff]
    %v834 = vld [vmem:[%s6 + $0x8] sm:$0xff]
    %v835 = vld [vmem:[%s6 + $0x10] sm:$0xff]
    %v836 = vld [vmem:[%s6 + $0x18] sm:$0xff]
    %v837 = vld [vmem:[%s6 + $0x20] sm:$0xff]
    %v838 = vld [vmem:[%s6 + $0x28] sm:$0xff]
    %v839 = vld [vmem:[%s6 + $0x30] sm:$0xff]
    %v840 = vld [vmem:[%s6 + $0x38] sm:$0xff]
    %v841 = vld [vmem:[%s6 + $0x40] sm:$0xff]
    %v842 = vld [vmem:[%s6 + $0x48] sm:$0xff]
    %v843 = vld [vmem:[%s6 + $0x50] sm:$0xff]
    %v844 = vld [vmem:[%s6 + $0x58] sm:$0xff]
    %v845 = vld [vmem:[%s6 + $0x60] sm:$0xff]
    %v846 = vld [vmem:[%s6 + $0x68] sm:$0xff]
    %v847 = vld [vmem:[%s6 + $0x70] sm:$0xff]
    %v848 = vld [vmem:[%s6 + $0x78] sm:$0xff]
    %850 = vset.pattern.permute.xlu0 0
    %851 = vperm.xlu0 %850, %v833
    %v852 = vpop.permute.xlu0 %851
    %855 = vset.pattern.permute.xlu0 0
    %856 = vperm.xlu0 %855, %v834
    %v857 = vpop.permute.xlu0 %856
    %860 = vset.pattern.permute.xlu0 0
    %861 = vperm.xlu0 %860, %v835
    %v862 = vpop.permute.xlu0 %861
    %865 = vset.pattern.permute.xlu0 0
    %866 = vperm.xlu0 %865, %v836
    %v867 = vpop.permute.xlu0 %866
    %870 = vset.pattern.permute.xlu0 0
    %871 = vperm.xlu0 %870, %v837
    %v872 = vpop.permute.xlu0 %871
    %875 = vset.pattern.permute.xlu0 0
    %876 = vperm.xlu0 %875, %v838
    %v877 = vpop.permute.xlu0 %876
    %880 = vset.pattern.permute.xlu0 0
    %881 = vperm.xlu0 %880, %v839
    %v882 = vpop.permute.xlu0 %881
    %885 = vset.pattern.permute.xlu0 0
    %886 = vperm.xlu0 %885, %v840
    %v887 = vpop.permute.xlu0 %886
    %890 = vset.pattern.permute.xlu0 0
    %891 = vperm.xlu0 %890, %v841
    %v892 = vpop.permute.xlu0 %891
    %895 = vset.pattern.permute.xlu0 0
    %896 = vperm.xlu0 %895, %v842
    %v897 = vpop.permute.xlu0 %896
    %900 = vset.pattern.permute.xlu0 0
    %901 = vperm.xlu0 %900, %v843
    %v902 = vpop.permute.xlu0 %901
    %905 = vset.pattern.permute.xlu0 0
    %906 = vperm.xlu0 %905, %v844
    %v907 = vpop.permute.xlu0 %906
    %910 = vset.pattern.permute.xlu0 0
    %911 = vperm.xlu0 %910, %v845
    %v912 = vpop.permute.xlu0 %911
    %915 = vset.pattern.permute.xlu0 0
    %916 = vperm.xlu0 %915, %v846
    %v917 = vpop.permute.xlu0 %916
    %920 = vset.pattern.permute.xlu0 0
    %921 = vperm.xlu0 %920, %v847
    %v922 = vpop.permute.xlu0 %921
    %925 = vset.pattern.permute.xlu0 0
    %926 = vperm.xlu0 %925, %v848
    %v927 = vpop.permute.xlu0 %926
    %vm929 = vcmask 588800
    %v931 = vsel %vm929, %v799, 0
    %v934 = vsel %vm929, %v800, 0
    %v937 = vsel %vm929, %v801, 0
    %v940 = vsel %vm929, %v802, 0
    %v943 = vsel %vm929, %v803, 0
    %v946 = vsel %vm929, %v804, 0
    %v949 = vsel %vm929, %v805, 0
    %v952 = vsel %vm929, %v806, 0
    %v955 = vsel %vm929, %v807, 0
    %v958 = vsel %vm929, %v808, 0
    %v961 = vsel %vm929, %v809, 0
    %v964 = vsel %vm929, %v810, 0
    %v967 = vsel %vm929, %v811, 0
    %v970 = vsel %vm929, %v812, 0
    %v973 = vsel %vm929, %v813, 0
    %v976 = vsel %vm929, %v814, 0
    %978 = vmatprep.subr.mxu0 0.0
    %979 = vmatpush1.msra.mxu0 0.0
    %980 = vmatprep.subr.mxu0 0.0
    %981 = vmatpush1.msra.mxu0 0.0
    %982 = vmatprep.subr.mxu0 0.0
    %983 = vmatpush1.msra.mxu0 0.0
    %984 = vmatprep.subr.mxu0 0.0
    %985 = vmatpush1.msra.mxu0 0.0
    %986 = vmatprep.subr.mxu0 0.0
    %987 = vmatpush1.msra.mxu0 0.0
    %988 = vmatprep.subr.mxu0 0.0
    %989 = vmatpush1.msra.mxu0 0.0
    %990 = vmatprep.subr.mxu0 0.0
    %991 = vmatpush1.msra.mxu0 0.0
    %992 = vmatprep.subr.mxu0 %v832
    %993 = vmatpush1.msra.mxu0 %v831
    %994 = vmatprep.subr.mxu0 %v830
    %995 = vmatpush1.msra.mxu0 %v829
    %996 = vmatprep.subr.mxu0 %v828
    %997 = vmatpush1.msra.mxu0 %v827
    %998 = vmatprep.subr.mxu0 %v826
    %999 = vmatpush1.msra.mxu0 %v825
    %1000 = vmatprep.subr.mxu0 %v824
    %1001 = vmatpush1.msra.mxu0 %v823
    %1002 = vmatprep.subr.mxu0 %v822
    %1003 = vmatpush1.msra.mxu0 %v821
    %1004 = vmatprep.subr.mxu0 %v820
    %1005 = vmatpush1.msra.mxu0 %v819
    %1006 = vmatprep.subr.mxu0 %v818
    %1007 = vmatpush1.msra.mxu0 %v817
    %1008 = vmatprep.subr.mxu0 %v816
    %1009 = vmatpush1.msra.mxu0 %v815
    %1010 = vmatprep.subr.mxu0 0.0
    %1011 = vmatpush2.msra.mxu0 0.0
    %1012 = vmatprep.subr.mxu0 0.0
    %1013 = vmatpush2.msra.mxu0 0.0
    %1014 = vmatprep.subr.mxu0 0.0
    %1015 = vmatpush2.msra.mxu0 0.0
    %1016 = vmatprep.subr.mxu0 0.0
    %1017 = vmatpush2.msra.mxu0 0.0
    %1018 = vmatprep.subr.mxu0 0.0
    %1019 = vmatpush2.msra.mxu0 0.0
    %1020 = vmatprep.subr.mxu0 0.0
    %1021 = vmatpush2.msra.mxu0 0.0
    %1022 = vmatprep.subr.mxu0 0.0
    %1023 = vmatpush2.msra.mxu0 0.0
    %1024 = vmatprep.subr.mxu0 0.0
    %1025 = vmatpush2.msra.mxu0 0.0
    %1026 = vmatprep.subr.mxu0 0.0
    %1027 = vmatpush2.msra.mxu0 0.0
    %1028 = vmatprep.subr.mxu0 0.0
    %1029 = vmatpush2.msra.mxu0 0.0
    %1030 = vmatprep.subr.mxu0 0.0
    %1031 = vmatpush2.msra.mxu0 0.0
    %1032 = vmatprep.subr.mxu0 0.0
    %1033 = vmatpush2.msra.mxu0 0.0
    %1034 = vmatprep.subr.mxu0 0.0
    %1035 = vmatpush2.msra.mxu0 0.0
    %1036 = vmatprep.subr.mxu0 0.0
    %1037 = vmatpush2.msra.mxu0 0.0
    %1038 = vmatprep.subr.mxu0 0.0
    %1039 = vmatpush2.msra.mxu0 0.0
    %1040 = vmatprep.subr.mxu0 0.0
    %1041 = vmatpush2.msra.mxu0 0.0
    %1042 = vmatprep.mubr.f32.mxu0 0.0
    %1043 = vmatmul.mubr.f32.gmra.mxu0 %v931
    %v1044 = vpop.f32.mrf.mxu0
    %v1045 = vadd.f32 %v852, %v1044
    %v1046 = vpop.f32.mrf.mxu0
    %v1047 = vadd.f32 %v852, %v1046
    %1048 = vmatprep.mubr.f32.mxu0 0.0
    %1049 = vmatmul.mubr.f32.gmra.mxu0 %v934
    %v1050 = vpop.f32.mrf.mxu0
    %v1051 = vadd.f32 %v857, %v1050
    %v1052 = vpop.f32.mrf.mxu0
    %v1053 = vadd.f32 %v857, %v1052
    %1054 = vmatprep.mubr.f32.mxu0 0.0
    %1055 = vmatmul.mubr.f32.gmra.mxu0 %v937
    %v1056 = vpop.f32.mrf.mxu0
    %v1057 = vadd.f32 %v862, %v1056
    %v1058 = vpop.f32.mrf.mxu0
    %v1059 = vadd.f32 %v862, %v1058
    %1060 = vmatprep.mubr.f32.mxu0 0.0
    %1061 = vmatmul.mubr.f32.gmra.mxu0 %v940
    %v1062 = vpop.f32.mrf.mxu0
    %v1063 = vadd.f32 %v867, %v1062
    %v1064 = vpop.f32.mrf.mxu0
    %v1065 = vadd.f32 %v867, %v1064
    %1066 = vmatprep.mubr.f32.mxu0 0.0
    %1067 = vmatmul.mubr.f32.gmra.mxu0 %v943
    %v1068 = vpop.f32.mrf.mxu0
    %v1069 = vadd.f32 %v872, %v1068
    %v1070 = vpop.f32.mrf.mxu0
    %v1071 = vadd.f32 %v872, %v1070
    %1072 = vmatprep.mubr.f32.mxu0 0.0
    %1073 = vmatmul.mubr.f32.gmra.mxu0 %v946
    %v1074 = vpop.f32.mrf.mxu0
    %v1075 = vadd.f32 %v877, %v1074
    %v1076 = vpop.f32.mrf.mxu0
    %v1077 = vadd.f32 %v877, %v1076
    %1078 = vmatprep.mubr.f32.mxu0 0.0
    %1079 = vmatmul.mubr.f32.gmra.mxu0 %v949
    %v1080 = vpop.f32.mrf.mxu0
    %v1081 = vadd.f32 %v882, %v1080
    %v1082 = vpop.f32.mrf.mxu0
    %v1083 = vadd.f32 %v882, %v1082
    %1084 = vmatprep.mubr.f32.mxu0 0.0
    %1085 = vmatmul.mubr.f32.gmra.mxu0 %v952
    %v1086 = vpop.f32.mrf.mxu0
    %v1087 = vadd.f32 %v887, %v1086
    %v1088 = vpop.f32.mrf.mxu0
    %v1089 = vadd.f32 %v887, %v1088
    %1090 = vmatprep.mubr.f32.mxu0 0.0
    %1091 = vmatmul.mubr.f32.gmra.mxu0 %v955
    %v1092 = vpop.f32.mrf.mxu0
    %v1093 = vadd.f32 %v892, %v1092
    %v1094 = vpop.f32.mrf.mxu0
    %v1095 = vadd.f32 %v892, %v1094
    %1096 = vmatprep.mubr.f32.mxu0 0.0
    %1097 = vmatmul.mubr.f32.gmra.mxu0 %v958
    %v1098 = vpop.f32.mrf.mxu0
    %v1099 = vadd.f32 %v897, %v1098
    %v1100 = vpop.f32.mrf.mxu0
    %v1101 = vadd.f32 %v897, %v1100
    %1102 = vmatprep.mubr.f32.mxu0 0.0
    %1103 = vmatmul.mubr.f32.gmra.mxu0 %v961
    %v1104 = vpop.f32.mrf.mxu0
    %v1105 = vadd.f32 %v902, %v1104
    %v1106 = vpop.f32.mrf.mxu0
    %v1107 = vadd.f32 %v902, %v1106
    %1108 = vmatprep.mubr.f32.mxu0 0.0
    %1109 = vmatmul.mubr.f32.gmra.mxu0 %v964
    %v1110 = vpop.f32.mrf.mxu0
    %v1111 = vadd.f32 %v907, %v1110
    %v1112 = vpop.f32.mrf.mxu0
    %v1113 = vadd.f32 %v907, %v1112
    %1114 = vmatprep.mubr.f32.mxu0 0.0
    %1115 = vmatmul.mubr.f32.gmra.mxu0 %v967
    %v1116 = vpop.f32.mrf.mxu0
    %v1117 = vadd.f32 %v912, %v1116
    %v1118 = vpop.f32.mrf.mxu0
    %v1119 = vadd.f32 %v912, %v1118
    %1120 = vmatprep.mubr.f32.mxu0 0.0
    %1121 = vmatmul.mubr.f32.gmra.mxu0 %v970
    %v1122 = vpop.f32.mrf.mxu0
    %v1123 = vadd.f32 %v917, %v1122
    %v1124 = vpop.f32.mrf.mxu0
    %v1125 = vadd.f32 %v917, %v1124
    %1126 = vmatprep.mubr.f32.mxu0 0.0
    %1127 = vmatmul.mubr.f32.gmra.mxu0 %v973
    %v1128 = vpop.f32.mrf.mxu0
    %v1129 = vadd.f32 %v922, %v1128
    %v1130 = vpop.f32.mrf.mxu0
    %v1131 = vadd.f32 %v922, %v1130
    %1132 = vmatprep.mubr.f32.mxu0 0.0
    %1133 = vmatmul.mubr.f32.gmra.mxu0 %v976
    %v1134 = vpop.f32.mrf.mxu0
    %v1135 = vadd.f32 %v927, %v1134
    %v1136 = vpop.f32.mrf.mxu0
    %v1137 = vadd.f32 %v927, %v1136
    %1138 = vdwg.mxu0
    %v1139 = vld [vmem:[%s7] sm:$0xff]
    %v1140 = vld [vmem:[%s7 + $0x8] sm:$0xff]
    %v1141 = vld [vmem:[%s7 + $0x10] sm:$0xff]
    %v1142 = vld [vmem:[%s7 + $0x18] sm:$0xff]
    %v1143 = vld [vmem:[%s7 + $0x20] sm:$0xff]
    %v1144 = vld [vmem:[%s7 + $0x28] sm:$0xff]
    %v1145 = vld [vmem:[%s7 + $0x30] sm:$0xff]
    %v1146 = vld [vmem:[%s7 + $0x38] sm:$0xff]
    %v1147 = vld [vmem:[%s7 + $0x40] sm:$0xff]
    %v1148 = vld [vmem:[%s7 + $0x48] sm:$0xff]
    %v1149 = vld [vmem:[%s7 + $0x50] sm:$0xff]
    %v1150 = vld [vmem:[%s7 + $0x58] sm:$0xff]
    %v1151 = vld [vmem:[%s7 + $0x60] sm:$0xff]
    %v1152 = vld [vmem:[%s7 + $0x68] sm:$0xff]
    %v1153 = vld [vmem:[%s7 + $0x70] sm:$0xff]
    %v1154 = vld [vmem:[%s7 + $0x78] sm:$0xff]
    %v1155 = vld [vmem:[%s7 + $0x80] sm:$0xff]
    %v1156 = vld [vmem:[%s7 + $0x88] sm:$0xff]
    %v1157 = vld [vmem:[%s7 + $0x90] sm:$0xff]
    %v1158 = vld [vmem:[%s7 + $0x98] sm:$0xff]
    %v1159 = vld [vmem:[%s7 + $0xa0] sm:$0xff]
    %v1160 = vld [vmem:[%s7 + $0xa8] sm:$0xff]
    %v1161 = vld [vmem:[%s7 + $0xb0] sm:$0xff]
    %v1162 = vld [vmem:[%s7 + $0xb8] sm:$0xff]
    %v1163 = vld [vmem:[%s7 + $0xc0] sm:$0xff]
    %v1164 = vld [vmem:[%s7 + $0xc8] sm:$0xff]
    %v1165 = vld [vmem:[%s7 + $0xd0] sm:$0xff]
    %v1166 = vld [vmem:[%s7 + $0xd8] sm:$0xff]
    %v1167 = vld [vmem:[%s7 + $0xe0] sm:$0xff]
    %v1168 = vld [vmem:[%s7 + $0xe8] sm:$0xff]
    %v1169 = vld [vmem:[%s7 + $0xf0] sm:$0xff]
    %v1170 = vld [vmem:[%s7 + $0xf8] sm:$0xff]
    %1171 = vmatprep.subr.mxu0 0.0
    %1172 = vmatpush1.msra.mxu0 %v1154
    %1173 = vmatprep.subr.mxu0 0.0
    %1174 = vmatpush1.msra.mxu0 %v1153
    %1175 = vmatprep.subr.mxu0 0.0
    %1176 = vmatpush1.msra.mxu0 %v1152
    %1177 = vmatprep.subr.mxu0 0.0
    %1178 = vmatpush1.msra.mxu0 %v1151
    %1179 = vmatprep.subr.mxu0 0.0
    %1180 = vmatpush1.msra.mxu0 %v1150
    %1181 = vmatprep.subr.mxu0 0.0
    %1182 = vmatpush1.msra.mxu0 %v1149
    %1183 = vmatprep.subr.mxu0 0.0
    %1184 = vmatpush1.msra.mxu0 %v1148
    %1185 = vmatprep.subr.mxu0 0.0
    %1186 = vmatpush1.msra.mxu0 %v1147
    %1187 = vmatprep.subr.mxu0 0.0
    %1188 = vmatpush1.msra.mxu0 %v1146
    %1189 = vmatprep.subr.mxu0 0.0
    %1190 = vmatpush1.msra.mxu0 %v1145
    %1191 = vmatprep.subr.mxu0 0.0
    %1192 = vmatpush1.msra.mxu0 %v1144
    %1193 = vmatprep.subr.mxu0 0.0
    %1194 = vmatpush1.msra.mxu0 %v1143
    %1195 = vmatprep.subr.mxu0 0.0
    %1196 = vmatpush1.msra.mxu0 %v1142
    %1197 = vmatprep.subr.mxu0 0.0
    %1198 = vmatpush1.msra.mxu0 %v1141
    %1199 = vmatprep.subr.mxu0 0.0
    %1200 = vmatpush1.msra.mxu0 %v1140
    %1201 = vmatprep.subr.mxu0 0.0
    %1202 = vmatpush1.msra.mxu0 %v1139
    %1203 = vmatprep.subr.mxu0 0.0
    %1204 = vmatpush2.msra.mxu0 %v1170
    %1205 = vmatprep.subr.mxu0 0.0
    %1206 = vmatpush2.msra.mxu0 %v1169
    %1207 = vmatprep.subr.mxu0 0.0
    %1208 = vmatpush2.msra.mxu0 %v1168
    %1209 = vmatprep.subr.mxu0 0.0
    %1210 = vmatpush2.msra.mxu0 %v1167
    %1211 = vmatprep.subr.mxu0 0.0
    %1212 = vmatpush2.msra.mxu0 %v1166
    %1213 = vmatprep.subr.mxu0 0.0
    %1214 = vmatpush2.msra.mxu0 %v1165
    %1215 = vmatprep.subr.mxu0 0.0
    %1216 = vmatpush2.msra.mxu0 %v1164
    %1217 = vmatprep.subr.mxu0 0.0
    %1218 = vmatpush2.msra.mxu0 %v1163
    %1219 = vmatprep.subr.mxu0 0.0
    %1220 = vmatpush2.msra.mxu0 %v1162
    %1221 = vmatprep.subr.mxu0 0.0
    %1222 = vmatpush2.msra.mxu0 %v1161
    %1223 = vmatprep.subr.mxu0 0.0
    %1224 = vmatpush2.msra.mxu0 %v1160
    %1225 = vmatprep.subr.mxu0 0.0
    %1226 = vmatpush2.msra.mxu0 %v1159
    %1227 = vmatprep.subr.mxu0 0.0
    %1228 = vmatpush2.msra.mxu0 %v1158
    %1229 = vmatprep.subr.mxu0 0.0
    %1230 = vmatpush2.msra.mxu0 %v1157
    %1231 = vmatprep.subr.mxu0 0.0
    %1232 = vmatpush2.msra.mxu0 %v1156
    %1233 = vmatprep.subr.mxu0 0.0
    %1234 = vmatpush2.msra.mxu0 %v1155
    %1235 = vmatprep.mubr.f32.mxu0 %v1047
    %1236 = vmatmul.mubr.f32.gmra.mxu0 %v1045
    %v1237 = vpop.f32.mrf.mxu0
    %v1238 = vadd.f32 0.0, %v1237
    %v1239 = vpop.f32.mrf.mxu0
    %1240 = vmatprep.mubr.f32.mxu0 %v1053
    %1241 = vmatmul.mubr.f32.gmra.mxu0 %v1051
    %v1242 = vpop.f32.mrf.mxu0
    %v1243 = vadd.f32 0.0, %v1242
    %v1244 = vpop.f32.mrf.mxu0
    %1245 = vmatprep.mubr.f32.mxu0 %v1059
    %1246 = vmatmul.mubr.f32.gmra.mxu0 %v1057
    %v1247 = vpop.f32.mrf.mxu0
    %v1248 = vadd.f32 0.0, %v1247
    %v1249 = vpop.f32.mrf.mxu0
    %1250 = vmatprep.mubr.f32.mxu0 %v1065
    %1251 = vmatmul.mubr.f32.gmra.mxu0 %v1063
    %v1252 = vpop.f32.mrf.mxu0
    %v1253 = vadd.f32 0.0, %v1252
    %v1254 = vpop.f32.mrf.mxu0
    %1255 = vmatprep.mubr.f32.mxu0 %v1071
    %1256 = vmatmul.mubr.f32.gmra.mxu0 %v1069
    %v1257 = vpop.f32.mrf.mxu0
    %v1258 = vadd.f32 0.0, %v1257
    %v1259 = vpop.f32.mrf.mxu0
    %1260 = vmatprep.mubr.f32.mxu0 %v1077
    %1261 = vmatmul.mubr.f32.gmra.mxu0 %v1075
    %v1262 = vpop.f32.mrf.mxu0
    %v1263 = vadd.f32 0.0, %v1262
    %v1264 = vpop.f32.mrf.mxu0
    %1265 = vmatprep.mubr.f32.mxu0 %v1083
    %1266 = vmatmul.mubr.f32.gmra.mxu0 %v1081
    %v1267 = vpop.f32.mrf.mxu0
    %v1268 = vadd.f32 0.0, %v1267
    %v1269 = vpop.f32.mrf.mxu0
    %1270 = vmatprep.mubr.f32.mxu0 %v1089
    %1271 = vmatmul.mubr.f32.gmra.mxu0 %v1087
    %v1272 = vpop.f32.mrf.mxu0
    %v1273 = vadd.f32 0.0, %v1272
    %v1274 = vpop.f32.mrf.mxu0
    %1275 = vmatprep.mubr.f32.mxu0 %v1095
    %1276 = vmatmul.mubr.f32.gmra.mxu0 %v1093
    %v1277 = vpop.f32.mrf.mxu0
    %v1278 = vadd.f32 0.0, %v1277
    %v1279 = vpop.f32.mrf.mxu0
    %1280 = vmatprep.mubr.f32.mxu0 %v1101
    %1281 = vmatmul.mubr.f32.gmra.mxu0 %v1099
    %v1282 = vpop.f32.mrf.mxu0
    %v1283 = vadd.f32 0.0, %v1282
    %v1284 = vpop.f32.mrf.mxu0
    %1285 = vmatprep.mubr.f32.mxu0 %v1107
    %1286 = vmatmul.mubr.f32.gmra.mxu0 %v1105
    %v1287 = vpop.f32.mrf.mxu0
    %v1288 = vadd.f32 0.0, %v1287
    %v1289 = vpop.f32.mrf.mxu0
    %1290 = vmatprep.mubr.f32.mxu0 %v1113
    %1291 = vmatmul.mubr.f32.gmra.mxu0 %v1111
    %v1292 = vpop.f32.mrf.mxu0
    %v1293 = vadd.f32 0.0, %v1292
    %v1294 = vpop.f32.mrf.mxu0
    %1295 = vmatprep.mubr.f32.mxu0 %v1119
    %1296 = vmatmul.mubr.f32.gmra.mxu0 %v1117
    %v1297 = vpop.f32.mrf.mxu0
    %v1298 = vadd.f32 0.0, %v1297
    %v1299 = vpop.f32.mrf.mxu0
    %1300 = vmatprep.mubr.f32.mxu0 %v1125
    %1301 = vmatmul.mubr.f32.gmra.mxu0 %v1123
    %v1302 = vpop.f32.mrf.mxu0
    %v1303 = vadd.f32 0.0, %v1302
    %v1304 = vpop.f32.mrf.mxu0
    %1305 = vmatprep.mubr.f32.mxu0 %v1131
    %1306 = vmatmul.mubr.f32.gmra.mxu0 %v1129
    %v1307 = vpop.f32.mrf.mxu0
    %v1308 = vadd.f32 0.0, %v1307
    %v1309 = vpop.f32.mrf.mxu0
    %1310 = vmatprep.mubr.f32.mxu0 %v1137
    %1311 = vmatmul.mubr.f32.gmra.mxu0 %v1135
    %v1312 = vpop.f32.mrf.mxu0
    %v1313 = vadd.f32 0.0, %v1312
    %v1314 = vpop.f32.mrf.mxu0
    %1315 = vdwg.mxu0
    %vm1316 = vcmask 31744
    %1317 = vst.msk [vmem:[%s8] sm:$0xff] %vm1316, %v1238
    %1318 = vst.msk [vmem:[%s8 + $0x8] sm:$0xff] %vm1316, %v1243
    %1319 = vst.msk [vmem:[%s8 + $0x10] sm:$0xff] %vm1316, %v1248
    %1320 = vst.msk [vmem:[%s8 + $0x18] sm:$0xff] %vm1316, %v1253
    %1321 = vst.msk [vmem:[%s8 + $0x20] sm:$0xff] %vm1316, %v1258
    %1322 = vst.msk [vmem:[%s8 + $0x28] sm:$0xff] %vm1316, %v1263
    %1323 = vst.msk [vmem:[%s8 + $0x30] sm:$0xff] %vm1316, %v1268
    %1324 = vst.msk [vmem:[%s8 + $0x38] sm:$0xff] %vm1316, %v1273
    %1325 = vst.msk [vmem:[%s8 + $0x40] sm:$0xff] %vm1316, %v1278
    %1326 = vst.msk [vmem:[%s8 + $0x48] sm:$0xff] %vm1316, %v1283
    %1327 = vst.msk [vmem:[%s8 + $0x50] sm:$0xff] %vm1316, %v1288
    %1328 = vst.msk [vmem:[%s8 + $0x58] sm:$0xff] %vm1316, %v1293
    %1329 = vst.msk [vmem:[%s8 + $0x60] sm:$0xff] %vm1316, %v1298
    %1330 = vst.msk [vmem:[%s8 + $0x68] sm:$0xff] %vm1316, %v1303
    %1331 = vst.msk [vmem:[%s8 + $0x70] sm:$0xff] %vm1316, %v1308
    %1332 = vst.msk [vmem:[%s8 + $0x78] sm:$0xff] %vm1316, %v1313
    // Predicated region
    $region46: #{forward.2} parent=1 // pred_check
      _
    $region47: #{forward.2} parent=1 // pred_check_branch
      %1334 = sbr.rel (0) target = $region49
    $region48: #{forward.2} parent=1 // pred_region
      _
    $region49: #{forward.2} parent=1 // pred_fallthru
      _
    // Predicated region
    $region50: #{forward.2} parent=1 // pred_check
      _
    $region51: #{forward.2} parent=1 // pred_check_branch
      %1336 = sbr.rel (0) target = $region53
    $region52: #{forward.2} parent=1 // pred_region
      _
    $region53: #{forward.2} parent=1 // pred_fallthru
      _
    %1337 = vsyncpa [#allocation7], 1
    %1338 = vsyncpa [#allocation9], 1

// kernel: forward.3
$region0: #{forward.3}
  #allocation0 [shape = 'u32[]', space=smem, size = 0x4, offset = 0x4, fixed_abs, tag = 'smem constant byte address 0x4 - core index']
  #allocation1 [shape = 'u32[144,128]{1,0:T(1,128)}', space=vmem, size = 0x12000, scoped, tag = 'internal scratch']
  %s0 = inlined_call_operand.vmem [shape: f32[1,512], index: 0, kind: input, shape index: {}]
  %s1 = inlined_call_operand.hbm [shape: bf16[512,512], index: 1, kind: input, shape index: {}]
  %s2 = inlined_call_operand.hbm [shape: f32[1,512], index: 2, kind: input, shape index: {}]
  %s3 = inlined_call_operand.hbm [shape: f32[1,512], index: 3, kind: input, shape index: {}]
  %s4 = inlined_call_operand.hbm [shape: bf16[512,512], index: 4, kind: input, shape index: {}]
  %s5 = inlined_call_operand.hbm [shape: f32[1,512], index: 5, kind: input, shape index: {}]
  %s6 = inlined_call_operand.hbm [shape: f32[1,512], index: 6, kind: input, shape index: {}]
  %s7 = inlined_call_operand.hbm [shape: bf16[512,512], index: 7, kind: input, shape index: {}]
  %s8 = inlined_call_operand.hbm [shape: f32[1,512], index: 8, kind: input, shape index: {}]
  %s9 = inlined_call_operand.hbm [shape: f32[1,512], index: 9, kind: input, shape index: {}]
  %s10 = inlined_call_operand.hbm [shape: bf16[512,2048], index: 10, kind: input, shape index: {}]
  %s11 = inlined_call_operand.hbm [shape: f32[1,2048], index: 11, kind: input, shape index: {}]
  %s12 = inlined_call_operand.hbm [shape: f32[1,2048], index: 12, kind: input, shape index: {}]
  %s13 = inlined_call_operand.hbm [shape: f32[1,2048], index: 13, kind: output, shape index: {}]
  %s14 = sld [smem:[#allocation0]]
  $region110: #{forward.3} parent=0
    _
  %s16 = ssub.s32 1, %s14
  %s17 = scalar_select 0, %s16, %s14
  $region1: #{forward.3} parent=0
    #allocation2 [shape = 'u8[524288]{0}', space=vmem, size = 0x80000, scoped, tag = 'input window, operand 1, single buffered']
    #allocation3 [shape = 's32[1]{0}', space=sflag, size = 0x4, scoped, tag = 'scoped memory for forward.3']
    #allocation4 [shape = 's32[1]{0}', space=sflag, size = 0x4, scoped, tag = 'scoped memory for forward.3']
    #allocation5 [shape = 'u8[2048]{0}', space=vmem, size = 0x800, scoped, tag = 'input window, operand 2, single buffered']
    #allocation6 [shape = 's32[1]{0}', space=sflag, size = 0x4, scoped, tag = 'scoped memory for forward.3']
    #allocation7 [shape = 'u8[2048]{0}', space=vmem, size = 0x800, scoped, tag = 'input window, operand 3, single buffered']
    #allocation8 [shape = 'u8[524288]{0}', space=vmem, size = 0x80000, scoped, tag = 'input window, operand 4, single buffered']
    #allocation9 [shape = 's32[1]{0}', space=sflag, size = 0x4, scoped, tag = 'scoped memory for forward.3']
    #allocation10 [shape = 'u8[2048]{0}', space=vmem, size = 0x800, scoped, tag = 'input window, operand 5, single buffered']
    #allocation11 [shape = 'u8[2048]{0}', space=vmem, size = 0x800, scoped, tag = 'input window, operand 6, single buffered']
    #allocation12 [shape = 's32[1]{0}', space=sflag, size = 0x4, scoped, tag = 'scoped memory for forward.3']
    #allocation13 [shape = 'u8[524288]{0}', space=vmem, size = 0x80000, scoped, tag = 'input window, operand 7, single buffered']
    #allocation14 [shape = 'u8[2048]{0}', space=vmem, size = 0x800, scoped, tag = 'input window, operand 8, single buffered']
    #allocation15 [shape = 's32[1]{0}', space=sflag, size = 0x4, scoped, tag = 'scoped memory for forward.3']
    #allocation16 [shape = 'u8[2048]{0}', space=vmem, size = 0x800, scoped, tag = 'input window, operand 9, single buffered']
    #allocation17 [shape = 'u8[2097152]{0}', space=vmem, size = 0x200000, scoped, tag = 'input window, operand 10, single buffered']
    #allocation18 [shape = 's32[1]{0}', space=sflag, size = 0x4, scoped, tag = 'scoped memory for forward.3']
    #allocation19 [shape = 'u8[8192]{0}', space=vmem, size = 0x2000, scoped, tag = 'input window, operand 11, single buffered']
    #allocation20 [shape = 'u8[8192]{0}', space=vmem, size = 0x2000, scoped, tag = 'input window, operand 12, single buffered']
    #allocation21 [shape = 's32[1]{0}', space=sflag, size = 0x4, scoped, tag = 'scoped memory for forward.3']
    #allocation22 [shape = 'u8[8192]{0}', space=vmem, size = 0x2000, scoped, tag = 'output window, operand 0, single buffered']
    %18 = vsyncpa [#allocation3], 0
    %19 = vsyncpa [#allocation6], 0
    %20 = vsyncpa [#allocation9], 0
    %21 = vsyncpa [#allocation12], 0
    %22 = vsyncpa [#allocation15], 0
    %23 = vsyncpa [#allocation18], 0
    %24 = vsyncpa [#allocation21], 0
    %25 = vsyncpa [#allocation4], 0
    // Predicated region
    $region2: #{forward.3} parent=1 // pred_check
      _
    $region3: #{forward.3} parent=1 // pred_check_branch
      %27 = sbr.rel (0) target = $region5
    $region4: #{forward.3} parent=1 // pred_region
      _
    $region5: #{forward.3} parent=1 // pred_fallthru
      _
    // Predicated region
    $region6: #{forward.3} parent=1 // pred_check
      _
    $region7: #{forward.3} parent=1 // pred_check_branch
      %29 = sbr.rel (0) target = $region9
    $region8: #{forward.3} parent=1 // pred_region
      %s31 = ssub.s32 16384, 16384
      %32 = vsyncadd [#allocation3], %s31
      %s33 = sshll.u32 [#allocation2], 4
      %s34 = int_to_ptr.vmem [resolvable:$true] %s33
      %39 = dma.hbm_to_vmem [thread:$0]  %s1, 16384, %s34, [#allocation3], 256, 256, 16
    $region9: #{forward.3} parent=1 // pred_fallthru
      _
    // Predicated region
    $region10: #{forward.3} parent=1 // pred_check
      _
    $region11: #{forward.3} parent=1 // pred_check_branch
      %41 = sbr.rel (0) target = $region13
    $region12: #{forward.3} parent=1 // pred_region
      %s43 = ssub.s32 64, 64
      %44 = vsyncadd [#allocation6], %s43
      %s46 = sshll.u32 [#allocation5], 4
      %s47 = int_to_ptr.vmem [resolvable:$true] %s46
      %49 = dma.hbm_to_vmem [thread:$0]  %s2, 64, %s47, [#allocation6]
    $region13: #{forward.3} parent=1 // pred_fallthru
      _
    // Predicated region
    $region14: #{forward.3} parent=1 // pred_check
      _
    $region15: #{forward.3} parent=1 // pred_check_branch
      %51 = sbr.rel (0) target = $region17
    $region16: #{forward.3} parent=1 // pred_region
      %s53 = ssub.s32 64, 64
      %54 = vsyncadd [#allocation6], %s53
      %s56 = sshll.u32 [#allocation7], 4
      %s57 = int_to_ptr.vmem [resolvable:$true] %s56
      %59 = dma.hbm_to_vmem [thread:$0]  %s3, 64, %s57, [#allocation6]
    $region17: #{forward.3} parent=1 // pred_fallthru
      _
    // Predicated region
    $region18: #{forward.3} parent=1 // pred_check
      _
    $region19: #{forward.3} parent=1 // pred_check_branch
      %61 = sbr.rel (0) target = $region21
    $region20: #{forward.3} parent=1 // pred_region
      %s63 = ssub.s32 16384, 16384
      %64 = vsyncadd [#allocation9], %s63
      %s65 = sshll.u32 [#allocation8], 4
      %s66 = int_to_ptr.vmem [resolvable:$true] %s65
      %71 = dma.hbm_to_vmem [thread:$0]  %s4, 16384, %s66, [#allocation9], 256, 256, 16
    $region21: #{forward.3} parent=1 // pred_fallthru
      _
    // Predicated region
    $region22: #{forward.3} parent=1 // pred_check
      _
    $region23: #{forward.3} parent=1 // pred_check_branch
      %73 = sbr.rel (0) target = $region25
    $region24: #{forward.3} parent=1 // pred_region
      %s75 = ssub.s32 64, 64
      %76 = vsyncadd [#allocation9], %s75
      %s78 = sshll.u32 [#allocation10], 4
      %s79 = int_to_ptr.vmem [resolvable:$true] %s78
      %81 = dma.hbm_to_vmem [thread:$0]  %s5, 64, %s79, [#allocation9]
    $region25: #{forward.3} parent=1 // pred_fallthru
      _
    // Predicated region
    $region26: #{forward.3} parent=1 // pred_check
      _
    $region27: #{forward.3} parent=1 // pred_check_branch
      %83 = sbr.rel (0) target = $region29
    $region28: #{forward.3} parent=1 // pred_region
      %s85 = ssub.s32 64, 64
      %86 = vsyncadd [#allocation12], %s85
      %s88 = sshll.u32 [#allocation11], 4
      %s89 = int_to_ptr.vmem [resolvable:$true] %s88
      %91 = dma.hbm_to_vmem [thread:$0]  %s6, 64, %s89, [#allocation12]
    $region29: #{forward.3} parent=1 // pred_fallthru
      _
    // Predicated region
    $region30: #{forward.3} parent=1 // pred_check
      _
    $region31: #{forward.3} parent=1 // pred_check_branch
      %93 = sbr.rel (0) target = $region33
    $region32: #{forward.3} parent=1 // pred_region
      %s95 = ssub.s32 16384, 16384
      %96 = vsyncadd [#allocation12], %s95
      %s97 = sshll.u32 [#allocation13], 4
      %s98 = int_to_ptr.vmem [resolvable:$true] %s97
      %103 = dma.hbm_to_vmem [thread:$0]  %s7, 16384, %s98, [#allocation12], 256, 256, 16
    $region33: #{forward.3} parent=1 // pred_fallthru
      _
    // Predicated region
    $region34: #{forward.3} parent=1 // pred_check
      _
    $region35: #{forward.3} parent=1 // pred_check_branch
      %105 = sbr.rel (0) target = $region37
    $region36: #{forward.3} parent=1 // pred_region
      %s107 = ssub.s32 64, 64
      %108 = vsyncadd [#allocation15], %s107
      %s110 = sshll.u32 [#allocation14], 4
      %s111 = int_to_ptr.vmem [resolvable:$true] %s110
      %113 = dma.hbm_to_vmem [thread:$0]  %s8, 64, %s111, [#allocation15]
    $region37: #{forward.3} parent=1 // pred_fallthru
      _
    // Predicated region
    $region38: #{forward.3} parent=1 // pred_check
      _
    $region39: #{forward.3} parent=1 // pred_check_branch
      %115 = sbr.rel (0) target = $region41
    $region40: #{forward.3} parent=1 // pred_region
      %s117 = ssub.s32 64, 64
      %118 = vsyncadd [#allocation15], %s117
      %s120 = sshll.u32 [#allocation16], 4
      %s121 = int_to_ptr.vmem [resolvable:$true] %s120
      %123 = dma.hbm_to_vmem [thread:$0]  %s9, 64, %s121, [#allocation15]
    $region41: #{forward.3} parent=1 // pred_fallthru
      _
    // Predicated region
    $region42: #{forward.3} parent=1 // pred_check
      _
    $region43: #{forward.3} parent=1 // pred_check_branch
      %125 = sbr.rel (0) target = $region45
    $region44: #{forward.3} parent=1 // pred_region
      %s127 = ssub.s32 65536, 65536
      %128 = vsyncadd [#allocation18], %s127
      %s129 = sshll.u32 [#allocation17], 4
      %s130 = int_to_ptr.vmem [resolvable:$true] %s129
      %135 = dma.hbm_to_vmem [thread:$0]  %s10, 65536, %s130, [#allocation18], 1024, 1024, 64
    $region45: #{forward.3} parent=1 // pred_fallthru
      _
    // Predicated region
    $region46: #{forward.3} parent=1 // pred_check
      _
    $region47: #{forward.3} parent=1 // pred_check_branch
      %137 = sbr.rel (0) target = $region49
    $region48: #{forward.3} parent=1 // pred_region
      %s139 = ssub.s32 256, 256
      %140 = vsyncadd [#allocation18], %s139
      %s142 = sshll.u32 [#allocation19], 4
      %s143 = int_to_ptr.vmem [resolvable:$true] %s142
      %145 = dma.hbm_to_vmem [thread:$0]  %s11, 256, %s143, [#allocation18]
    $region49: #{forward.3} parent=1 // pred_fallthru
      _
    // Predicated region
    $region50: #{forward.3} parent=1 // pred_check
      _
    $region51: #{forward.3} parent=1 // pred_check_branch
      %147 = sbr.rel (0) target = $region53
    $region52: #{forward.3} parent=1 // pred_region
      %s149 = ssub.s32 256, 256
      %150 = vsyncadd [#allocation21], %s149
      %s152 = sshll.u32 [#allocation20], 4
      %s153 = int_to_ptr.vmem [resolvable:$true] %s152
      %155 = dma.hbm_to_vmem [thread:$0]  %s12, 256, %s153, [#allocation21]
    $region53: #{forward.3} parent=1 // pred_fallthru
      _
    // Predicated region
    $region54: #{forward.3} parent=1 // pred_check
      _
    $region55: #{forward.3} parent=1 // pred_check_branch
      %157 = sbr.rel (0) target = $region57
    $region56: #{forward.3} parent=1 // pred_region
      %158 = dma.done [#allocation3], 16384
    $region57: #{forward.3} parent=1 // pred_fallthru
      _
    // Predicated region
    $region58: #{forward.3} parent=1 // pred_check
      _
    $region59: #{forward.3} parent=1 // pred_check_branch
      %160 = sbr.rel (0) target = $region61
    $region60: #{forward.3} parent=1 // pred_region
      %161 = dma.done [#allocation6], 64
    $region61: #{forward.3} parent=1 // pred_fallthru
      _
    // Predicated region
    $region62: #{forward.3} parent=1 // pred_check
      _
    $region63: #{forward.3} parent=1 // pred_check_branch
      %163 = sbr.rel (0) target = $region65
    $region64: #{forward.3} parent=1 // pred_region
      %164 = dma.done [#allocation6], 64
    $region65: #{forward.3} parent=1 // pred_fallthru
      _
    // Predicated region
    $region66: #{forward.3} parent=1 // pred_check
      _
    $region67: #{forward.3} parent=1 // pred_check_branch
      %166 = sbr.rel (0) target = $region69
    $region68: #{forward.3} parent=1 // pred_region
      %167 = dma.done [#allocation9], 16384
    $region69: #{forward.3} parent=1 // pred_fallthru
      _
    // Predicated region
    $region70: #{forward.3} parent=1 // pred_check
      _
    $region71: #{forward.3} parent=1 // pred_check_branch
      %169 = sbr.rel (0) target = $region73
    $region72: #{forward.3} parent=1 // pred_region
      %170 = dma.done [#allocation9], 64
    $region73: #{forward.3} parent=1 // pred_fallthru
      _
    // Predicated region
    $region74: #{forward.3} parent=1 // pred_check
      _
    $region75: #{forward.3} parent=1 // pred_check_branch
      %172 = sbr.rel (0) target = $region77
    $region76: #{forward.3} parent=1 // pred_region
      %173 = dma.done [#allocation12], 64
    $region77: #{forward.3} parent=1 // pred_fallthru
      _
    // Predicated region
    $region78: #{forward.3} parent=1 // pred_check
      _
    $region79: #{forward.3} parent=1 // pred_check_branch
      %175 = sbr.rel (0) target = $region81
    $region80: #{forward.3} parent=1 // pred_region
      %176 = dma.done [#allocation12], 16384
    $region81: #{forward.3} parent=1 // pred_fallthru
      _
    // Predicated region
    $region82: #{forward.3} parent=1 // pred_check
      _
    $region83: #{forward.3} parent=1 // pred_check_branch
      %178 = sbr.rel (0) target = $region85
    $region84: #{forward.3} parent=1 // pred_region
      %179 = dma.done [#allocation15], 64
    $region85: #{forward.3} parent=1 // pred_fallthru
      _
    // Predicated region
    $region86: #{forward.3} parent=1 // pred_check
      _
    $region87: #{forward.3} parent=1 // pred_check_branch
      %181 = sbr.rel (0) target = $region89
    $region88: #{forward.3} parent=1 // pred_region
      %182 = dma.done [#allocation15], 64
    $region89: #{forward.3} parent=1 // pred_fallthru
      _
    // Predicated region
    $region90: #{forward.3} parent=1 // pred_check
      _
    $region91: #{forward.3} parent=1 // pred_check_branch
      %184 = sbr.rel (0) target = $region93
    $region92: #{forward.3} parent=1 // pred_region
      %185 = dma.done [#allocation18], 65536
    $region93: #{forward.3} parent=1 // pred_fallthru
      _
    // Predicated region
    $region94: #{forward.3} parent=1 // pred_check
      _
    $region95: #{forward.3} parent=1 // pred_check_branch
      %187 = sbr.rel (0) target = $region97
    $region96: #{forward.3} parent=1 // pred_region
      %188 = dma.done [#allocation18], 256
    $region97: #{forward.3} parent=1 // pred_fallthru
      _
    // Predicated region
    $region98: #{forward.3} parent=1 // pred_check
      _
    $region99: #{forward.3} parent=1 // pred_check_branch
      %190 = sbr.rel (0) target = $region101
    $region100: #{forward.3} parent=1 // pred_region
      %191 = dma.done [#allocation21], 256
    $region101: #{forward.3} parent=1 // pred_fallthru
      _
    %v192 = vld [vmem:[%s0] sm:$0xf]
    %v194 = vlaneseq
    %v195 = vshrl.u32 %v194, 7
    %v196 = vsub.s32 0, %v195
    %v197 = vrot.slane %v192, %v196
    %v198 = vlaneseq
    %v199 = vshrl.u32 %v198, 7
    %v200 = vsub.s32 1, %v199
    %v201 = vrot.slane %v192, %v200
    %v202 = vlaneseq
    %v203 = vshrl.u32 %v202, 7
    %v204 = vsub.s32 2, %v203
    %v205 = vrot.slane %v192, %v204
    %v206 = vlaneseq
    %v207 = vshrl.u32 %v206, 7
    %v208 = vsub.s32 3, %v207
    %v209 = vrot.slane %v192, %v208
    %v214 = vpack.c.bf16 %v197, %v197
    %v215 = vpack.c.bf16 %v201, %v201
    %v216 = vpack.c.bf16 %v205, %v205
    %v217 = vpack.c.bf16 %v209, %v209
    %v218 = vld [vmem:[#allocation2] sm:$0xff]
    %v219 = vld [vmem:[#allocation2 + $0x8] sm:$0xff]
    %v220 = vld [vmem:[#allocation2 + $0x10] sm:$0xff]
    %v221 = vld [vmem:[#allocation2 + $0x18] sm:$0xff]
    %v222 = vld [vmem:[#allocation2 + $0x20] sm:$0xff]
    %v223 = vld [vmem:[#allocation2 + $0x28] sm:$0xff]
    %v224 = vld [vmem:[#allocation2 + $0x30] sm:$0xff]
    %v225 = vld [vmem:[#allocation2 + $0x38] sm:$0xff]
    %v226 = vld [vmem:[#allocation2 + $0x40] sm:$0xff]
    %v227 = vld [vmem:[#allocation2 + $0x48] sm:$0xff]
    %v228 = vld [vmem:[#allocation2 + $0x50] sm:$0xff]
    %v229 = vld [vmem:[#allocation2 + $0x58] sm:$0xff]
    %v230 = vld [vmem:[#allocation2 + $0x60] sm:$0xff]
    %v231 = vld [vmem:[#allocation2 + $0x68] sm:$0xff]
    %v232 = vld [vmem:[#allocation2 + $0x70] sm:$0xff]
    %v233 = vld [vmem:[#allocation2 + $0x78] sm:$0xff]
    %v234 = vld [vmem:[#allocation2 + $0x80] sm:$0xff]
    %v235 = vld [vmem:[#allocation2 + $0x88] sm:$0xff]
    %v236 = vld [vmem:[#allocation2 + $0x90] sm:$0xff]
    %v237 = vld [vmem:[#allocation2 + $0x98] sm:$0xff]
    %v238 = vld [vmem:[#allocation2 + $0xa0] sm:$0xff]
    %v239 = vld [vmem:[#allocation2 + $0xa8] sm:$0xff]
    %v240 = vld [vmem:[#allocation2 + $0xb0] sm:$0xff]
    %v241 = vld [vmem:[#allocation2 + $0xb8] sm:$0xff]
    %v242 = vld [vmem:[#allocation2 + $0xc0] sm:$0xff]
    %v243 = vld [vmem:[#allocation2 + $0xc8] sm:$0xff]
    %v244 = vld [vmem:[#allocation2 + $0xd0] sm:$0xff]
    %v245 = vld [vmem:[#allocation2 + $0xd8] sm:$0xff]
    %v246 = vld [vmem:[#allocation2 + $0xe0] sm:$0xff]
    %v247 = vld [vmem:[#allocation2 + $0xe8] sm:$0xff]
    %v248 = vld [vmem:[#allocation2 + $0xf0] sm:$0xff]
    %v249 = vld [vmem:[#allocation2 + $0xf8] sm:$0xff]
    %v250 = vld [vmem:[#allocation2 + $0x100] sm:$0xff]
    %v251 = vld [vmem:[#allocation2 + $0x108] sm:$0xff]
    %v252 = vld [vmem:[#allocation2 + $0x110] sm:$0xff]
    %v253 = vld [vmem:[#allocation2 + $0x118] sm:$0xff]
    %v254 = vld [vmem:[#allocation2 + $0x120] sm:$0xff]
    %v255 = vld [vmem:[#allocation2 + $0x128] sm:$0xff]
    %v256 = vld [vmem:[#allocation2 + $0x130] sm:$0xff]
    %v257 = vld [vmem:[#allocation2 + $0x138] sm:$0xff]
    %v258 = vld [vmem:[#allocation2 + $0x140] sm:$0xff]
    %v259 = vld [vmem:[#allocation2 + $0x148] sm:$0xff]
    %v260 = vld [vmem:[#allocation2 + $0x150] sm:$0xff]
    %v261 = vld [vmem:[#allocation2 + $0x158] sm:$0xff]
    %v262 = vld [vmem:[#allocation2 + $0x160] sm:$0xff]
    %v263 = vld [vmem:[#allocation2 + $0x168] sm:$0xff]
    %v264 = vld [vmem:[#allocation2 + $0x170] sm:$0xff]
    %v265 = vld [vmem:[#allocation2 + $0x178] sm:$0xff]
    %v266 = vld [vmem:[#allocation2 + $0x180] sm:$0xff]
    %v267 = vld [vmem:[#allocation2 + $0x188] sm:$0xff]
    %v268 = vld [vmem:[#allocation2 + $0x190] sm:$0xff]
    %v269 = vld [vmem:[#allocation2 + $0x198] sm:$0xff]
    %v270 = vld [vmem:[#allocation2 + $0x1a0] sm:$0xff]
    %v271 = vld [vmem:[#allocation2 + $0x1a8] sm:$0xff]
    %v272 = vld [vmem:[#allocation2 + $0x1b0] sm:$0xff]
    %v273 = vld [vmem:[#allocation2 + $0x1b8] sm:$0xff]
    %v274 = vld [vmem:[#allocation2 + $0x1c0] sm:$0xff]
    %v275 = vld [vmem:[#allocation2 + $0x1c8] sm:$0xff]
    %v276 = vld [vmem:[#allocation2 + $0x1d0] sm:$0xff]
    %v277 = vld [vmem:[#allocation2 + $0x1d8] sm:$0xff]
    %v278 = vld [vmem:[#allocation2 + $0x1e0] sm:$0xff]
    %v279 = vld [vmem:[#allocation2 + $0x1e8] sm:$0xff]
    %v280 = vld [vmem:[#allocation2 + $0x1f0] sm:$0xff]
    %v281 = vld [vmem:[#allocation2 + $0x1f8] sm:$0xff]
    %v282 = vld [vmem:[#allocation2 + $0x200] sm:$0xff]
    %v283 = vld [vmem:[#allocation2 + $0x208] sm:$0xff]
    %v284 = vld [vmem:[#allocation2 + $0x210] sm:$0xff]
    %v285 = vld [vmem:[#allocation2 + $0x218] sm:$0xff]
    %v286 = vld [vmem:[#allocation2 + $0x220] sm:$0xff]
    %v287 = vld [vmem:[#allocation2 + $0x228] sm:$0xff]
    %v288 = vld [vmem:[#allocation2 + $0x230] sm:$0xff]
    %v289 = vld [vmem:[#allocation2 + $0x238] sm:$0xff]
    %v290 = vld [vmem:[#allocation2 + $0x240] sm:$0xff]
    %v291 = vld [vmem:[#allocation2 + $0x248] sm:$0xff]
    %v292 = vld [vmem:[#allocation2 + $0x250] sm:$0xff]
    %v293 = vld [vmem:[#allocation2 + $0x258] sm:$0xff]
    %v294 = vld [vmem:[#allocation2 + $0x260] sm:$0xff]
    %v295 = vld [vmem:[#allocation2 + $0x268] sm:$0xff]
    %v296 = vld [vmem:[#allocation2 + $0x270] sm:$0xff]
    %v297 = vld [vmem:[#allocation2 + $0x278] sm:$0xff]
    %v298 = vld [vmem:[#allocation2 + $0x280] sm:$0xff]
    %v299 = vld [vmem:[#allocation2 + $0x288] sm:$0xff]
    %v300 = vld [vmem:[#allocation2 + $0x290] sm:$0xff]
    %v301 = vld [vmem:[#allocation2 + $0x298] sm:$0xff]
    %v302 = vld [vmem:[#allocation2 + $0x2a0] sm:$0xff]
    %v303 = vld [vmem:[#allocation2 + $0x2a8] sm:$0xff]
    %v304 = vld [vmem:[#allocation2 + $0x2b0] sm:$0xff]
    %v305 = vld [vmem:[#allocation2 + $0x2b8] sm:$0xff]
    %v306 = vld [vmem:[#allocation2 + $0x2c0] sm:$0xff]
    %v307 = vld [vmem:[#allocation2 + $0x2c8] sm:$0xff]
    %v308 = vld [vmem:[#allocation2 + $0x2d0] sm:$0xff]
    %v309 = vld [vmem:[#allocation2 + $0x2d8] sm:$0xff]
    %v310 = vld [vmem:[#allocation2 + $0x2e0] sm:$0xff]
    %v311 = vld [vmem:[#allocation2 + $0x2e8] sm:$0xff]
    %v312 = vld [vmem:[#allocation2 + $0x2f0] sm:$0xff]
    %v313 = vld [vmem:[#allocation2 + $0x2f8] sm:$0xff]
    %v314 = vld [vmem:[#allocation2 + $0x300] sm:$0xff]
    %v315 = vld [vmem:[#allocation2 + $0x308] sm:$0xff]
    %v316 = vld [vmem:[#allocation2 + $0x310] sm:$0xff]
    %v317 = vld [vmem:[#allocation2 + $0x318] sm:$0xff]
    %v318 = vld [vmem:[#allocation2 + $0x320] sm:$0xff]
    %v319 = vld [vmem:[#allocation2 + $0x328] sm:$0xff]
    %v320 = vld [vmem:[#allocation2 + $0x330] sm:$0xff]
    %v321 = vld [vmem:[#allocation2 + $0x338] sm:$0xff]
    %v322 = vld [vmem:[#allocation2 + $0x340] sm:$0xff]
    %v323 = vld [vmem:[#allocation2 + $0x348] sm:$0xff]
    %v324 = vld [vmem:[#allocation2 + $0x350] sm:$0xff]
    %v325 = vld [vmem:[#allocation2 + $0x358] sm:$0xff]
    %v326 = vld [vmem:[#allocation2 + $0x360] sm:$0xff]
    %v327 = vld [vmem:[#allocation2 + $0x368] sm:$0xff]
    %v328 = vld [vmem:[#allocation2 + $0x370] sm:$0xff]
    %v329 = vld [vmem:[#allocation2 + $0x378] sm:$0xff]
    %v330 = vld [vmem:[#allocation2 + $0x380] sm:$0xff]
    %v331 = vld [vmem:[#allocation2 + $0x388] sm:$0xff]
    %v332 = vld [vmem:[#allocation2 + $0x390] sm:$0xff]
    %v333 = vld [vmem:[#allocation2 + $0x398] sm:$0xff]
    %v334 = vld [vmem:[#allocation2 + $0x3a0] sm:$0xff]
    %v335 = vld [vmem:[#allocation2 + $0x3a8] sm:$0xff]
    %v336 = vld [vmem:[#allocation2 + $0x3b0] sm:$0xff]
    %v337 = vld [vmem:[#allocation2 + $0x3b8] sm:$0xff]
    %v338 = vld [vmem:[#allocation2 + $0x3c0] sm:$0xff]
    %v339 = vld [vmem:[#allocation2 + $0x3c8] sm:$0xff]
    %v340 = vld [vmem:[#allocation2 + $0x3d0] sm:$0xff]
    %v341 = vld [vmem:[#allocation2 + $0x3d8] sm:$0xff]
    %v342 = vld [vmem:[#allocation2 + $0x3e0] sm:$0xff]
    %v343 = vld [vmem:[#allocation2 + $0x3e8] sm:$0xff]
    %v344 = vld [vmem:[#allocation2 + $0x3f0] sm:$0xff]
    %v345 = vld [vmem:[#allocation2 + $0x3f8] sm:$0xff]
    %v474 = vunpack.c.l.b16 %v218
    %v475 = vunpack.c.h.b16 %v218
    %v476 = vunpack.c.l.b16 %v219
    %v477 = vunpack.c.h.b16 %v219
    %v478 = vunpack.c.l.b16 %v220
    %v479 = vunpack.c.h.b16 %v220
    %v480 = vunpack.c.l.b16 %v221
    %v481 = vunpack.c.h.b16 %v221
    %v482 = vunpack.c.l.b16 %v222
    %v483 = vunpack.c.h.b16 %v222
    %v484 = vunpack.c.l.b16 %v223
    %v485 = vunpack.c.h.b16 %v223
    %v486 = vunpack.c.l.b16 %v224
    %v487 = vunpack.c.h.b16 %v224
    %v488 = vunpack.c.l.b16 %v225
    %v489 = vunpack.c.h.b16 %v225
    %v490 = vunpack.c.l.b16 %v226
    %v491 = vunpack.c.h.b16 %v226
    %v492 = vunpack.c.l.b16 %v227
    %v493 = vunpack.c.h.b16 %v227
    %v494 = vunpack.c.l.b16 %v228
    %v495 = vunpack.c.h.b16 %v228
    %v496 = vunpack.c.l.b16 %v229
    %v497 = vunpack.c.h.b16 %v229
    %v498 = vunpack.c.l.b16 %v230
    %v499 = vunpack.c.h.b16 %v230
    %v500 = vunpack.c.l.b16 %v231
    %v501 = vunpack.c.h.b16 %v231
    %v502 = vunpack.c.l.b16 %v232
    %v503 = vunpack.c.h.b16 %v232
    %v504 = vunpack.c.l.b16 %v233
    %v505 = vunpack.c.h.b16 %v233
    %v506 = vunpack.c.l.b16 %v234
    %v507 = vunpack.c.h.b16 %v234
    %v508 = vunpack.c.l.b16 %v235
    %v509 = vunpack.c.h.b16 %v235
    %v510 = vunpack.c.l.b16 %v236
    %v511 = vunpack.c.h.b16 %v236
    %v512 = vunpack.c.l.b16 %v237
    %v513 = vunpack.c.h.b16 %v237
    %v514 = vunpack.c.l.b16 %v238
    %v515 = vunpack.c.h.b16 %v238
    %v516 = vunpack.c.l.b16 %v239
    %v517 = vunpack.c.h.b16 %v239
    %v518 = vunpack.c.l.b16 %v240
    %v519 = vunpack.c.h.b16 %v240
    %v520 = vunpack.c.l.b16 %v241
    %v521 = vunpack.c.h.b16 %v241
    %v522 = vunpack.c.l.b16 %v242
    %v523 = vunpack.c.h.b16 %v242
    %v524 = vunpack.c.l.b16 %v243
    %v525 = vunpack.c.h.b16 %v243
    %v526 = vunpack.c.l.b16 %v244
    %v527 = vunpack.c.h.b16 %v244
    %v528 = vunpack.c.l.b16 %v245
    %v529 = vunpack.c.h.b16 %v245
    %v530 = vunpack.c.l.b16 %v246
    %v531 = vunpack.c.h.b16 %v246
    %v532 = vunpack.c.l.b16 %v247
    %v533 = vunpack.c.h.b16 %v247
    %v534 = vunpack.c.l.b16 %v248
    %v535 = vunpack.c.h.b16 %v248
    %v536 = vunpack.c.l.b16 %v249
    %v537 = vunpack.c.h.b16 %v249
    %v538 = vunpack.c.l.b16 %v250
    %v539 = vunpack.c.h.b16 %v250
    %v540 = vunpack.c.l.b16 %v251
    %v541 = vunpack.c.h.b16 %v251
    %v542 = vunpack.c.l.b16 %v252
    %v543 = vunpack.c.h.b16 %v252
    %v544 = vunpack.c.l.b16 %v253
    %v545 = vunpack.c.h.b16 %v253
    %v546 = vunpack.c.l.b16 %v254
    %v547 = vunpack.c.h.b16 %v254
    %v548 = vunpack.c.l.b16 %v255
    %v549 = vunpack.c.h.b16 %v255
    %v550 = vunpack.c.l.b16 %v256
    %v551 = vunpack.c.h.b16 %v256
    %v552 = vunpack.c.l.b16 %v257
    %v553 = vunpack.c.h.b16 %v257
    %v554 = vunpack.c.l.b16 %v258
    %v555 = vunpack.c.h.b16 %v258
    %v556 = vunpack.c.l.b16 %v259
    %v557 = vunpack.c.h.b16 %v259
    %v558 = vunpack.c.l.b16 %v260
    %v559 = vunpack.c.h.b16 %v260
    %v560 = vunpack.c.l.b16 %v261
    %v561 = vunpack.c.h.b16 %v261
    %v562 = vunpack.c.l.b16 %v262
    %v563 = vunpack.c.h.b16 %v262
    %v564 = vunpack.c.l.b16 %v263
    %v565 = vunpack.c.h.b16 %v263
    %v566 = vunpack.c.l.b16 %v264
    %v567 = vunpack.c.h.b16 %v264
    %v568 = vunpack.c.l.b16 %v265
    %v569 = vunpack.c.h.b16 %v265
    %v570 = vunpack.c.l.b16 %v266
    %v571 = vunpack.c.h.b16 %v266
    %v572 = vunpack.c.l.b16 %v267
    %v573 = vunpack.c.h.b16 %v267
    %v574 = vunpack.c.l.b16 %v268
    %v575 = vunpack.c.h.b16 %v268
    %v576 = vunpack.c.l.b16 %v269
    %v577 = vunpack.c.h.b16 %v269
    %v578 = vunpack.c.l.b16 %v270
    %v579 = vunpack.c.h.b16 %v270
    %v580 = vunpack.c.l.b16 %v271
    %v581 = vunpack.c.h.b16 %v271
    %v582 = vunpack.c.l.b16 %v272
    %v583 = vunpack.c.h.b16 %v272
    %v584 = vunpack.c.l.b16 %v273
    %v585 = vunpack.c.h.b16 %v273
    %v586 = vunpack.c.l.b16 %v274
    %v587 = vunpack.c.h.b16 %v274
    %v588 = vunpack.c.l.b16 %v275
    %v589 = vunpack.c.h.b16 %v275
    %v590 = vunpack.c.l.b16 %v276
    %v591 = vunpack.c.h.b16 %v276
    %v592 = vunpack.c.l.b16 %v277
    %v593 = vunpack.c.h.b16 %v277
    %v594 = vunpack.c.l.b16 %v278
    %v595 = vunpack.c.h.b16 %v278
    %v596 = vunpack.c.l.b16 %v279
    %v597 = vunpack.c.h.b16 %v279
    %v598 = vunpack.c.l.b16 %v280
    %v599 = vunpack.c.h.b16 %v280
    %v600 = vunpack.c.l.b16 %v281
    %v601 = vunpack.c.h.b16 %v281
    %v602 = vunpack.c.l.b16 %v282
    %v603 = vunpack.c.h.b16 %v282
    %v604 = vunpack.c.l.b16 %v283
    %v605 = vunpack.c.h.b16 %v283
    %v606 = vunpack.c.l.b16 %v284
    %v607 = vunpack.c.h.b16 %v284
    %v608 = vunpack.c.l.b16 %v285
    %v609 = vunpack.c.h.b16 %v285
    %v610 = vunpack.c.l.b16 %v286
    %v611 = vunpack.c.h.b16 %v286
    %v612 = vunpack.c.l.b16 %v287
    %v613 = vunpack.c.h.b16 %v287
    %v614 = vunpack.c.l.b16 %v288
    %v615 = vunpack.c.h.b16 %v288
    %v616 = vunpack.c.l.b16 %v289
    %v617 = vunpack.c.h.b16 %v289
    %v618 = vunpack.c.l.b16 %v290
    %v619 = vunpack.c.h.b16 %v290
    %v620 = vunpack.c.l.b16 %v291
    %v621 = vunpack.c.h.b16 %v291
    %v622 = vunpack.c.l.b16 %v292
    %v623 = vunpack.c.h.b16 %v292
    %v624 = vunpack.c.l.b16 %v293
    %v625 = vunpack.c.h.b16 %v293
    %v626 = vunpack.c.l.b16 %v294
    %v627 = vunpack.c.h.b16 %v294
    %v628 = vunpack.c.l.b16 %v295
    %v629 = vunpack.c.h.b16 %v295
    %v630 = vunpack.c.l.b16 %v296
    %v631 = vunpack.c.h.b16 %v296
    %v632 = vunpack.c.l.b16 %v297
    %v633 = vunpack.c.h.b16 %v297
    %v634 = vunpack.c.l.b16 %v298
    %v635 = vunpack.c.h.b16 %v298
    %v636 = vunpack.c.l.b16 %v299
    %v637 = vunpack.c.h.b16 %v299
    %v638 = vunpack.c.l.b16 %v300
    %v639 = vunpack.c.h.b16 %v300
    %v640 = vunpack.c.l.b16 %v301
    %v641 = vunpack.c.h.b16 %v301
    %v642 = vunpack.c.l.b16 %v302
    %v643 = vunpack.c.h.b16 %v302
    %v644 = vunpack.c.l.b16 %v303
    %v645 = vunpack.c.h.b16 %v303
    %v646 = vunpack.c.l.b16 %v304
    %v647 = vunpack.c.h.b16 %v304
    %v648 = vunpack.c.l.b16 %v305
    %v649 = vunpack.c.h.b16 %v305
    %v650 = vunpack.c.l.b16 %v306
    %v651 = vunpack.c.h.b16 %v306
    %v652 = vunpack.c.l.b16 %v307
    %v653 = vunpack.c.h.b16 %v307
    %v654 = vunpack.c.l.b16 %v308
    %v655 = vunpack.c.h.b16 %v308
    %v656 = vunpack.c.l.b16 %v309
    %v657 = vunpack.c.h.b16 %v309
    %v658 = vunpack.c.l.b16 %v310
    %v659 = vunpack.c.h.b16 %v310
    %v660 = vunpack.c.l.b16 %v311
    %v661 = vunpack.c.h.b16 %v311
    %v662 = vunpack.c.l.b16 %v312
    %v663 = vunpack.c.h.b16 %v312
    %v664 = vunpack.c.l.b16 %v313
    %v665 = vunpack.c.h.b16 %v313
    %v666 = vunpack.c.l.b16 %v314
    %v667 = vunpack.c.h.b16 %v314
    %v668 = vunpack.c.l.b16 %v315
    %v669 = vunpack.c.h.b16 %v315
    %v670 = vunpack.c.l.b16 %v316
    %v671 = vunpack.c.h.b16 %v316
    %v672 = vunpack.c.l.b16 %v317
    %v673 = vunpack.c.h.b16 %v317
    %v674 = vunpack.c.l.b16 %v318
    %v675 = vunpack.c.h.b16 %v318
    %v676 = vunpack.c.l.b16 %v319
    %v677 = vunpack.c.h.b16 %v319
    %v678 = vunpack.c.l.b16 %v320
    %v679 = vunpack.c.h.b16 %v320
    %v680 = vunpack.c.l.b16 %v321
    %v681 = vunpack.c.h.b16 %v321
    %v682 = vunpack.c.l.b16 %v322
    %v683 = vunpack.c.h.b16 %v322
    %v684 = vunpack.c.l.b16 %v323
    %v685 = vunpack.c.h.b16 %v323
    %v686 = vunpack.c.l.b16 %v324
    %v687 = vunpack.c.h.b16 %v324
    %v688 = vunpack.c.l.b16 %v325
    %v689 = vunpack.c.h.b16 %v325
    %v690 = vunpack.c.l.b16 %v326
    %v691 = vunpack.c.h.b16 %v326
    %v692 = vunpack.c.l.b16 %v327
    %v693 = vunpack.c.h.b16 %v327
    %v694 = vunpack.c.l.b16 %v328
    %v695 = vunpack.c.h.b16 %v328
    %v696 = vunpack.c.l.b16 %v329
    %v697 = vunpack.c.h.b16 %v329
    %v698 = vunpack.c.l.b16 %v330
    %v699 = vunpack.c.h.b16 %v330
    %v700 = vunpack.c.l.b16 %v331
    %v701 = vunpack.c.h.b16 %v331
    %v702 = vunpack.c.l.b16 %v332
    %v703 = vunpack.c.h.b16 %v332
    %v704 = vunpack.c.l.b16 %v333
    %v705 = vunpack.c.h.b16 %v333
    %v706 = vunpack.c.l.b16 %v334
    %v707 = vunpack.c.h.b16 %v334
    %v708 = vunpack.c.l.b16 %v335
    %v709 = vunpack.c.h.b16 %v335
    %v710 = vunpack.c.l.b16 %v336
    %v711 = vunpack.c.h.b16 %v336
    %v712 = vunpack.c.l.b16 %v337
    %v713 = vunpack.c.h.b16 %v337
    %v714 = vunpack.c.l.b16 %v338
    %v715 = vunpack.c.h.b16 %v338
    %v716 = vunpack.c.l.b16 %v339
    %v717 = vunpack.c.h.b16 %v339
    %v718 = vunpack.c.l.b16 %v340
    %v719 = vunpack.c.h.b16 %v340
    %v720 = vunpack.c.l.b16 %v341
    %v721 = vunpack.c.h.b16 %v341
    %v722 = vunpack.c.l.b16 %v342
    %v723 = vunpack.c.h.b16 %v342
    %v724 = vunpack.c.l.b16 %v343
    %v725 = vunpack.c.h.b16 %v343
    %v726 = vunpack.c.l.b16 %v344
    %v727 = vunpack.c.h.b16 %v344
    %v728 = vunpack.c.l.b16 %v345
    %v729 = vunpack.c.h.b16 %v345
    %v730 = vpack.c.b16 %v478, %v474
    %v731 = vpack.c.b16 %v479, %v475
    %v732 = vpack.c.b16 %v480, %v476
    %v733 = vpack.c.b16 %v481, %v477
    %v734 = vpack.c.b16 %v486, %v482
    %v735 = vpack.c.b16 %v487, %v483
    %v736 = vpack.c.b16 %v488, %v484
    %v737 = vpack.c.b16 %v489, %v485
    %v738 = vpack.c.b16 %v494, %v490
    %v739 = vpack.c.b16 %v495, %v491
    %v740 = vpack.c.b16 %v496, %v492
    %v741 = vpack.c.b16 %v497, %v493
    %v742 = vpack.c.b16 %v502, %v498
    %v743 = vpack.c.b16 %v503, %v499
    %v744 = vpack.c.b16 %v504, %v500
    %v745 = vpack.c.b16 %v505, %v501
    %v746 = vpack.c.b16 %v510, %v506
    %v747 = vpack.c.b16 %v511, %v507
    %v748 = vpack.c.b16 %v512, %v508
    %v749 = vpack.c.b16 %v513, %v509
    %v750 = vpack.c.b16 %v518, %v514
    %v751 = vpack.c.b16 %v519, %v515
    %v752 = vpack.c.b16 %v520, %v516
    %v753 = vpack.c.b16 %v521, %v517
    %v754 = vpack.c.b16 %v526, %v522
    %v755 = vpack.c.b16 %v527, %v523
    %v756 = vpack.c.b16 %v528, %v524
    %v757 = vpack.c.b16 %v529, %v525
    %v758 = vpack.c.b16 %v534, %v530
    %v759 = vpack.c.b16 %v535, %v531
    %v760 = vpack.c.b16 %v536, %v532
    %v761 = vpack.c.b16 %v537, %v533
    %v762 = vpack.c.b16 %v542, %v538
    %v763 = vpack.c.b16 %v543, %v539
    %v764 = vpack.c.b16 %v544, %v540
    %v765 = vpack.c.b16 %v545, %v541
    %v766 = vpack.c.b16 %v550, %v546
    %v767 = vpack.c.b16 %v551, %v547
    %v768 = vpack.c.b16 %v552, %v548
    %v769 = vpack.c.b16 %v553, %v549
    %v770 = vpack.c.b16 %v558, %v554
    %v771 = vpack.c.b16 %v559, %v555
    %v772 = vpack.c.b16 %v560, %v556
    %v773 = vpack.c.b16 %v561, %v557
    %v774 = vpack.c.b16 %v566, %v562
    %v775 = vpack.c.b16 %v567, %v563
    %v776 = vpack.c.b16 %v568, %v564
    %v777 = vpack.c.b16 %v569, %v565
    %v778 = vpack.c.b16 %v574, %v570
    %v779 = vpack.c.b16 %v575, %v571
    %v780 = vpack.c.b16 %v576, %v572
    %v781 = vpack.c.b16 %v577, %v573
    %v782 = vpack.c.b16 %v582, %v578
    %v783 = vpack.c.b16 %v583, %v579
    %v784 = vpack.c.b16 %v584, %v580
    %v785 = vpack.c.b16 %v585, %v581
    %v786 = vpack.c.b16 %v590, %v586
    %v787 = vpack.c.b16 %v591, %v587
    %v788 = vpack.c.b16 %v592, %v588
    %v789 = vpack.c.b16 %v593, %v589
    %v790 = vpack.c.b16 %v598, %v594
    %v791 = vpack.c.b16 %v599, %v595
    %v792 = vpack.c.b16 %v600, %v596
    %v793 = vpack.c.b16 %v601, %v597
    %v794 = vpack.c.b16 %v606, %v602
    %v795 = vpack.c.b16 %v607, %v603
    %v796 = vpack.c.b16 %v608, %v604
    %v797 = vpack.c.b16 %v609, %v605
    %v798 = vpack.c.b16 %v614, %v610
    %v799 = vpack.c.b16 %v615, %v611
    %v800 = vpack.c.b16 %v616, %v612
    %v801 = vpack.c.b16 %v617, %v613
    %v802 = vpack.c.b16 %v622, %v618
    %v803 = vpack.c.b16 %v623, %v619
    %v804 = vpack.c.b16 %v624, %v620
    %v805 = vpack.c.b16 %v625, %v621
    %v806 = vpack.c.b16 %v630, %v626
    %v807 = vpack.c.b16 %v631, %v627
    %v808 = vpack.c.b16 %v632, %v628
    %v809 = vpack.c.b16 %v633, %v629
    %v810 = vpack.c.b16 %v638, %v634
    %v811 = vpack.c.b16 %v639, %v635
    %v812 = vpack.c.b16 %v640, %v636
    %v813 = vpack.c.b16 %v641, %v637
    %v814 = vpack.c.b16 %v646, %v642
    %v815 = vpack.c.b16 %v647, %v643
    %v816 = vpack.c.b16 %v648, %v644
    %v817 = vpack.c.b16 %v649, %v645
    %v818 = vpack.c.b16 %v654, %v650
    %v819 = vpack.c.b16 %v655, %v651
    %v820 = vpack.c.b16 %v656, %v652
    %v821 = vpack.c.b16 %v657, %v653
    %v822 = vpack.c.b16 %v662, %v658
    %v823 = vpack.c.b16 %v663, %v659
    %v824 = vpack.c.b16 %v664, %v660
    %v825 = vpack.c.b16 %v665, %v661
    %v826 = vpack.c.b16 %v670, %v666
    %v827 = vpack.c.b16 %v671, %v667
    %v828 = vpack.c.b16 %v672, %v668
    %v829 = vpack.c.b16 %v673, %v669
    %v830 = vpack.c.b16 %v678, %v674
    %v831 = vpack.c.b16 %v679, %v675
    %v832 = vpack.c.b16 %v680, %v676
    %v833 = vpack.c.b16 %v681, %v677
    %v834 = vpack.c.b16 %v686, %v682
    %v835 = vpack.c.b16 %v687, %v683
    %v836 = vpack.c.b16 %v688, %v684
    %v837 = vpack.c.b16 %v689, %v685
    %v838 = vpack.c.b16 %v694, %v690
    %v839 = vpack.c.b16 %v695, %v691
    %v840 = vpack.c.b16 %v696, %v692
    %v841 = vpack.c.b16 %v697, %v693
    %v842 = vpack.c.b16 %v702, %v698
    %v843 = vpack.c.b16 %v703, %v699
    %v844 = vpack.c.b16 %v704, %v700
    %v845 = vpack.c.b16 %v705, %v701
    %v846 = vpack.c.b16 %v710, %v706
    %v847 = vpack.c.b16 %v711, %v707
    %v848 = vpack.c.b16 %v712, %v708
    %v849 = vpack.c.b16 %v713, %v709
    %v850 = vpack.c.b16 %v718, %v714
    %v851 = vpack.c.b16 %v719, %v715
    %v852 = vpack.c.b16 %v720, %v716
    %v853 = vpack.c.b16 %v721, %v717
    %v854 = vpack.c.b16 %v726, %v722
    %v855 = vpack.c.b16 %v727, %v723
    %v856 = vpack.c.b16 %v728, %v724
    %v857 = vpack.c.b16 %v729, %v725
    %986 = vmatprep.subr.bf16.mxu0 %v759
    %987 = vmatpush1.bf16.msra.mxu0 %v758
    %988 = vmatprep.subr.bf16.mxu0 %v755
    %989 = vmatpush1.bf16.msra.mxu0 %v754
    %990 = vmatprep.subr.bf16.mxu0 %v751
    %991 = vmatpush1.bf16.msra.mxu0 %v750
    %992 = vmatprep.subr.bf16.mxu0 %v747
    %993 = vmatpush1.bf16.msra.mxu0 %v746
    %994 = vmatprep.subr.bf16.mxu0 %v743
    %995 = vmatpush1.bf16.msra.mxu0 %v742
    %996 = vmatprep.subr.bf16.mxu0 %v739
    %997 = vmatpush1.bf16.msra.mxu0 %v738
    %998 = vmatprep.subr.bf16.mxu0 %v735
    %999 = vmatpush1.bf16.msra.mxu0 %v734
    %1000 = vmatprep.subr.bf16.mxu0 %v731
    %1001 = vmatpush1.bf16.msra.mxu0 %v730
    %1002 = vmatprep.subr.bf16.mxu0 %v791
    %1003 = vmatpush2.bf16.msra.mxu0 %v790
    %1004 = vmatprep.subr.bf16.mxu0 %v787
    %1005 = vmatpush2.bf16.msra.mxu0 %v786
    %1006 = vmatprep.subr.bf16.mxu0 %v783
    %1007 = vmatpush2.bf16.msra.mxu0 %v782
    %1008 = vmatprep.subr.bf16.mxu0 %v779
    %1009 = vmatpush2.bf16.msra.mxu0 %v778
    %1010 = vmatprep.subr.bf16.mxu0 %v775
    %1011 = vmatpush2.bf16.msra.mxu0 %v774
    %1012 = vmatprep.subr.bf16.mxu0 %v771
    %1013 = vmatpush2.bf16.msra.mxu0 %v770
    %1014 = vmatprep.subr.bf16.mxu0 %v767
    %1015 = vmatpush2.bf16.msra.mxu0 %v766
    %1016 = vmatprep.subr.bf16.mxu0 %v763
    %1017 = vmatpush2.bf16.msra.mxu0 %v762
    %1018 = vmatprep.mubr.bf16.mxu0 %v215
    %1019 = vmatmul.mubr.bf16.gmra.mxu0 %v214
    %v1020 = vpop.f32.mrf.mxu0
    %v1021 = vadd.f32 0.0, %v1020
    %v1022 = vpop.f32.mrf.mxu0
    %v1023 = vadd.f32 0.0, %v1022
    %v1024 = vpop.f32.mrf.mxu0
    %v1025 = vpop.f32.mrf.mxu0
    %1026 = vdwg.mxu0
    %1027 = vmatprep.subr.bf16.mxu0 %v823
    %1028 = vmatpush1.bf16.msra.mxu0 %v822
    %1029 = vmatprep.subr.bf16.mxu0 %v819
    %1030 = vmatpush1.bf16.msra.mxu0 %v818
    %1031 = vmatprep.subr.bf16.mxu0 %v815
    %1032 = vmatpush1.bf16.msra.mxu0 %v814
    %1033 = vmatprep.subr.bf16.mxu0 %v811
    %1034 = vmatpush1.bf16.msra.mxu0 %v810
    %1035 = vmatprep.subr.bf16.mxu0 %v807
    %1036 = vmatpush1.bf16.msra.mxu0 %v806
    %1037 = vmatprep.subr.bf16.mxu0 %v803
    %1038 = vmatpush1.bf16.msra.mxu0 %v802
    %1039 = vmatprep.subr.bf16.mxu0 %v799
    %1040 = vmatpush1.bf16.msra.mxu0 %v798
    %1041 = vmatprep.subr.bf16.mxu0 %v795
    %1042 = vmatpush1.bf16.msra.mxu0 %v794
    %1043 = vmatprep.subr.bf16.mxu0 %v855
    %1044 = vmatpush2.bf16.msra.mxu0 %v854
    %1045 = vmatprep.subr.bf16.mxu0 %v851
    %1046 = vmatpush2.bf16.msra.mxu0 %v850
    %1047 = vmatprep.subr.bf16.mxu0 %v847
    %1048 = vmatpush2.bf16.msra.mxu0 %v846
    %1049 = vmatprep.subr.bf16.mxu0 %v843
    %1050 = vmatpush2.bf16.msra.mxu0 %v842
    %1051 = vmatprep.subr.bf16.mxu0 %v839
    %1052 = vmatpush2.bf16.msra.mxu0 %v838
    %1053 = vmatprep.subr.bf16.mxu0 %v835
    %1054 = vmatpush2.bf16.msra.mxu0 %v834
    %1055 = vmatprep.subr.bf16.mxu0 %v831
    %1056 = vmatpush2.bf16.msra.mxu0 %v830
    %1057 = vmatprep.subr.bf16.mxu0 %v827
    %1058 = vmatpush2.bf16.msra.mxu0 %v826
    %1059 = vmatprep.mubr.bf16.mxu0 %v217
    %1060 = vmatmul.mubr.bf16.gmra.mxu0 %v216
    %v1061 = vpop.f32.mrf.mxu0
    %v1062 = vadd.f32 %v1021, %v1061
    %v1063 = vpop.f32.mrf.mxu0
    %v1064 = vadd.f32 %v1023, %v1063
    %v1065 = vpop.f32.mrf.mxu0
    %v1066 = vpop.f32.mrf.mxu0
    %1067 = vdwg.mxu0
    %1068 = vmatprep.subr.bf16.mxu0 %v761
    %1069 = vmatpush1.bf16.msra.mxu0 %v760
    %1070 = vmatprep.subr.bf16.mxu0 %v757
    %1071 = vmatpush1.bf16.msra.mxu0 %v756
    %1072 = vmatprep.subr.bf16.mxu0 %v753
    %1073 = vmatpush1.bf16.msra.mxu0 %v752
    %1074 = vmatprep.subr.bf16.mxu0 %v749
    %1075 = vmatpush1.bf16.msra.mxu0 %v748
    %1076 = vmatprep.subr.bf16.mxu0 %v745
    %1077 = vmatpush1.bf16.msra.mxu0 %v744
    %1078 = vmatprep.subr.bf16.mxu0 %v741
    %1079 = vmatpush1.bf16.msra.mxu0 %v740
    %1080 = vmatprep.subr.bf16.mxu0 %v737
    %1081 = vmatpush1.bf16.msra.mxu0 %v736
    %1082 = vmatprep.subr.bf16.mxu0 %v733
    %1083 = vmatpush1.bf16.msra.mxu0 %v732
    %1084 = vmatprep.subr.bf16.mxu0 %v793
    %1085 = vmatpush2.bf16.msra.mxu0 %v792
    %1086 = vmatprep.subr.bf16.mxu0 %v789
    %1087 = vmatpush2.bf16.msra.mxu0 %v788
    %1088 = vmatprep.subr.bf16.mxu0 %v785
    %1089 = vmatpush2.bf16.msra.mxu0 %v784
    %1090 = vmatprep.subr.bf16.mxu0 %v781
    %1091 = vmatpush2.bf16.msra.mxu0 %v780
    %1092 = vmatprep.subr.bf16.mxu0 %v777
    %1093 = vmatpush2.bf16.msra.mxu0 %v776
    %1094 = vmatprep.subr.bf16.mxu0 %v773
    %1095 = vmatpush2.bf16.msra.mxu0 %v772
    %1096 = vmatprep.subr.bf16.mxu0 %v769
    %1097 = vmatpush2.bf16.msra.mxu0 %v768
    %1098 = vmatprep.subr.bf16.mxu0 %v765
    %1099 = vmatpush2.bf16.msra.mxu0 %v764
    %1100 = vmatprep.mubr.bf16.mxu0 %v215
    %1101 = vmatmul.mubr.bf16.gmra.mxu0 %v214
    %v1102 = vpop.f32.mrf.mxu0
    %v1103 = vadd.f32 0.0, %v1102
    %v1104 = vpop.f32.mrf.mxu0
    %v1105 = vadd.f32 0.0, %v1104
    %v1106 = vpop.f32.mrf.mxu0
    %v1107 = vpop.f32.mrf.mxu0
    %1108 = vdwg.mxu0
    %1109 = vmatprep.subr.bf16.mxu0 %v825
    %1110 = vmatpush1.bf16.msra.mxu0 %v824
    %1111 = vmatprep.subr.bf16.mxu0 %v821
    %1112 = vmatpush1.bf16.msra.mxu0 %v820
    %1113 = vmatprep.subr.bf16.mxu0 %v817
    %1114 = vmatpush1.bf16.msra.mxu0 %v816
    %1115 = vmatprep.subr.bf16.mxu0 %v813
    %1116 = vmatpush1.bf16.msra.mxu0 %v812
    %1117 = vmatprep.subr.bf16.mxu0 %v809
    %1118 = vmatpush1.bf16.msra.mxu0 %v808
    %1119 = vmatprep.subr.bf16.mxu0 %v805
    %1120 = vmatpush1.bf16.msra.mxu0 %v804
    %1121 = vmatprep.subr.bf16.mxu0 %v801
    %1122 = vmatpush1.bf16.msra.mxu0 %v800
    %1123 = vmatprep.subr.bf16.mxu0 %v797
    %1124 = vmatpush1.bf16.msra.mxu0 %v796
    %1125 = vmatprep.subr.bf16.mxu0 %v857
    %1126 = vmatpush2.bf16.msra.mxu0 %v856
    %1127 = vmatprep.subr.bf16.mxu0 %v853
    %1128 = vmatpush2.bf16.msra.mxu0 %v852
    %1129 = vmatprep.subr.bf16.mxu0 %v849
    %1130 = vmatpush2.bf16.msra.mxu0 %v848
    %1131 = vmatprep.subr.bf16.mxu0 %v845
    %1132 = vmatpush2.bf16.msra.mxu0 %v844
    %1133 = vmatprep.subr.bf16.mxu0 %v841
    %1134 = vmatpush2.bf16.msra.mxu0 %v840
    %1135 = vmatprep.subr.bf16.mxu0 %v837
    %1136 = vmatpush2.bf16.msra.mxu0 %v836
    %1137 = vmatprep.subr.bf16.mxu0 %v833
    %1138 = vmatpush2.bf16.msra.mxu0 %v832
    %1139 = vmatprep.subr.bf16.mxu0 %v829
    %1140 = vmatpush2.bf16.msra.mxu0 %v828
    %1141 = vmatprep.mubr.bf16.mxu0 %v217
    %1142 = vmatmul.mubr.bf16.gmra.mxu0 %v216
    %v1143 = vpop.f32.mrf.mxu0
    %v1144 = vadd.f32 %v1103, %v1143
    %v1145 = vpop.f32.mrf.mxu0
    %v1146 = vadd.f32 %v1105, %v1145
    %v1147 = vpop.f32.mrf.mxu0
    %v1148 = vpop.f32.mrf.mxu0
    %1149 = vdwg.mxu0
    %v1150 = vld [vmem:[#allocation5] sm:$0xf]
    %v1152 = vlaneseq
    %v1153 = vshrl.u32 %v1152, 7
    %v1154 = vsub.s32 0, %v1153
    %v1155 = vrot.slane %v1150, %v1154
    %v1156 = vlaneseq
    %v1157 = vshrl.u32 %v1156, 7
    %v1158 = vsub.s32 1, %v1157
    %v1159 = vrot.slane %v1150, %v1158
    %v1160 = vlaneseq
    %v1161 = vshrl.u32 %v1160, 7
    %v1162 = vsub.s32 2, %v1161
    %v1163 = vrot.slane %v1150, %v1162
    %v1164 = vlaneseq
    %v1165 = vshrl.u32 %v1164, 7
    %v1166 = vsub.s32 3, %v1165
    %v1167 = vrot.slane %v1150, %v1166
    %v1172 = vmul.f32 %v1062, %v1155
    %v1173 = vmul.f32 %v1064, %v1159
    %v1174 = vmul.f32 %v1144, %v1163
    %v1175 = vmul.f32 %v1146, %v1167
    %v1176 = vld [vmem:[#allocation7] sm:$0xf]
    %v1178 = vlaneseq
    %v1179 = vshrl.u32 %v1178, 7
    %v1180 = vsub.s32 0, %v1179
    %v1181 = vrot.slane %v1176, %v1180
    %v1182 = vlaneseq
    %v1183 = vshrl.u32 %v1182, 7
    %v1184 = vsub.s32 1, %v1183
    %v1185 = vrot.slane %v1176, %v1184
    %v1186 = vlaneseq
    %v1187 = vshrl.u32 %v1186, 7
    %v1188 = vsub.s32 2, %v1187
    %v1189 = vrot.slane %v1176, %v1188
    %v1190 = vlaneseq
    %v1191 = vshrl.u32 %v1190, 7
    %v1192 = vsub.s32 3, %v1191
    %v1193 = vrot.slane %v1176, %v1192
    %v1198 = vadd.f32 %v1172, %v1181
    %v1199 = vadd.f32 %v1173, %v1185
    %v1200 = vadd.f32 %v1174, %v1189
    %v1201 = vadd.f32 %v1175, %v1193
    %v1202 = vpack.c.bf16 %v1198, %v1198
    %v1203 = vpack.c.bf16 %v1199, %v1199
    %v1204 = vpack.c.bf16 %v1200, %v1200
    %v1205 = vpack.c.bf16 %v1201, %v1201
    %v1206 = vld [vmem:[#allocation8] sm:$0xff]
    %v1207 = vld [vmem:[#allocation8 + $0x8] sm:$0xff]
    %v1208 = vld [vmem:[#allocation8 + $0x10] sm:$0xff]
    %v1209 = vld [vmem:[#allocation8 + $0x18] sm:$0xff]
    %v1210 = vld [vmem:[#allocation8 + $0x20] sm:$0xff]
    %v1211 = vld [vmem:[#allocation8 + $0x28] sm:$0xff]
    %v1212 = vld [vmem:[#allocation8 + $0x30] sm:$0xff]
    %v1213 = vld [vmem:[#allocation8 + $0x38] sm:$0xff]
    %v1214 = vld [vmem:[#allocation8 + $0x40] sm:$0xff]
    %v1215 = vld [vmem:[#allocation8 + $0x48] sm:$0xff]
    %v1216 = vld [vmem:[#allocation8 + $0x50] sm:$0xff]
    %v1217 = vld [vmem:[#allocation8 + $0x58] sm:$0xff]
    %v1218 = vld [vmem:[#allocation8 + $0x60] sm:$0xff]
    %v1219 = vld [vmem:[#allocation8 + $0x68] sm:$0xff]
    %v1220 = vld [vmem:[#allocation8 + $0x70] sm:$0xff]
    %v1221 = vld [vmem:[#allocation8 + $0x78] sm:$0xff]
    %v1222 = vld [vmem:[#allocation8 + $0x80] sm:$0xff]
    %v1223 = vld [vmem:[#allocation8 + $0x88] sm:$0xff]
    %v1224 = vld [vmem:[#allocation8 + $0x90] sm:$0xff]
    %v1225 = vld [vmem:[#allocation8 + $0x98] sm:$0xff]
    %v1226 = vld [vmem:[#allocation8 + $0xa0] sm:$0xff]
    %v1227 = vld [vmem:[#allocation8 + $0xa8] sm:$0xff]
    %v1228 = vld [vmem:[#allocation8 + $0xb0] sm:$0xff]
    %v1229 = vld [vmem:[#allocation8 + $0xb8] sm:$0xff]
    %v1230 = vld [vmem:[#allocation8 + $0xc0] sm:$0xff]
    %v1231 = vld [vmem:[#allocation8 + $0xc8] sm:$0xff]
    %v1232 = vld [vmem:[#allocation8 + $0xd0] sm:$0xff]
    %v1233 = vld [vmem:[#allocation8 + $0xd8] sm:$0xff]
    %v1234 = vld [vmem:[#allocation8 + $0xe0] sm:$0xff]
    %v1235 = vld [vmem:[#allocation8 + $0xe8] sm:$0xff]
    %v1236 = vld [vmem:[#allocation8 + $0xf0] sm:$0xff]
    %v1237 = vld [vmem:[#allocation8 + $0xf8] sm:$0xff]
    %v1238 = vld [vmem:[#allocation8 + $0x100] sm:$0xff]
    %v1239 = vld [vmem:[#allocation8 + $0x108] sm:$0xff]
    %v1240 = vld [vmem:[#allocation8 + $0x110] sm:$0xff]
    %v1241 = vld [vmem:[#allocation8 + $0x118] sm:$0xff]
    %v1242 = vld [vmem:[#allocation8 + $0x120] sm:$0xff]
    %v1243 = vld [vmem:[#allocation8 + $0x128] sm:$0xff]
    %v1244 = vld [vmem:[#allocation8 + $0x130] sm:$0xff]
    %v1245 = vld [vmem:[#allocation8 + $0x138] sm:$0xff]
    %v1246 = vld [vmem:[#allocation8 + $0x140] sm:$0xff]
    %v1247 = vld [vmem:[#allocation8 + $0x148] sm:$0xff]
    %v1248 = vld [vmem:[#allocation8 + $0x150] sm:$0xff]
    %v1249 = vld [vmem:[#allocation8 + $0x158] sm:$0xff]
    %v1250 = vld [vmem:[#allocation8 + $0x160] sm:$0xff]
    %v1251 = vld [vmem:[#allocation8 + $0x168] sm:$0xff]
    %v1252 = vld [vmem:[#allocation8 + $0x170] sm:$0xff]
    %v1253 = vld [vmem:[#allocation8 + $0x178] sm:$0xff]
    %v1254 = vld [vmem:[#allocation8 + $0x180] sm:$0xff]
    %v1255 = vld [vmem:[#allocation8 + $0x188] sm:$0xff]
    %v1256 = vld [vmem:[#allocation8 + $0x190] sm:$0xff]
    %v1257 = vld [vmem:[#allocation8 + $0x198] sm:$0xff]
    %v1258 = vld [vmem:[#allocation8 + $0x1a0] sm:$0xff]
    %v1259 = vld [vmem:[#allocation8 + $0x1a8] sm:$0xff]
    %v1260 = vld [vmem:[#allocation8 + $0x1b0] sm:$0xff]
    %v1261 = vld [vmem:[#allocation8 + $0x1b8] sm:$0xff]
    %v1262 = vld [vmem:[#allocation8 + $0x1c0] sm:$0xff]
    %v1263 = vld [vmem:[#allocation8 + $0x1c8] sm:$0xff]
    %v1264 = vld [vmem:[#allocation8 + $0x1d0] sm:$0xff]
    %v1265 = vld [vmem:[#allocation8 + $0x1d8] sm:$0xff]
    %v1266 = vld [vmem:[#allocation8 + $0x1e0] sm:$0xff]
    %v1267 = vld [vmem:[#allocation8 + $0x1e8] sm:$0xff]
    %v1268 = vld [vmem:[#allocation8 + $0x1f0] sm:$0xff]
    %v1269 = vld [vmem:[#allocation8 + $0x1f8] sm:$0xff]
    %v1270 = vld [vmem:[#allocation8 + $0x200] sm:$0xff]
    %v1271 = vld [vmem:[#allocation8 + $0x208] sm:$0xff]
    %v1272 = vld [vmem:[#allocation8 + $0x210] sm:$0xff]
    %v1273 = vld [vmem:[#allocation8 + $0x218] sm:$0xff]
    %v1274 = vld [vmem:[#allocation8 + $0x220] sm:$0xff]
    %v1275 = vld [vmem:[#allocation8 + $0x228] sm:$0xff]
    %v1276 = vld [vmem:[#allocation8 + $0x230] sm:$0xff]
    %v1277 = vld [vmem:[#allocation8 + $0x238] sm:$0xff]
    %v1278 = vld [vmem:[#allocation8 + $0x240] sm:$0xff]
    %v1279 = vld [vmem:[#allocation8 + $0x248] sm:$0xff]
    %v1280 = vld [vmem:[#allocation8 + $0x250] sm:$0xff]
    %v1281 = vld [vmem:[#allocation8 + $0x258] sm:$0xff]
    %v1282 = vld [vmem:[#allocation8 + $0x260] sm:$0xff]
    %v1283 = vld [vmem:[#allocation8 + $0x268] sm:$0xff]
    %v1284 = vld [vmem:[#allocation8 + $0x270] sm:$0xff]
    %v1285 = vld [vmem:[#allocation8 + $0x278] sm:$0xff]
    %v1286 = vld [vmem:[#allocation8 + $0x280] sm:$0xff]
    %v1287 = vld [vmem:[#allocation8 + $0x288] sm:$0xff]
    %v1288 = vld [vmem:[#allocation8 + $0x290] sm:$0xff]
    %v1289 = vld [vmem:[#allocation8 + $0x298] sm:$0xff]
    %v1290 = vld [vmem:[#allocation8 + $0x2a0] sm:$0xff]
    %v1291 = vld [vmem:[#allocation8 + $0x2a8] sm:$0xff]
    %v1292 = vld [vmem:[#allocation8 + $0x2b0] sm:$0xff]
    %v1293 = vld [vmem:[#allocation8 + $0x2b8] sm:$0xff]
    %v1294 = vld [vmem:[#allocation8 + $0x2c0] sm:$0xff]
    %v1295 = vld [vmem:[#allocation8 + $0x2c8] sm:$0xff]
    %v1296 = vld [vmem:[#allocation8 + $0x2d0] sm:$0xff]
    %v1297 = vld [vmem:[#allocation8 + $0x2d8] sm:$0xff]
    %v1298 = vld [vmem:[#allocation8 + $0x2e0] sm:$0xff]
    %v1299 = vld [vmem:[#allocation8 + $0x2e8] sm:$0xff]
    %v1300 = vld [vmem:[#allocation8 + $0x2f0] sm:$0xff]
    %v1301 = vld [vmem:[#allocation8 + $0x2f8] sm:$0xff]
    %v1302 = vld [vmem:[#allocation8 + $0x300] sm:$0xff]
    %v1303 = vld [vmem:[#allocation8 + $0x308] sm:$0xff]
    %v1304 = vld [vmem:[#allocation8 + $0x310] sm:$0xff]
    %v1305 = vld [vmem:[#allocation8 + $0x318] sm:$0xff]
    %v1306 = vld [vmem:[#allocation8 + $0x320] sm:$0xff]
    %v1307 = vld [vmem:[#allocation8 + $0x328] sm:$0xff]
    %v1308 = vld [vmem:[#allocation8 + $0x330] sm:$0xff]
    %v1309 = vld [vmem:[#allocation8 + $0x338] sm:$0xff]
    %v1310 = vld [vmem:[#allocation8 + $0x340] sm:$0xff]
    %v1311 = vld [vmem:[#allocation8 + $0x348] sm:$0xff]
    %v1312 = vld [vmem:[#allocation8 + $0x350] sm:$0xff]
    %v1313 = vld [vmem:[#allocation8 + $0x358] sm:$0xff]
    %v1314 = vld [vmem:[#allocation8 + $0x360] sm:$0xff]
    %v1315 = vld [vmem:[#allocation8 + $0x368] sm:$0xff]
    %v1316 = vld [vmem:[#allocation8 + $0x370] sm:$0xff]
    %v1317 = vld [vmem:[#allocation8 + $0x378] sm:$0xff]
    %v1318 = vld [vmem:[#allocation8 + $0x380] sm:$0xff]
    %v1319 = vld [vmem:[#allocation8 + $0x388] sm:$0xff]
    %v1320 = vld [vmem:[#allocation8 + $0x390] sm:$0xff]
    %v1321 = vld [vmem:[#allocation8 + $0x398] sm:$0xff]
    %v1322 = vld [vmem:[#allocation8 + $0x3a0] sm:$0xff]
    %v1323 = vld [vmem:[#allocation8 + $0x3a8] sm:$0xff]
    %v1324 = vld [vmem:[#allocation8 + $0x3b0] sm:$0xff]
    %v1325 = vld [vmem:[#allocation8 + $0x3b8] sm:$0xff]
    %v1326 = vld [vmem:[#allocation8 + $0x3c0] sm:$0xff]
    %v1327 = vld [vmem:[#allocation8 + $0x3c8] sm:$0xff]
    %v1328 = vld [vmem:[#allocation8 + $0x3d0] sm:$0xff]
    %v1329 = vld [vmem:[#allocation8 + $0x3d8] sm:$0xff]
    %v1330 = vld [vmem:[#allocation8 + $0x3e0] sm:$0xff]
    %v1331 = vld [vmem:[#allocation8 + $0x3e8] sm:$0xff]
    %v1332 = vld [vmem:[#allocation8 + $0x3f0] sm:$0xff]
    %v1333 = vld [vmem:[#allocation8 + $0x3f8] sm:$0xff]
    %v1462 = vunpack.c.l.b16 %v1206
    %v1463 = vunpack.c.h.b16 %v1206
    %v1464 = vunpack.c.l.b16 %v1207
    %v1465 = vunpack.c.h.b16 %v1207
    %v1466 = vunpack.c.l.b16 %v1208
    %v1467 = vunpack.c.h.b16 %v1208
    %v1468 = vunpack.c.l.b16 %v1209
    %v1469 = vunpack.c.h.b16 %v1209
    %v1470 = vunpack.c.l.b16 %v1210
    %v1471 = vunpack.c.h.b16 %v1210
    %v1472 = vunpack.c.l.b16 %v1211
    %v1473 = vunpack.c.h.b16 %v1211
    %v1474 = vunpack.c.l.b16 %v1212
    %v1475 = vunpack.c.h.b16 %v1212
    %v1476 = vunpack.c.l.b16 %v1213
    %v1477 = vunpack.c.h.b16 %v1213
    %v1478 = vunpack.c.l.b16 %v1214
    %v1479 = vunpack.c.h.b16 %v1214
    %v1480 = vunpack.c.l.b16 %v1215
    %v1481 = vunpack.c.h.b16 %v1215
    %v1482 = vunpack.c.l.b16 %v1216
    %v1483 = vunpack.c.h.b16 %v1216
    %v1484 = vunpack.c.l.b16 %v1217
    %v1485 = vunpack.c.h.b16 %v1217
    %v1486 = vunpack.c.l.b16 %v1218
    %v1487 = vunpack.c.h.b16 %v1218
    %v1488 = vunpack.c.l.b16 %v1219
    %v1489 = vunpack.c.h.b16 %v1219
    %v1490 = vunpack.c.l.b16 %v1220
    %v1491 = vunpack.c.h.b16 %v1220
    %v1492 = vunpack.c.l.b16 %v1221
    %v1493 = vunpack.c.h.b16 %v1221
    %v1494 = vunpack.c.l.b16 %v1222
    %v1495 = vunpack.c.h.b16 %v1222
    %v1496 = vunpack.c.l.b16 %v1223
    %v1497 = vunpack.c.h.b16 %v1223
    %v1498 = vunpack.c.l.b16 %v1224
    %v1499 = vunpack.c.h.b16 %v1224
    %v1500 = vunpack.c.l.b16 %v1225
    %v1501 = vunpack.c.h.b16 %v1225
    %v1502 = vunpack.c.l.b16 %v1226
    %v1503 = vunpack.c.h.b16 %v1226
    %v1504 = vunpack.c.l.b16 %v1227
    %v1505 = vunpack.c.h.b16 %v1227
    %v1506 = vunpack.c.l.b16 %v1228
    %v1507 = vunpack.c.h.b16 %v1228
    %v1508 = vunpack.c.l.b16 %v1229
    %v1509 = vunpack.c.h.b16 %v1229
    %v1510 = vunpack.c.l.b16 %v1230
    %v1511 = vunpack.c.h.b16 %v1230
    %v1512 = vunpack.c.l.b16 %v1231
    %v1513 = vunpack.c.h.b16 %v1231
    %v1514 = vunpack.c.l.b16 %v1232
    %v1515 = vunpack.c.h.b16 %v1232
    %v1516 = vunpack.c.l.b16 %v1233
    %v1517 = vunpack.c.h.b16 %v1233
    %v1518 = vunpack.c.l.b16 %v1234
    %v1519 = vunpack.c.h.b16 %v1234
    %v1520 = vunpack.c.l.b16 %v1235
    %v1521 = vunpack.c.h.b16 %v1235
    %v1522 = vunpack.c.l.b16 %v1236
    %v1523 = vunpack.c.h.b16 %v1236
    %v1524 = vunpack.c.l.b16 %v1237
    %v1525 = vunpack.c.h.b16 %v1237
    %v1526 = vunpack.c.l.b16 %v1238
    %v1527 = vunpack.c.h.b16 %v1238
    %v1528 = vunpack.c.l.b16 %v1239
    %v1529 = vunpack.c.h.b16 %v1239
    %v1530 = vunpack.c.l.b16 %v1240
    %v1531 = vunpack.c.h.b16 %v1240
    %v1532 = vunpack.c.l.b16 %v1241
    %v1533 = vunpack.c.h.b16 %v1241
    %v1534 = vunpack.c.l.b16 %v1242
    %v1535 = vunpack.c.h.b16 %v1242
    %v1536 = vunpack.c.l.b16 %v1243
    %v1537 = vunpack.c.h.b16 %v1243
    %v1538 = vunpack.c.l.b16 %v1244
    %v1539 = vunpack.c.h.b16 %v1244
    %v1540 = vunpack.c.l.b16 %v1245
    %v1541 = vunpack.c.h.b16 %v1245
    %v1542 = vunpack.c.l.b16 %v1246
    %v1543 = vunpack.c.h.b16 %v1246
    %v1544 = vunpack.c.l.b16 %v1247
    %v1545 = vunpack.c.h.b16 %v1247
    %v1546 = vunpack.c.l.b16 %v1248
    %v1547 = vunpack.c.h.b16 %v1248
    %v1548 = vunpack.c.l.b16 %v1249
    %v1549 = vunpack.c.h.b16 %v1249
    %v1550 = vunpack.c.l.b16 %v1250
    %v1551 = vunpack.c.h.b16 %v1250
    %v1552 = vunpack.c.l.b16 %v1251
    %v1553 = vunpack.c.h.b16 %v1251
    %v1554 = vunpack.c.l.b16 %v1252
    %v1555 = vunpack.c.h.b16 %v1252
    %v1556 = vunpack.c.l.b16 %v1253
    %v1557 = vunpack.c.h.b16 %v1253
    %v1558 = vunpack.c.l.b16 %v1254
    %v1559 = vunpack.c.h.b16 %v1254
    %v1560 = vunpack.c.l.b16 %v1255
    %v1561 = vunpack.c.h.b16 %v1255
    %v1562 = vunpack.c.l.b16 %v1256
    %v1563 = vunpack.c.h.b16 %v1256
    %v1564 = vunpack.c.l.b16 %v1257
    %v1565 = vunpack.c.h.b16 %v1257
    %v1566 = vunpack.c.l.b16 %v1258
    %v1567 = vunpack.c.h.b16 %v1258
    %v1568 = vunpack.c.l.b16 %v1259
    %v1569 = vunpack.c.h.b16 %v1259
    %v1570 = vunpack.c.l.b16 %v1260
    %v1571 = vunpack.c.h.b16 %v1260
    %v1572 = vunpack.c.l.b16 %v1261
    %v1573 = vunpack.c.h.b16 %v1261
    %v1574 = vunpack.c.l.b16 %v1262
    %v1575 = vunpack.c.h.b16 %v1262
    %v1576 = vunpack.c.l.b16 %v1263
    %v1577 = vunpack.c.h.b16 %v1263
    %v1578 = vunpack.c.l.b16 %v1264
    %v1579 = vunpack.c.h.b16 %v1264
    %v1580 = vunpack.c.l.b16 %v1265
    %v1581 = vunpack.c.h.b16 %v1265
    %v1582 = vunpack.c.l.b16 %v1266
    %v1583 = vunpack.c.h.b16 %v1266
    %v1584 = vunpack.c.l.b16 %v1267
    %v1585 = vunpack.c.h.b16 %v1267
    %v1586 = vunpack.c.l.b16 %v1268
    %v1587 = vunpack.c.h.b16 %v1268
    %v1588 = vunpack.c.l.b16 %v1269
    %v1589 = vunpack.c.h.b16 %v1269
    %v1590 = vunpack.c.l.b16 %v1270
    %v1591 = vunpack.c.h.b16 %v1270
    %v1592 = vunpack.c.l.b16 %v1271
    %v1593 = vunpack.c.h.b16 %v1271
    %v1594 = vunpack.c.l.b16 %v1272
    %v1595 = vunpack.c.h.b16 %v1272
    %v1596 = vunpack.c.l.b16 %v1273
    %v1597 = vunpack.c.h.b16 %v1273
    %v1598 = vunpack.c.l.b16 %v1274
    %v1599 = vunpack.c.h.b16 %v1274
    %v1600 = vunpack.c.l.b16 %v1275
    %v1601 = vunpack.c.h.b16 %v1275
    %v1602 = vunpack.c.l.b16 %v1276
    %v1603 = vunpack.c.h.b16 %v1276
    %v1604 = vunpack.c.l.b16 %v1277
    %v1605 = vunpack.c.h.b16 %v1277
    %v1606 = vunpack.c.l.b16 %v1278
    %v1607 = vunpack.c.h.b16 %v1278
    %v1608 = vunpack.c.l.b16 %v1279
    %v1609 = vunpack.c.h.b16 %v1279
    %v1610 = vunpack.c.l.b16 %v1280
    %v1611 = vunpack.c.h.b16 %v1280
    %v1612 = vunpack.c.l.b16 %v1281
    %v1613 = vunpack.c.h.b16 %v1281
    %v1614 = vunpack.c.l.b16 %v1282
    %v1615 = vunpack.c.h.b16 %v1282
    %v1616 = vunpack.c.l.b16 %v1283
    %v1617 = vunpack.c.h.b16 %v1283
    %v1618 = vunpack.c.l.b16 %v1284
    %v1619 = vunpack.c.h.b16 %v1284
    %v1620 = vunpack.c.l.b16 %v1285
    %v1621 = vunpack.c.h.b16 %v1285
    %v1622 = vunpack.c.l.b16 %v1286
    %v1623 = vunpack.c.h.b16 %v1286
    %v1624 = vunpack.c.l.b16 %v1287
    %v1625 = vunpack.c.h.b16 %v1287
    %v1626 = vunpack.c.l.b16 %v1288
    %v1627 = vunpack.c.h.b16 %v1288
    %v1628 = vunpack.c.l.b16 %v1289
    %v1629 = vunpack.c.h.b16 %v1289
    %v1630 = vunpack.c.l.b16 %v1290
    %v1631 = vunpack.c.h.b16 %v1290
    %v1632 = vunpack.c.l.b16 %v1291
    %v1633 = vunpack.c.h.b16 %v1291
    %v1634 = vunpack.c.l.b16 %v1292
    %v1635 = vunpack.c.h.b16 %v1292
    %v1636 = vunpack.c.l.b16 %v1293
    %v1637 = vunpack.c.h.b16 %v1293
    %v1638 = vunpack.c.l.b16 %v1294
    %v1639 = vunpack.c.h.b16 %v1294
    %v1640 = vunpack.c.l.b16 %v1295
    %v1641 = vunpack.c.h.b16 %v1295
    %v1642 = vunpack.c.l.b16 %v1296
    %v1643 = vunpack.c.h.b16 %v1296
    %v1644 = vunpack.c.l.b16 %v1297
    %v1645 = vunpack.c.h.b16 %v1297
    %v1646 = vunpack.c.l.b16 %v1298
    %v1647 = vunpack.c.h.b16 %v1298
    %v1648 = vunpack.c.l.b16 %v1299
    %v1649 = vunpack.c.h.b16 %v1299
    %v1650 = vunpack.c.l.b16 %v1300
    %v1651 = vunpack.c.h.b16 %v1300
    %v1652 = vunpack.c.l.b16 %v1301
    %v1653 = vunpack.c.h.b16 %v1301
    %v1654 = vunpack.c.l.b16 %v1302
    %v1655 = vunpack.c.h.b16 %v1302
    %v1656 = vunpack.c.l.b16 %v1303
    %v1657 = vunpack.c.h.b16 %v1303
    %v1658 = vunpack.c.l.b16 %v1304
    %v1659 = vunpack.c.h.b16 %v1304
    %v1660 = vunpack.c.l.b16 %v1305
    %v1661 = vunpack.c.h.b16 %v1305
    %v1662 = vunpack.c.l.b16 %v1306
    %v1663 = vunpack.c.h.b16 %v1306
    %v1664 = vunpack.c.l.b16 %v1307
    %v1665 = vunpack.c.h.b16 %v1307
    %v1666 = vunpack.c.l.b16 %v1308
    %v1667 = vunpack.c.h.b16 %v1308
    %v1668 = vunpack.c.l.b16 %v1309
    %v1669 = vunpack.c.h.b16 %v1309
    %v1670 = vunpack.c.l.b16 %v1310
    %v1671 = vunpack.c.h.b16 %v1310
    %v1672 = vunpack.c.l.b16 %v1311
    %v1673 = vunpack.c.h.b16 %v1311
    %v1674 = vunpack.c.l.b16 %v1312
    %v1675 = vunpack.c.h.b16 %v1312
    %v1676 = vunpack.c.l.b16 %v1313
    %v1677 = vunpack.c.h.b16 %v1313
    %v1678 = vunpack.c.l.b16 %v1314
    %v1679 = vunpack.c.h.b16 %v1314
    %v1680 = vunpack.c.l.b16 %v1315
    %v1681 = vunpack.c.h.b16 %v1315
    %v1682 = vunpack.c.l.b16 %v1316
    %v1683 = vunpack.c.h.b16 %v1316
    %v1684 = vunpack.c.l.b16 %v1317
    %v1685 = vunpack.c.h.b16 %v1317
    %v1686 = vunpack.c.l.b16 %v1318
    %v1687 = vunpack.c.h.b16 %v1318
    %v1688 = vunpack.c.l.b16 %v1319
    %v1689 = vunpack.c.h.b16 %v1319
    %v1690 = vunpack.c.l.b16 %v1320
    %v1691 = vunpack.c.h.b16 %v1320
    %v1692 = vunpack.c.l.b16 %v1321
    %v1693 = vunpack.c.h.b16 %v1321
    %v1694 = vunpack.c.l.b16 %v1322
    %v1695 = vunpack.c.h.b16 %v1322
    %v1696 = vunpack.c.l.b16 %v1323
    %v1697 = vunpack.c.h.b16 %v1323
    %v1698 = vunpack.c.l.b16 %v1324
    %v1699 = vunpack.c.h.b16 %v1324
    %v1700 = vunpack.c.l.b16 %v1325
    %v1701 = vunpack.c.h.b16 %v1325
    %v1702 = vunpack.c.l.b16 %v1326
    %v1703 = vunpack.c.h.b16 %v1326
    %v1704 = vunpack.c.l.b16 %v1327
    %v1705 = vunpack.c.h.b16 %v1327
    %v1706 = vunpack.c.l.b16 %v1328
    %v1707 = vunpack.c.h.b16 %v1328
    %v1708 = vunpack.c.l.b16 %v1329
    %v1709 = vunpack.c.h.b16 %v1329
    %v1710 = vunpack.c.l.b16 %v1330
    %v1711 = vunpack.c.h.b16 %v1330
    %v1712 = vunpack.c.l.b16 %v1331
    %v1713 = vunpack.c.h.b16 %v1331
    %v1714 = vunpack.c.l.b16 %v1332
    %v1715 = vunpack.c.h.b16 %v1332
    %v1716 = vunpack.c.l.b16 %v1333
    %v1717 = vunpack.c.h.b16 %v1333
    %v1718 = vpack.c.b16 %v1466, %v1462
    %v1719 = vpack.c.b16 %v1467, %v1463
    %v1720 = vpack.c.b16 %v1468, %v1464
    %v1721 = vpack.c.b16 %v1469, %v1465
    %v1722 = vpack.c.b16 %v1474, %v1470
    %v1723 = vpack.c.b16 %v1475, %v1471
    %v1724 = vpack.c.b16 %v1476, %v1472
    %v1725 = vpack.c.b16 %v1477, %v1473
    %v1726 = vpack.c.b16 %v1482, %v1478
    %v1727 = vpack.c.b16 %v1483, %v1479
    %v1728 = vpack.c.b16 %v1484, %v1480
    %v1729 = vpack.c.b16 %v1485, %v1481
    %v1730 = vpack.c.b16 %v1490, %v1486
    %v1731 = vpack.c.b16 %v1491, %v1487
    %v1732 = vpack.c.b16 %v1492, %v1488
    %v1733 = vpack.c.b16 %v1493, %v1489
    %v1734 = vpack.c.b16 %v1498, %v1494
    %v1735 = vpack.c.b16 %v1499, %v1495
    %v1736 = vpack.c.b16 %v1500, %v1496
    %v1737 = vpack.c.b16 %v1501, %v1497
    %v1738 = vpack.c.b16 %v1506, %v1502
    %v1739 = vpack.c.b16 %v1507, %v1503
    %v1740 = vpack.c.b16 %v1508, %v1504
    %v1741 = vpack.c.b16 %v1509, %v1505
    %v1742 = vpack.c.b16 %v1514, %v1510
    %v1743 = vpack.c.b16 %v1515, %v1511
    %v1744 = vpack.c.b16 %v1516, %v1512
    %v1745 = vpack.c.b16 %v1517, %v1513
    %v1746 = vpack.c.b16 %v1522, %v1518
    %v1747 = vpack.c.b16 %v1523, %v1519
    %v1748 = vpack.c.b16 %v1524, %v1520
    %v1749 = vpack.c.b16 %v1525, %v1521
    %v1750 = vpack.c.b16 %v1530, %v1526
    %v1751 = vpack.c.b16 %v1531, %v1527
    %v1752 = vpack.c.b16 %v1532, %v1528
    %v1753 = vpack.c.b16 %v1533, %v1529
    %v1754 = vpack.c.b16 %v1538, %v1534
    %v1755 = vpack.c.b16 %v1539, %v1535
    %v1756 = vpack.c.b16 %v1540, %v1536
    %v1757 = vpack.c.b16 %v1541, %v1537
    %v1758 = vpack.c.b16 %v1546, %v1542
    %v1759 = vpack.c.b16 %v1547, %v1543
    %v1760 = vpack.c.b16 %v1548, %v1544
    %v1761 = vpack.c.b16 %v1549, %v1545
    %v1762 = vpack.c.b16 %v1554, %v1550
    %v1763 = vpack.c.b16 %v1555, %v1551
    %v1764 = vpack.c.b16 %v1556, %v1552
    %v1765 = vpack.c.b16 %v1557, %v1553
    %v1766 = vpack.c.b16 %v1562, %v1558
    %v1767 = vpack.c.b16 %v1563, %v1559
    %v1768 = vpack.c.b16 %v1564, %v1560
    %v1769 = vpack.c.b16 %v1565, %v1561
    %v1770 = vpack.c.b16 %v1570, %v1566
    %v1771 = vpack.c.b16 %v1571, %v1567
    %v1772 = vpack.c.b16 %v1572, %v1568
    %v1773 = vpack.c.b16 %v1573, %v1569
    %v1774 = vpack.c.b16 %v1578, %v1574
    %v1775 = vpack.c.b16 %v1579, %v1575
    %v1776 = vpack.c.b16 %v1580, %v1576
    %v1777 = vpack.c.b16 %v1581, %v1577
    %v1778 = vpack.c.b16 %v1586, %v1582
    %v1779 = vpack.c.b16 %v1587, %v1583
    %v1780 = vpack.c.b16 %v1588, %v1584
    %v1781 = vpack.c.b16 %v1589, %v1585
    %v1782 = vpack.c.b16 %v1594, %v1590
    %v1783 = vpack.c.b16 %v1595, %v1591
    %v1784 = vpack.c.b16 %v1596, %v1592
    %v1785 = vpack.c.b16 %v1597, %v1593
    %v1786 = vpack.c.b16 %v1602, %v1598
    %v1787 = vpack.c.b16 %v1603, %v1599
    %v1788 = vpack.c.b16 %v1604, %v1600
    %v1789 = vpack.c.b16 %v1605, %v1601
    %v1790 = vpack.c.b16 %v1610, %v1606
    %v1791 = vpack.c.b16 %v1611, %v1607
    %v1792 = vpack.c.b16 %v1612, %v1608
    %v1793 = vpack.c.b16 %v1613, %v1609
    %v1794 = vpack.c.b16 %v1618, %v1614
    %v1795 = vpack.c.b16 %v1619, %v1615
    %v1796 = vpack.c.b16 %v1620, %v1616
    %v1797 = vpack.c.b16 %v1621, %v1617
    %v1798 = vpack.c.b16 %v1626, %v1622
    %v1799 = vpack.c.b16 %v1627, %v1623
    %v1800 = vpack.c.b16 %v1628, %v1624
    %v1801 = vpack.c.b16 %v1629, %v1625
    %v1802 = vpack.c.b16 %v1634, %v1630
    %v1803 = vpack.c.b16 %v1635, %v1631
    %v1804 = vpack.c.b16 %v1636, %v1632
    %v1805 = vpack.c.b16 %v1637, %v1633
    %v1806 = vpack.c.b16 %v1642, %v1638
    %v1807 = vpack.c.b16 %v1643, %v1639
    %v1808 = vpack.c.b16 %v1644, %v1640
    %v1809 = vpack.c.b16 %v1645, %v1641
    %v1810 = vpack.c.b16 %v1650, %v1646
    %v1811 = vpack.c.b16 %v1651, %v1647
    %v1812 = vpack.c.b16 %v1652, %v1648
    %v1813 = vpack.c.b16 %v1653, %v1649
    %v1814 = vpack.c.b16 %v1658, %v1654
    %v1815 = vpack.c.b16 %v1659, %v1655
    %v1816 = vpack.c.b16 %v1660, %v1656
    %v1817 = vpack.c.b16 %v1661, %v1657
    %v1818 = vpack.c.b16 %v1666, %v1662
    %v1819 = vpack.c.b16 %v1667, %v1663
    %v1820 = vpack.c.b16 %v1668, %v1664
    %v1821 = vpack.c.b16 %v1669, %v1665
    %v1822 = vpack.c.b16 %v1674, %v1670
    %v1823 = vpack.c.b16 %v1675, %v1671
    %v1824 = vpack.c.b16 %v1676, %v1672
    %v1825 = vpack.c.b16 %v1677, %v1673
    %v1826 = vpack.c.b16 %v1682, %v1678
    %v1827 = vpack.c.b16 %v1683, %v1679
    %v1828 = vpack.c.b16 %v1684, %v1680
    %v1829 = vpack.c.b16 %v1685, %v1681
    %v1830 = vpack.c.b16 %v1690, %v1686
    %v1831 = vpack.c.b16 %v1691, %v1687
    %v1832 = vpack.c.b16 %v1692, %v1688
    %v1833 = vpack.c.b16 %v1693, %v1689
    %v1834 = vpack.c.b16 %v1698, %v1694
    %v1835 = vpack.c.b16 %v1699, %v1695
    %v1836 = vpack.c.b16 %v1700, %v1696
    %v1837 = vpack.c.b16 %v1701, %v1697
    %v1838 = vpack.c.b16 %v1706, %v1702
    %v1839 = vpack.c.b16 %v1707, %v1703
    %v1840 = vpack.c.b16 %v1708, %v1704
    %v1841 = vpack.c.b16 %v1709, %v1705
    %v1842 = vpack.c.b16 %v1714, %v1710
    %v1843 = vpack.c.b16 %v1715, %v1711
    %v1844 = vpack.c.b16 %v1716, %v1712
    %v1845 = vpack.c.b16 %v1717, %v1713
    %1974 = vmatprep.subr.bf16.mxu0 %v1747
    %1975 = vmatpush1.bf16.msra.mxu0 %v1746
    %1976 = vmatprep.subr.bf16.mxu0 %v1743
    %1977 = vmatpush1.bf16.msra.mxu0 %v1742
    %1978 = vmatprep.subr.bf16.mxu0 %v1739
    %1979 = vmatpush1.bf16.msra.mxu0 %v1738
    %1980 = vmatprep.subr.bf16.mxu0 %v1735
    %1981 = vmatpush1.bf16.msra.mxu0 %v1734
    %1982 = vmatprep.subr.bf16.mxu0 %v1731
    %1983 = vmatpush1.bf16.msra.mxu0 %v1730
    %1984 = vmatprep.subr.bf16.mxu0 %v1727
    %1985 = vmatpush1.bf16.msra.mxu0 %v1726
    %1986 = vmatprep.subr.bf16.mxu0 %v1723
    %1987 = vmatpush1.bf16.msra.mxu0 %v1722
    %1988 = vmatprep.subr.bf16.mxu0 %v1719
    %1989 = vmatpush1.bf16.msra.mxu0 %v1718
    %1990 = vmatprep.subr.bf16.mxu0 %v1779
    %1991 = vmatpush2.bf16.msra.mxu0 %v1778
    %1992 = vmatprep.subr.bf16.mxu0 %v1775
    %1993 = vmatpush2.bf16.msra.mxu0 %v1774
    %1994 = vmatprep.subr.bf16.mxu0 %v1771
    %1995 = vmatpush2.bf16.msra.mxu0 %v1770
    %1996 = vmatprep.subr.bf16.mxu0 %v1767
    %1997 = vmatpush2.bf16.msra.mxu0 %v1766
    %1998 = vmatprep.subr.bf16.mxu0 %v1763
    %1999 = vmatpush2.bf16.msra.mxu0 %v1762
    %2000 = vmatprep.subr.bf16.mxu0 %v1759
    %2001 = vmatpush2.bf16.msra.mxu0 %v1758
    %2002 = vmatprep.subr.bf16.mxu0 %v1755
    %2003 = vmatpush2.bf16.msra.mxu0 %v1754
    %2004 = vmatprep.subr.bf16.mxu0 %v1751
    %2005 = vmatpush2.bf16.msra.mxu0 %v1750
    %2006 = vmatprep.mubr.bf16.mxu0 %v1203
    %2007 = vmatmul.mubr.bf16.gmra.mxu0 %v1202
    %v2008 = vpop.f32.mrf.mxu0
    %v2009 = vadd.f32 0.0, %v2008
    %v2010 = vpop.f32.mrf.mxu0
    %v2011 = vadd.f32 0.0, %v2010
    %v2012 = vpop.f32.mrf.mxu0
    %v2013 = vpop.f32.mrf.mxu0
    %2014 = vdwg.mxu0
    %2015 = vmatprep.subr.bf16.mxu0 %v1811
    %2016 = vmatpush1.bf16.msra.mxu0 %v1810
    %2017 = vmatprep.subr.bf16.mxu0 %v1807
    %2018 = vmatpush1.bf16.msra.mxu0 %v1806
    %2019 = vmatprep.subr.bf16.mxu0 %v1803
    %2020 = vmatpush1.bf16.msra.mxu0 %v1802
    %2021 = vmatprep.subr.bf16.mxu0 %v1799
    %2022 = vmatpush1.bf16.msra.mxu0 %v1798
    %2023 = vmatprep.subr.bf16.mxu0 %v1795
    %2024 = vmatpush1.bf16.msra.mxu0 %v1794
    %2025 = vmatprep.subr.bf16.mxu0 %v1791
    %2026 = vmatpush1.bf16.msra.mxu0 %v1790
    %2027 = vmatprep.subr.bf16.mxu0 %v1787
    %2028 = vmatpush1.bf16.msra.mxu0 %v1786
    %2029 = vmatprep.subr.bf16.mxu0 %v1783
    %2030 = vmatpush1.bf16.msra.mxu0 %v1782
    %2031 = vmatprep.subr.bf16.mxu0 %v1843
    %2032 = vmatpush2.bf16.msra.mxu0 %v1842
    %2033 = vmatprep.subr.bf16.mxu0 %v1839
    %2034 = vmatpush2.bf16.msra.mxu0 %v1838
    %2035 = vmatprep.subr.bf16.mxu0 %v1835
    %2036 = vmatpush2.bf16.msra.mxu0 %v1834
    %2037 = vmatprep.subr.bf16.mxu0 %v1831
    %2038 = vmatpush2.bf16.msra.mxu0 %v1830
    %2039 = vmatprep.subr.bf16.mxu0 %v1827
    %2040 = vmatpush2.bf16.msra.mxu0 %v1826
    %2041 = vmatprep.subr.bf16.mxu0 %v1823
    %2042 = vmatpush2.bf16.msra.mxu0 %v1822
    %2043 = vmatprep.subr.bf16.mxu0 %v1819
    %2044 = vmatpush2.bf16.msra.mxu0 %v1818
    %2045 = vmatprep.subr.bf16.mxu0 %v1815
    %2046 = vmatpush2.bf16.msra.mxu0 %v1814
    %2047 = vmatprep.mubr.bf16.mxu0 %v1205
    %2048 = vmatmul.mubr.bf16.gmra.mxu0 %v1204
    %v2049 = vpop.f32.mrf.mxu0
    %v2050 = vadd.f32 %v2009, %v2049
    %v2051 = vpop.f32.mrf.mxu0
    %v2052 = vadd.f32 %v2011, %v2051
    %v2053 = vpop.f32.mrf.mxu0
    %v2054 = vpop.f32.mrf.mxu0
    %2055 = vdwg.mxu0
    %2056 = vmatprep.subr.bf16.mxu0 %v1749
    %2057 = vmatpush1.bf16.msra.mxu0 %v1748
    %2058 = vmatprep.subr.bf16.mxu0 %v1745
    %2059 = vmatpush1.bf16.msra.mxu0 %v1744
    %2060 = vmatprep.subr.bf16.mxu0 %v1741
    %2061 = vmatpush1.bf16.msra.mxu0 %v1740
    %2062 = vmatprep.subr.bf16.mxu0 %v1737
    %2063 = vmatpush1.bf16.msra.mxu0 %v1736
    %2064 = vmatprep.subr.bf16.mxu0 %v1733
    %2065 = vmatpush1.bf16.msra.mxu0 %v1732
    %2066 = vmatprep.subr.bf16.mxu0 %v1729
    %2067 = vmatpush1.bf16.msra.mxu0 %v1728
    %2068 = vmatprep.subr.bf16.mxu0 %v1725
    %2069 = vmatpush1.bf16.msra.mxu0 %v1724
    %2070 = vmatprep.subr.bf16.mxu0 %v1721
    %2071 = vmatpush1.bf16.msra.mxu0 %v1720
    %2072 = vmatprep.subr.bf16.mxu0 %v1781
    %2073 = vmatpush2.bf16.msra.mxu0 %v1780
    %2074 = vmatprep.subr.bf16.mxu0 %v1777
    %2075 = vmatpush2.bf16.msra.mxu0 %v1776
    %2076 = vmatprep.subr.bf16.mxu0 %v1773
    %2077 = vmatpush2.bf16.msra.mxu0 %v1772
    %2078 = vmatprep.subr.bf16.mxu0 %v1769
    %2079 = vmatpush2.bf16.msra.mxu0 %v1768
    %2080 = vmatprep.subr.bf16.mxu0 %v1765
    %2081 = vmatpush2.bf16.msra.mxu0 %v1764
    %2082 = vmatprep.subr.bf16.mxu0 %v1761
    %2083 = vmatpush2.bf16.msra.mxu0 %v1760
    %2084 = vmatprep.subr.bf16.mxu0 %v1757
    %2085 = vmatpush2.bf16.msra.mxu0 %v1756
    %2086 = vmatprep.subr.bf16.mxu0 %v1753
    %2087 = vmatpush2.bf16.msra.mxu0 %v1752
    %2088 = vmatprep.mubr.bf16.mxu0 %v1203
    %2089 = vmatmul.mubr.bf16.gmra.mxu0 %v1202
    %v2090 = vpop.f32.mrf.mxu0
    %v2091 = vadd.f32 0.0, %v2090
    %v2092 = vpop.f32.mrf.mxu0
    %v2093 = vadd.f32 0.0, %v2092
    %v2094 = vpop.f32.mrf.mxu0
    %v2095 = vpop.f32.mrf.mxu0
    %2096 = vdwg.mxu0
    %2097 = vmatprep.subr.bf16.mxu0 %v1813
    %2098 = vmatpush1.bf16.msra.mxu0 %v1812
    %2099 = vmatprep.subr.bf16.mxu0 %v1809
    %2100 = vmatpush1.bf16.msra.mxu0 %v1808
    %2101 = vmatprep.subr.bf16.mxu0 %v1805
    %2102 = vmatpush1.bf16.msra.mxu0 %v1804
    %2103 = vmatprep.subr.bf16.mxu0 %v1801
    %2104 = vmatpush1.bf16.msra.mxu0 %v1800
    %2105 = vmatprep.subr.bf16.mxu0 %v1797
    %2106 = vmatpush1.bf16.msra.mxu0 %v1796
    %2107 = vmatprep.subr.bf16.mxu0 %v1793
    %2108 = vmatpush1.bf16.msra.mxu0 %v1792
    %2109 = vmatprep.subr.bf16.mxu0 %v1789
    %2110 = vmatpush1.bf16.msra.mxu0 %v1788
    %2111 = vmatprep.subr.bf16.mxu0 %v1785
    %2112 = vmatpush1.bf16.msra.mxu0 %v1784
    %2113 = vmatprep.subr.bf16.mxu0 %v1845
    %2114 = vmatpush2.bf16.msra.mxu0 %v1844
    %2115 = vmatprep.subr.bf16.mxu0 %v1841
    %2116 = vmatpush2.bf16.msra.mxu0 %v1840
    %2117 = vmatprep.subr.bf16.mxu0 %v1837
    %2118 = vmatpush2.bf16.msra.mxu0 %v1836
    %2119 = vmatprep.subr.bf16.mxu0 %v1833
    %2120 = vmatpush2.bf16.msra.mxu0 %v1832
    %2121 = vmatprep.subr.bf16.mxu0 %v1829
    %2122 = vmatpush2.bf16.msra.mxu0 %v1828
    %2123 = vmatprep.subr.bf16.mxu0 %v1825
    %2124 = vmatpush2.bf16.msra.mxu0 %v1824
    %2125 = vmatprep.subr.bf16.mxu0 %v1821
    %2126 = vmatpush2.bf16.msra.mxu0 %v1820
    %2127 = vmatprep.subr.bf16.mxu0 %v1817
    %2128 = vmatpush2.bf16.msra.mxu0 %v1816
    %2129 = vmatprep.mubr.bf16.mxu0 %v1205
    %2130 = vmatmul.mubr.bf16.gmra.mxu0 %v1204
    %v2131 = vpop.f32.mrf.mxu0
    %v2132 = vadd.f32 %v2091, %v2131
    %v2133 = vpop.f32.mrf.mxu0
    %v2134 = vadd.f32 %v2093, %v2133
    %v2135 = vpop.f32.mrf.mxu0
    %v2136 = vpop.f32.mrf.mxu0
    %2137 = vdwg.mxu0
    %v2138 = vld [vmem:[#allocation10] sm:$0xf]
    %v2140 = vlaneseq
    %v2141 = vshrl.u32 %v2140, 7
    %v2142 = vsub.s32 0, %v2141
    %v2143 = vrot.slane %v2138, %v2142
    %v2144 = vlaneseq
    %v2145 = vshrl.u32 %v2144, 7
    %v2146 = vsub.s32 1, %v2145
    %v2147 = vrot.slane %v2138, %v2146
    %v2148 = vlaneseq
    %v2149 = vshrl.u32 %v2148, 7
    %v2150 = vsub.s32 2, %v2149
    %v2151 = vrot.slane %v2138, %v2150
    %v2152 = vlaneseq
    %v2153 = vshrl.u32 %v2152, 7
    %v2154 = vsub.s32 3, %v2153
    %v2155 = vrot.slane %v2138, %v2154
    %v2160 = vmul.f32 %v2050, %v2143
    %v2161 = vmul.f32 %v2052, %v2147
    %v2162 = vmul.f32 %v2132, %v2151
    %v2163 = vmul.f32 %v2134, %v2155
    %v2164 = vld [vmem:[#allocation11] sm:$0xf]
    %v2166 = vlaneseq
    %v2167 = vshrl.u32 %v2166, 7
    %v2168 = vsub.s32 0, %v2167
    %v2169 = vrot.slane %v2164, %v2168
    %v2170 = vlaneseq
    %v2171 = vshrl.u32 %v2170, 7
    %v2172 = vsub.s32 1, %v2171
    %v2173 = vrot.slane %v2164, %v2172
    %v2174 = vlaneseq
    %v2175 = vshrl.u32 %v2174, 7
    %v2176 = vsub.s32 2, %v2175
    %v2177 = vrot.slane %v2164, %v2176
    %v2178 = vlaneseq
    %v2179 = vshrl.u32 %v2178, 7
    %v2180 = vsub.s32 3, %v2179
    %v2181 = vrot.slane %v2164, %v2180
    %v2186 = vadd.f32 %v2160, %v2169
    %v2187 = vadd.f32 %v2161, %v2173
    %v2188 = vadd.f32 %v2162, %v2177
    %v2189 = vadd.f32 %v2163, %v2181
    %v2190 = vpack.c.bf16 %v2186, %v2186
    %v2191 = vpack.c.bf16 %v2187, %v2187
    %v2192 = vpack.c.bf16 %v2188, %v2188
    %v2193 = vpack.c.bf16 %v2189, %v2189
    %v2194 = vld [vmem:[#allocation13] sm:$0xff]
    %v2195 = vld [vmem:[#allocation13 + $0x8] sm:$0xff]
    %v2196 = vld [vmem:[#allocation13 + $0x10] sm:$0xff]
    %v2197 = vld [vmem:[#allocation13 + $0x18] sm:$0xff]
    %v2198 = vld [vmem:[#allocation13 + $0x20] sm:$0xff]
    %v2199 = vld [vmem:[#allocation13 + $0x28] sm:$0xff]
    %v2200 = vld [vmem:[#allocation13 + $0x30] sm:$0xff]
    %v2201 = vld [vmem:[#allocation13 + $0x38] sm:$0xff]
    %v2202 = vld [vmem:[#allocation13 + $0x40] sm:$0xff]
    %v2203 = vld [vmem:[#allocation13 + $0x48] sm:$0xff]
    %v2204 = vld [vmem:[#allocation13 + $0x50] sm:$0xff]
    %v2205 = vld [vmem:[#allocation13 + $0x58] sm:$0xff]
    %v2206 = vld [vmem:[#allocation13 + $0x60] sm:$0xff]
    %v2207 = vld [vmem:[#allocation13 + $0x68] sm:$0xff]
    %v2208 = vld [vmem:[#allocation13 + $0x70] sm:$0xff]
    %v2209 = vld [vmem:[#allocation13 + $0x78] sm:$0xff]
    %v2210 = vld [vmem:[#allocation13 + $0x80] sm:$0xff]
    %v2211 = vld [vmem:[#allocation13 + $0x88] sm:$0xff]
    %v2212 = vld [vmem:[#allocation13 + $0x90] sm:$0xff]
    %v2213 = vld [vmem:[#allocation13 + $0x98] sm:$0xff]
    %v2214 = vld [vmem:[#allocation13 + $0xa0] sm:$0xff]
    %v2215 = vld [vmem:[#allocation13 + $0xa8] sm:$0xff]
    %v2216 = vld [vmem:[#allocation13 + $0xb0] sm:$0xff]
    %v2217 = vld [vmem:[#allocation13 + $0xb8] sm:$0xff]
    %v2218 = vld [vmem:[#allocation13 + $0xc0] sm:$0xff]
    %v2219 = vld [vmem:[#allocation13 + $0xc8] sm:$0xff]
    %v2220 = vld [vmem:[#allocation13 + $0xd0] sm:$0xff]
    %v2221 = vld [vmem:[#allocation13 + $0xd8] sm:$0xff]
    %v2222 = vld [vmem:[#allocation13 + $0xe0] sm:$0xff]
    %v2223 = vld [vmem:[#allocation13 + $0xe8] sm:$0xff]
    %v2224 = vld [vmem:[#allocation13 + $0xf0] sm:$0xff]
    %v2225 = vld [vmem:[#allocation13 + $0xf8] sm:$0xff]
    %v2226 = vld [vmem:[#allocation13 + $0x100] sm:$0xff]
    %v2227 = vld [vmem:[#allocation13 + $0x108] sm:$0xff]
    %v2228 = vld [vmem:[#allocation13 + $0x110] sm:$0xff]
    %v2229 = vld [vmem:[#allocation13 + $0x118] sm:$0xff]
    %v2230 = vld [vmem:[#allocation13 + $0x120] sm:$0xff]
    %v2231 = vld [vmem:[#allocation13 + $0x128] sm:$0xff]
    %v2232 = vld [vmem:[#allocation13 + $0x130] sm:$0xff]
    %v2233 = vld [vmem:[#allocation13 + $0x138] sm:$0xff]
    %v2234 = vld [vmem:[#allocation13 + $0x140] sm:$0xff]
    %v2235 = vld [vmem:[#allocation13 + $0x148] sm:$0xff]
    %v2236 = vld [vmem:[#allocation13 + $0x150] sm:$0xff]
    %v2237 = vld [vmem:[#allocation13 + $0x158] sm:$0xff]
    %v2238 = vld [vmem:[#allocation13 + $0x160] sm:$0xff]
    %v2239 = vld [vmem:[#allocation13 + $0x168] sm:$0xff]
    %v2240 = vld [vmem:[#allocation13 + $0x170] sm:$0xff]
    %v2241 = vld [vmem:[#allocation13 + $0x178] sm:$0xff]
    %v2242 = vld [vmem:[#allocation13 + $0x180] sm:$0xff]
    %v2243 = vld [vmem:[#allocation13 + $0x188] sm:$0xff]
    %v2244 = vld [vmem:[#allocation13 + $0x190] sm:$0xff]
    %v2245 = vld [vmem:[#allocation13 + $0x198] sm:$0xff]
    %v2246 = vld [vmem:[#allocation13 + $0x1a0] sm:$0xff]
    %v2247 = vld [vmem:[#allocation13 + $0x1a8] sm:$0xff]
    %v2248 = vld [vmem:[#allocation13 + $0x1b0] sm:$0xff]
    %v2249 = vld [vmem:[#allocation13 + $0x1b8] sm:$0xff]
    %v2250 = vld [vmem:[#allocation13 + $0x1c0] sm:$0xff]
    %v2251 = vld [vmem:[#allocation13 + $0x1c8] sm:$0xff]
    %v2252 = vld [vmem:[#allocation13 + $0x1d0] sm:$0xff]
    %v2253 = vld [vmem:[#allocation13 + $0x1d8] sm:$0xff]
    %v2254 = vld [vmem:[#allocation13 + $0x1e0] sm:$0xff]
    %v2255 = vld [vmem:[#allocation13 + $0x1e8] sm:$0xff]
    %v2256 = vld [vmem:[#allocation13 + $0x1f0] sm:$0xff]
    %v2257 = vld [vmem:[#allocation13 + $0x1f8] sm:$0xff]
    %v2258 = vld [vmem:[#allocation13 + $0x200] sm:$0xff]
    %v2259 = vld [vmem:[#allocation13 + $0x208] sm:$0xff]
    %v2260 = vld [vmem:[#allocation13 + $0x210] sm:$0xff]
    %v2261 = vld [vmem:[#allocation13 + $0x218] sm:$0xff]
    %v2262 = vld [vmem:[#allocation13 + $0x220] sm:$0xff]
    %v2263 = vld [vmem:[#allocation13 + $0x228] sm:$0xff]
    %v2264 = vld [vmem:[#allocation13 + $0x230] sm:$0xff]
    %v2265 = vld [vmem:[#allocation13 + $0x238] sm:$0xff]
    %v2266 = vld [vmem:[#allocation13 + $0x240] sm:$0xff]
    %v2267 = vld [vmem:[#allocation13 + $0x248] sm:$0xff]
    %v2268 = vld [vmem:[#allocation13 + $0x250] sm:$0xff]
    %v2269 = vld [vmem:[#allocation13 + $0x258] sm:$0xff]
    %v2270 = vld [vmem:[#allocation13 + $0x260] sm:$0xff]
    %v2271 = vld [vmem:[#allocation13 + $0x268] sm:$0xff]
    %v2272 = vld [vmem:[#allocation13 + $0x270] sm:$0xff]
    %v2273 = vld [vmem:[#allocation13 + $0x278] sm:$0xff]
    %v2274 = vld [vmem:[#allocation13 + $0x280] sm:$0xff]
    %v2275 = vld [vmem:[#allocation13 + $0x288] sm:$0xff]
    %v2276 = vld [vmem:[#allocation13 + $0x290] sm:$0xff]
    %v2277 = vld [vmem:[#allocation13 + $0x298] sm:$0xff]
    %v2278 = vld [vmem:[#allocation13 + $0x2a0] sm:$0xff]
    %v2279 = vld [vmem:[#allocation13 + $0x2a8] sm:$0xff]
    %v2280 = vld [vmem:[#allocation13 + $0x2b0] sm:$0xff]
    %v2281 = vld [vmem:[#allocation13 + $0x2b8] sm:$0xff]
    %v2282 = vld [vmem:[#allocation13 + $0x2c0] sm:$0xff]
    %v2283 = vld [vmem:[#allocation13 + $0x2c8] sm:$0xff]
    %v2284 = vld [vmem:[#allocation13 + $0x2d0] sm:$0xff]
    %v2285 = vld [vmem:[#allocation13 + $0x2d8] sm:$0xff]
    %v2286 = vld [vmem:[#allocation13 + $0x2e0] sm:$0xff]
    %v2287 = vld [vmem:[#allocation13 + $0x2e8] sm:$0xff]
    %v2288 = vld [vmem:[#allocation13 + $0x2f0] sm:$0xff]
    %v2289 = vld [vmem:[#allocation13 + $0x2f8] sm:$0xff]
    %v2290 = vld [vmem:[#allocation13 + $0x300] sm:$0xff]
    %v2291 = vld [vmem:[#allocation13 + $0x308] sm:$0xff]
    %v2292 = vld [vmem:[#allocation13 + $0x310] sm:$0xff]
    %v2293 = vld [vmem:[#allocation13 + $0x318] sm:$0xff]
    %v2294 = vld [vmem:[#allocation13 + $0x320] sm:$0xff]
    %v2295 = vld [vmem:[#allocation13 + $0x328] sm:$0xff]
    %v2296 = vld [vmem:[#allocation13 + $0x330] sm:$0xff]
    %v2297 = vld [vmem:[#allocation13 + $0x338] sm:$0xff]
    %v2298 = vld [vmem:[#allocation13 + $0x340] sm:$0xff]
    %v2299 = vld [vmem:[#allocation13 + $0x348] sm:$0xff]
    %v2300 = vld [vmem:[#allocation13 + $0x350] sm:$0xff]
    %v2301 = vld [vmem:[#allocation13 + $0x358] sm:$0xff]
    %v2302 = vld [vmem:[#allocation13 + $0x360] sm:$0xff]
    %v2303 = vld [vmem:[#allocation13 + $0x368] sm:$0xff]
    %v2304 = vld [vmem:[#allocation13 + $0x370] sm:$0xff]
    %v2305 = vld [vmem:[#allocation13 + $0x378] sm:$0xff]
    %v2306 = vld [vmem:[#allocation13 + $0x380] sm:$0xff]
    %v2307 = vld [vmem:[#allocation13 + $0x388] sm:$0xff]
    %v2308 = vld [vmem:[#allocation13 + $0x390] sm:$0xff]
    %v2309 = vld [vmem:[#allocation13 + $0x398] sm:$0xff]
    %v2310 = vld [vmem:[#allocation13 + $0x3a0] sm:$0xff]
    %v2311 = vld [vmem:[#allocation13 + $0x3a8] sm:$0xff]
    %v2312 = vld [vmem:[#allocation13 + $0x3b0] sm:$0xff]
    %v2313 = vld [vmem:[#allocation13 + $0x3b8] sm:$0xff]
    %v2314 = vld [vmem:[#allocation13 + $0x3c0] sm:$0xff]
    %v2315 = vld [vmem:[#allocation13 + $0x3c8] sm:$0xff]
    %v2316 = vld [vmem:[#allocation13 + $0x3d0] sm:$0xff]
    %v2317 = vld [vmem:[#allocation13 + $0x3d8] sm:$0xff]
    %v2318 = vld [vmem:[#allocation13 + $0x3e0] sm:$0xff]
    %v2319 = vld [vmem:[#allocation13 + $0x3e8] sm:$0xff]
    %v2320 = vld [vmem:[#allocation13 + $0x3f0] sm:$0xff]
    %v2321 = vld [vmem:[#allocation13 + $0x3f8] sm:$0xff]
    %v2450 = vunpack.c.l.b16 %v2194
    %v2451 = vunpack.c.h.b16 %v2194
    %v2452 = vunpack.c.l.b16 %v2195
    %v2453 = vunpack.c.h.b16 %v2195
    %v2454 = vunpack.c.l.b16 %v2196
    %v2455 = vunpack.c.h.b16 %v2196
    %v2456 = vunpack.c.l.b16 %v2197
    %v2457 = vunpack.c.h.b16 %v2197
    %v2458 = vunpack.c.l.b16 %v2198
    %v2459 = vunpack.c.h.b16 %v2198
    %v2460 = vunpack.c.l.b16 %v2199
    %v2461 = vunpack.c.h.b16 %v2199
    %v2462 = vunpack.c.l.b16 %v2200
    %v2463 = vunpack.c.h.b16 %v2200
    %v2464 = vunpack.c.l.b16 %v2201
    %v2465 = vunpack.c.h.b16 %v2201
    %v2466 = vunpack.c.l.b16 %v2202
    %v2467 = vunpack.c.h.b16 %v2202
    %v2468 = vunpack.c.l.b16 %v2203
    %v2469 = vunpack.c.h.b16 %v2203
    %v2470 = vunpack.c.l.b16 %v2204
    %v2471 = vunpack.c.h.b16 %v2204
    %v2472 = vunpack.c.l.b16 %v2205
    %v2473 = vunpack.c.h.b16 %v2205
    %v2474 = vunpack.c.l.b16 %v2206
    %v2475 = vunpack.c.h.b16 %v2206
    %v2476 = vunpack.c.l.b16 %v2207
    %v2477 = vunpack.c.h.b16 %v2207
    %v2478 = vunpack.c.l.b16 %v2208
    %v2479 = vunpack.c.h.b16 %v2208
    %v2480 = vunpack.c.l.b16 %v2209
    %v2481 = vunpack.c.h.b16 %v2209
    %v2482 = vunpack.c.l.b16 %v2210
    %v2483 = vunpack.c.h.b16 %v2210
    %v2484 = vunpack.c.l.b16 %v2211
    %v2485 = vunpack.c.h.b16 %v2211
    %v2486 = vunpack.c.l.b16 %v2212
    %v2487 = vunpack.c.h.b16 %v2212
    %v2488 = vunpack.c.l.b16 %v2213
    %v2489 = vunpack.c.h.b16 %v2213
    %v2490 = vunpack.c.l.b16 %v2214
    %v2491 = vunpack.c.h.b16 %v2214
    %v2492 = vunpack.c.l.b16 %v2215
    %v2493 = vunpack.c.h.b16 %v2215
    %v2494 = vunpack.c.l.b16 %v2216
    %v2495 = vunpack.c.h.b16 %v2216
    %v2496 = vunpack.c.l.b16 %v2217
    %v2497 = vunpack.c.h.b16 %v2217
    %v2498 = vunpack.c.l.b16 %v2218
    %v2499 = vunpack.c.h.b16 %v2218
    %v2500 = vunpack.c.l.b16 %v2219
    %v2501 = vunpack.c.h.b16 %v2219
    %v2502 = vunpack.c.l.b16 %v2220
    %v2503 = vunpack.c.h.b16 %v2220
    %v2504 = vunpack.c.l.b16 %v2221
    %v2505 = vunpack.c.h.b16 %v2221
    %v2506 = vunpack.c.l.b16 %v2222
    %v2507 = vunpack.c.h.b16 %v2222
    %v2508 = vunpack.c.l.b16 %v2223
    %v2509 = vunpack.c.h.b16 %v2223
    %v2510 = vunpack.c.l.b16 %v2224
    %v2511 = vunpack.c.h.b16 %v2224
    %v2512 = vunpack.c.l.b16 %v2225
    %v2513 = vunpack.c.h.b16 %v2225
    %v2514 = vunpack.c.l.b16 %v2226
    %v2515 = vunpack.c.h.b16 %v2226
    %v2516 = vunpack.c.l.b16 %v2227
    %v2517 = vunpack.c.h.b16 %v2227
    %v2518 = vunpack.c.l.b16 %v2228
    %v2519 = vunpack.c.h.b16 %v2228
    %v2520 = vunpack.c.l.b16 %v2229
    %v2521 = vunpack.c.h.b16 %v2229
    %v2522 = vunpack.c.l.b16 %v2230
    %v2523 = vunpack.c.h.b16 %v2230
    %v2524 = vunpack.c.l.b16 %v2231
    %v2525 = vunpack.c.h.b16 %v2231
    %v2526 = vunpack.c.l.b16 %v2232
    %v2527 = vunpack.c.h.b16 %v2232
    %v2528 = vunpack.c.l.b16 %v2233
    %v2529 = vunpack.c.h.b16 %v2233
    %v2530 = vunpack.c.l.b16 %v2234
    %v2531 = vunpack.c.h.b16 %v2234
    %v2532 = vunpack.c.l.b16 %v2235
    %v2533 = vunpack.c.h.b16 %v2235
    %v2534 = vunpack.c.l.b16 %v2236
    %v2535 = vunpack.c.h.b16 %v2236
    %v2536 = vunpack.c.l.b16 %v2237
    %v2537 = vunpack.c.h.b16 %v2237
    %v2538 = vunpack.c.l.b16 %v2238
    %v2539 = vunpack.c.h.b16 %v2238
    %v2540 = vunpack.c.l.b16 %v2239
    %v2541 = vunpack.c.h.b16 %v2239
    %v2542 = vunpack.c.l.b16 %v2240
    %v2543 = vunpack.c.h.b16 %v2240
    %v2544 = vunpack.c.l.b16 %v2241
    %v2545 = vunpack.c.h.b16 %v2241
    %v2546 = vunpack.c.l.b16 %v2242
    %v2547 = vunpack.c.h.b16 %v2242
    %v2548 = vunpack.c.l.b16 %v2243
    %v2549 = vunpack.c.h.b16 %v2243
    %v2550 = vunpack.c.l.b16 %v2244
    %v2551 = vunpack.c.h.b16 %v2244
    %v2552 = vunpack.c.l.b16 %v2245
    %v2553 = vunpack.c.h.b16 %v2245
    %v2554 = vunpack.c.l.b16 %v2246
    %v2555 = vunpack.c.h.b16 %v2246
    %v2556 = vunpack.c.l.b16 %v2247
    %v2557 = vunpack.c.h.b16 %v2247
    %v2558 = vunpack.c.l.b16 %v2248
    %v2559 = vunpack.c.h.b16 %v2248
    %v2560 = vunpack.c.l.b16 %v2249
    %v2561 = vunpack.c.h.b16 %v2249
    %v2562 = vunpack.c.l.b16 %v2250
    %v2563 = vunpack.c.h.b16 %v2250
    %v2564 = vunpack.c.l.b16 %v2251
    %v2565 = vunpack.c.h.b16 %v2251
    %v2566 = vunpack.c.l.b16 %v2252
    %v2567 = vunpack.c.h.b16 %v2252
    %v2568 = vunpack.c.l.b16 %v2253
    %v2569 = vunpack.c.h.b16 %v2253
    %v2570 = vunpack.c.l.b16 %v2254
    %v2571 = vunpack.c.h.b16 %v2254
    %v2572 = vunpack.c.l.b16 %v2255
    %v2573 = vunpack.c.h.b16 %v2255
    %v2574 = vunpack.c.l.b16 %v2256
    %v2575 = vunpack.c.h.b16 %v2256
    %v2576 = vunpack.c.l.b16 %v2257
    %v2577 = vunpack.c.h.b16 %v2257
    %v2578 = vunpack.c.l.b16 %v2258
    %v2579 = vunpack.c.h.b16 %v2258
    %v2580 = vunpack.c.l.b16 %v2259
    %v2581 = vunpack.c.h.b16 %v2259
    %v2582 = vunpack.c.l.b16 %v2260
    %v2583 = vunpack.c.h.b16 %v2260
    %v2584 = vunpack.c.l.b16 %v2261
    %v2585 = vunpack.c.h.b16 %v2261
    %v2586 = vunpack.c.l.b16 %v2262
    %v2587 = vunpack.c.h.b16 %v2262
    %v2588 = vunpack.c.l.b16 %v2263
    %v2589 = vunpack.c.h.b16 %v2263
    %v2590 = vunpack.c.l.b16 %v2264
    %v2591 = vunpack.c.h.b16 %v2264
    %v2592 = vunpack.c.l.b16 %v2265
    %v2593 = vunpack.c.h.b16 %v2265
    %v2594 = vunpack.c.l.b16 %v2266
    %v2595 = vunpack.c.h.b16 %v2266
    %v2596 = vunpack.c.l.b16 %v2267
    %v2597 = vunpack.c.h.b16 %v2267
    %v2598 = vunpack.c.l.b16 %v2268
    %v2599 = vunpack.c.h.b16 %v2268
    %v2600 = vunpack.c.l.b16 %v2269
    %v2601 = vunpack.c.h.b16 %v2269
    %v2602 = vunpack.c.l.b16 %v2270
    %v2603 = vunpack.c.h.b16 %v2270
    %v2604 = vunpack.c.l.b16 %v2271
    %v2605 = vunpack.c.h.b16 %v2271
    %v2606 = vunpack.c.l.b16 %v2272
    %v2607 = vunpack.c.h.b16 %v2272
    %v2608 = vunpack.c.l.b16 %v2273
    %v2609 = vunpack.c.h.b16 %v2273
    %v2610 = vunpack.c.l.b16 %v2274
    %v2611 = vunpack.c.h.b16 %v2274
    %v2612 = vunpack.c.l.b16 %v2275
    %v2613 = vunpack.c.h.b16 %v2275
    %v2614 = vunpack.c.l.b16 %v2276
    %v2615 = vunpack.c.h.b16 %v2276
    %v2616 = vunpack.c.l.b16 %v2277
    %v2617 = vunpack.c.h.b16 %v2277
    %v2618 = vunpack.c.l.b16 %v2278
    %v2619 = vunpack.c.h.b16 %v2278
    %v2620 = vunpack.c.l.b16 %v2279
    %v2621 = vunpack.c.h.b16 %v2279
    %v2622 = vunpack.c.l.b16 %v2280
    %v2623 = vunpack.c.h.b16 %v2280
    %v2624 = vunpack.c.l.b16 %v2281
    %v2625 = vunpack.c.h.b16 %v2281
    %v2626 = vunpack.c.l.b16 %v2282
    %v2627 = vunpack.c.h.b16 %v2282
    %v2628 = vunpack.c.l.b16 %v2283
    %v2629 = vunpack.c.h.b16 %v2283
    %v2630 = vunpack.c.l.b16 %v2284
    %v2631 = vunpack.c.h.b16 %v2284
    %v2632 = vunpack.c.l.b16 %v2285
    %v2633 = vunpack.c.h.b16 %v2285
    %v2634 = vunpack.c.l.b16 %v2286
    %v2635 = vunpack.c.h.b16 %v2286
    %v2636 = vunpack.c.l.b16 %v2287
    %v2637 = vunpack.c.h.b16 %v2287
    %v2638 = vunpack.c.l.b16 %v2288
    %v2639 = vunpack.c.h.b16 %v2288
    %v2640 = vunpack.c.l.b16 %v2289
    %v2641 = vunpack.c.h.b16 %v2289
    %v2642 = vunpack.c.l.b16 %v2290
    %v2643 = vunpack.c.h.b16 %v2290
    %v2644 = vunpack.c.l.b16 %v2291
    %v2645 = vunpack.c.h.b16 %v2291
    %v2646 = vunpack.c.l.b16 %v2292
    %v2647 = vunpack.c.h.b16 %v2292
    %v2648 = vunpack.c.l.b16 %v2293
    %v2649 = vunpack.c.h.b16 %v2293
    %v2650 = vunpack.c.l.b16 %v2294
    %v2651 = vunpack.c.h.b16 %v2294
    %v2652 = vunpack.c.l.b16 %v2295
    %v2653 = vunpack.c.h.b16 %v2295
    %v2654 = vunpack.c.l.b16 %v2296
    %v2655 = vunpack.c.h.b16 %v2296
    %v2656 = vunpack.c.l.b16 %v2297
    %v2657 = vunpack.c.h.b16 %v2297
    %v2658 = vunpack.c.l.b16 %v2298
    %v2659 = vunpack.c.h.b16 %v2298
    %v2660 = vunpack.c.l.b16 %v2299
    %v2661 = vunpack.c.h.b16 %v2299
    %v2662 = vunpack.c.l.b16 %v2300
    %v2663 = vunpack.c.h.b16 %v2300
    %v2664 = vunpack.c.l.b16 %v2301
    %v2665 = vunpack.c.h.b16 %v2301
    %v2666 = vunpack.c.l.b16 %v2302
    %v2667 = vunpack.c.h.b16 %v2302
    %v2668 = vunpack.c.l.b16 %v2303
    %v2669 = vunpack.c.h.b16 %v2303
    %v2670 = vunpack.c.l.b16 %v2304
    %v2671 = vunpack.c.h.b16 %v2304
    %v2672 = vunpack.c.l.b16 %v2305
    %v2673 = vunpack.c.h.b16 %v2305
    %v2674 = vunpack.c.l.b16 %v2306
    %v2675 = vunpack.c.h.b16 %v2306
    %v2676 = vunpack.c.l.b16 %v2307
    %v2677 = vunpack.c.h.b16 %v2307
    %v2678 = vunpack.c.l.b16 %v2308
    %v2679 = vunpack.c.h.b16 %v2308
    %v2680 = vunpack.c.l.b16 %v2309
    %v2681 = vunpack.c.h.b16 %v2309
    %v2682 = vunpack.c.l.b16 %v2310
    %v2683 = vunpack.c.h.b16 %v2310
    %v2684 = vunpack.c.l.b16 %v2311
    %v2685 = vunpack.c.h.b16 %v2311
    %v2686 = vunpack.c.l.b16 %v2312
    %v2687 = vunpack.c.h.b16 %v2312
    %v2688 = vunpack.c.l.b16 %v2313
    %v2689 = vunpack.c.h.b16 %v2313
    %v2690 = vunpack.c.l.b16 %v2314
    %v2691 = vunpack.c.h.b16 %v2314
    %v2692 = vunpack.c.l.b16 %v2315
    %v2693 = vunpack.c.h.b16 %v2315
    %v2694 = vunpack.c.l.b16 %v2316
    %v2695 = vunpack.c.h.b16 %v2316
    %v2696 = vunpack.c.l.b16 %v2317
    %v2697 = vunpack.c.h.b16 %v2317
    %v2698 = vunpack.c.l.b16 %v2318
    %v2699 = vunpack.c.h.b16 %v2318
    %v2700 = vunpack.c.l.b16 %v2319
    %v2701 = vunpack.c.h.b16 %v2319
    %v2702 = vunpack.c.l.b16 %v2320
    %v2703 = vunpack.c.h.b16 %v2320
    %v2704 = vunpack.c.l.b16 %v2321
    %v2705 = vunpack.c.h.b16 %v2321
    %v2706 = vpack.c.b16 %v2454, %v2450
    %v2707 = vpack.c.b16 %v2455, %v2451
    %v2708 = vpack.c.b16 %v2456, %v2452
    %v2709 = vpack.c.b16 %v2457, %v2453
    %v2710 = vpack.c.b16 %v2462, %v2458
    %v2711 = vpack.c.b16 %v2463, %v2459
    %v2712 = vpack.c.b16 %v2464, %v2460
    %v2713 = vpack.c.b16 %v2465, %v2461
    %v2714 = vpack.c.b16 %v2470, %v2466
    %v2715 = vpack.c.b16 %v2471, %v2467
    %v2716 = vpack.c.b16 %v2472, %v2468
    %v2717 = vpack.c.b16 %v2473, %v2469
    %v2718 = vpack.c.b16 %v2478, %v2474
    %v2719 = vpack.c.b16 %v2479, %v2475
    %v2720 = vpack.c.b16 %v2480, %v2476
    %v2721 = vpack.c.b16 %v2481, %v2477
    %v2722 = vpack.c.b16 %v2486, %v2482
    %v2723 = vpack.c.b16 %v2487, %v2483
    %v2724 = vpack.c.b16 %v2488, %v2484
    %v2725 = vpack.c.b16 %v2489, %v2485
    %v2726 = vpack.c.b16 %v2494, %v2490
    %v2727 = vpack.c.b16 %v2495, %v2491
    %v2728 = vpack.c.b16 %v2496, %v2492
    %v2729 = vpack.c.b16 %v2497, %v2493
    %v2730 = vpack.c.b16 %v2502, %v2498
    %v2731 = vpack.c.b16 %v2503, %v2499
    %v2732 = vpack.c.b16 %v2504, %v2500
    %v2733 = vpack.c.b16 %v2505, %v2501
    %v2734 = vpack.c.b16 %v2510, %v2506
    %v2735 = vpack.c.b16 %v2511, %v2507
    %v2736 = vpack.c.b16 %v2512, %v2508
    %v2737 = vpack.c.b16 %v2513, %v2509
    %v2738 = vpack.c.b16 %v2518, %v2514
    %v2739 = vpack.c.b16 %v2519, %v2515
    %v2740 = vpack.c.b16 %v2520, %v2516
    %v2741 = vpack.c.b16 %v2521, %v2517
    %v2742 = vpack.c.b16 %v2526, %v2522
    %v2743 = vpack.c.b16 %v2527, %v2523
    %v2744 = vpack.c.b16 %v2528, %v2524
    %v2745 = vpack.c.b16 %v2529, %v2525
    %v2746 = vpack.c.b16 %v2534, %v2530
    %v2747 = vpack.c.b16 %v2535, %v2531
    %v2748 = vpack.c.b16 %v2536, %v2532
    %v2749 = vpack.c.b16 %v2537, %v2533
    %v2750 = vpack.c.b16 %v2542, %v2538
    %v2751 = vpack.c.b16 %v2543, %v2539
    %v2752 = vpack.c.b16 %v2544, %v2540
    %v2753 = vpack.c.b16 %v2545, %v2541
    %v2754 = vpack.c.b16 %v2550, %v2546
    %v2755 = vpack.c.b16 %v2551, %v2547
    %v2756 = vpack.c.b16 %v2552, %v2548
    %v2757 = vpack.c.b16 %v2553, %v2549
    %v2758 = vpack.c.b16 %v2558, %v2554
    %v2759 = vpack.c.b16 %v2559, %v2555
    %v2760 = vpack.c.b16 %v2560, %v2556
    %v2761 = vpack.c.b16 %v2561, %v2557
    %v2762 = vpack.c.b16 %v2566, %v2562
    %v2763 = vpack.c.b16 %v2567, %v2563
    %v2764 = vpack.c.b16 %v2568, %v2564
    %v2765 = vpack.c.b16 %v2569, %v2565
    %v2766 = vpack.c.b16 %v2574, %v2570
    %v2767 = vpack.c.b16 %v2575, %v2571
    %v2768 = vpack.c.b16 %v2576, %v2572
    %v2769 = vpack.c.b16 %v2577, %v2573
    %v2770 = vpack.c.b16 %v2582, %v2578
    %v2771 = vpack.c.b16 %v2583, %v2579
    %v2772 = vpack.c.b16 %v2584, %v2580
    %v2773 = vpack.c.b16 %v2585, %v2581
    %v2774 = vpack.c.b16 %v2590, %v2586
    %v2775 = vpack.c.b16 %v2591, %v2587
    %v2776 = vpack.c.b16 %v2592, %v2588
    %v2777 = vpack.c.b16 %v2593, %v2589
    %v2778 = vpack.c.b16 %v2598, %v2594
    %v2779 = vpack.c.b16 %v2599, %v2595
    %v2780 = vpack.c.b16 %v2600, %v2596
    %v2781 = vpack.c.b16 %v2601, %v2597
    %v2782 = vpack.c.b16 %v2606, %v2602
    %v2783 = vpack.c.b16 %v2607, %v2603
    %v2784 = vpack.c.b16 %v2608, %v2604
    %v2785 = vpack.c.b16 %v2609, %v2605
    %v2786 = vpack.c.b16 %v2614, %v2610
    %v2787 = vpack.c.b16 %v2615, %v2611
    %v2788 = vpack.c.b16 %v2616, %v2612
    %v2789 = vpack.c.b16 %v2617, %v2613
    %v2790 = vpack.c.b16 %v2622, %v2618
    %v2791 = vpack.c.b16 %v2623, %v2619
    %v2792 = vpack.c.b16 %v2624, %v2620
    %v2793 = vpack.c.b16 %v2625, %v2621
    %v2794 = vpack.c.b16 %v2630, %v2626
    %v2795 = vpack.c.b16 %v2631, %v2627
    %v2796 = vpack.c.b16 %v2632, %v2628
    %v2797 = vpack.c.b16 %v2633, %v2629
    %v2798 = vpack.c.b16 %v2638, %v2634
    %v2799 = vpack.c.b16 %v2639, %v2635
    %v2800 = vpack.c.b16 %v2640, %v2636
    %v2801 = vpack.c.b16 %v2641, %v2637
    %v2802 = vpack.c.b16 %v2646, %v2642
    %v2803 = vpack.c.b16 %v2647, %v2643
    %v2804 = vpack.c.b16 %v2648, %v2644
    %v2805 = vpack.c.b16 %v2649, %v2645
    %v2806 = vpack.c.b16 %v2654, %v2650
    %v2807 = vpack.c.b16 %v2655, %v2651
    %v2808 = vpack.c.b16 %v2656, %v2652
    %v2809 = vpack.c.b16 %v2657, %v2653
    %v2810 = vpack.c.b16 %v2662, %v2658
    %v2811 = vpack.c.b16 %v2663, %v2659
    %v2812 = vpack.c.b16 %v2664, %v2660
    %v2813 = vpack.c.b16 %v2665, %v2661
    %v2814 = vpack.c.b16 %v2670, %v2666
    %v2815 = vpack.c.b16 %v2671, %v2667
    %v2816 = vpack.c.b16 %v2672, %v2668
    %v2817 = vpack.c.b16 %v2673, %v2669
    %v2818 = vpack.c.b16 %v2678, %v2674
    %v2819 = vpack.c.b16 %v2679, %v2675
    %v2820 = vpack.c.b16 %v2680, %v2676
    %v2821 = vpack.c.b16 %v2681, %v2677
    %v2822 = vpack.c.b16 %v2686, %v2682
    %v2823 = vpack.c.b16 %v2687, %v2683
    %v2824 = vpack.c.b16 %v2688, %v2684
    %v2825 = vpack.c.b16 %v2689, %v2685
    %v2826 = vpack.c.b16 %v2694, %v2690
    %v2827 = vpack.c.b16 %v2695, %v2691
    %v2828 = vpack.c.b16 %v2696, %v2692
    %v2829 = vpack.c.b16 %v2697, %v2693
    %v2830 = vpack.c.b16 %v2702, %v2698
    %v2831 = vpack.c.b16 %v2703, %v2699
    %v2832 = vpack.c.b16 %v2704, %v2700
    %v2833 = vpack.c.b16 %v2705, %v2701
    %2962 = vmatprep.subr.bf16.mxu0 %v2735
    %2963 = vmatpush1.bf16.msra.mxu0 %v2734
    %2964 = vmatprep.subr.bf16.mxu0 %v2731
    %2965 = vmatpush1.bf16.msra.mxu0 %v2730
    %2966 = vmatprep.subr.bf16.mxu0 %v2727
    %2967 = vmatpush1.bf16.msra.mxu0 %v2726
    %2968 = vmatprep.subr.bf16.mxu0 %v2723
    %2969 = vmatpush1.bf16.msra.mxu0 %v2722
    %2970 = vmatprep.subr.bf16.mxu0 %v2719
    %2971 = vmatpush1.bf16.msra.mxu0 %v2718
    %2972 = vmatprep.subr.bf16.mxu0 %v2715
    %2973 = vmatpush1.bf16.msra.mxu0 %v2714
    %2974 = vmatprep.subr.bf16.mxu0 %v2711
    %2975 = vmatpush1.bf16.msra.mxu0 %v2710
    %2976 = vmatprep.subr.bf16.mxu0 %v2707
    %2977 = vmatpush1.bf16.msra.mxu0 %v2706
    %2978 = vmatprep.subr.bf16.mxu0 %v2767
    %2979 = vmatpush2.bf16.msra.mxu0 %v2766
    %2980 = vmatprep.subr.bf16.mxu0 %v2763
    %2981 = vmatpush2.bf16.msra.mxu0 %v2762
    %2982 = vmatprep.subr.bf16.mxu0 %v2759
    %2983 = vmatpush2.bf16.msra.mxu0 %v2758
    %2984 = vmatprep.subr.bf16.mxu0 %v2755
    %2985 = vmatpush2.bf16.msra.mxu0 %v2754
    %2986 = vmatprep.subr.bf16.mxu0 %v2751
    %2987 = vmatpush2.bf16.msra.mxu0 %v2750
    %2988 = vmatprep.subr.bf16.mxu0 %v2747
    %2989 = vmatpush2.bf16.msra.mxu0 %v2746
    %2990 = vmatprep.subr.bf16.mxu0 %v2743
    %2991 = vmatpush2.bf16.msra.mxu0 %v2742
    %2992 = vmatprep.subr.bf16.mxu0 %v2739
    %2993 = vmatpush2.bf16.msra.mxu0 %v2738
    %2994 = vmatprep.mubr.bf16.mxu0 %v2191
    %2995 = vmatmul.mubr.bf16.gmra.mxu0 %v2190
    %v2996 = vpop.f32.mrf.mxu0
    %v2997 = vadd.f32 0.0, %v2996
    %v2998 = vpop.f32.mrf.mxu0
    %v2999 = vadd.f32 0.0, %v2998
    %v3000 = vpop.f32.mrf.mxu0
    %v3001 = vpop.f32.mrf.mxu0
    %3002 = vdwg.mxu0
    %3003 = vmatprep.subr.bf16.mxu0 %v2799
    %3004 = vmatpush1.bf16.msra.mxu0 %v2798
    %3005 = vmatprep.subr.bf16.mxu0 %v2795
    %3006 = vmatpush1.bf16.msra.mxu0 %v2794
    %3007 = vmatprep.subr.bf16.mxu0 %v2791
    %3008 = vmatpush1.bf16.msra.mxu0 %v2790
    %3009 = vmatprep.subr.bf16.mxu0 %v2787
    %3010 = vmatpush1.bf16.msra.mxu0 %v2786
    %3011 = vmatprep.subr.bf16.mxu0 %v2783
    %3012 = vmatpush1.bf16.msra.mxu0 %v2782
    %3013 = vmatprep.subr.bf16.mxu0 %v2779
    %3014 = vmatpush1.bf16.msra.mxu0 %v2778
    %3015 = vmatprep.subr.bf16.mxu0 %v2775
    %3016 = vmatpush1.bf16.msra.mxu0 %v2774
    %3017 = vmatprep.subr.bf16.mxu0 %v2771
    %3018 = vmatpush1.bf16.msra.mxu0 %v2770
    %3019 = vmatprep.subr.bf16.mxu0 %v2831
    %3020 = vmatpush2.bf16.msra.mxu0 %v2830
    %3021 = vmatprep.subr.bf16.mxu0 %v2827
    %3022 = vmatpush2.bf16.msra.mxu0 %v2826
    %3023 = vmatprep.subr.bf16.mxu0 %v2823
    %3024 = vmatpush2.bf16.msra.mxu0 %v2822
    %3025 = vmatprep.subr.bf16.mxu0 %v2819
    %3026 = vmatpush2.bf16.msra.mxu0 %v2818
    %3027 = vmatprep.subr.bf16.mxu0 %v2815
    %3028 = vmatpush2.bf16.msra.mxu0 %v2814
    %3029 = vmatprep.subr.bf16.mxu0 %v2811
    %3030 = vmatpush2.bf16.msra.mxu0 %v2810
    %3031 = vmatprep.subr.bf16.mxu0 %v2807
    %3032 = vmatpush2.bf16.msra.mxu0 %v2806
    %3033 = vmatprep.subr.bf16.mxu0 %v2803
    %3034 = vmatpush2.bf16.msra.mxu0 %v2802
    %3035 = vmatprep.mubr.bf16.mxu0 %v2193
    %3036 = vmatmul.mubr.bf16.gmra.mxu0 %v2192
    %v3037 = vpop.f32.mrf.mxu0
    %v3038 = vadd.f32 %v2997, %v3037
    %v3039 = vpop.f32.mrf.mxu0
    %v3040 = vadd.f32 %v2999, %v3039
    %v3041 = vpop.f32.mrf.mxu0
    %v3042 = vpop.f32.mrf.mxu0
    %3043 = vdwg.mxu0
    %3044 = vmatprep.subr.bf16.mxu0 %v2737
    %3045 = vmatpush1.bf16.msra.mxu0 %v2736
    %3046 = vmatprep.subr.bf16.mxu0 %v2733
    %3047 = vmatpush1.bf16.msra.mxu0 %v2732
    %3048 = vmatprep.subr.bf16.mxu0 %v2729
    %3049 = vmatpush1.bf16.msra.mxu0 %v2728
    %3050 = vmatprep.subr.bf16.mxu0 %v2725
    %3051 = vmatpush1.bf16.msra.mxu0 %v2724
    %3052 = vmatprep.subr.bf16.mxu0 %v2721
    %3053 = vmatpush1.bf16.msra.mxu0 %v2720
    %3054 = vmatprep.subr.bf16.mxu0 %v2717
    %3055 = vmatpush1.bf16.msra.mxu0 %v2716
    %3056 = vmatprep.subr.bf16.mxu0 %v2713
    %3057 = vmatpush1.bf16.msra.mxu0 %v2712
    %3058 = vmatprep.subr.bf16.mxu0 %v2709
    %3059 = vmatpush1.bf16.msra.mxu0 %v2708
    %3060 = vmatprep.subr.bf16.mxu0 %v2769
    %3061 = vmatpush2.bf16.msra.mxu0 %v2768
    %3062 = vmatprep.subr.bf16.mxu0 %v2765
    %3063 = vmatpush2.bf16.msra.mxu0 %v2764
    %3064 = vmatprep.subr.bf16.mxu0 %v2761
    %3065 = vmatpush2.bf16.msra.mxu0 %v2760
    %3066 = vmatprep.subr.bf16.mxu0 %v2757
    %3067 = vmatpush2.bf16.msra.mxu0 %v2756
    %3068 = vmatprep.subr.bf16.mxu0 %v2753
    %3069 = vmatpush2.bf16.msra.mxu0 %v2752
    %3070 = vmatprep.subr.bf16.mxu0 %v2749
    %3071 = vmatpush2.bf16.msra.mxu0 %v2748
    %3072 = vmatprep.subr.bf16.mxu0 %v2745
    %3073 = vmatpush2.bf16.msra.mxu0 %v2744
    %3074 = vmatprep.subr.bf16.mxu0 %v2741
    %3075 = vmatpush2.bf16.msra.mxu0 %v2740
    %3076 = vmatprep.mubr.bf16.mxu0 %v2191
    %3077 = vmatmul.mubr.bf16.gmra.mxu0 %v2190
    %v3078 = vpop.f32.mrf.mxu0
    %v3079 = vadd.f32 0.0, %v3078
    %v3080 = vpop.f32.mrf.mxu0
    %v3081 = vadd.f32 0.0, %v3080
    %v3082 = vpop.f32.mrf.mxu0
    %v3083 = vpop.f32.mrf.mxu0
    %3084 = vdwg.mxu0
    %3085 = vmatprep.subr.bf16.mxu0 %v2801
    %3086 = vmatpush1.bf16.msra.mxu0 %v2800
    %3087 = vmatprep.subr.bf16.mxu0 %v2797
    %3088 = vmatpush1.bf16.msra.mxu0 %v2796
    %3089 = vmatprep.subr.bf16.mxu0 %v2793
    %3090 = vmatpush1.bf16.msra.mxu0 %v2792
    %3091 = vmatprep.subr.bf16.mxu0 %v2789
    %3092 = vmatpush1.bf16.msra.mxu0 %v2788
    %3093 = vmatprep.subr.bf16.mxu0 %v2785
    %3094 = vmatpush1.bf16.msra.mxu0 %v2784
    %3095 = vmatprep.subr.bf16.mxu0 %v2781
    %3096 = vmatpush1.bf16.msra.mxu0 %v2780
    %3097 = vmatprep.subr.bf16.mxu0 %v2777
    %3098 = vmatpush1.bf16.msra.mxu0 %v2776
    %3099 = vmatprep.subr.bf16.mxu0 %v2773
    %3100 = vmatpush1.bf16.msra.mxu0 %v2772
    %3101 = vmatprep.subr.bf16.mxu0 %v2833
    %3102 = vmatpush2.bf16.msra.mxu0 %v2832
    %3103 = vmatprep.subr.bf16.mxu0 %v2829
    %3104 = vmatpush2.bf16.msra.mxu0 %v2828
    %3105 = vmatprep.subr.bf16.mxu0 %v2825
    %3106 = vmatpush2.bf16.msra.mxu0 %v2824
    %3107 = vmatprep.subr.bf16.mxu0 %v2821
    %3108 = vmatpush2.bf16.msra.mxu0 %v2820
    %3109 = vmatprep.subr.bf16.mxu0 %v2817
    %3110 = vmatpush2.bf16.msra.mxu0 %v2816
    %3111 = vmatprep.subr.bf16.mxu0 %v2813
    %3112 = vmatpush2.bf16.msra.mxu0 %v2812
    %3113 = vmatprep.subr.bf16.mxu0 %v2809
    %3114 = vmatpush2.bf16.msra.mxu0 %v2808
    %3115 = vmatprep.subr.bf16.mxu0 %v2805
    %3116 = vmatpush2.bf16.msra.mxu0 %v2804
    %3117 = vmatprep.mubr.bf16.mxu0 %v2193
    %3118 = vmatmul.mubr.bf16.gmra.mxu0 %v2192
    %v3119 = vpop.f32.mrf.mxu0
    %v3120 = vadd.f32 %v3079, %v3119
    %v3121 = vpop.f32.mrf.mxu0
    %v3122 = vadd.f32 %v3081, %v3121
    %v3123 = vpop.f32.mrf.mxu0
    %v3124 = vpop.f32.mrf.mxu0
    %3125 = vdwg.mxu0
    %v3126 = vld [vmem:[#allocation14] sm:$0xf]
    %v3128 = vlaneseq
    %v3129 = vshrl.u32 %v3128, 7
    %v3130 = vsub.s32 0, %v3129
    %v3131 = vrot.slane %v3126, %v3130
    %v3132 = vlaneseq
    %v3133 = vshrl.u32 %v3132, 7
    %v3134 = vsub.s32 1, %v3133
    %v3135 = vrot.slane %v3126, %v3134
    %v3136 = vlaneseq
    %v3137 = vshrl.u32 %v3136, 7
    %v3138 = vsub.s32 2, %v3137
    %v3139 = vrot.slane %v3126, %v3138
    %v3140 = vlaneseq
    %v3141 = vshrl.u32 %v3140, 7
    %v3142 = vsub.s32 3, %v3141
    %v3143 = vrot.slane %v3126, %v3142
    %v3148 = vmul.f32 %v3038, %v3131
    %v3149 = vmul.f32 %v3040, %v3135
    %v3150 = vmul.f32 %v3120, %v3139
    %v3151 = vmul.f32 %v3122, %v3143
    %v3152 = vld [vmem:[#allocation16] sm:$0xf]
    %v3154 = vlaneseq
    %v3155 = vshrl.u32 %v3154, 7
    %v3156 = vsub.s32 0, %v3155
    %v3157 = vrot.slane %v3152, %v3156
    %v3158 = vlaneseq
    %v3159 = vshrl.u32 %v3158, 7
    %v3160 = vsub.s32 1, %v3159
    %v3161 = vrot.slane %v3152, %v3160
    %v3162 = vlaneseq
    %v3163 = vshrl.u32 %v3162, 7
    %v3164 = vsub.s32 2, %v3163
    %v3165 = vrot.slane %v3152, %v3164
    %v3166 = vlaneseq
    %v3167 = vshrl.u32 %v3166, 7
    %v3168 = vsub.s32 3, %v3167
    %v3169 = vrot.slane %v3152, %v3168
    %v3174 = vadd.f32 %v3148, %v3157
    %v3175 = vadd.f32 %v3149, %v3161
    %v3176 = vadd.f32 %v3150, %v3165
    %v3177 = vadd.f32 %v3151, %v3169
    %v3178 = vpack.c.bf16 %v3174, %v3174
    %v3179 = vpack.c.bf16 %v3175, %v3175
    %v3180 = vpack.c.bf16 %v3176, %v3176
    %v3181 = vpack.c.bf16 %v3177, %v3177
    %v3182 = vld [vmem:[#allocation17] sm:$0xff]
    %v3183 = vld [vmem:[#allocation17 + $0x8] sm:$0xff]
    %v3184 = vld [vmem:[#allocation17 + $0x10] sm:$0xff]
    %v3185 = vld [vmem:[#allocation17 + $0x18] sm:$0xff]
    %v3186 = vld [vmem:[#allocation17 + $0x20] sm:$0xff]
    %v3187 = vld [vmem:[#allocation17 + $0x28] sm:$0xff]
    %v3188 = vld [vmem:[#allocation17 + $0x30] sm:$0xff]
    %v3189 = vld [vmem:[#allocation17 + $0x38] sm:$0xff]
    %v3190 = vld [vmem:[#allocation17 + $0x40] sm:$0xff]
    %v3191 = vld [vmem:[#allocation17 + $0x48] sm:$0xff]
    %v3192 = vld [vmem:[#allocation17 + $0x50] sm:$0xff]
    %v3193 = vld [vmem:[#allocation17 + $0x58] sm:$0xff]
    %v3194 = vld [vmem:[#allocation17 + $0x60] sm:$0xff]
    %v3195 = vld [vmem:[#allocation17 + $0x68] sm:$0xff]
    %v3196 = vld [vmem:[#allocation17 + $0x70] sm:$0xff]
    %v3197 = vld [vmem:[#allocation17 + $0x78] sm:$0xff]
    %v3198 = vld [vmem:[#allocation17 + $0x80] sm:$0xff]
    %v3199 = vld [vmem:[#allocation17 + $0x88] sm:$0xff]
    %v3200 = vld [vmem:[#allocation17 + $0x90] sm:$0xff]
    %v3201 = vld [vmem:[#allocation17 + $0x98] sm:$0xff]
    %v3202 = vld [vmem:[#allocation17 + $0xa0] sm:$0xff]
    %v3203 = vld [vmem:[#allocation17 + $0xa8] sm:$0xff]
    %v3204 = vld [vmem:[#allocation17 + $0xb0] sm:$0xff]
    %v3205 = vld [vmem:[#allocation17 + $0xb8] sm:$0xff]
    %v3206 = vld [vmem:[#allocation17 + $0xc0] sm:$0xff]
    %v3207 = vld [vmem:[#allocation17 + $0xc8] sm:$0xff]
    %v3208 = vld [vmem:[#allocation17 + $0xd0] sm:$0xff]
    %v3209 = vld [vmem:[#allocation17 + $0xd8] sm:$0xff]
    %v3210 = vld [vmem:[#allocation17 + $0xe0] sm:$0xff]
    %v3211 = vld [vmem:[#allocation17 + $0xe8] sm:$0xff]
    %v3212 = vld [vmem:[#allocation17 + $0xf0] sm:$0xff]
    %v3213 = vld [vmem:[#allocation17 + $0xf8] sm:$0xff]
    %v3214 = vld [vmem:[#allocation17 + $0x100] sm:$0xff]
    %v3215 = vld [vmem:[#allocation17 + $0x108] sm:$0xff]
    %v3216 = vld [vmem:[#allocation17 + $0x110] sm:$0xff]
    %v3217 = vld [vmem:[#allocation17 + $0x118] sm:$0xff]
    %v3218 = vld [vmem:[#allocation17 + $0x120] sm:$0xff]
    %v3219 = vld [vmem:[#allocation17 + $0x128] sm:$0xff]
    %v3220 = vld [vmem:[#allocation17 + $0x130] sm:$0xff]
    %v3221 = vld [vmem:[#allocation17 + $0x138] sm:$0xff]
    %v3222 = vld [vmem:[#allocation17 + $0x140] sm:$0xff]
    %v3223 = vld [vmem:[#allocation17 + $0x148] sm:$0xff]
    %v3224 = vld [vmem:[#allocation17 + $0x150] sm:$0xff]
    %v3225 = vld [vmem:[#allocation17 + $0x158] sm:$0xff]
    %v3226 = vld [vmem:[#allocation17 + $0x160] sm:$0xff]
    %v3227 = vld [vmem:[#allocation17 + $0x168] sm:$0xff]
    %v3228 = vld [vmem:[#allocation17 + $0x170] sm:$0xff]
    %v3229 = vld [vmem:[#allocation17 + $0x178] sm:$0xff]
    %v3230 = vld [vmem:[#allocation17 + $0x180] sm:$0xff]
    %v3231 = vld [vmem:[#allocation17 + $0x188] sm:$0xff]
    %v3232 = vld [vmem:[#allocation17 + $0x190] sm:$0xff]
    %v3233 = vld [vmem:[#allocation17 + $0x198] sm:$0xff]
    %v3234 = vld [vmem:[#allocation17 + $0x1a0] sm:$0xff]
    %v3235 = vld [vmem:[#allocation17 + $0x1a8] sm:$0xff]
    %v3236 = vld [vmem:[#allocation17 + $0x1b0] sm:$0xff]
    %v3237 = vld [vmem:[#allocation17 + $0x1b8] sm:$0xff]
    %v3238 = vld [vmem:[#allocation17 + $0x1c0] sm:$0xff]
    %v3239 = vld [vmem:[#allocation17 + $0x1c8] sm:$0xff]
    %v3240 = vld [vmem:[#allocation17 + $0x1d0] sm:$0xff]
    %v3241 = vld [vmem:[#allocation17 + $0x1d8] sm:$0xff]
    %v3242 = vld [vmem:[#allocation17 + $0x1e0] sm:$0xff]
    %v3243 = vld [vmem:[#allocation17 + $0x1e8] sm:$0xff]
    %v3244 = vld [vmem:[#allocation17 + $0x1f0] sm:$0xff]
    %v3245 = vld [vmem:[#allocation17 + $0x1f8] sm:$0xff]
    %v3246 = vld [vmem:[#allocation17 + $0x200] sm:$0xff]
    %v3247 = vld [vmem:[#allocation17 + $0x208] sm:$0xff]
    %v3248 = vld [vmem:[#allocation17 + $0x210] sm:$0xff]
    %v3249 = vld [vmem:[#allocation17 + $0x218] sm:$0xff]
    %v3250 = vld [vmem:[#allocation17 + $0x220] sm:$0xff]
    %v3251 = vld [vmem:[#allocation17 + $0x228] sm:$0xff]
    %v3252 = vld [vmem:[#allocation17 + $0x230] sm:$0xff]
    %v3253 = vld [vmem:[#allocation17 + $0x238] sm:$0xff]
    %v3254 = vld [vmem:[#allocation17 + $0x240] sm:$0xff]
    %v3255 = vld [vmem:[#allocation17 + $0x248] sm:$0xff]
    %v3256 = vld [vmem:[#allocation17 + $0x250] sm:$0xff]
    %v3257 = vld [vmem:[#allocation17 + $0x258] sm:$0xff]
    %v3258 = vld [vmem:[#allocation17 + $0x260] sm:$0xff]
    %v3259 = vld [vmem:[#allocation17 + $0x268] sm:$0xff]
    %v3260 = vld [vmem:[#allocation17 + $0x270] sm:$0xff]
    %v3261 = vld [vmem:[#allocation17 + $0x278] sm:$0xff]
    %v3262 = vld [vmem:[#allocation17 + $0x280] sm:$0xff]
    %v3263 = vld [vmem:[#allocation17 + $0x288] sm:$0xff]
    %v3264 = vld [vmem:[#allocation17 + $0x290] sm:$0xff]
    %v3265 = vld [vmem:[#allocation17 + $0x298] sm:$0xff]
    %v3266 = vld [vmem:[#allocation17 + $0x2a0] sm:$0xff]
    %v3267 = vld [vmem:[#allocation17 + $0x2a8] sm:$0xff]
    %v3268 = vld [vmem:[#allocation17 + $0x2b0] sm:$0xff]
    %v3269 = vld [vmem:[#allocation17 + $0x2b8] sm:$0xff]
    %v3270 = vld [vmem:[#allocation17 + $0x2c0] sm:$0xff]
    %v3271 = vld [vmem:[#allocation17 + $0x2c8] sm:$0xff]
    %v3272 = vld [vmem:[#allocation17 + $0x2d0] sm:$0xff]
    %v3273 = vld [vmem:[#allocation17 + $0x2d8] sm:$0xff]
    %v3274 = vld [vmem:[#allocation17 + $0x2e0] sm:$0xff]
    %v3275 = vld [vmem:[#allocation17 + $0x2e8] sm:$0xff]
    %v3276 = vld [vmem:[#allocation17 + $0x2f0] sm:$0xff]
    %v3277 = vld [vmem:[#allocation17 + $0x2f8] sm:$0xff]
    %v3278 = vld [vmem:[#allocation17 + $0x300] sm:$0xff]
    %v3279 = vld [vmem:[#allocation17 + $0x308] sm:$0xff]
    %v3280 = vld [vmem:[#allocation17 + $0x310] sm:$0xff]
    %v3281 = vld [vmem:[#allocation17 + $0x318] sm:$0xff]
    %v3282 = vld [vmem:[#allocation17 + $0x320] sm:$0xff]
    %v3283 = vld [vmem:[#allocation17 + $0x328] sm:$0xff]
    %v3284 = vld [vmem:[#allocation17 + $0x330] sm:$0xff]
    %v3285 = vld [vmem:[#allocation17 + $0x338] sm:$0xff]
    %v3286 = vld [vmem:[#allocation17 + $0x340] sm:$0xff]
    %v3287 = vld [vmem:[#allocation17 + $0x348] sm:$0xff]
    %v3288 = vld [vmem:[#allocation17 + $0x350] sm:$0xff]
    %v3289 = vld [vmem:[#allocation17 + $0x358] sm:$0xff]
    %v3290 = vld [vmem:[#allocation17 + $0x360] sm:$0xff]
    %v3291 = vld [vmem:[#allocation17 + $0x368] sm:$0xff]
    %v3292 = vld [vmem:[#allocation17 + $0x370] sm:$0xff]
    %v3293 = vld [vmem:[#allocation17 + $0x378] sm:$0xff]
    %v3294 = vld [vmem:[#allocation17 + $0x380] sm:$0xff]
    %v3295 = vld [vmem:[#allocation17 + $0x388] sm:$0xff]
    %v3296 = vld [vmem:[#allocation17 + $0x390] sm:$0xff]
    %v3297 = vld [vmem:[#allocation17 + $0x398] sm:$0xff]
    %v3298 = vld [vmem:[#allocation17 + $0x3a0] sm:$0xff]
    %v3299 = vld [vmem:[#allocation17 + $0x3a8] sm:$0xff]
    %v3300 = vld [vmem:[#allocation17 + $0x3b0] sm:$0xff]
    %v3301 = vld [vmem:[#allocation17 + $0x3b8] sm:$0xff]
    %v3302 = vld [vmem:[#allocation17 + $0x3c0] sm:$0xff]
    %v3303 = vld [vmem:[#allocation17 + $0x3c8] sm:$0xff]
    %v3304 = vld [vmem:[#allocation17 + $0x3d0] sm:$0xff]
    %v3305 = vld [vmem:[#allocation17 + $0x3d8] sm:$0xff]
    %v3306 = vld [vmem:[#allocation17 + $0x3e0] sm:$0xff]
    %v3307 = vld [vmem:[#allocation17 + $0x3e8] sm:$0xff]
    %v3308 = vld [vmem:[#allocation17 + $0x3f0] sm:$0xff]
    %v3309 = vld [vmem:[#allocation17 + $0x3f8] sm:$0xff]
    %v3310 = vld [vmem:[#allocation17 + $0x400] sm:$0xff]
    %v3311 = vld [vmem:[#allocation17 + $0x408] sm:$0xff]
    %v3312 = vld [vmem:[#allocation17 + $0x410] sm:$0xff]
    %v3313 = vld [vmem:[#allocation17 + $0x418] sm:$0xff]
    %v3314 = vld [vmem:[#allocation17 + $0x420] sm:$0xff]
    %v3315 = vld [vmem:[#allocation17 + $0x428] sm:$0xff]
    %v3316 = vld [vmem:[#allocation17 + $0x430] sm:$0xff]
    %v3317 = vld [vmem:[#allocation17 + $0x438] sm:$0xff]
    %v3318 = vld [vmem:[#allocation17 + $0x440] sm:$0xff]
    %v3319 = vld [vmem:[#allocation17 + $0x448] sm:$0xff]
    %v3320 = vld [vmem:[#allocation17 + $0x450] sm:$0xff]
    %v3321 = vld [vmem:[#allocation17 + $0x458] sm:$0xff]
    %v3322 = vld [vmem:[#allocation17 + $0x460] sm:$0xff]
    %v3323 = vld [vmem:[#allocation17 + $0x468] sm:$0xff]
    %v3324 = vld [vmem:[#allocation17 + $0x470] sm:$0xff]
    %v3325 = vld [vmem:[#allocation17 + $0x478] sm:$0xff]
    %v3326 = vld [vmem:[#allocation17 + $0x480] sm:$0xff]
    %v3327 = vld [vmem:[#allocation17 + $0x488] sm:$0xff]
    %v3328 = vld [vmem:[#allocation17 + $0x490] sm:$0xff]
    %v3329 = vld [vmem:[#allocation17 + $0x498] sm:$0xff]
    %v3330 = vld [vmem:[#allocation17 + $0x4a0] sm:$0xff]
    %v3331 = vld [vmem:[#allocation17 + $0x4a8] sm:$0xff]
    %v3332 = vld [vmem:[#allocation17 + $0x4b0] sm:$0xff]
    %v3333 = vld [vmem:[#allocation17 + $0x4b8] sm:$0xff]
    %v3334 = vld [vmem:[#allocation17 + $0x4c0] sm:$0xff]
    %v3335 = vld [vmem:[#allocation17 + $0x4c8] sm:$0xff]
    %v3336 = vld [vmem:[#allocation17 + $0x4d0] sm:$0xff]
    %v3337 = vld [vmem:[#allocation17 + $0x4d8] sm:$0xff]
    %v3338 = vld [vmem:[#allocation17 + $0x4e0] sm:$0xff]
    %v3339 = vld [vmem:[#allocation17 + $0x4e8] sm:$0xff]
    %v3340 = vld [vmem:[#allocation17 + $0x4f0] sm:$0xff]
    %v3341 = vld [vmem:[#allocation17 + $0x4f8] sm:$0xff]
    %v3342 = vld [vmem:[#allocation17 + $0x500] sm:$0xff]
    %v3343 = vld [vmem:[#allocation17 + $0x508] sm:$0xff]
    %v3344 = vld [vmem:[#allocation17 + $0x510] sm:$0xff]
    %v3345 = vld [vmem:[#allocation17 + $0x518] sm:$0xff]
    %v3346 = vld [vmem:[#allocation17 + $0x520] sm:$0xff]
    %v3347 = vld [vmem:[#allocation17 + $0x528] sm:$0xff]
    %v3348 = vld [vmem:[#allocation17 + $0x530] sm:$0xff]
    %v3349 = vld [vmem:[#allocation17 + $0x538] sm:$0xff]
    %v3350 = vld [vmem:[#allocation17 + $0x540] sm:$0xff]
    %v3351 = vld [vmem:[#allocation17 + $0x548] sm:$0xff]
    %v3352 = vld [vmem:[#allocation17 + $0x550] sm:$0xff]
    %v3353 = vld [vmem:[#allocation17 + $0x558] sm:$0xff]
    %v3354 = vld [vmem:[#allocation17 + $0x560] sm:$0xff]
    %v3355 = vld [vmem:[#allocation17 + $0x568] sm:$0xff]
    %v3356 = vld [vmem:[#allocation17 + $0x570] sm:$0xff]
    %v3357 = vld [vmem:[#allocation17 + $0x578] sm:$0xff]
    %v3358 = vld [vmem:[#allocation17 + $0x580] sm:$0xff]
    %v3359 = vld [vmem:[#allocation17 + $0x588] sm:$0xff]
    %v3360 = vld [vmem:[#allocation17 + $0x590] sm:$0xff]
    %v3361 = vld [vmem:[#allocation17 + $0x598] sm:$0xff]
    %v3362 = vld [vmem:[#allocation17 + $0x5a0] sm:$0xff]
    %v3363 = vld [vmem:[#allocation17 + $0x5a8] sm:$0xff]
    %v3364 = vld [vmem:[#allocation17 + $0x5b0] sm:$0xff]
    %v3365 = vld [vmem:[#allocation17 + $0x5b8] sm:$0xff]
    %v3366 = vld [vmem:[#allocation17 + $0x5c0] sm:$0xff]
    %v3367 = vld [vmem:[#allocation17 + $0x5c8] sm:$0xff]
    %v3368 = vld [vmem:[#allocation17 + $0x5d0] sm:$0xff]
    %v3369 = vld [vmem:[#allocation17 + $0x5d8] sm:$0xff]
    %v3370 = vld [vmem:[#allocation17 + $0x5e0] sm:$0xff]
    %v3371 = vld [vmem:[#allocation17 + $0x5e8] sm:$0xff]
    %v3372 = vld [vmem:[#allocation17 + $0x5f0] sm:$0xff]
    %v3373 = vld [vmem:[#allocation17 + $0x5f8] sm:$0xff]
    %v3374 = vld [vmem:[#allocation17 + $0x600] sm:$0xff]
    %v3375 = vld [vmem:[#allocation17 + $0x608] sm:$0xff]
    %v3376 = vld [vmem:[#allocation17 + $0x610] sm:$0xff]
    %v3377 = vld [vmem:[#allocation17 + $0x618] sm:$0xff]
    %v3378 = vld [vmem:[#allocation17 + $0x620] sm:$0xff]
    %v3379 = vld [vmem:[#allocation17 + $0x628] sm:$0xff]
    %v3380 = vld [vmem:[#allocation17 + $0x630] sm:$0xff]
    %v3381 = vld [vmem:[#allocation17 + $0x638] sm:$0xff]
    %v3382 = vld [vmem:[#allocation17 + $0x640] sm:$0xff]
    %v3383 = vld [vmem:[#allocation17 + $0x648] sm:$0xff]
    %v3384 = vld [vmem:[#allocation17 + $0x650] sm:$0xff]
    %v3385 = vld [vmem:[#allocation17 + $0x658] sm:$0xff]
    %v3386 = vld [vmem:[#allocation17 + $0x660] sm:$0xff]
    %v3387 = vld [vmem:[#allocation17 + $0x668] sm:$0xff]
    %v3388 = vld [vmem:[#allocation17 + $0x670] sm:$0xff]
    %v3389 = vld [vmem:[#allocation17 + $0x678] sm:$0xff]
    %v3390 = vld [vmem:[#allocation17 + $0x680] sm:$0xff]
    %v3391 = vld [vmem:[#allocation17 + $0x688] sm:$0xff]
    %v3392 = vld [vmem:[#allocation17 + $0x690] sm:$0xff]
    %v3393 = vld [vmem:[#allocation17 + $0x698] sm:$0xff]
    %v3394 = vld [vmem:[#allocation17 + $0x6a0] sm:$0xff]
    %v3395 = vld [vmem:[#allocation17 + $0x6a8] sm:$0xff]
    %v3396 = vld [vmem:[#allocation17 + $0x6b0] sm:$0xff]
    %v3397 = vld [vmem:[#allocation17 + $0x6b8] sm:$0xff]
    %v3398 = vld [vmem:[#allocation17 + $0x6c0] sm:$0xff]
    %v3399 = vld [vmem:[#allocation17 + $0x6c8] sm:$0xff]
    %v3400 = vld [vmem:[#allocation17 + $0x6d0] sm:$0xff]
    %v3401 = vld [vmem:[#allocation17 + $0x6d8] sm:$0xff]
    %v3402 = vld [vmem:[#allocation17 + $0x6e0] sm:$0xff]
    %v3403 = vld [vmem:[#allocation17 + $0x6e8] sm:$0xff]
    %v3404 = vld [vmem:[#allocation17 + $0x6f0] sm:$0xff]
    %v3405 = vld [vmem:[#allocation17 + $0x6f8] sm:$0xff]
    %v3406 = vld [vmem:[#allocation17 + $0x700] sm:$0xff]
    %v3407 = vld [vmem:[#allocation17 + $0x708] sm:$0xff]
    %v3408 = vld [vmem:[#allocation17 + $0x710] sm:$0xff]
    %v3409 = vld [vmem:[#allocation17 + $0x718] sm:$0xff]
    %v3410 = vld [vmem:[#allocation17 + $0x720] sm:$0xff]
    %v3411 = vld [vmem:[#allocation17 + $0x728] sm:$0xff]
    %v3412 = vld [vmem:[#allocation17 + $0x730] sm:$0xff]
    %v3413 = vld [vmem:[#allocation17 + $0x738] sm:$0xff]
    %v3414 = vld [vmem:[#allocation17 + $0x740] sm:$0xff]
    %v3415 = vld [vmem:[#allocation17 + $0x748] sm:$0xff]
    %v3416 = vld [vmem:[#allocation17 + $0x750] sm:$0xff]
    %v3417 = vld [vmem:[#allocation17 + $0x758] sm:$0xff]
    %v3418 = vld [vmem:[#allocation17 + $0x760] sm:$0xff]
    %v3419 = vld [vmem:[#allocation17 + $0x768] sm:$0xff]
    %v3420 = vld [vmem:[#allocation17 + $0x770] sm:$0xff]
    %v3421 = vld [vmem:[#allocation17 + $0x778] sm:$0xff]
    %v3422 = vld [vmem:[#allocation17 + $0x780] sm:$0xff]
    %v3423 = vld [vmem:[#allocation17 + $0x788] sm:$0xff]
    %v3424 = vld [vmem:[#allocation17 + $0x790] sm:$0xff]
    %v3425 = vld [vmem:[#allocation17 + $0x798] sm:$0xff]
    %v3426 = vld [vmem:[#allocation17 + $0x7a0] sm:$0xff]
    %v3427 = vld [vmem:[#allocation17 + $0x7a8] sm:$0xff]
    %v3428 = vld [vmem:[#allocation17 + $0x7b0] sm:$0xff]
    %v3429 = vld [vmem:[#allocation17 + $0x7b8] sm:$0xff]
    %v3430 = vld [vmem:[#allocation17 + $0x7c0] sm:$0xff]
    %v3431 = vld [vmem:[#allocation17 + $0x7c8] sm:$0xff]
    %v3432 = vld [vmem:[#allocation17 + $0x7d0] sm:$0xff]
    %v3433 = vld [vmem:[#allocation17 + $0x7d8] sm:$0xff]
    %v3434 = vld [vmem:[#allocation17 + $0x7e0] sm:$0xff]
    %v3435 = vld [vmem:[#allocation17 + $0x7e8] sm:$0xff]
    %v3436 = vld [vmem:[#allocation17 + $0x7f0] sm:$0xff]
    %v3437 = vld [vmem:[#allocation17 + $0x7f8] sm:$0xff]
    %v3438 = vld [vmem:[#allocation17 + $0x800] sm:$0xff]
    %v3439 = vld [vmem:[#allocation17 + $0x808] sm:$0xff]
    %v3440 = vld [vmem:[#allocation17 + $0x810] sm:$0xff]
    %v3441 = vld [vmem:[#allocation17 + $0x818] sm:$0xff]
    %v3442 = vld [vmem:[#allocation17 + $0x820] sm:$0xff]
    %v3443 = vld [vmem:[#allocation17 + $0x828] sm:$0xff]
    %v3444 = vld [vmem:[#allocation17 + $0x830] sm:$0xff]
    %v3445 = vld [vmem:[#allocation17 + $0x838] sm:$0xff]
    %v3446 = vld [vmem:[#allocation17 + $0x840] sm:$0xff]
    %v3447 = vld [vmem:[#allocation17 + $0x848] sm:$0xff]
    %v3448 = vld [vmem:[#allocation17 + $0x850] sm:$0xff]
    %v3449 = vld [vmem:[#allocation17 + $0x858] sm:$0xff]
    %v3450 = vld [vmem:[#allocation17 + $0x860] sm:$0xff]
    %v3451 = vld [vmem:[#allocation17 + $0x868] sm:$0xff]
    %v3452 = vld [vmem:[#allocation17 + $0x870] sm:$0xff]
    %v3453 = vld [vmem:[#allocation17 + $0x878] sm:$0xff]
    %v3454 = vld [vmem:[#allocation17 + $0x880] sm:$0xff]
    %v3455 = vld [vmem:[#allocation17 + $0x888] sm:$0xff]
    %v3456 = vld [vmem:[#allocation17 + $0x890] sm:$0xff]
    %v3457 = vld [vmem:[#allocation17 + $0x898] sm:$0xff]
    %v3458 = vld [vmem:[#allocation17 + $0x8a0] sm:$0xff]
    %v3459 = vld [vmem:[#allocation17 + $0x8a8] sm:$0xff]
    %v3460 = vld [vmem:[#allocation17 + $0x8b0] sm:$0xff]
    %v3461 = vld [vmem:[#allocation17 + $0x8b8] sm:$0xff]
    %v3462 = vld [vmem:[#allocation17 + $0x8c0] sm:$0xff]
    %v3463 = vld [vmem:[#allocation17 + $0x8c8] sm:$0xff]
    %v3464 = vld [vmem:[#allocation17 + $0x8d0] sm:$0xff]
    %v3465 = vld [vmem:[#allocation17 + $0x8d8] sm:$0xff]
    %v3466 = vld [vmem:[#allocation17 + $0x8e0] sm:$0xff]
    %v3467 = vld [vmem:[#allocation17 + $0x8e8] sm:$0xff]
    %v3468 = vld [vmem:[#allocation17 + $0x8f0] sm:$0xff]
    %v3469 = vld [vmem:[#allocation17 + $0x8f8] sm:$0xff]
    %v3470 = vld [vmem:[#allocation17 + $0x900] sm:$0xff]
    %v3471 = vld [vmem:[#allocation17 + $0x908] sm:$0xff]
    %v3472 = vld [vmem:[#allocation17 + $0x910] sm:$0xff]
    %v3473 = vld [vmem:[#allocation17 + $0x918] sm:$0xff]
    %v3474 = vld [vmem:[#allocation17 + $0x920] sm:$0xff]
    %v3475 = vld [vmem:[#allocation17 + $0x928] sm:$0xff]
    %v3476 = vld [vmem:[#allocation17 + $0x930] sm:$0xff]
    %v3477 = vld [vmem:[#allocation17 + $0x938] sm:$0xff]
    %v3478 = vld [vmem:[#allocation17 + $0x940] sm:$0xff]
    %v3479 = vld [vmem:[#allocation17 + $0x948] sm:$0xff]
    %v3480 = vld [vmem:[#allocation17 + $0x950] sm:$0xff]
    %v3481 = vld [vmem:[#allocation17 + $0x958] sm:$0xff]
    %v3482 = vld [vmem:[#allocation17 + $0x960] sm:$0xff]
    %v3483 = vld [vmem:[#allocation17 + $0x968] sm:$0xff]
    %v3484 = vld [vmem:[#allocation17 + $0x970] sm:$0xff]
    %v3485 = vld [vmem:[#allocation17 + $0x978] sm:$0xff]
    %v3486 = vld [vmem:[#allocation17 + $0x980] sm:$0xff]
    %v3487 = vld [vmem:[#allocation17 + $0x988] sm:$0xff]
    %v3488 = vld [vmem:[#allocation17 + $0x990] sm:$0xff]
    %v3489 = vld [vmem:[#allocation17 + $0x998] sm:$0xff]
    %v3490 = vld [vmem:[#allocation17 + $0x9a0] sm:$0xff]
    %v3491 = vld [vmem:[#allocation17 + $0x9a8] sm:$0xff]
    %v3492 = vld [vmem:[#allocation17 + $0x9b0] sm:$0xff]
    %v3493 = vld [vmem:[#allocation17 + $0x9b8] sm:$0xff]
    %v3494 = vld [vmem:[#allocation17 + $0x9c0] sm:$0xff]
    %v3495 = vld [vmem:[#allocation17 + $0x9c8] sm:$0xff]
    %v3496 = vld [vmem:[#allocation17 + $0x9d0] sm:$0xff]
    %v3497 = vld [vmem:[#allocation17 + $0x9d8] sm:$0xff]
    %v3498 = vld [vmem:[#allocation17 + $0x9e0] sm:$0xff]
    %v3499 = vld [vmem:[#allocation17 + $0x9e8] sm:$0xff]
    %v3500 = vld [vmem:[#allocation17 + $0x9f0] sm:$0xff]
    %v3501 = vld [vmem:[#allocation17 + $0x9f8] sm:$0xff]
    %v3502 = vld [vmem:[#allocation17 + $0xa00] sm:$0xff]
    %v3503 = vld [vmem:[#allocation17 + $0xa08] sm:$0xff]
    %v3504 = vld [vmem:[#allocation17 + $0xa10] sm:$0xff]
    %v3505 = vld [vmem:[#allocation17 + $0xa18] sm:$0xff]
    %v3506 = vld [vmem:[#allocation17 + $0xa20] sm:$0xff]
    %v3507 = vld [vmem:[#allocation17 + $0xa28] sm:$0xff]
    %v3508 = vld [vmem:[#allocation17 + $0xa30] sm:$0xff]
    %v3509 = vld [vmem:[#allocation17 + $0xa38] sm:$0xff]
    %v3510 = vld [vmem:[#allocation17 + $0xa40] sm:$0xff]
    %v3511 = vld [vmem:[#allocation17 + $0xa48] sm:$0xff]
    %v3512 = vld [vmem:[#allocation17 + $0xa50] sm:$0xff]
    %v3513 = vld [vmem:[#allocation17 + $0xa58] sm:$0xff]
    %v3514 = vld [vmem:[#allocation17 + $0xa60] sm:$0xff]
    %v3515 = vld [vmem:[#allocation17 + $0xa68] sm:$0xff]
    %v3516 = vld [vmem:[#allocation17 + $0xa70] sm:$0xff]
    %v3517 = vld [vmem:[#allocation17 + $0xa78] sm:$0xff]
    %v3518 = vld [vmem:[#allocation17 + $0xa80] sm:$0xff]
    %v3519 = vld [vmem:[#allocation17 + $0xa88] sm:$0xff]
    %v3520 = vld [vmem:[#allocation17 + $0xa90] sm:$0xff]
    %v3521 = vld [vmem:[#allocation17 + $0xa98] sm:$0xff]
    %v3522 = vld [vmem:[#allocation17 + $0xaa0] sm:$0xff]
    %v3523 = vld [vmem:[#allocation17 + $0xaa8] sm:$0xff]
    %v3524 = vld [vmem:[#allocation17 + $0xab0] sm:$0xff]
    %v3525 = vld [vmem:[#allocation17 + $0xab8] sm:$0xff]
    %v3526 = vld [vmem:[#allocation17 + $0xac0] sm:$0xff]
    %v3527 = vld [vmem:[#allocation17 + $0xac8] sm:$0xff]
    %v3528 = vld [vmem:[#allocation17 + $0xad0] sm:$0xff]
    %v3529 = vld [vmem:[#allocation17 + $0xad8] sm:$0xff]
    %v3530 = vld [vmem:[#allocation17 + $0xae0] sm:$0xff]
    %v3531 = vld [vmem:[#allocation17 + $0xae8] sm:$0xff]
    %v3532 = vld [vmem:[#allocation17 + $0xaf0] sm:$0xff]
    %v3533 = vld [vmem:[#allocation17 + $0xaf8] sm:$0xff]
    %v3534 = vld [vmem:[#allocation17 + $0xb00] sm:$0xff]
    %v3535 = vld [vmem:[#allocation17 + $0xb08] sm:$0xff]
    %v3536 = vld [vmem:[#allocation17 + $0xb10] sm:$0xff]
    %v3537 = vld [vmem:[#allocation17 + $0xb18] sm:$0xff]
    %v3538 = vld [vmem:[#allocation17 + $0xb20] sm:$0xff]
    %v3539 = vld [vmem:[#allocation17 + $0xb28] sm:$0xff]
    %v3540 = vld [vmem:[#allocation17 + $0xb30] sm:$0xff]
    %v3541 = vld [vmem:[#allocation17 + $0xb38] sm:$0xff]
    %v3542 = vld [vmem:[#allocation17 + $0xb40] sm:$0xff]
    %v3543 = vld [vmem:[#allocation17 + $0xb48] sm:$0xff]
    %v3544 = vld [vmem:[#allocation17 + $0xb50] sm:$0xff]
    %v3545 = vld [vmem:[#allocation17 + $0xb58] sm:$0xff]
    %v3546 = vld [vmem:[#allocation17 + $0xb60] sm:$0xff]
    %v3547 = vld [vmem:[#allocation17 + $0xb68] sm:$0xff]
    %v3548 = vld [vmem:[#allocation17 + $0xb70] sm:$0xff]
    %v3549 = vld [vmem:[#allocation17 + $0xb78] sm:$0xff]
    %v3550 = vld [vmem:[#allocation17 + $0xb80] sm:$0xff]
    %v3551 = vld [vmem:[#allocation17 + $0xb88] sm:$0xff]
    %v3552 = vld [vmem:[#allocation17 + $0xb90] sm:$0xff]
    %v3553 = vld [vmem:[#allocation17 + $0xb98] sm:$0xff]
    %v3554 = vld [vmem:[#allocation17 + $0xba0] sm:$0xff]
    %v3555 = vld [vmem:[#allocation17 + $0xba8] sm:$0xff]
    %v3556 = vld [vmem:[#allocation17 + $0xbb0] sm:$0xff]
    %v3557 = vld [vmem:[#allocation17 + $0xbb8] sm:$0xff]
    %v3558 = vld [vmem:[#allocation17 + $0xbc0] sm:$0xff]
    %v3559 = vld [vmem:[#allocation17 + $0xbc8] sm:$0xff]
    %v3560 = vld [vmem:[#allocation17 + $0xbd0] sm:$0xff]
    %v3561 = vld [vmem:[#allocation17 + $0xbd8] sm:$0xff]
    %v3562 = vld [vmem:[#allocation17 + $0xbe0] sm:$0xff]
    %v3563 = vld [vmem:[#allocation17 + $0xbe8] sm:$0xff]
    %v3564 = vld [vmem:[#allocation17 + $0xbf0] sm:$0xff]
    %v3565 = vld [vmem:[#allocation17 + $0xbf8] sm:$0xff]
    %v3566 = vld [vmem:[#allocation17 + $0xc00] sm:$0xff]
    %v3567 = vld [vmem:[#allocation17 + $0xc08] sm:$0xff]
    %v3568 = vld [vmem:[#allocation17 + $0xc10] sm:$0xff]
    %v3569 = vld [vmem:[#allocation17 + $0xc18] sm:$0xff]
    %v3570 = vld [vmem:[#allocation17 + $0xc20] sm:$0xff]
    %v3571 = vld [vmem:[#allocation17 + $0xc28] sm:$0xff]
    %v3572 = vld [vmem:[#allocation17 + $0xc30] sm:$0xff]
    %v3573 = vld [vmem:[#allocation17 + $0xc38] sm:$0xff]
    %v3574 = vld [vmem:[#allocation17 + $0xc40] sm:$0xff]
    %v3575 = vld [vmem:[#allocation17 + $0xc48] sm:$0xff]
    %v3576 = vld [vmem:[#allocation17 + $0xc50] sm:$0xff]
    %v3577 = vld [vmem:[#allocation17 + $0xc58] sm:$0xff]
    %v3578 = vld [vmem:[#allocation17 + $0xc60] sm:$0xff]
    %v3579 = vld [vmem:[#allocation17 + $0xc68] sm:$0xff]
    %v3580 = vld [vmem:[#allocation17 + $0xc70] sm:$0xff]
    %v3581 = vld [vmem:[#allocation17 + $0xc78] sm:$0xff]
    %v3582 = vld [vmem:[#allocation17 + $0xc80] sm:$0xff]
    %v3583 = vld [vmem:[#allocation17 + $0xc88] sm:$0xff]
    %v3584 = vld [vmem:[#allocation17 + $0xc90] sm:$0xff]
    %v3585 = vld [vmem:[#allocation17 + $0xc98] sm:$0xff]
    %v3586 = vld [vmem:[#allocation17 + $0xca0] sm:$0xff]
    %v3587 = vld [vmem:[#allocation17 + $0xca8] sm:$0xff]
    %v3588 = vld [vmem:[#allocation17 + $0xcb0] sm:$0xff]
    %v3589 = vld [vmem:[#allocation17 + $0xcb8] sm:$0xff]
    %v3590 = vld [vmem:[#allocation17 + $0xcc0] sm:$0xff]
    %v3591 = vld [vmem:[#allocation17 + $0xcc8] sm:$0xff]
    %v3592 = vld [vmem:[#allocation17 + $0xcd0] sm:$0xff]
    %v3593 = vld [vmem:[#allocation17 + $0xcd8] sm:$0xff]
    %v3594 = vld [vmem:[#allocation17 + $0xce0] sm:$0xff]
    %v3595 = vld [vmem:[#allocation17 + $0xce8] sm:$0xff]
    %v3596 = vld [vmem:[#allocation17 + $0xcf0] sm:$0xff]
    %v3597 = vld [vmem:[#allocation17 + $0xcf8] sm:$0xff]
    %v3598 = vld [vmem:[#allocation17 + $0xd00] sm:$0xff]
    %v3599 = vld [vmem:[#allocation17 + $0xd08] sm:$0xff]
    %v3600 = vld [vmem:[#allocation17 + $0xd10] sm:$0xff]
    %v3601 = vld [vmem:[#allocation17 + $0xd18] sm:$0xff]
    %v3602 = vld [vmem:[#allocation17 + $0xd20] sm:$0xff]
    %v3603 = vld [vmem:[#allocation17 + $0xd28] sm:$0xff]
    %v3604 = vld [vmem:[#allocation17 + $0xd30] sm:$0xff]
    %v3605 = vld [vmem:[#allocation17 + $0xd38] sm:$0xff]
    %v3606 = vld [vmem:[#allocation17 + $0xd40] sm:$0xff]
    %v3607 = vld [vmem:[#allocation17 + $0xd48] sm:$0xff]
    %v3608 = vld [vmem:[#allocation17 + $0xd50] sm:$0xff]
    %v3609 = vld [vmem:[#allocation17 + $0xd58] sm:$0xff]
    %v3610 = vld [vmem:[#allocation17 + $0xd60] sm:$0xff]
    %v3611 = vld [vmem:[#allocation17 + $0xd68] sm:$0xff]
    %v3612 = vld [vmem:[#allocation17 + $0xd70] sm:$0xff]
    %v3613 = vld [vmem:[#allocation17 + $0xd78] sm:$0xff]
    %v3614 = vld [vmem:[#allocation17 + $0xd80] sm:$0xff]
    %v3615 = vld [vmem:[#allocation17 + $0xd88] sm:$0xff]
    %v3616 = vld [vmem:[#allocation17 + $0xd90] sm:$0xff]
    %v3617 = vld [vmem:[#allocation17 + $0xd98] sm:$0xff]
    %v3618 = vld [vmem:[#allocation17 + $0xda0] sm:$0xff]
    %v3619 = vld [vmem:[#allocation17 + $0xda8] sm:$0xff]
    %v3620 = vld [vmem:[#allocation17 + $0xdb0] sm:$0xff]
    %v3621 = vld [vmem:[#allocation17 + $0xdb8] sm:$0xff]
    %v3622 = vld [vmem:[#allocation17 + $0xdc0] sm:$0xff]
    %v3623 = vld [vmem:[#allocation17 + $0xdc8] sm:$0xff]
    %v3624 = vld [vmem:[#allocation17 + $0xdd0] sm:$0xff]
    %v3625 = vld [vmem:[#allocation17 + $0xdd8] sm:$0xff]
    %v3626 = vld [vmem:[#allocation17 + $0xde0] sm:$0xff]
    %v3627 = vld [vmem:[#allocation17 + $0xde8] sm:$0xff]
    %v3628 = vld [vmem:[#allocation17 + $0xdf0] sm:$0xff]
    %v3629 = vld [vmem:[#allocation17 + $0xdf8] sm:$0xff]
    %v3630 = vld [vmem:[#allocation17 + $0xe00] sm:$0xff]
    %v3631 = vld [vmem:[#allocation17 + $0xe08] sm:$0xff]
    %v3632 = vld [vmem:[#allocation17 + $0xe10] sm:$0xff]
    %v3633 = vld [vmem:[#allocation17 + $0xe18] sm:$0xff]
    %v3634 = vld [vmem:[#allocation17 + $0xe20] sm:$0xff]
    %v3635 = vld [vmem:[#allocation17 + $0xe28] sm:$0xff]
    %v3636 = vld [vmem:[#allocation17 + $0xe30] sm:$0xff]
    %v3637 = vld [vmem:[#allocation17 + $0xe38] sm:$0xff]
    %v3638 = vld [vmem:[#allocation17 + $0xe40] sm:$0xff]
    %v3639 = vld [vmem:[#allocation17 + $0xe48] sm:$0xff]
    %v3640 = vld [vmem:[#allocation17 + $0xe50] sm:$0xff]
    %v3641 = vld [vmem:[#allocation17 + $0xe58] sm:$0xff]
    %v3642 = vld [vmem:[#allocation17 + $0xe60] sm:$0xff]
    %v3643 = vld [vmem:[#allocation17 + $0xe68] sm:$0xff]
    %v3644 = vld [vmem:[#allocation17 + $0xe70] sm:$0xff]
    %v3645 = vld [vmem:[#allocation17 + $0xe78] sm:$0xff]
    %v3646 = vld [vmem:[#allocation17 + $0xe80] sm:$0xff]
    %v3647 = vld [vmem:[#allocation17 + $0xe88] sm:$0xff]
    %v3648 = vld [vmem:[#allocation17 + $0xe90] sm:$0xff]
    %v3649 = vld [vmem:[#allocation17 + $0xe98] sm:$0xff]
    %v3650 = vld [vmem:[#allocation17 + $0xea0] sm:$0xff]
    %v3651 = vld [vmem:[#allocation17 + $0xea8] sm:$0xff]
    %v3652 = vld [vmem:[#allocation17 + $0xeb0] sm:$0xff]
    %v3653 = vld [vmem:[#allocation17 + $0xeb8] sm:$0xff]
    %v3654 = vld [vmem:[#allocation17 + $0xec0] sm:$0xff]
    %v3655 = vld [vmem:[#allocation17 + $0xec8] sm:$0xff]
    %v3656 = vld [vmem:[#allocation17 + $0xed0] sm:$0xff]
    %v3657 = vld [vmem:[#allocation17 + $0xed8] sm:$0xff]
    %v3658 = vld [vmem:[#allocation17 + $0xee0] sm:$0xff]
    %v3659 = vld [vmem:[#allocation17 + $0xee8] sm:$0xff]
    %v3660 = vld [vmem:[#allocation17 + $0xef0] sm:$0xff]
    %v3661 = vld [vmem:[#allocation17 + $0xef8] sm:$0xff]
    %v3662 = vld [vmem:[#allocation17 + $0xf00] sm:$0xff]
    %v3663 = vld [vmem:[#allocation17 + $0xf08] sm:$0xff]
    %v3664 = vld [vmem:[#allocation17 + $0xf10] sm:$0xff]
    %v3665 = vld [vmem:[#allocation17 + $0xf18] sm:$0xff]
    %v3666 = vld [vmem:[#allocation17 + $0xf20] sm:$0xff]
    %v3667 = vld [vmem:[#allocation17 + $0xf28] sm:$0xff]
    %v3668 = vld [vmem:[#allocation17 + $0xf30] sm:$0xff]
    %v3669 = vld [vmem:[#allocation17 + $0xf38] sm:$0xff]
    %v3670 = vld [vmem:[#allocation17 + $0xf40] sm:$0xff]
    %v3671 = vld [vmem:[#allocation17 + $0xf48] sm:$0xff]
    %v3672 = vld [vmem:[#allocation17 + $0xf50] sm:$0xff]
    %v3673 = vld [vmem:[#allocation17 + $0xf58] sm:$0xff]
    %v3674 = vld [vmem:[#allocation17 + $0xf60] sm:$0xff]
    %v3675 = vld [vmem:[#allocation17 + $0xf68] sm:$0xff]
    %v3676 = vld [vmem:[#allocation17 + $0xf70] sm:$0xff]
    %v3677 = vld [vmem:[#allocation17 + $0xf78] sm:$0xff]
    %v3678 = vld [vmem:[#allocation17 + $0xf80] sm:$0xff]
    %v3679 = vld [vmem:[#allocation17 + $0xf88] sm:$0xff]
    %v3680 = vld [vmem:[#allocation17 + $0xf90] sm:$0xff]
    %v3681 = vld [vmem:[#allocation17 + $0xf98] sm:$0xff]
    %v3682 = vld [vmem:[#allocation17 + $0xfa0] sm:$0xff]
    %v3683 = vld [vmem:[#allocation17 + $0xfa8] sm:$0xff]
    %v3684 = vld [vmem:[#allocation17 + $0xfb0] sm:$0xff]
    %v3685 = vld [vmem:[#allocation17 + $0xfb8] sm:$0xff]
    %v3686 = vld [vmem:[#allocation17 + $0xfc0] sm:$0xff]
    %v3687 = vld [vmem:[#allocation17 + $0xfc8] sm:$0xff]
    %v3688 = vld [vmem:[#allocation17 + $0xfd0] sm:$0xff]
    %v3689 = vld [vmem:[#allocation17 + $0xfd8] sm:$0xff]
    %v3690 = vld [vmem:[#allocation17 + $0xfe0] sm:$0xff]
    %v3691 = vld [vmem:[#allocation17 + $0xfe8] sm:$0xff]
    %v3692 = vld [vmem:[#allocation17 + $0xff0] sm:$0xff]
    %v3693 = vld [vmem:[#allocation17 + $0xff8] sm:$0xff]
    %v4206 = vunpack.c.l.b16 %v3182
    %v4207 = vunpack.c.h.b16 %v3182
    %v4208 = vunpack.c.l.b16 %v3183
    %v4209 = vunpack.c.h.b16 %v3183
    %v4210 = vunpack.c.l.b16 %v3184
    %v4211 = vunpack.c.h.b16 %v3184
    %v4212 = vunpack.c.l.b16 %v3185
    %v4213 = vunpack.c.h.b16 %v3185
    %v4214 = vunpack.c.l.b16 %v3186
    %v4215 = vunpack.c.h.b16 %v3186
    %v4216 = vunpack.c.l.b16 %v3187
    %v4217 = vunpack.c.h.b16 %v3187
    %v4218 = vunpack.c.l.b16 %v3188
    %v4219 = vunpack.c.h.b16 %v3188
    %v4220 = vunpack.c.l.b16 %v3189
    %v4221 = vunpack.c.h.b16 %v3189
    %v4222 = vunpack.c.l.b16 %v3190
    %v4223 = vunpack.c.h.b16 %v3190
    %v4224 = vunpack.c.l.b16 %v3191
    %v4225 = vunpack.c.h.b16 %v3191
    %v4226 = vunpack.c.l.b16 %v3192
    %v4227 = vunpack.c.h.b16 %v3192
    %v4228 = vunpack.c.l.b16 %v3193
    %v4229 = vunpack.c.h.b16 %v3193
    %v4230 = vunpack.c.l.b16 %v3194
    %v4231 = vunpack.c.h.b16 %v3194
    %v4232 = vunpack.c.l.b16 %v3195
    %v4233 = vunpack.c.h.b16 %v3195
    %v4234 = vunpack.c.l.b16 %v3196
    %v4235 = vunpack.c.h.b16 %v3196
    %v4236 = vunpack.c.l.b16 %v3197
    %v4237 = vunpack.c.h.b16 %v3197
    %v4238 = vunpack.c.l.b16 %v3198
    %v4239 = vunpack.c.h.b16 %v3198
    %v4240 = vunpack.c.l.b16 %v3199
    %v4241 = vunpack.c.h.b16 %v3199
    %v4242 = vunpack.c.l.b16 %v3200
    %v4243 = vunpack.c.h.b16 %v3200
    %v4244 = vunpack.c.l.b16 %v3201
    %v4245 = vunpack.c.h.b16 %v3201
    %v4246 = vunpack.c.l.b16 %v3202
    %v4247 = vunpack.c.h.b16 %v3202
    %v4248 = vunpack.c.l.b16 %v3203
    %v4249 = vunpack.c.h.b16 %v3203
    %v4250 = vunpack.c.l.b16 %v3204
    %v4251 = vunpack.c.h.b16 %v3204
    %v4252 = vunpack.c.l.b16 %v3205
    %v4253 = vunpack.c.h.b16 %v3205
    %v4254 = vunpack.c.l.b16 %v3206
    %v4255 = vunpack.c.h.b16 %v3206
    %v4256 = vunpack.c.l.b16 %v3207
    %v4257 = vunpack.c.h.b16 %v3207
    %v4258 = vunpack.c.l.b16 %v3208
    %v4259 = vunpack.c.h.b16 %v3208
    %v4260 = vunpack.c.l.b16 %v3209
    %v4261 = vunpack.c.h.b16 %v3209
    %v4262 = vunpack.c.l.b16 %v3210
    %v4263 = vunpack.c.h.b16 %v3210
    %v4264 = vunpack.c.l.b16 %v3211
    %v4265 = vunpack.c.h.b16 %v3211
    %v4266 = vunpack.c.l.b16 %v3212
    %v4267 = vunpack.c.h.b16 %v3212
    %v4268 = vunpack.c.l.b16 %v3213
    %v4269 = vunpack.c.h.b16 %v3213
    %v4270 = vunpack.c.l.b16 %v3214
    %v4271 = vunpack.c.h.b16 %v3214
    %v4272 = vunpack.c.l.b16 %v3215
    %v4273 = vunpack.c.h.b16 %v3215
    %v4274 = vunpack.c.l.b16 %v3216
    %v4275 = vunpack.c.h.b16 %v3216
    %v4276 = vunpack.c.l.b16 %v3217
    %v4277 = vunpack.c.h.b16 %v3217
    %v4278 = vunpack.c.l.b16 %v3218
    %v4279 = vunpack.c.h.b16 %v3218
    %v4280 = vunpack.c.l.b16 %v3219
    %v4281 = vunpack.c.h.b16 %v3219
    %v4282 = vunpack.c.l.b16 %v3220
    %v4283 = vunpack.c.h.b16 %v3220
    %v4284 = vunpack.c.l.b16 %v3221
    %v4285 = vunpack.c.h.b16 %v3221
    %v4286 = vunpack.c.l.b16 %v3222
    %v4287 = vunpack.c.h.b16 %v3222
    %v4288 = vunpack.c.l.b16 %v3223
    %v4289 = vunpack.c.h.b16 %v3223
    %v4290 = vunpack.c.l.b16 %v3224
    %v4291 = vunpack.c.h.b16 %v3224
    %v4292 = vunpack.c.l.b16 %v3225
    %v4293 = vunpack.c.h.b16 %v3225
    %v4294 = vunpack.c.l.b16 %v3226
    %v4295 = vunpack.c.h.b16 %v3226
    %v4296 = vunpack.c.l.b16 %v3227
    %v4297 = vunpack.c.h.b16 %v3227
    %v4298 = vunpack.c.l.b16 %v3228
    %v4299 = vunpack.c.h.b16 %v3228
    %v4300 = vunpack.c.l.b16 %v3229
    %v4301 = vunpack.c.h.b16 %v3229
    %v4302 = vunpack.c.l.b16 %v3230
    %v4303 = vunpack.c.h.b16 %v3230
    %v4304 = vunpack.c.l.b16 %v3231
    %v4305 = vunpack.c.h.b16 %v3231
    %v4306 = vunpack.c.l.b16 %v3232
    %v4307 = vunpack.c.h.b16 %v3232
    %v4308 = vunpack.c.l.b16 %v3233
    %v4309 = vunpack.c.h.b16 %v3233
    %v4310 = vunpack.c.l.b16 %v3234
    %v4311 = vunpack.c.h.b16 %v3234
    %v4312 = vunpack.c.l.b16 %v3235
    %v4313 = vunpack.c.h.b16 %v3235
    %v4314 = vunpack.c.l.b16 %v3236
    %v4315 = vunpack.c.h.b16 %v3236
    %v4316 = vunpack.c.l.b16 %v3237
    %v4317 = vunpack.c.h.b16 %v3237
    %v4318 = vunpack.c.l.b16 %v3238
    %v4319 = vunpack.c.h.b16 %v3238
    %v4320 = vunpack.c.l.b16 %v3239
    %v4321 = vunpack.c.h.b16 %v3239
    %v4322 = vunpack.c.l.b16 %v3240
    %v4323 = vunpack.c.h.b16 %v3240
    %v4324 = vunpack.c.l.b16 %v3241
    %v4325 = vunpack.c.h.b16 %v3241
    %v4326 = vunpack.c.l.b16 %v3242
    %v4327 = vunpack.c.h.b16 %v3242
    %v4328 = vunpack.c.l.b16 %v3243
    %v4329 = vunpack.c.h.b16 %v3243
    %v4330 = vunpack.c.l.b16 %v3244
    %v4331 = vunpack.c.h.b16 %v3244
    %v4332 = vunpack.c.l.b16 %v3245
    %v4333 = vunpack.c.h.b16 %v3245
    %v4334 = vunpack.c.l.b16 %v3246
    %v4335 = vunpack.c.h.b16 %v3246
    %v4336 = vunpack.c.l.b16 %v3247
    %v4337 = vunpack.c.h.b16 %v3247
    %v4338 = vunpack.c.l.b16 %v3248
    %v4339 = vunpack.c.h.b16 %v3248
    %v4340 = vunpack.c.l.b16 %v3249
    %v4341 = vunpack.c.h.b16 %v3249
    %v4342 = vunpack.c.l.b16 %v3250
    %v4343 = vunpack.c.h.b16 %v3250
    %v4344 = vunpack.c.l.b16 %v3251
    %v4345 = vunpack.c.h.b16 %v3251
    %v4346 = vunpack.c.l.b16 %v3252
    %v4347 = vunpack.c.h.b16 %v3252
    %v4348 = vunpack.c.l.b16 %v3253
    %v4349 = vunpack.c.h.b16 %v3253
    %v4350 = vunpack.c.l.b16 %v3254
    %v4351 = vunpack.c.h.b16 %v3254
    %v4352 = vunpack.c.l.b16 %v3255
    %v4353 = vunpack.c.h.b16 %v3255
    %v4354 = vunpack.c.l.b16 %v3256
    %v4355 = vunpack.c.h.b16 %v3256
    %v4356 = vunpack.c.l.b16 %v3257
    %v4357 = vunpack.c.h.b16 %v3257
    %v4358 = vunpack.c.l.b16 %v3258
    %v4359 = vunpack.c.h.b16 %v3258
    %v4360 = vunpack.c.l.b16 %v3259
    %v4361 = vunpack.c.h.b16 %v3259
    %v4362 = vunpack.c.l.b16 %v3260
    %v4363 = vunpack.c.h.b16 %v3260
    %v4364 = vunpack.c.l.b16 %v3261
    %v4365 = vunpack.c.h.b16 %v3261
    %v4366 = vunpack.c.l.b16 %v3262
    %v4367 = vunpack.c.h.b16 %v3262
    %v4368 = vunpack.c.l.b16 %v3263
    %v4369 = vunpack.c.h.b16 %v3263
    %v4370 = vunpack.c.l.b16 %v3264
    %v4371 = vunpack.c.h.b16 %v3264
    %v4372 = vunpack.c.l.b16 %v3265
    %v4373 = vunpack.c.h.b16 %v3265
    %v4374 = vunpack.c.l.b16 %v3266
    %v4375 = vunpack.c.h.b16 %v3266
    %v4376 = vunpack.c.l.b16 %v3267
    %v4377 = vunpack.c.h.b16 %v3267
    %v4378 = vunpack.c.l.b16 %v3268
    %v4379 = vunpack.c.h.b16 %v3268
    %v4380 = vunpack.c.l.b16 %v3269
    %v4381 = vunpack.c.h.b16 %v3269
    %v4382 = vunpack.c.l.b16 %v3270
    %v4383 = vunpack.c.h.b16 %v3270
    %v4384 = vunpack.c.l.b16 %v3271
    %v4385 = vunpack.c.h.b16 %v3271
    %v4386 = vunpack.c.l.b16 %v3272
    %v4387 = vunpack.c.h.b16 %v3272
    %v4388 = vunpack.c.l.b16 %v3273
    %v4389 = vunpack.c.h.b16 %v3273
    %v4390 = vunpack.c.l.b16 %v3274
    %v4391 = vunpack.c.h.b16 %v3274
    %v4392 = vunpack.c.l.b16 %v3275
    %v4393 = vunpack.c.h.b16 %v3275
    %v4394 = vunpack.c.l.b16 %v3276
    %v4395 = vunpack.c.h.b16 %v3276
    %v4396 = vunpack.c.l.b16 %v3277
    %v4397 = vunpack.c.h.b16 %v3277
    %v4398 = vunpack.c.l.b16 %v3278
    %v4399 = vunpack.c.h.b16 %v3278
    %v4400 = vunpack.c.l.b16 %v3279
    %v4401 = vunpack.c.h.b16 %v3279
    %v4402 = vunpack.c.l.b16 %v3280
    %v4403 = vunpack.c.h.b16 %v3280
    %v4404 = vunpack.c.l.b16 %v3281
    %v4405 = vunpack.c.h.b16 %v3281
    %v4406 = vunpack.c.l.b16 %v3282
    %v4407 = vunpack.c.h.b16 %v3282
    %v4408 = vunpack.c.l.b16 %v3283
    %v4409 = vunpack.c.h.b16 %v3283
    %v4410 = vunpack.c.l.b16 %v3284
    %v4411 = vunpack.c.h.b16 %v3284
    %v4412 = vunpack.c.l.b16 %v3285
    %v4413 = vunpack.c.h.b16 %v3285
    %v4414 = vunpack.c.l.b16 %v3286
    %v4415 = vunpack.c.h.b16 %v3286
    %v4416 = vunpack.c.l.b16 %v3287
    %v4417 = vunpack.c.h.b16 %v3287
    %v4418 = vunpack.c.l.b16 %v3288
    %v4419 = vunpack.c.h.b16 %v3288
    %v4420 = vunpack.c.l.b16 %v3289
    %v4421 = vunpack.c.h.b16 %v3289
    %v4422 = vunpack.c.l.b16 %v3290
    %v4423 = vunpack.c.h.b16 %v3290
    %v4424 = vunpack.c.l.b16 %v3291
    %v4425 = vunpack.c.h.b16 %v3291
    %v4426 = vunpack.c.l.b16 %v3292
    %v4427 = vunpack.c.h.b16 %v3292
    %v4428 = vunpack.c.l.b16 %v3293
    %v4429 = vunpack.c.h.b16 %v3293
    %v4430 = vunpack.c.l.b16 %v3294
    %v4431 = vunpack.c.h.b16 %v3294
    %v4432 = vunpack.c.l.b16 %v3295
    %v4433 = vunpack.c.h.b16 %v3295
    %v4434 = vunpack.c.l.b16 %v3296
    %v4435 = vunpack.c.h.b16 %v3296
    %v4436 = vunpack.c.l.b16 %v3297
    %v4437 = vunpack.c.h.b16 %v3297
    %v4438 = vunpack.c.l.b16 %v3298
    %v4439 = vunpack.c.h.b16 %v3298
    %v4440 = vunpack.c.l.b16 %v3299
    %v4441 = vunpack.c.h.b16 %v3299
    %v4442 = vunpack.c.l.b16 %v3300
    %v4443 = vunpack.c.h.b16 %v3300
    %v4444 = vunpack.c.l.b16 %v3301
    %v4445 = vunpack.c.h.b16 %v3301
    %v4446 = vunpack.c.l.b16 %v3302
    %v4447 = vunpack.c.h.b16 %v3302
    %v4448 = vunpack.c.l.b16 %v3303
    %v4449 = vunpack.c.h.b16 %v3303
    %v4450 = vunpack.c.l.b16 %v3304
    %v4451 = vunpack.c.h.b16 %v3304
    %v4452 = vunpack.c.l.b16 %v3305
    %v4453 = vunpack.c.h.b16 %v3305
    %v4454 = vunpack.c.l.b16 %v3306
    %v4455 = vunpack.c.h.b16 %v3306
    %v4456 = vunpack.c.l.b16 %v3307
    %v4457 = vunpack.c.h.b16 %v3307
    %v4458 = vunpack.c.l.b16 %v3308
    %v4459 = vunpack.c.h.b16 %v3308
    %v4460 = vunpack.c.l.b16 %v3309
    %v4461 = vunpack.c.h.b16 %v3309
    %v4462 = vunpack.c.l.b16 %v3310
    %v4463 = vunpack.c.h.b16 %v3310
    %v4464 = vunpack.c.l.b16 %v3311
    %v4465 = vunpack.c.h.b16 %v3311
    %v4466 = vunpack.c.l.b16 %v3312
    %v4467 = vunpack.c.h.b16 %v3312
    %v4468 = vunpack.c.l.b16 %v3313
    %v4469 = vunpack.c.h.b16 %v3313
    %v4470 = vunpack.c.l.b16 %v3314
    %v4471 = vunpack.c.h.b16 %v3314
    %v4472 = vunpack.c.l.b16 %v3315
    %v4473 = vunpack.c.h.b16 %v3315
    %v4474 = vunpack.c.l.b16 %v3316
    %v4475 = vunpack.c.h.b16 %v3316
    %v4476 = vunpack.c.l.b16 %v3317
    %v4477 = vunpack.c.h.b16 %v3317
    %v4478 = vunpack.c.l.b16 %v3318
    %v4479 = vunpack.c.h.b16 %v3318
    %v4480 = vunpack.c.l.b16 %v3319
    %v4481 = vunpack.c.h.b16 %v3319
    %v4482 = vunpack.c.l.b16 %v3320
    %v4483 = vunpack.c.h.b16 %v3320
    %v4484 = vunpack.c.l.b16 %v3321
    %v4485 = vunpack.c.h.b16 %v3321
    %v4486 = vunpack.c.l.b16 %v3322
    %v4487 = vunpack.c.h.b16 %v3322
    %v4488 = vunpack.c.l.b16 %v3323
    %v4489 = vunpack.c.h.b16 %v3323
    %v4490 = vunpack.c.l.b16 %v3324
    %v4491 = vunpack.c.h.b16 %v3324
    %v4492 = vunpack.c.l.b16 %v3325
    %v4493 = vunpack.c.h.b16 %v3325
    %v4494 = vunpack.c.l.b16 %v3326
    %v4495 = vunpack.c.h.b16 %v3326
    %v4496 = vunpack.c.l.b16 %v3327
    %v4497 = vunpack.c.h.b16 %v3327
    %v4498 = vunpack.c.l.b16 %v3328
    %v4499 = vunpack.c.h.b16 %v3328
    %v4500 = vunpack.c.l.b16 %v3329
    %v4501 = vunpack.c.h.b16 %v3329
    %v4502 = vunpack.c.l.b16 %v3330
    %v4503 = vunpack.c.h.b16 %v3330
    %v4504 = vunpack.c.l.b16 %v3331
    %v4505 = vunpack.c.h.b16 %v3331
    %v4506 = vunpack.c.l.b16 %v3332
    %v4507 = vunpack.c.h.b16 %v3332
    %v4508 = vunpack.c.l.b16 %v3333
    %v4509 = vunpack.c.h.b16 %v3333
    %v4510 = vunpack.c.l.b16 %v3334
    %v4511 = vunpack.c.h.b16 %v3334
    %v4512 = vunpack.c.l.b16 %v3335
    %v4513 = vunpack.c.h.b16 %v3335
    %v4514 = vunpack.c.l.b16 %v3336
    %v4515 = vunpack.c.h.b16 %v3336
    %v4516 = vunpack.c.l.b16 %v3337
    %v4517 = vunpack.c.h.b16 %v3337
    %v4518 = vunpack.c.l.b16 %v3338
    %v4519 = vunpack.c.h.b16 %v3338
    %v4520 = vunpack.c.l.b16 %v3339
    %v4521 = vunpack.c.h.b16 %v3339
    %v4522 = vunpack.c.l.b16 %v3340
    %v4523 = vunpack.c.h.b16 %v3340
    %v4524 = vunpack.c.l.b16 %v3341
    %v4525 = vunpack.c.h.b16 %v3341
    %v4526 = vunpack.c.l.b16 %v3342
    %v4527 = vunpack.c.h.b16 %v3342
    %v4528 = vunpack.c.l.b16 %v3343
    %v4529 = vunpack.c.h.b16 %v3343
    %v4530 = vunpack.c.l.b16 %v3344
    %v4531 = vunpack.c.h.b16 %v3344
    %v4532 = vunpack.c.l.b16 %v3345
    %v4533 = vunpack.c.h.b16 %v3345
    %v4534 = vunpack.c.l.b16 %v3346
    %v4535 = vunpack.c.h.b16 %v3346
    %v4536 = vunpack.c.l.b16 %v3347
    %v4537 = vunpack.c.h.b16 %v3347
    %v4538 = vunpack.c.l.b16 %v3348
    %v4539 = vunpack.c.h.b16 %v3348
    %v4540 = vunpack.c.l.b16 %v3349
    %v4541 = vunpack.c.h.b16 %v3349
    %v4542 = vunpack.c.l.b16 %v3350
    %v4543 = vunpack.c.h.b16 %v3350
    %v4544 = vunpack.c.l.b16 %v3351
    %v4545 = vunpack.c.h.b16 %v3351
    %v4546 = vunpack.c.l.b16 %v3352
    %v4547 = vunpack.c.h.b16 %v3352
    %v4548 = vunpack.c.l.b16 %v3353
    %v4549 = vunpack.c.h.b16 %v3353
    %v4550 = vunpack.c.l.b16 %v3354
    %v4551 = vunpack.c.h.b16 %v3354
    %v4552 = vunpack.c.l.b16 %v3355
    %v4553 = vunpack.c.h.b16 %v3355
    %v4554 = vunpack.c.l.b16 %v3356
    %v4555 = vunpack.c.h.b16 %v3356
    %v4556 = vunpack.c.l.b16 %v3357
    %v4557 = vunpack.c.h.b16 %v3357
    %v4558 = vunpack.c.l.b16 %v3358
    %v4559 = vunpack.c.h.b16 %v3358
    %v4560 = vunpack.c.l.b16 %v3359
    %v4561 = vunpack.c.h.b16 %v3359
    %v4562 = vunpack.c.l.b16 %v3360
    %v4563 = vunpack.c.h.b16 %v3360
    %v4564 = vunpack.c.l.b16 %v3361
    %v4565 = vunpack.c.h.b16 %v3361
    %v4566 = vunpack.c.l.b16 %v3362
    %v4567 = vunpack.c.h.b16 %v3362
    %v4568 = vunpack.c.l.b16 %v3363
    %v4569 = vunpack.c.h.b16 %v3363
    %v4570 = vunpack.c.l.b16 %v3364
    %v4571 = vunpack.c.h.b16 %v3364
    %v4572 = vunpack.c.l.b16 %v3365
    %v4573 = vunpack.c.h.b16 %v3365
    %v4574 = vunpack.c.l.b16 %v3366
    %v4575 = vunpack.c.h.b16 %v3366
    %v4576 = vunpack.c.l.b16 %v3367
    %v4577 = vunpack.c.h.b16 %v3367
    %v4578 = vunpack.c.l.b16 %v3368
    %v4579 = vunpack.c.h.b16 %v3368
    %v4580 = vunpack.c.l.b16 %v3369
    %v4581 = vunpack.c.h.b16 %v3369
    %v4582 = vunpack.c.l.b16 %v3370
    %v4583 = vunpack.c.h.b16 %v3370
    %v4584 = vunpack.c.l.b16 %v3371
    %v4585 = vunpack.c.h.b16 %v3371
    %v4586 = vunpack.c.l.b16 %v3372
    %v4587 = vunpack.c.h.b16 %v3372
    %v4588 = vunpack.c.l.b16 %v3373
    %v4589 = vunpack.c.h.b16 %v3373
    %v4590 = vunpack.c.l.b16 %v3374
    %v4591 = vunpack.c.h.b16 %v3374
    %v4592 = vunpack.c.l.b16 %v3375
    %v4593 = vunpack.c.h.b16 %v3375
    %v4594 = vunpack.c.l.b16 %v3376
    %v4595 = vunpack.c.h.b16 %v3376
    %v4596 = vunpack.c.l.b16 %v3377
    %v4597 = vunpack.c.h.b16 %v3377
    %v4598 = vunpack.c.l.b16 %v3378
    %v4599 = vunpack.c.h.b16 %v3378
    %v4600 = vunpack.c.l.b16 %v3379
    %v4601 = vunpack.c.h.b16 %v3379
    %v4602 = vunpack.c.l.b16 %v3380
    %v4603 = vunpack.c.h.b16 %v3380
    %v4604 = vunpack.c.l.b16 %v3381
    %v4605 = vunpack.c.h.b16 %v3381
    %v4606 = vunpack.c.l.b16 %v3382
    %v4607 = vunpack.c.h.b16 %v3382
    %v4608 = vunpack.c.l.b16 %v3383
    %v4609 = vunpack.c.h.b16 %v3383
    %v4610 = vunpack.c.l.b16 %v3384
    %v4611 = vunpack.c.h.b16 %v3384
    %v4612 = vunpack.c.l.b16 %v3385
    %v4613 = vunpack.c.h.b16 %v3385
    %v4614 = vunpack.c.l.b16 %v3386
    %v4615 = vunpack.c.h.b16 %v3386
    %v4616 = vunpack.c.l.b16 %v3387
    %v4617 = vunpack.c.h.b16 %v3387
    %v4618 = vunpack.c.l.b16 %v3388
    %v4619 = vunpack.c.h.b16 %v3388
    %v4620 = vunpack.c.l.b16 %v3389
    %v4621 = vunpack.c.h.b16 %v3389
    %v4622 = vunpack.c.l.b16 %v3390
    %v4623 = vunpack.c.h.b16 %v3390
    %v4624 = vunpack.c.l.b16 %v3391
    %v4625 = vunpack.c.h.b16 %v3391
    %v4626 = vunpack.c.l.b16 %v3392
    %v4627 = vunpack.c.h.b16 %v3392
    %v4628 = vunpack.c.l.b16 %v3393
    %v4629 = vunpack.c.h.b16 %v3393
    %v4630 = vunpack.c.l.b16 %v3394
    %v4631 = vunpack.c.h.b16 %v3394
    %v4632 = vunpack.c.l.b16 %v3395
    %v4633 = vunpack.c.h.b16 %v3395
    %v4634 = vunpack.c.l.b16 %v3396
    %v4635 = vunpack.c.h.b16 %v3396
    %v4636 = vunpack.c.l.b16 %v3397
    %v4637 = vunpack.c.h.b16 %v3397
    %v4638 = vunpack.c.l.b16 %v3398
    %v4639 = vunpack.c.h.b16 %v3398
    %v4640 = vunpack.c.l.b16 %v3399
    %v4641 = vunpack.c.h.b16 %v3399
    %v4642 = vunpack.c.l.b16 %v3400
    %v4643 = vunpack.c.h.b16 %v3400
    %v4644 = vunpack.c.l.b16 %v3401
    %v4645 = vunpack.c.h.b16 %v3401
    %v4646 = vunpack.c.l.b16 %v3402
    %v4647 = vunpack.c.h.b16 %v3402
    %v4648 = vunpack.c.l.b16 %v3403
    %v4649 = vunpack.c.h.b16 %v3403
    %v4650 = vunpack.c.l.b16 %v3404
    %v4651 = vunpack.c.h.b16 %v3404
    %v4652 = vunpack.c.l.b16 %v3405
    %v4653 = vunpack.c.h.b16 %v3405
    %v4654 = vunpack.c.l.b16 %v3406
    %v4655 = vunpack.c.h.b16 %v3406
    %v4656 = vunpack.c.l.b16 %v3407
    %v4657 = vunpack.c.h.b16 %v3407
    %v4658 = vunpack.c.l.b16 %v3408
    %v4659 = vunpack.c.h.b16 %v3408
    %v4660 = vunpack.c.l.b16 %v3409
    %v4661 = vunpack.c.h.b16 %v3409
    %v4662 = vunpack.c.l.b16 %v3410
    %v4663 = vunpack.c.h.b16 %v3410
    %v4664 = vunpack.c.l.b16 %v3411
    %v4665 = vunpack.c.h.b16 %v3411
    %v4666 = vunpack.c.l.b16 %v3412
    %v4667 = vunpack.c.h.b16 %v3412
    %v4668 = vunpack.c.l.b16 %v3413
    %v4669 = vunpack.c.h.b16 %v3413
    %v4670 = vunpack.c.l.b16 %v3414
    %v4671 = vunpack.c.h.b16 %v3414
    %v4672 = vunpack.c.l.b16 %v3415
    %v4673 = vunpack.c.h.b16 %v3415
    %v4674 = vunpack.c.l.b16 %v3416
    %v4675 = vunpack.c.h.b16 %v3416
    %v4676 = vunpack.c.l.b16 %v3417
    %v4677 = vunpack.c.h.b16 %v3417
    %v4678 = vunpack.c.l.b16 %v3418
    %v4679 = vunpack.c.h.b16 %v3418
    %v4680 = vunpack.c.l.b16 %v3419
    %v4681 = vunpack.c.h.b16 %v3419
    %v4682 = vunpack.c.l.b16 %v3420
    %v4683 = vunpack.c.h.b16 %v3420
    %v4684 = vunpack.c.l.b16 %v3421
    %v4685 = vunpack.c.h.b16 %v3421
    %v4686 = vunpack.c.l.b16 %v3422
    %v4687 = vunpack.c.h.b16 %v3422
    %v4688 = vunpack.c.l.b16 %v3423
    %v4689 = vunpack.c.h.b16 %v3423
    %v4690 = vunpack.c.l.b16 %v3424
    %v4691 = vunpack.c.h.b16 %v3424
    %v4692 = vunpack.c.l.b16 %v3425
    %v4693 = vunpack.c.h.b16 %v3425
    %v4694 = vunpack.c.l.b16 %v3426
    %v4695 = vunpack.c.h.b16 %v3426
    %v4696 = vunpack.c.l.b16 %v3427
    %v4697 = vunpack.c.h.b16 %v3427
    %v4698 = vunpack.c.l.b16 %v3428
    %v4699 = vunpack.c.h.b16 %v3428
    %v4700 = vunpack.c.l.b16 %v3429
    %v4701 = vunpack.c.h.b16 %v3429
    %v4702 = vunpack.c.l.b16 %v3430
    %v4703 = vunpack.c.h.b16 %v3430
    %v4704 = vunpack.c.l.b16 %v3431
    %v4705 = vunpack.c.h.b16 %v3431
    %v4706 = vunpack.c.l.b16 %v3432
    %v4707 = vunpack.c.h.b16 %v3432
    %v4708 = vunpack.c.l.b16 %v3433
    %v4709 = vunpack.c.h.b16 %v3433
    %v4710 = vunpack.c.l.b16 %v3434
    %v4711 = vunpack.c.h.b16 %v3434
    %v4712 = vunpack.c.l.b16 %v3435
    %v4713 = vunpack.c.h.b16 %v3435
    %v4714 = vunpack.c.l.b16 %v3436
    %v4715 = vunpack.c.h.b16 %v3436
    %v4716 = vunpack.c.l.b16 %v3437
    %v4717 = vunpack.c.h.b16 %v3437
    %v4718 = vunpack.c.l.b16 %v3438
    %v4719 = vunpack.c.h.b16 %v3438
    %v4720 = vunpack.c.l.b16 %v3439
    %v4721 = vunpack.c.h.b16 %v3439
    %v4722 = vunpack.c.l.b16 %v3440
    %v4723 = vunpack.c.h.b16 %v3440
    %v4724 = vunpack.c.l.b16 %v3441
    %v4725 = vunpack.c.h.b16 %v3441
    %v4726 = vunpack.c.l.b16 %v3442
    %v4727 = vunpack.c.h.b16 %v3442
    %v4728 = vunpack.c.l.b16 %v3443
    %v4729 = vunpack.c.h.b16 %v3443
    %v4730 = vunpack.c.l.b16 %v3444
    %v4731 = vunpack.c.h.b16 %v3444
    %v4732 = vunpack.c.l.b16 %v3445
    %v4733 = vunpack.c.h.b16 %v3445
    %v4734 = vunpack.c.l.b16 %v3446
    %v4735 = vunpack.c.h.b16 %v3446
    %v4736 = vunpack.c.l.b16 %v3447
    %v4737 = vunpack.c.h.b16 %v3447
    %v4738 = vunpack.c.l.b16 %v3448
    %v4739 = vunpack.c.h.b16 %v3448
    %v4740 = vunpack.c.l.b16 %v3449
    %v4741 = vunpack.c.h.b16 %v3449
    %v4742 = vunpack.c.l.b16 %v3450
    %v4743 = vunpack.c.h.b16 %v3450
    %v4744 = vunpack.c.l.b16 %v3451
    %v4745 = vunpack.c.h.b16 %v3451
    %v4746 = vunpack.c.l.b16 %v3452
    %v4747 = vunpack.c.h.b16 %v3452
    %v4748 = vunpack.c.l.b16 %v3453
    %v4749 = vunpack.c.h.b16 %v3453
    %v4750 = vunpack.c.l.b16 %v3454
    %v4751 = vunpack.c.h.b16 %v3454
    %v4752 = vunpack.c.l.b16 %v3455
    %v4753 = vunpack.c.h.b16 %v3455
    %v4754 = vunpack.c.l.b16 %v3456
    %v4755 = vunpack.c.h.b16 %v3456
    %v4756 = vunpack.c.l.b16 %v3457
    %v4757 = vunpack.c.h.b16 %v3457
    %v4758 = vunpack.c.l.b16 %v3458
    %v4759 = vunpack.c.h.b16 %v3458
    %v4760 = vunpack.c.l.b16 %v3459
    %v4761 = vunpack.c.h.b16 %v3459
    %v4762 = vunpack.c.l.b16 %v3460
    %v4763 = vunpack.c.h.b16 %v3460
    %v4764 = vunpack.c.l.b16 %v3461
    %v4765 = vunpack.c.h.b16 %v3461
    %v4766 = vunpack.c.l.b16 %v3462
    %v4767 = vunpack.c.h.b16 %v3462
    %v4768 = vunpack.c.l.b16 %v3463
    %v4769 = vunpack.c.h.b16 %v3463
    %v4770 = vunpack.c.l.b16 %v3464
    %v4771 = vunpack.c.h.b16 %v3464
    %v4772 = vunpack.c.l.b16 %v3465
    %v4773 = vunpack.c.h.b16 %v3465
    %v4774 = vunpack.c.l.b16 %v3466
    %v4775 = vunpack.c.h.b16 %v3466
    %v4776 = vunpack.c.l.b16 %v3467
    %v4777 = vunpack.c.h.b16 %v3467
    %v4778 = vunpack.c.l.b16 %v3468
    %v4779 = vunpack.c.h.b16 %v3468
    %v4780 = vunpack.c.l.b16 %v3469
    %v4781 = vunpack.c.h.b16 %v3469
    %v4782 = vunpack.c.l.b16 %v3470
    %v4783 = vunpack.c.h.b16 %v3470
    %v4784 = vunpack.c.l.b16 %v3471
    %v4785 = vunpack.c.h.b16 %v3471
    %v4786 = vunpack.c.l.b16 %v3472
    %v4787 = vunpack.c.h.b16 %v3472
    %v4788 = vunpack.c.l.b16 %v3473
    %v4789 = vunpack.c.h.b16 %v3473
    %v4790 = vunpack.c.l.b16 %v3474
    %v4791 = vunpack.c.h.b16 %v3474
    %v4792 = vunpack.c.l.b16 %v3475
    %v4793 = vunpack.c.h.b16 %v3475
    %v4794 = vunpack.c.l.b16 %v3476
    %v4795 = vunpack.c.h.b16 %v3476
    %v4796 = vunpack.c.l.b16 %v3477
    %v4797 = vunpack.c.h.b16 %v3477
    %v4798 = vunpack.c.l.b16 %v3478
    %v4799 = vunpack.c.h.b16 %v3478
    %v4800 = vunpack.c.l.b16 %v3479
    %v4801 = vunpack.c.h.b16 %v3479
    %v4802 = vunpack.c.l.b16 %v3480
    %v4803 = vunpack.c.h.b16 %v3480
    %v4804 = vunpack.c.l.b16 %v3481
    %v4805 = vunpack.c.h.b16 %v3481
    %v4806 = vunpack.c.l.b16 %v3482
    %v4807 = vunpack.c.h.b16 %v3482
    %v4808 = vunpack.c.l.b16 %v3483
    %v4809 = vunpack.c.h.b16 %v3483
    %v4810 = vunpack.c.l.b16 %v3484
    %v4811 = vunpack.c.h.b16 %v3484
    %v4812 = vunpack.c.l.b16 %v3485
    %v4813 = vunpack.c.h.b16 %v3485
    %v4814 = vunpack.c.l.b16 %v3486
    %v4815 = vunpack.c.h.b16 %v3486
    %v4816 = vunpack.c.l.b16 %v3487
    %v4817 = vunpack.c.h.b16 %v3487
    %v4818 = vunpack.c.l.b16 %v3488
    %v4819 = vunpack.c.h.b16 %v3488
    %v4820 = vunpack.c.l.b16 %v3489
    %v4821 = vunpack.c.h.b16 %v3489
    %v4822 = vunpack.c.l.b16 %v3490
    %v4823 = vunpack.c.h.b16 %v3490
    %v4824 = vunpack.c.l.b16 %v3491
    %v4825 = vunpack.c.h.b16 %v3491
    %v4826 = vunpack.c.l.b16 %v3492
    %v4827 = vunpack.c.h.b16 %v3492
    %v4828 = vunpack.c.l.b16 %v3493
    %v4829 = vunpack.c.h.b16 %v3493
    %v4830 = vunpack.c.l.b16 %v3494
    %v4831 = vunpack.c.h.b16 %v3494
    %v4832 = vunpack.c.l.b16 %v3495
    %v4833 = vunpack.c.h.b16 %v3495
    %v4834 = vunpack.c.l.b16 %v3496
    %v4835 = vunpack.c.h.b16 %v3496
    %v4836 = vunpack.c.l.b16 %v3497
    %v4837 = vunpack.c.h.b16 %v3497
    %v4838 = vunpack.c.l.b16 %v3498
    %v4839 = vunpack.c.h.b16 %v3498
    %v4840 = vunpack.c.l.b16 %v3499
    %v4841 = vunpack.c.h.b16 %v3499
    %v4842 = vunpack.c.l.b16 %v3500
    %v4843 = vunpack.c.h.b16 %v3500
    %v4844 = vunpack.c.l.b16 %v3501
    %v4845 = vunpack.c.h.b16 %v3501
    %v4846 = vunpack.c.l.b16 %v3502
    %v4847 = vunpack.c.h.b16 %v3502
    %v4848 = vunpack.c.l.b16 %v3503
    %v4849 = vunpack.c.h.b16 %v3503
    %v4850 = vunpack.c.l.b16 %v3504
    %v4851 = vunpack.c.h.b16 %v3504
    %v4852 = vunpack.c.l.b16 %v3505
    %v4853 = vunpack.c.h.b16 %v3505
    %v4854 = vunpack.c.l.b16 %v3506
    %v4855 = vunpack.c.h.b16 %v3506
    %v4856 = vunpack.c.l.b16 %v3507
    %v4857 = vunpack.c.h.b16 %v3507
    %v4858 = vunpack.c.l.b16 %v3508
    %v4859 = vunpack.c.h.b16 %v3508
    %v4860 = vunpack.c.l.b16 %v3509
    %v4861 = vunpack.c.h.b16 %v3509
    %v4862 = vunpack.c.l.b16 %v3510
    %v4863 = vunpack.c.h.b16 %v3510
    %v4864 = vunpack.c.l.b16 %v3511
    %v4865 = vunpack.c.h.b16 %v3511
    %v4866 = vunpack.c.l.b16 %v3512
    %v4867 = vunpack.c.h.b16 %v3512
    %v4868 = vunpack.c.l.b16 %v3513
    %v4869 = vunpack.c.h.b16 %v3513
    %v4870 = vunpack.c.l.b16 %v3514
    %v4871 = vunpack.c.h.b16 %v3514
    %v4872 = vunpack.c.l.b16 %v3515
    %v4873 = vunpack.c.h.b16 %v3515
    %v4874 = vunpack.c.l.b16 %v3516
    %v4875 = vunpack.c.h.b16 %v3516
    %v4876 = vunpack.c.l.b16 %v3517
    %v4877 = vunpack.c.h.b16 %v3517
    %v4878 = vunpack.c.l.b16 %v3518
    %v4879 = vunpack.c.h.b16 %v3518
    %v4880 = vunpack.c.l.b16 %v3519
    %v4881 = vunpack.c.h.b16 %v3519
    %v4882 = vunpack.c.l.b16 %v3520
    %v4883 = vunpack.c.h.b16 %v3520
    %v4884 = vunpack.c.l.b16 %v3521
    %v4885 = vunpack.c.h.b16 %v3521
    %v4886 = vunpack.c.l.b16 %v3522
    %v4887 = vunpack.c.h.b16 %v3522
    %v4888 = vunpack.c.l.b16 %v3523
    %v4889 = vunpack.c.h.b16 %v3523
    %v4890 = vunpack.c.l.b16 %v3524
    %v4891 = vunpack.c.h.b16 %v3524
    %v4892 = vunpack.c.l.b16 %v3525
    %v4893 = vunpack.c.h.b16 %v3525
    %v4894 = vunpack.c.l.b16 %v3526
    %v4895 = vunpack.c.h.b16 %v3526
    %v4896 = vunpack.c.l.b16 %v3527
    %v4897 = vunpack.c.h.b16 %v3527
    %v4898 = vunpack.c.l.b16 %v3528
    %v4899 = vunpack.c.h.b16 %v3528
    %v4900 = vunpack.c.l.b16 %v3529
    %v4901 = vunpack.c.h.b16 %v3529
    %v4902 = vunpack.c.l.b16 %v3530
    %v4903 = vunpack.c.h.b16 %v3530
    %v4904 = vunpack.c.l.b16 %v3531
    %v4905 = vunpack.c.h.b16 %v3531
    %v4906 = vunpack.c.l.b16 %v3532
    %v4907 = vunpack.c.h.b16 %v3532
    %v4908 = vunpack.c.l.b16 %v3533
    %v4909 = vunpack.c.h.b16 %v3533
    %v4910 = vunpack.c.l.b16 %v3534
    %v4911 = vunpack.c.h.b16 %v3534
    %v4912 = vunpack.c.l.b16 %v3535
    %v4913 = vunpack.c.h.b16 %v3535
    %v4914 = vunpack.c.l.b16 %v3536
    %v4915 = vunpack.c.h.b16 %v3536
    %v4916 = vunpack.c.l.b16 %v3537
    %v4917 = vunpack.c.h.b16 %v3537
    %v4918 = vunpack.c.l.b16 %v3538
    %v4919 = vunpack.c.h.b16 %v3538
    %v4920 = vunpack.c.l.b16 %v3539
    %v4921 = vunpack.c.h.b16 %v3539
    %v4922 = vunpack.c.l.b16 %v3540
    %v4923 = vunpack.c.h.b16 %v3540
    %v4924 = vunpack.c.l.b16 %v3541
    %v4925 = vunpack.c.h.b16 %v3541
    %v4926 = vunpack.c.l.b16 %v3542
    %v4927 = vunpack.c.h.b16 %v3542
    %v4928 = vunpack.c.l.b16 %v3543
    %v4929 = vunpack.c.h.b16 %v3543
    %v4930 = vunpack.c.l.b16 %v3544
    %v4931 = vunpack.c.h.b16 %v3544
    %v4932 = vunpack.c.l.b16 %v3545
    %v4933 = vunpack.c.h.b16 %v3545
    %v4934 = vunpack.c.l.b16 %v3546
    %v4935 = vunpack.c.h.b16 %v3546
    %v4936 = vunpack.c.l.b16 %v3547
    %v4937 = vunpack.c.h.b16 %v3547
    %v4938 = vunpack.c.l.b16 %v3548
    %v4939 = vunpack.c.h.b16 %v3548
    %v4940 = vunpack.c.l.b16 %v3549
    %v4941 = vunpack.c.h.b16 %v3549
    %v4942 = vunpack.c.l.b16 %v3550
    %v4943 = vunpack.c.h.b16 %v3550
    %v4944 = vunpack.c.l.b16 %v3551
    %v4945 = vunpack.c.h.b16 %v3551
    %v4946 = vunpack.c.l.b16 %v3552
    %v4947 = vunpack.c.h.b16 %v3552
    %v4948 = vunpack.c.l.b16 %v3553
    %v4949 = vunpack.c.h.b16 %v3553
    %v4950 = vunpack.c.l.b16 %v3554
    %v4951 = vunpack.c.h.b16 %v3554
    %v4952 = vunpack.c.l.b16 %v3555
    %v4953 = vunpack.c.h.b16 %v3555
    %v4954 = vunpack.c.l.b16 %v3556
    %v4955 = vunpack.c.h.b16 %v3556
    %v4956 = vunpack.c.l.b16 %v3557
    %v4957 = vunpack.c.h.b16 %v3557
    %v4958 = vunpack.c.l.b16 %v3558
    %v4959 = vunpack.c.h.b16 %v3558
    %v4960 = vunpack.c.l.b16 %v3559
    %v4961 = vunpack.c.h.b16 %v3559
    %v4962 = vunpack.c.l.b16 %v3560
    %v4963 = vunpack.c.h.b16 %v3560
    %v4964 = vunpack.c.l.b16 %v3561
    %v4965 = vunpack.c.h.b16 %v3561
    %v4966 = vunpack.c.l.b16 %v3562
    %v4967 = vunpack.c.h.b16 %v3562
    %v4968 = vunpack.c.l.b16 %v3563
    %v4969 = vunpack.c.h.b16 %v3563
    %v4970 = vunpack.c.l.b16 %v3564
    %v4971 = vunpack.c.h.b16 %v3564
    %v4972 = vunpack.c.l.b16 %v3565
    %v4973 = vunpack.c.h.b16 %v3565
    %v4974 = vunpack.c.l.b16 %v3566
    %v4975 = vunpack.c.h.b16 %v3566
    %v4976 = vunpack.c.l.b16 %v3567
    %v4977 = vunpack.c.h.b16 %v3567
    %v4978 = vunpack.c.l.b16 %v3568
    %v4979 = vunpack.c.h.b16 %v3568
    %v4980 = vunpack.c.l.b16 %v3569
    %v4981 = vunpack.c.h.b16 %v3569
    %v4982 = vunpack.c.l.b16 %v3570
    %v4983 = vunpack.c.h.b16 %v3570
    %v4984 = vunpack.c.l.b16 %v3571
    %v4985 = vunpack.c.h.b16 %v3571
    %v4986 = vunpack.c.l.b16 %v3572
    %v4987 = vunpack.c.h.b16 %v3572
    %v4988 = vunpack.c.l.b16 %v3573
    %v4989 = vunpack.c.h.b16 %v3573
    %v4990 = vunpack.c.l.b16 %v3574
    %v4991 = vunpack.c.h.b16 %v3574
    %v4992 = vunpack.c.l.b16 %v3575
    %v4993 = vunpack.c.h.b16 %v3575
    %v4994 = vunpack.c.l.b16 %v3576
    %v4995 = vunpack.c.h.b16 %v3576
    %v4996 = vunpack.c.l.b16 %v3577
    %v4997 = vunpack.c.h.b16 %v3577
    %v4998 = vunpack.c.l.b16 %v3578
    %v4999 = vunpack.c.h.b16 %v3578
    %v5000 = vunpack.c.l.b16 %v3579
    %v5001 = vunpack.c.h.b16 %v3579
    %v5002 = vunpack.c.l.b16 %v3580
    %v5003 = vunpack.c.h.b16 %v3580
    %v5004 = vunpack.c.l.b16 %v3581
    %v5005 = vunpack.c.h.b16 %v3581
    %v5006 = vunpack.c.l.b16 %v3582
    %v5007 = vunpack.c.h.b16 %v3582
    %v5008 = vunpack.c.l.b16 %v3583
    %v5009 = vunpack.c.h.b16 %v3583
    %v5010 = vunpack.c.l.b16 %v3584
    %v5011 = vunpack.c.h.b16 %v3584
    %v5012 = vunpack.c.l.b16 %v3585
    %v5013 = vunpack.c.h.b16 %v3585
    %v5014 = vunpack.c.l.b16 %v3586
    %v5015 = vunpack.c.h.b16 %v3586
    %v5016 = vunpack.c.l.b16 %v3587
    %v5017 = vunpack.c.h.b16 %v3587
    %v5018 = vunpack.c.l.b16 %v3588
    %v5019 = vunpack.c.h.b16 %v3588
    %v5020 = vunpack.c.l.b16 %v3589
    %v5021 = vunpack.c.h.b16 %v3589
    %v5022 = vunpack.c.l.b16 %v3590
    %v5023 = vunpack.c.h.b16 %v3590
    %v5024 = vunpack.c.l.b16 %v3591
    %v5025 = vunpack.c.h.b16 %v3591
    %v5026 = vunpack.c.l.b16 %v3592
    %v5027 = vunpack.c.h.b16 %v3592
    %v5028 = vunpack.c.l.b16 %v3593
    %v5029 = vunpack.c.h.b16 %v3593
    %v5030 = vunpack.c.l.b16 %v3594
    %v5031 = vunpack.c.h.b16 %v3594
    %v5032 = vunpack.c.l.b16 %v3595
    %v5033 = vunpack.c.h.b16 %v3595
    %v5034 = vunpack.c.l.b16 %v3596
    %v5035 = vunpack.c.h.b16 %v3596
    %v5036 = vunpack.c.l.b16 %v3597
    %v5037 = vunpack.c.h.b16 %v3597
    %v5038 = vunpack.c.l.b16 %v3598
    %v5039 = vunpack.c.h.b16 %v3598
    %v5040 = vunpack.c.l.b16 %v3599
    %v5041 = vunpack.c.h.b16 %v3599
    %v5042 = vunpack.c.l.b16 %v3600
    %v5043 = vunpack.c.h.b16 %v3600
    %v5044 = vunpack.c.l.b16 %v3601
    %v5045 = vunpack.c.h.b16 %v3601
    %v5046 = vunpack.c.l.b16 %v3602
    %v5047 = vunpack.c.h.b16 %v3602
    %v5048 = vunpack.c.l.b16 %v3603
    %v5049 = vunpack.c.h.b16 %v3603
    %v5050 = vunpack.c.l.b16 %v3604
    %v5051 = vunpack.c.h.b16 %v3604
    %v5052 = vunpack.c.l.b16 %v3605
    %v5053 = vunpack.c.h.b16 %v3605
    %v5054 = vunpack.c.l.b16 %v3606
    %v5055 = vunpack.c.h.b16 %v3606
    %v5056 = vunpack.c.l.b16 %v3607
    %v5057 = vunpack.c.h.b16 %v3607
    %v5058 = vunpack.c.l.b16 %v3608
    %v5059 = vunpack.c.h.b16 %v3608
    %v5060 = vunpack.c.l.b16 %v3609
    %v5061 = vunpack.c.h.b16 %v3609
    %v5062 = vunpack.c.l.b16 %v3610
    %v5063 = vunpack.c.h.b16 %v3610
    %v5064 = vunpack.c.l.b16 %v3611
    %v5065 = vunpack.c.h.b16 %v3611
    %v5066 = vunpack.c.l.b16 %v3612
    %v5067 = vunpack.c.h.b16 %v3612
    %v5068 = vunpack.c.l.b16 %v3613
    %v5069 = vunpack.c.h.b16 %v3613
    %v5070 = vunpack.c.l.b16 %v3614
    %v5071 = vunpack.c.h.b16 %v3614
    %v5072 = vunpack.c.l.b16 %v3615
    %v5073 = vunpack.c.h.b16 %v3615
    %v5074 = vunpack.c.l.b16 %v3616
    %v5075 = vunpack.c.h.b16 %v3616
    %v5076 = vunpack.c.l.b16 %v3617
    %v5077 = vunpack.c.h.b16 %v3617
    %v5078 = vunpack.c.l.b16 %v3618
    %v5079 = vunpack.c.h.b16 %v3618
    %v5080 = vunpack.c.l.b16 %v3619
    %v5081 = vunpack.c.h.b16 %v3619
    %v5082 = vunpack.c.l.b16 %v3620
    %v5083 = vunpack.c.h.b16 %v3620
    %v5084 = vunpack.c.l.b16 %v3621
    %v5085 = vunpack.c.h.b16 %v3621
    %v5086 = vunpack.c.l.b16 %v3622
    %v5087 = vunpack.c.h.b16 %v3622
    %v5088 = vunpack.c.l.b16 %v3623
    %v5089 = vunpack.c.h.b16 %v3623
    %v5090 = vunpack.c.l.b16 %v3624
    %v5091 = vunpack.c.h.b16 %v3624
    %v5092 = vunpack.c.l.b16 %v3625
    %v5093 = vunpack.c.h.b16 %v3625
    %v5094 = vunpack.c.l.b16 %v3626
    %v5095 = vunpack.c.h.b16 %v3626
    %v5096 = vunpack.c.l.b16 %v3627
    %v5097 = vunpack.c.h.b16 %v3627
    %v5098 = vunpack.c.l.b16 %v3628
    %v5099 = vunpack.c.h.b16 %v3628
    %v5100 = vunpack.c.l.b16 %v3629
    %v5101 = vunpack.c.h.b16 %v3629
    %v5102 = vunpack.c.l.b16 %v3630
    %v5103 = vunpack.c.h.b16 %v3630
    %v5104 = vunpack.c.l.b16 %v3631
    %v5105 = vunpack.c.h.b16 %v3631
    %v5106 = vunpack.c.l.b16 %v3632
    %v5107 = vunpack.c.h.b16 %v3632
    %v5108 = vunpack.c.l.b16 %v3633
    %v5109 = vunpack.c.h.b16 %v3633
    %v5110 = vunpack.c.l.b16 %v3634
    %v5111 = vunpack.c.h.b16 %v3634
    %v5112 = vunpack.c.l.b16 %v3635
    %v5113 = vunpack.c.h.b16 %v3635
    %v5114 = vunpack.c.l.b16 %v3636
    %v5115 = vunpack.c.h.b16 %v3636
    %v5116 = vunpack.c.l.b16 %v3637
    %v5117 = vunpack.c.h.b16 %v3637
    %v5118 = vunpack.c.l.b16 %v3638
    %v5119 = vunpack.c.h.b16 %v3638
    %v5120 = vunpack.c.l.b16 %v3639
    %v5121 = vunpack.c.h.b16 %v3639
    %v5122 = vunpack.c.l.b16 %v3640
    %v5123 = vunpack.c.h.b16 %v3640
    %v5124 = vunpack.c.l.b16 %v3641
    %v5125 = vunpack.c.h.b16 %v3641
    %v5126 = vunpack.c.l.b16 %v3642
    %v5127 = vunpack.c.h.b16 %v3642
    %v5128 = vunpack.c.l.b16 %v3643
    %v5129 = vunpack.c.h.b16 %v3643
    %v5130 = vunpack.c.l.b16 %v3644
    %v5131 = vunpack.c.h.b16 %v3644
    %v5132 = vunpack.c.l.b16 %v3645
    %v5133 = vunpack.c.h.b16 %v3645
    %v5134 = vunpack.c.l.b16 %v3646
    %v5135 = vunpack.c.h.b16 %v3646
    %v5136 = vunpack.c.l.b16 %v3647
    %v5137 = vunpack.c.h.b16 %v3647
    %v5138 = vunpack.c.l.b16 %v3648
    %v5139 = vunpack.c.h.b16 %v3648
    %v5140 = vunpack.c.l.b16 %v3649
    %v5141 = vunpack.c.h.b16 %v3649
    %v5142 = vunpack.c.l.b16 %v3650
    %v5143 = vunpack.c.h.b16 %v3650
    %v5144 = vunpack.c.l.b16 %v3651
    %v5145 = vunpack.c.h.b16 %v3651
    %v5146 = vunpack.c.l.b16 %v3652
    %v5147 = vunpack.c.h.b16 %v3652
    %v5148 = vunpack.c.l.b16 %v3653
    %v5149 = vunpack.c.h.b16 %v3653
    %v5150 = vunpack.c.l.b16 %v3654
    %v5151 = vunpack.c.h.b16 %v3654
    %v5152 = vunpack.c.l.b16 %v3655
    %v5153 = vunpack.c.h.b16 %v3655
    %v5154 = vunpack.c.l.b16 %v3656
    %v5155 = vunpack.c.h.b16 %v3656
    %v5156 = vunpack.c.l.b16 %v3657
    %v5157 = vunpack.c.h.b16 %v3657
    %v5158 = vunpack.c.l.b16 %v3658
    %v5159 = vunpack.c.h.b16 %v3658
    %v5160 = vunpack.c.l.b16 %v3659
    %v5161 = vunpack.c.h.b16 %v3659
    %v5162 = vunpack.c.l.b16 %v3660
    %v5163 = vunpack.c.h.b16 %v3660
    %v5164 = vunpack.c.l.b16 %v3661
    %v5165 = vunpack.c.h.b16 %v3661
    %v5166 = vunpack.c.l.b16 %v3662
    %v5167 = vunpack.c.h.b16 %v3662
    %v5168 = vunpack.c.l.b16 %v3663
    %v5169 = vunpack.c.h.b16 %v3663
    %v5170 = vunpack.c.l.b16 %v3664
    %v5171 = vunpack.c.h.b16 %v3664
    %v5172 = vunpack.c.l.b16 %v3665
    %v5173 = vunpack.c.h.b16 %v3665
    %v5174 = vunpack.c.l.b16 %v3666
    %v5175 = vunpack.c.h.b16 %v3666
    %v5176 = vunpack.c.l.b16 %v3667
    %v5177 = vunpack.c.h.b16 %v3667
    %v5178 = vunpack.c.l.b16 %v3668
    %v5179 = vunpack.c.h.b16 %v3668
    %v5180 = vunpack.c.l.b16 %v3669
    %v5181 = vunpack.c.h.b16 %v3669
    %v5182 = vunpack.c.l.b16 %v3670
    %v5183 = vunpack.c.h.b16 %v3670
    %v5184 = vunpack.c.l.b16 %v3671
    %v5185 = vunpack.c.h.b16 %v3671
    %v5186 = vunpack.c.l.b16 %v3672
    %v5187 = vunpack.c.h.b16 %v3672
    %v5188 = vunpack.c.l.b16 %v3673
    %v5189 = vunpack.c.h.b16 %v3673
    %v5190 = vunpack.c.l.b16 %v3674
    %v5191 = vunpack.c.h.b16 %v3674
    %v5192 = vunpack.c.l.b16 %v3675
    %v5193 = vunpack.c.h.b16 %v3675
    %v5194 = vunpack.c.l.b16 %v3676
    %v5195 = vunpack.c.h.b16 %v3676
    %v5196 = vunpack.c.l.b16 %v3677
    %v5197 = vunpack.c.h.b16 %v3677
    %v5198 = vunpack.c.l.b16 %v3678
    %v5199 = vunpack.c.h.b16 %v3678
    %v5200 = vunpack.c.l.b16 %v3679
    %v5201 = vunpack.c.h.b16 %v3679
    %v5202 = vunpack.c.l.b16 %v3680
    %v5203 = vunpack.c.h.b16 %v3680
    %v5204 = vunpack.c.l.b16 %v3681
    %v5205 = vunpack.c.h.b16 %v3681
    %v5206 = vunpack.c.l.b16 %v3682
    %v5207 = vunpack.c.h.b16 %v3682
    %v5208 = vunpack.c.l.b16 %v3683
    %v5209 = vunpack.c.h.b16 %v3683
    %v5210 = vunpack.c.l.b16 %v3684
    %v5211 = vunpack.c.h.b16 %v3684
    %v5212 = vunpack.c.l.b16 %v3685
    %v5213 = vunpack.c.h.b16 %v3685
    %v5214 = vunpack.c.l.b16 %v3686
    %v5215 = vunpack.c.h.b16 %v3686
    %v5216 = vunpack.c.l.b16 %v3687
    %v5217 = vunpack.c.h.b16 %v3687
    %v5218 = vunpack.c.l.b16 %v3688
    %v5219 = vunpack.c.h.b16 %v3688
    %v5220 = vunpack.c.l.b16 %v3689
    %v5221 = vunpack.c.h.b16 %v3689
    %v5222 = vunpack.c.l.b16 %v3690
    %v5223 = vunpack.c.h.b16 %v3690
    %v5224 = vunpack.c.l.b16 %v3691
    %v5225 = vunpack.c.h.b16 %v3691
    %v5226 = vunpack.c.l.b16 %v3692
    %v5227 = vunpack.c.h.b16 %v3692
    %v5228 = vunpack.c.l.b16 %v3693
    %v5229 = vunpack.c.h.b16 %v3693
    %v5230 = vpack.c.b16 %v4222, %v4206
    %v5231 = vpack.c.b16 %v4223, %v4207
    %v5232 = vpack.c.b16 %v4224, %v4208
    %v5233 = vpack.c.b16 %v4225, %v4209
    %v5234 = vpack.c.b16 %v4226, %v4210
    %v5235 = vpack.c.b16 %v4227, %v4211
    %v5236 = vpack.c.b16 %v4228, %v4212
    %v5237 = vpack.c.b16 %v4229, %v4213
    %v5238 = vpack.c.b16 %v4230, %v4214
    %v5239 = vpack.c.b16 %v4231, %v4215
    %v5240 = vpack.c.b16 %v4232, %v4216
    %v5241 = vpack.c.b16 %v4233, %v4217
    %v5242 = vpack.c.b16 %v4234, %v4218
    %v5243 = vpack.c.b16 %v4235, %v4219
    %v5244 = vpack.c.b16 %v4236, %v4220
    %v5245 = vpack.c.b16 %v4237, %v4221
    %v5246 = vpack.c.b16 %v4254, %v4238
    %v5247 = vpack.c.b16 %v4255, %v4239
    %v5248 = vpack.c.b16 %v4256, %v4240
    %v5249 = vpack.c.b16 %v4257, %v4241
    %v5250 = vpack.c.b16 %v4258, %v4242
    %v5251 = vpack.c.b16 %v4259, %v4243
    %v5252 = vpack.c.b16 %v4260, %v4244
    %v5253 = vpack.c.b16 %v4261, %v4245
    %v5254 = vpack.c.b16 %v4262, %v4246
    %v5255 = vpack.c.b16 %v4263, %v4247
    %v5256 = vpack.c.b16 %v4264, %v4248
    %v5257 = vpack.c.b16 %v4265, %v4249
    %v5258 = vpack.c.b16 %v4266, %v4250
    %v5259 = vpack.c.b16 %v4267, %v4251
    %v5260 = vpack.c.b16 %v4268, %v4252
    %v5261 = vpack.c.b16 %v4269, %v4253
    %v5262 = vpack.c.b16 %v4286, %v4270
    %v5263 = vpack.c.b16 %v4287, %v4271
    %v5264 = vpack.c.b16 %v4288, %v4272
    %v5265 = vpack.c.b16 %v4289, %v4273
    %v5266 = vpack.c.b16 %v4290, %v4274
    %v5267 = vpack.c.b16 %v4291, %v4275
    %v5268 = vpack.c.b16 %v4292, %v4276
    %v5269 = vpack.c.b16 %v4293, %v4277
    %v5270 = vpack.c.b16 %v4294, %v4278
    %v5271 = vpack.c.b16 %v4295, %v4279
    %v5272 = vpack.c.b16 %v4296, %v4280
    %v5273 = vpack.c.b16 %v4297, %v4281
    %v5274 = vpack.c.b16 %v4298, %v4282
    %v5275 = vpack.c.b16 %v4299, %v4283
    %v5276 = vpack.c.b16 %v4300, %v4284
    %v5277 = vpack.c.b16 %v4301, %v4285
    %v5278 = vpack.c.b16 %v4318, %v4302
    %v5279 = vpack.c.b16 %v4319, %v4303
    %v5280 = vpack.c.b16 %v4320, %v4304
    %v5281 = vpack.c.b16 %v4321, %v4305
    %v5282 = vpack.c.b16 %v4322, %v4306
    %v5283 = vpack.c.b16 %v4323, %v4307
    %v5284 = vpack.c.b16 %v4324, %v4308
    %v5285 = vpack.c.b16 %v4325, %v4309
    %v5286 = vpack.c.b16 %v4326, %v4310
    %v5287 = vpack.c.b16 %v4327, %v4311
    %v5288 = vpack.c.b16 %v4328, %v4312
    %v5289 = vpack.c.b16 %v4329, %v4313
    %v5290 = vpack.c.b16 %v4330, %v4314
    %v5291 = vpack.c.b16 %v4331, %v4315
    %v5292 = vpack.c.b16 %v4332, %v4316
    %v5293 = vpack.c.b16 %v4333, %v4317
    %v5294 = vpack.c.b16 %v4350, %v4334
    %v5295 = vpack.c.b16 %v4351, %v4335
    %v5296 = vpack.c.b16 %v4352, %v4336
    %v5297 = vpack.c.b16 %v4353, %v4337
    %v5298 = vpack.c.b16 %v4354, %v4338
    %v5299 = vpack.c.b16 %v4355, %v4339
    %v5300 = vpack.c.b16 %v4356, %v4340
    %v5301 = vpack.c.b16 %v4357, %v4341
    %v5302 = vpack.c.b16 %v4358, %v4342
    %v5303 = vpack.c.b16 %v4359, %v4343
    %v5304 = vpack.c.b16 %v4360, %v4344
    %v5305 = vpack.c.b16 %v4361, %v4345
    %v5306 = vpack.c.b16 %v4362, %v4346
    %v5307 = vpack.c.b16 %v4363, %v4347
    %v5308 = vpack.c.b16 %v4364, %v4348
    %v5309 = vpack.c.b16 %v4365, %v4349
    %v5310 = vpack.c.b16 %v4382, %v4366
    %v5311 = vpack.c.b16 %v4383, %v4367
    %v5312 = vpack.c.b16 %v4384, %v4368
    %v5313 = vpack.c.b16 %v4385, %v4369
    %v5314 = vpack.c.b16 %v4386, %v4370
    %v5315 = vpack.c.b16 %v4387, %v4371
    %v5316 = vpack.c.b16 %v4388, %v4372
    %v5317 = vpack.c.b16 %v4389, %v4373
    %v5318 = vpack.c.b16 %v4390, %v4374
    %v5319 = vpack.c.b16 %v4391, %v4375
    %v5320 = vpack.c.b16 %v4392, %v4376
    %v5321 = vpack.c.b16 %v4393, %v4377
    %v5322 = vpack.c.b16 %v4394, %v4378
    %v5323 = vpack.c.b16 %v4395, %v4379
    %v5324 = vpack.c.b16 %v4396, %v4380
    %v5325 = vpack.c.b16 %v4397, %v4381
    %v5326 = vpack.c.b16 %v4414, %v4398
    %v5327 = vpack.c.b16 %v4415, %v4399
    %v5328 = vpack.c.b16 %v4416, %v4400
    %v5329 = vpack.c.b16 %v4417, %v4401
    %v5330 = vpack.c.b16 %v4418, %v4402
    %v5331 = vpack.c.b16 %v4419, %v4403
    %v5332 = vpack.c.b16 %v4420, %v4404
    %v5333 = vpack.c.b16 %v4421, %v4405
    %v5334 = vpack.c.b16 %v4422, %v4406
    %v5335 = vpack.c.b16 %v4423, %v4407
    %v5336 = vpack.c.b16 %v4424, %v4408
    %v5337 = vpack.c.b16 %v4425, %v4409
    %v5338 = vpack.c.b16 %v4426, %v4410
    %v5339 = vpack.c.b16 %v4427, %v4411
    %v5340 = vpack.c.b16 %v4428, %v4412
    %v5341 = vpack.c.b16 %v4429, %v4413
    %v5342 = vpack.c.b16 %v4446, %v4430
    %v5343 = vpack.c.b16 %v4447, %v4431
    %v5344 = vpack.c.b16 %v4448, %v4432
    %v5345 = vpack.c.b16 %v4449, %v4433
    %v5346 = vpack.c.b16 %v4450, %v4434
    %v5347 = vpack.c.b16 %v4451, %v4435
    %v5348 = vpack.c.b16 %v4452, %v4436
    %v5349 = vpack.c.b16 %v4453, %v4437
    %v5350 = vpack.c.b16 %v4454, %v4438
    %v5351 = vpack.c.b16 %v4455, %v4439
    %v5352 = vpack.c.b16 %v4456, %v4440
    %v5353 = vpack.c.b16 %v4457, %v4441
    %v5354 = vpack.c.b16 %v4458, %v4442
    %v5355 = vpack.c.b16 %v4459, %v4443
    %v5356 = vpack.c.b16 %v4460, %v4444
    %v5357 = vpack.c.b16 %v4461, %v4445
    %v5358 = vpack.c.b16 %v4478, %v4462
    %v5359 = vpack.c.b16 %v4479, %v4463
    %v5360 = vpack.c.b16 %v4480, %v4464
    %v5361 = vpack.c.b16 %v4481, %v4465
    %v5362 = vpack.c.b16 %v4482, %v4466
    %v5363 = vpack.c.b16 %v4483, %v4467
    %v5364 = vpack.c.b16 %v4484, %v4468
    %v5365 = vpack.c.b16 %v4485, %v4469
    %v5366 = vpack.c.b16 %v4486, %v4470
    %v5367 = vpack.c.b16 %v4487, %v4471
    %v5368 = vpack.c.b16 %v4488, %v4472
    %v5369 = vpack.c.b16 %v4489, %v4473
    %v5370 = vpack.c.b16 %v4490, %v4474
    %v5371 = vpack.c.b16 %v4491, %v4475
    %v5372 = vpack.c.b16 %v4492, %v4476
    %v5373 = vpack.c.b16 %v4493, %v4477
    %v5374 = vpack.c.b16 %v4510, %v4494
    %v5375 = vpack.c.b16 %v4511, %v4495
    %v5376 = vpack.c.b16 %v4512, %v4496
    %v5377 = vpack.c.b16 %v4513, %v4497
    %v5378 = vpack.c.b16 %v4514, %v4498
    %v5379 = vpack.c.b16 %v4515, %v4499
    %v5380 = vpack.c.b16 %v4516, %v4500
    %v5381 = vpack.c.b16 %v4517, %v4501
    %v5382 = vpack.c.b16 %v4518, %v4502
    %v5383 = vpack.c.b16 %v4519, %v4503
    %v5384 = vpack.c.b16 %v4520, %v4504
    %v5385 = vpack.c.b16 %v4521, %v4505
    %v5386 = vpack.c.b16 %v4522, %v4506
    %v5387 = vpack.c.b16 %v4523, %v4507
    %v5388 = vpack.c.b16 %v4524, %v4508
    %v5389 = vpack.c.b16 %v4525, %v4509
    %v5390 = vpack.c.b16 %v4542, %v4526
    %v5391 = vpack.c.b16 %v4543, %v4527
    %v5392 = vpack.c.b16 %v4544, %v4528
    %v5393 = vpack.c.b16 %v4545, %v4529
    %v5394 = vpack.c.b16 %v4546, %v4530
    %v5395 = vpack.c.b16 %v4547, %v4531
    %v5396 = vpack.c.b16 %v4548, %v4532
    %v5397 = vpack.c.b16 %v4549, %v4533
    %v5398 = vpack.c.b16 %v4550, %v4534
    %v5399 = vpack.c.b16 %v4551, %v4535
    %v5400 = vpack.c.b16 %v4552, %v4536
    %v5401 = vpack.c.b16 %v4553, %v4537
    %v5402 = vpack.c.b16 %v4554, %v4538
    %v5403 = vpack.c.b16 %v4555, %v4539
    %v5404 = vpack.c.b16 %v4556, %v4540
    %v5405 = vpack.c.b16 %v4557, %v4541
    %v5406 = vpack.c.b16 %v4574, %v4558
    %v5407 = vpack.c.b16 %v4575, %v4559
    %v5408 = vpack.c.b16 %v4576, %v4560
    %v5409 = vpack.c.b16 %v4577, %v4561
    %v5410 = vpack.c.b16 %v4578, %v4562
    %v5411 = vpack.c.b16 %v4579, %v4563
    %v5412 = vpack.c.b16 %v4580, %v4564
    %v5413 = vpack.c.b16 %v4581, %v4565
    %v5414 = vpack.c.b16 %v4582, %v4566
    %v5415 = vpack.c.b16 %v4583, %v4567
    %v5416 = vpack.c.b16 %v4584, %v4568
    %v5417 = vpack.c.b16 %v4585, %v4569
    %v5418 = vpack.c.b16 %v4586, %v4570
    %v5419 = vpack.c.b16 %v4587, %v4571
    %v5420 = vpack.c.b16 %v4588, %v4572
    %v5421 = vpack.c.b16 %v4589, %v4573
    %v5422 = vpack.c.b16 %v4606, %v4590
    %v5423 = vpack.c.b16 %v4607, %v4591
    %v5424 = vpack.c.b16 %v4608, %v4592
    %v5425 = vpack.c.b16 %v4609, %v4593
    %v5426 = vpack.c.b16 %v4610, %v4594
    %v5427 = vpack.c.b16 %v4611, %v4595
    %v5428 = vpack.c.b16 %v4612, %v4596
    %v5429 = vpack.c.b16 %v4613, %v4597
    %v5430 = vpack.c.b16 %v4614, %v4598
    %v5431 = vpack.c.b16 %v4615, %v4599
    %v5432 = vpack.c.b16 %v4616, %v4600
    %v5433 = vpack.c.b16 %v4617, %v4601
    %v5434 = vpack.c.b16 %v4618, %v4602
    %v5435 = vpack.c.b16 %v4619, %v4603
    %v5436 = vpack.c.b16 %v4620, %v4604
    %v5437 = vpack.c.b16 %v4621, %v4605
    %v5438 = vpack.c.b16 %v4638, %v4622
    %v5439 = vpack.c.b16 %v4639, %v4623
    %v5440 = vpack.c.b16 %v4640, %v4624
    %v5441 = vpack.c.b16 %v4641, %v4625
    %v5442 = vpack.c.b16 %v4642, %v4626
    %v5443 = vpack.c.b16 %v4643, %v4627
    %v5444 = vpack.c.b16 %v4644, %v4628
    %v5445 = vpack.c.b16 %v4645, %v4629
    %v5446 = vpack.c.b16 %v4646, %v4630
    %v5447 = vpack.c.b16 %v4647, %v4631
    %v5448 = vpack.c.b16 %v4648, %v4632
    %v5449 = vpack.c.b16 %v4649, %v4633
    %v5450 = vpack.c.b16 %v4650, %v4634
    %v5451 = vpack.c.b16 %v4651, %v4635
    %v5452 = vpack.c.b16 %v4652, %v4636
    %v5453 = vpack.c.b16 %v4653, %v4637
    %v5454 = vpack.c.b16 %v4670, %v4654
    %v5455 = vpack.c.b16 %v4671, %v4655
    %v5456 = vpack.c.b16 %v4672, %v4656
    %v5457 = vpack.c.b16 %v4673, %v4657
    %v5458 = vpack.c.b16 %v4674, %v4658
    %v5459 = vpack.c.b16 %v4675, %v4659
    %v5460 = vpack.c.b16 %v4676, %v4660
    %v5461 = vpack.c.b16 %v4677, %v4661
    %v5462 = vpack.c.b16 %v4678, %v4662
    %v5463 = vpack.c.b16 %v4679, %v4663
    %v5464 = vpack.c.b16 %v4680, %v4664
    %v5465 = vpack.c.b16 %v4681, %v4665
    %v5466 = vpack.c.b16 %v4682, %v4666
    %v5467 = vpack.c.b16 %v4683, %v4667
    %v5468 = vpack.c.b16 %v4684, %v4668
    %v5469 = vpack.c.b16 %v4685, %v4669
    %v5470 = vpack.c.b16 %v4702, %v4686
    %v5471 = vpack.c.b16 %v4703, %v4687
    %v5472 = vpack.c.b16 %v4704, %v4688
    %v5473 = vpack.c.b16 %v4705, %v4689
    %v5474 = vpack.c.b16 %v4706, %v4690
    %v5475 = vpack.c.b16 %v4707, %v4691
    %v5476 = vpack.c.b16 %v4708, %v4692
    %v5477 = vpack.c.b16 %v4709, %v4693
    %v5478 = vpack.c.b16 %v4710, %v4694
    %v5479 = vpack.c.b16 %v4711, %v4695
    %v5480 = vpack.c.b16 %v4712, %v4696
    %v5481 = vpack.c.b16 %v4713, %v4697
    %v5482 = vpack.c.b16 %v4714, %v4698
    %v5483 = vpack.c.b16 %v4715, %v4699
    %v5484 = vpack.c.b16 %v4716, %v4700
    %v5485 = vpack.c.b16 %v4717, %v4701
    %v5486 = vpack.c.b16 %v4734, %v4718
    %v5487 = vpack.c.b16 %v4735, %v4719
    %v5488 = vpack.c.b16 %v4736, %v4720
    %v5489 = vpack.c.b16 %v4737, %v4721
    %v5490 = vpack.c.b16 %v4738, %v4722
    %v5491 = vpack.c.b16 %v4739, %v4723
    %v5492 = vpack.c.b16 %v4740, %v4724
    %v5493 = vpack.c.b16 %v4741, %v4725
    %v5494 = vpack.c.b16 %v4742, %v4726
    %v5495 = vpack.c.b16 %v4743, %v4727
    %v5496 = vpack.c.b16 %v4744, %v4728
    %v5497 = vpack.c.b16 %v4745, %v4729
    %v5498 = vpack.c.b16 %v4746, %v4730
    %v5499 = vpack.c.b16 %v4747, %v4731
    %v5500 = vpack.c.b16 %v4748, %v4732
    %v5501 = vpack.c.b16 %v4749, %v4733
    %v5502 = vpack.c.b16 %v4766, %v4750
    %v5503 = vpack.c.b16 %v4767, %v4751
    %v5504 = vpack.c.b16 %v4768, %v4752
    %v5505 = vpack.c.b16 %v4769, %v4753
    %v5506 = vpack.c.b16 %v4770, %v4754
    %v5507 = vpack.c.b16 %v4771, %v4755
    %v5508 = vpack.c.b16 %v4772, %v4756
    %v5509 = vpack.c.b16 %v4773, %v4757
    %v5510 = vpack.c.b16 %v4774, %v4758
    %v5511 = vpack.c.b16 %v4775, %v4759
    %v5512 = vpack.c.b16 %v4776, %v4760
    %v5513 = vpack.c.b16 %v4777, %v4761
    %v5514 = vpack.c.b16 %v4778, %v4762
    %v5515 = vpack.c.b16 %v4779, %v4763
    %v5516 = vpack.c.b16 %v4780, %v4764
    %v5517 = vpack.c.b16 %v4781, %v4765
    %v5518 = vpack.c.b16 %v4798, %v4782
    %v5519 = vpack.c.b16 %v4799, %v4783
    %v5520 = vpack.c.b16 %v4800, %v4784
    %v5521 = vpack.c.b16 %v4801, %v4785
    %v5522 = vpack.c.b16 %v4802, %v4786
    %v5523 = vpack.c.b16 %v4803, %v4787
    %v5524 = vpack.c.b16 %v4804, %v4788
    %v5525 = vpack.c.b16 %v4805, %v4789
    %v5526 = vpack.c.b16 %v4806, %v4790
    %v5527 = vpack.c.b16 %v4807, %v4791
    %v5528 = vpack.c.b16 %v4808, %v4792
    %v5529 = vpack.c.b16 %v4809, %v4793
    %v5530 = vpack.c.b16 %v4810, %v4794
    %v5531 = vpack.c.b16 %v4811, %v4795
    %v5532 = vpack.c.b16 %v4812, %v4796
    %v5533 = vpack.c.b16 %v4813, %v4797
    %v5534 = vpack.c.b16 %v4830, %v4814
    %v5535 = vpack.c.b16 %v4831, %v4815
    %v5536 = vpack.c.b16 %v4832, %v4816
    %v5537 = vpack.c.b16 %v4833, %v4817
    %v5538 = vpack.c.b16 %v4834, %v4818
    %v5539 = vpack.c.b16 %v4835, %v4819
    %v5540 = vpack.c.b16 %v4836, %v4820
    %v5541 = vpack.c.b16 %v4837, %v4821
    %v5542 = vpack.c.b16 %v4838, %v4822
    %v5543 = vpack.c.b16 %v4839, %v4823
    %v5544 = vpack.c.b16 %v4840, %v4824
    %v5545 = vpack.c.b16 %v4841, %v4825
    %v5546 = vpack.c.b16 %v4842, %v4826
    %v5547 = vpack.c.b16 %v4843, %v4827
    %v5548 = vpack.c.b16 %v4844, %v4828
    %v5549 = vpack.c.b16 %v4845, %v4829
    %v5550 = vpack.c.b16 %v4862, %v4846
    %v5551 = vpack.c.b16 %v4863, %v4847
    %v5552 = vpack.c.b16 %v4864, %v4848
    %v5553 = vpack.c.b16 %v4865, %v4849
    %v5554 = vpack.c.b16 %v4866, %v4850
    %v5555 = vpack.c.b16 %v4867, %v4851
    %v5556 = vpack.c.b16 %v4868, %v4852
    %v5557 = vpack.c.b16 %v4869, %v4853
    %v5558 = vpack.c.b16 %v4870, %v4854
    %v5559 = vpack.c.b16 %v4871, %v4855
    %v5560 = vpack.c.b16 %v4872, %v4856
    %v5561 = vpack.c.b16 %v4873, %v4857
    %v5562 = vpack.c.b16 %v4874, %v4858
    %v5563 = vpack.c.b16 %v4875, %v4859
    %v5564 = vpack.c.b16 %v4876, %v4860
    %v5565 = vpack.c.b16 %v4877, %v4861
    %v5566 = vpack.c.b16 %v4894, %v4878
    %v5567 = vpack.c.b16 %v4895, %v4879
    %v5568 = vpack.c.b16 %v4896, %v4880
    %v5569 = vpack.c.b16 %v4897, %v4881
    %v5570 = vpack.c.b16 %v4898, %v4882
    %v5571 = vpack.c.b16 %v4899, %v4883
    %v5572 = vpack.c.b16 %v4900, %v4884
    %v5573 = vpack.c.b16 %v4901, %v4885
    %v5574 = vpack.c.b16 %v4902, %v4886
    %v5575 = vpack.c.b16 %v4903, %v4887
    %v5576 = vpack.c.b16 %v4904, %v4888
    %v5577 = vpack.c.b16 %v4905, %v4889
    %v5578 = vpack.c.b16 %v4906, %v4890
    %v5579 = vpack.c.b16 %v4907, %v4891
    %v5580 = vpack.c.b16 %v4908, %v4892
    %v5581 = vpack.c.b16 %v4909, %v4893
    %v5582 = vpack.c.b16 %v4926, %v4910
    %v5583 = vpack.c.b16 %v4927, %v4911
    %v5584 = vpack.c.b16 %v4928, %v4912
    %v5585 = vpack.c.b16 %v4929, %v4913
    %v5586 = vpack.c.b16 %v4930, %v4914
    %v5587 = vpack.c.b16 %v4931, %v4915
    %v5588 = vpack.c.b16 %v4932, %v4916
    %v5589 = vpack.c.b16 %v4933, %v4917
    %v5590 = vpack.c.b16 %v4934, %v4918
    %v5591 = vpack.c.b16 %v4935, %v4919
    %v5592 = vpack.c.b16 %v4936, %v4920
    %v5593 = vpack.c.b16 %v4937, %v4921
    %v5594 = vpack.c.b16 %v4938, %v4922
    %v5595 = vpack.c.b16 %v4939, %v4923
    %v5596 = vpack.c.b16 %v4940, %v4924
    %v5597 = vpack.c.b16 %v4941, %v4925
    %v5598 = vpack.c.b16 %v4958, %v4942
    %v5599 = vpack.c.b16 %v4959, %v4943
    %v5600 = vpack.c.b16 %v4960, %v4944
    %v5601 = vpack.c.b16 %v4961, %v4945
    %v5602 = vpack.c.b16 %v4962, %v4946
    %v5603 = vpack.c.b16 %v4963, %v4947
    %v5604 = vpack.c.b16 %v4964, %v4948
    %v5605 = vpack.c.b16 %v4965, %v4949
    %v5606 = vpack.c.b16 %v4966, %v4950
    %v5607 = vpack.c.b16 %v4967, %v4951
    %v5608 = vpack.c.b16 %v4968, %v4952
    %v5609 = vpack.c.b16 %v4969, %v4953
    %v5610 = vpack.c.b16 %v4970, %v4954
    %v5611 = vpack.c.b16 %v4971, %v4955
    %v5612 = vpack.c.b16 %v4972, %v4956
    %v5613 = vpack.c.b16 %v4973, %v4957
    %v5614 = vpack.c.b16 %v4990, %v4974
    %v5615 = vpack.c.b16 %v4991, %v4975
    %v5616 = vpack.c.b16 %v4992, %v4976
    %v5617 = vpack.c.b16 %v4993, %v4977
    %v5618 = vpack.c.b16 %v4994, %v4978
    %v5619 = vpack.c.b16 %v4995, %v4979
    %v5620 = vpack.c.b16 %v4996, %v4980
    %v5621 = vpack.c.b16 %v4997, %v4981
    %v5622 = vpack.c.b16 %v4998, %v4982
    %v5623 = vpack.c.b16 %v4999, %v4983
    %v5624 = vpack.c.b16 %v5000, %v4984
    %v5625 = vpack.c.b16 %v5001, %v4985
    %v5626 = vpack.c.b16 %v5002, %v4986
    %v5627 = vpack.c.b16 %v5003, %v4987
    %v5628 = vpack.c.b16 %v5004, %v4988
    %v5629 = vpack.c.b16 %v5005, %v4989
    %v5630 = vpack.c.b16 %v5022, %v5006
    %v5631 = vpack.c.b16 %v5023, %v5007
    %v5632 = vpack.c.b16 %v5024, %v5008
    %v5633 = vpack.c.b16 %v5025, %v5009
    %v5634 = vpack.c.b16 %v5026, %v5010
    %v5635 = vpack.c.b16 %v5027, %v5011
    %v5636 = vpack.c.b16 %v5028, %v5012
    %v5637 = vpack.c.b16 %v5029, %v5013
    %v5638 = vpack.c.b16 %v5030, %v5014
    %v5639 = vpack.c.b16 %v5031, %v5015
    %v5640 = vpack.c.b16 %v5032, %v5016
    %v5641 = vpack.c.b16 %v5033, %v5017
    %v5642 = vpack.c.b16 %v5034, %v5018
    %v5643 = vpack.c.b16 %v5035, %v5019
    %v5644 = vpack.c.b16 %v5036, %v5020
    %v5645 = vpack.c.b16 %v5037, %v5021
    %v5646 = vpack.c.b16 %v5054, %v5038
    %v5647 = vpack.c.b16 %v5055, %v5039
    %v5648 = vpack.c.b16 %v5056, %v5040
    %v5649 = vpack.c.b16 %v5057, %v5041
    %v5650 = vpack.c.b16 %v5058, %v5042
    %v5651 = vpack.c.b16 %v5059, %v5043
    %v5652 = vpack.c.b16 %v5060, %v5044
    %v5653 = vpack.c.b16 %v5061, %v5045
    %v5654 = vpack.c.b16 %v5062, %v5046
    %v5655 = vpack.c.b16 %v5063, %v5047
    %v5656 = vpack.c.b16 %v5064, %v5048
    %v5657 = vpack.c.b16 %v5065, %v5049
    %v5658 = vpack.c.b16 %v5066, %v5050
    %v5659 = vpack.c.b16 %v5067, %v5051
    %v5660 = vpack.c.b16 %v5068, %v5052
    %v5661 = vpack.c.b16 %v5069, %v5053
    %v5662 = vpack.c.b16 %v5086, %v5070
    %v5663 = vpack.c.b16 %v5087, %v5071
    %v5664 = vpack.c.b16 %v5088, %v5072
    %v5665 = vpack.c.b16 %v5089, %v5073
    %v5666 = vpack.c.b16 %v5090, %v5074
    %v5667 = vpack.c.b16 %v5091, %v5075
    %v5668 = vpack.c.b16 %v5092, %v5076
    %v5669 = vpack.c.b16 %v5093, %v5077
    %v5670 = vpack.c.b16 %v5094, %v5078
    %v5671 = vpack.c.b16 %v5095, %v5079
    %v5672 = vpack.c.b16 %v5096, %v5080
    %v5673 = vpack.c.b16 %v5097, %v5081
    %v5674 = vpack.c.b16 %v5098, %v5082
    %v5675 = vpack.c.b16 %v5099, %v5083
    %v5676 = vpack.c.b16 %v5100, %v5084
    %v5677 = vpack.c.b16 %v5101, %v5085
    %v5678 = vpack.c.b16 %v5118, %v5102
    %v5679 = vpack.c.b16 %v5119, %v5103
    %v5680 = vpack.c.b16 %v5120, %v5104
    %v5681 = vpack.c.b16 %v5121, %v5105
    %v5682 = vpack.c.b16 %v5122, %v5106
    %v5683 = vpack.c.b16 %v5123, %v5107
    %v5684 = vpack.c.b16 %v5124, %v5108
    %v5685 = vpack.c.b16 %v5125, %v5109
    %v5686 = vpack.c.b16 %v5126, %v5110
    %v5687 = vpack.c.b16 %v5127, %v5111
    %v5688 = vpack.c.b16 %v5128, %v5112
    %v5689 = vpack.c.b16 %v5129, %v5113
    %v5690 = vpack.c.b16 %v5130, %v5114
    %v5691 = vpack.c.b16 %v5131, %v5115
    %v5692 = vpack.c.b16 %v5132, %v5116
    %v5693 = vpack.c.b16 %v5133, %v5117
    %v5694 = vpack.c.b16 %v5150, %v5134
    %v5695 = vpack.c.b16 %v5151, %v5135
    %v5696 = vpack.c.b16 %v5152, %v5136
    %v5697 = vpack.c.b16 %v5153, %v5137
    %v5698 = vpack.c.b16 %v5154, %v5138
    %v5699 = vpack.c.b16 %v5155, %v5139
    %v5700 = vpack.c.b16 %v5156, %v5140
    %v5701 = vpack.c.b16 %v5157, %v5141
    %v5702 = vpack.c.b16 %v5158, %v5142
    %v5703 = vpack.c.b16 %v5159, %v5143
    %v5704 = vpack.c.b16 %v5160, %v5144
    %v5705 = vpack.c.b16 %v5161, %v5145
    %v5706 = vpack.c.b16 %v5162, %v5146
    %v5707 = vpack.c.b16 %v5163, %v5147
    %v5708 = vpack.c.b16 %v5164, %v5148
    %v5709 = vpack.c.b16 %v5165, %v5149
    %v5710 = vpack.c.b16 %v5182, %v5166
    %v5711 = vpack.c.b16 %v5183, %v5167
    %v5712 = vpack.c.b16 %v5184, %v5168
    %v5713 = vpack.c.b16 %v5185, %v5169
    %v5714 = vpack.c.b16 %v5186, %v5170
    %v5715 = vpack.c.b16 %v5187, %v5171
    %v5716 = vpack.c.b16 %v5188, %v5172
    %v5717 = vpack.c.b16 %v5189, %v5173
    %v5718 = vpack.c.b16 %v5190, %v5174
    %v5719 = vpack.c.b16 %v5191, %v5175
    %v5720 = vpack.c.b16 %v5192, %v5176
    %v5721 = vpack.c.b16 %v5193, %v5177
    %v5722 = vpack.c.b16 %v5194, %v5178
    %v5723 = vpack.c.b16 %v5195, %v5179
    %v5724 = vpack.c.b16 %v5196, %v5180
    %v5725 = vpack.c.b16 %v5197, %v5181
    %v5726 = vpack.c.b16 %v5214, %v5198
    %v5727 = vpack.c.b16 %v5215, %v5199
    %v5728 = vpack.c.b16 %v5216, %v5200
    %v5729 = vpack.c.b16 %v5217, %v5201
    %v5730 = vpack.c.b16 %v5218, %v5202
    %v5731 = vpack.c.b16 %v5219, %v5203
    %v5732 = vpack.c.b16 %v5220, %v5204
    %v5733 = vpack.c.b16 %v5221, %v5205
    %v5734 = vpack.c.b16 %v5222, %v5206
    %v5735 = vpack.c.b16 %v5223, %v5207
    %v5736 = vpack.c.b16 %v5224, %v5208
    %v5737 = vpack.c.b16 %v5225, %v5209
    %v5738 = vpack.c.b16 %v5226, %v5210
    %v5739 = vpack.c.b16 %v5227, %v5211
    %v5740 = vpack.c.b16 %v5228, %v5212
    %v5741 = vpack.c.b16 %v5229, %v5213
    %6254 = vmatprep.subr.bf16.mxu0 %v5343
    %6255 = vmatpush1.bf16.msra.mxu0 %v5342
    %6256 = vmatprep.subr.bf16.mxu0 %v5327
    %6257 = vmatpush1.bf16.msra.mxu0 %v5326
    %6258 = vmatprep.subr.bf16.mxu0 %v5311
    %6259 = vmatpush1.bf16.msra.mxu0 %v5310
    %6260 = vmatprep.subr.bf16.mxu0 %v5295
    %6261 = vmatpush1.bf16.msra.mxu0 %v5294
    %6262 = vmatprep.subr.bf16.mxu0 %v5279
    %6263 = vmatpush1.bf16.msra.mxu0 %v5278
    %6264 = vmatprep.subr.bf16.mxu0 %v5263
    %6265 = vmatpush1.bf16.msra.mxu0 %v5262
    %6266 = vmatprep.subr.bf16.mxu0 %v5247
    %6267 = vmatpush1.bf16.msra.mxu0 %v5246
    %6268 = vmatprep.subr.bf16.mxu0 %v5231
    %6269 = vmatpush1.bf16.msra.mxu0 %v5230
    %6270 = vmatprep.subr.bf16.mxu0 %v5471
    %6271 = vmatpush2.bf16.msra.mxu0 %v5470
    %6272 = vmatprep.subr.bf16.mxu0 %v5455
    %6273 = vmatpush2.bf16.msra.mxu0 %v5454
    %6274 = vmatprep.subr.bf16.mxu0 %v5439
    %6275 = vmatpush2.bf16.msra.mxu0 %v5438
    %6276 = vmatprep.subr.bf16.mxu0 %v5423
    %6277 = vmatpush2.bf16.msra.mxu0 %v5422
    %6278 = vmatprep.subr.bf16.mxu0 %v5407
    %6279 = vmatpush2.bf16.msra.mxu0 %v5406
    %6280 = vmatprep.subr.bf16.mxu0 %v5391
    %6281 = vmatpush2.bf16.msra.mxu0 %v5390
    %6282 = vmatprep.subr.bf16.mxu0 %v5375
    %6283 = vmatpush2.bf16.msra.mxu0 %v5374
    %6284 = vmatprep.subr.bf16.mxu0 %v5359
    %6285 = vmatpush2.bf16.msra.mxu0 %v5358
    %6286 = vmatprep.mubr.bf16.mxu0 %v3179
    %6287 = vmatmul.mubr.bf16.gmra.mxu0 %v3178
    %v6288 = vpop.f32.mrf.mxu0
    %v6289 = vadd.f32 0.0, %v6288
    %v6290 = vpop.f32.mrf.mxu0
    %v6291 = vadd.f32 0.0, %v6290
    %v6292 = vpop.f32.mrf.mxu0
    %v6293 = vpop.f32.mrf.mxu0
    %6294 = vdwg.mxu0
    %6295 = vmatprep.subr.bf16.mxu0 %v5599
    %6296 = vmatpush1.bf16.msra.mxu0 %v5598
    %6297 = vmatprep.subr.bf16.mxu0 %v5583
    %6298 = vmatpush1.bf16.msra.mxu0 %v5582
    %6299 = vmatprep.subr.bf16.mxu0 %v5567
    %6300 = vmatpush1.bf16.msra.mxu0 %v5566
    %6301 = vmatprep.subr.bf16.mxu0 %v5551
    %6302 = vmatpush1.bf16.msra.mxu0 %v5550
    %6303 = vmatprep.subr.bf16.mxu0 %v5535
    %6304 = vmatpush1.bf16.msra.mxu0 %v5534
    %6305 = vmatprep.subr.bf16.mxu0 %v5519
    %6306 = vmatpush1.bf16.msra.mxu0 %v5518
    %6307 = vmatprep.subr.bf16.mxu0 %v5503
    %6308 = vmatpush1.bf16.msra.mxu0 %v5502
    %6309 = vmatprep.subr.bf16.mxu0 %v5487
    %6310 = vmatpush1.bf16.msra.mxu0 %v5486
    %6311 = vmatprep.subr.bf16.mxu0 %v5727
    %6312 = vmatpush2.bf16.msra.mxu0 %v5726
    %6313 = vmatprep.subr.bf16.mxu0 %v5711
    %6314 = vmatpush2.bf16.msra.mxu0 %v5710
    %6315 = vmatprep.subr.bf16.mxu0 %v5695
    %6316 = vmatpush2.bf16.msra.mxu0 %v5694
    %6317 = vmatprep.subr.bf16.mxu0 %v5679
    %6318 = vmatpush2.bf16.msra.mxu0 %v5678
    %6319 = vmatprep.subr.bf16.mxu0 %v5663
    %6320 = vmatpush2.bf16.msra.mxu0 %v5662
    %6321 = vmatprep.subr.bf16.mxu0 %v5647
    %6322 = vmatpush2.bf16.msra.mxu0 %v5646
    %6323 = vmatprep.subr.bf16.mxu0 %v5631
    %6324 = vmatpush2.bf16.msra.mxu0 %v5630
    %6325 = vmatprep.subr.bf16.mxu0 %v5615
    %6326 = vmatpush2.bf16.msra.mxu0 %v5614
    %6327 = vmatprep.mubr.bf16.mxu0 %v3181
    %6328 = vmatmul.mubr.bf16.gmra.mxu0 %v3180
    %v6329 = vpop.f32.mrf.mxu0
    %v6330 = vadd.f32 %v6289, %v6329
    %v6331 = vpop.f32.mrf.mxu0
    %v6332 = vadd.f32 %v6291, %v6331
    %v6333 = vpop.f32.mrf.mxu0
    %v6334 = vpop.f32.mrf.mxu0
    %6335 = vdwg.mxu0
    %6336 = vmatprep.subr.bf16.mxu0 %v5345
    %6337 = vmatpush1.bf16.msra.mxu0 %v5344
    %6338 = vmatprep.subr.bf16.mxu0 %v5329
    %6339 = vmatpush1.bf16.msra.mxu0 %v5328
    %6340 = vmatprep.subr.bf16.mxu0 %v5313
    %6341 = vmatpush1.bf16.msra.mxu0 %v5312
    %6342 = vmatprep.subr.bf16.mxu0 %v5297
    %6343 = vmatpush1.bf16.msra.mxu0 %v5296
    %6344 = vmatprep.subr.bf16.mxu0 %v5281
    %6345 = vmatpush1.bf16.msra.mxu0 %v5280
    %6346 = vmatprep.subr.bf16.mxu0 %v5265
    %6347 = vmatpush1.bf16.msra.mxu0 %v5264
    %6348 = vmatprep.subr.bf16.mxu0 %v5249
    %6349 = vmatpush1.bf16.msra.mxu0 %v5248
    %6350 = vmatprep.subr.bf16.mxu0 %v5233
    %6351 = vmatpush1.bf16.msra.mxu0 %v5232
    %6352 = vmatprep.subr.bf16.mxu0 %v5473
    %6353 = vmatpush2.bf16.msra.mxu0 %v5472
    %6354 = vmatprep.subr.bf16.mxu0 %v5457
    %6355 = vmatpush2.bf16.msra.mxu0 %v5456
    %6356 = vmatprep.subr.bf16.mxu0 %v5441
    %6357 = vmatpush2.bf16.msra.mxu0 %v5440
    %6358 = vmatprep.subr.bf16.mxu0 %v5425
    %6359 = vmatpush2.bf16.msra.mxu0 %v5424
    %6360 = vmatprep.subr.bf16.mxu0 %v5409
    %6361 = vmatpush2.bf16.msra.mxu0 %v5408
    %6362 = vmatprep.subr.bf16.mxu0 %v5393
    %6363 = vmatpush2.bf16.msra.mxu0 %v5392
    %6364 = vmatprep.subr.bf16.mxu0 %v5377
    %6365 = vmatpush2.bf16.msra.mxu0 %v5376
    %6366 = vmatprep.subr.bf16.mxu0 %v5361
    %6367 = vmatpush2.bf16.msra.mxu0 %v5360
    %6368 = vmatprep.mubr.bf16.mxu0 %v3179
    %6369 = vmatmul.mubr.bf16.gmra.mxu0 %v3178
    %v6370 = vpop.f32.mrf.mxu0
    %v6371 = vadd.f32 0.0, %v6370
    %v6372 = vpop.f32.mrf.mxu0
    %v6373 = vadd.f32 0.0, %v6372
    %v6374 = vpop.f32.mrf.mxu0
    %v6375 = vpop.f32.mrf.mxu0
    %6376 = vdwg.mxu0
    %6377 = vmatprep.subr.bf16.mxu0 %v5601
    %6378 = vmatpush1.bf16.msra.mxu0 %v5600
    %6379 = vmatprep.subr.bf16.mxu0 %v5585
    %6380 = vmatpush1.bf16.msra.mxu0 %v5584
    %6381 = vmatprep.subr.bf16.mxu0 %v5569
    %6382 = vmatpush1.bf16.msra.mxu0 %v5568
    %6383 = vmatprep.subr.bf16.mxu0 %v5553
    %6384 = vmatpush1.bf16.msra.mxu0 %v5552
    %6385 = vmatprep.subr.bf16.mxu0 %v5537
    %6386 = vmatpush1.bf16.msra.mxu0 %v5536
    %6387 = vmatprep.subr.bf16.mxu0 %v5521
    %6388 = vmatpush1.bf16.msra.mxu0 %v5520
    %6389 = vmatprep.subr.bf16.mxu0 %v5505
    %6390 = vmatpush1.bf16.msra.mxu0 %v5504
    %6391 = vmatprep.subr.bf16.mxu0 %v5489
    %6392 = vmatpush1.bf16.msra.mxu0 %v5488
    %6393 = vmatprep.subr.bf16.mxu0 %v5729
    %6394 = vmatpush2.bf16.msra.mxu0 %v5728
    %6395 = vmatprep.subr.bf16.mxu0 %v5713
    %6396 = vmatpush2.bf16.msra.mxu0 %v5712
    %6397 = vmatprep.subr.bf16.mxu0 %v5697
    %6398 = vmatpush2.bf16.msra.mxu0 %v5696
    %6399 = vmatprep.subr.bf16.mxu0 %v5681
    %6400 = vmatpush2.bf16.msra.mxu0 %v5680
    %6401 = vmatprep.subr.bf16.mxu0 %v5665
    %6402 = vmatpush2.bf16.msra.mxu0 %v5664
    %6403 = vmatprep.subr.bf16.mxu0 %v5649
    %6404 = vmatpush2.bf16.msra.mxu0 %v5648
    %6405 = vmatprep.subr.bf16.mxu0 %v5633
    %6406 = vmatpush2.bf16.msra.mxu0 %v5632
    %6407 = vmatprep.subr.bf16.mxu0 %v5617
    %6408 = vmatpush2.bf16.msra.mxu0 %v5616
    %6409 = vmatprep.mubr.bf16.mxu0 %v3181
    %6410 = vmatmul.mubr.bf16.gmra.mxu0 %v3180
    %v6411 = vpop.f32.mrf.mxu0
    %v6412 = vadd.f32 %v6371, %v6411
    %v6413 = vpop.f32.mrf.mxu0
    %v6414 = vadd.f32 %v6373, %v6413
    %v6415 = vpop.f32.mrf.mxu0
    %v6416 = vpop.f32.mrf.mxu0
    %6417 = vdwg.mxu0
    %6418 = vmatprep.subr.bf16.mxu0 %v5347
    %6419 = vmatpush1.bf16.msra.mxu0 %v5346
    %6420 = vmatprep.subr.bf16.mxu0 %v5331
    %6421 = vmatpush1.bf16.msra.mxu0 %v5330
    %6422 = vmatprep.subr.bf16.mxu0 %v5315
    %6423 = vmatpush1.bf16.msra.mxu0 %v5314
    %6424 = vmatprep.subr.bf16.mxu0 %v5299
    %6425 = vmatpush1.bf16.msra.mxu0 %v5298
    %6426 = vmatprep.subr.bf16.mxu0 %v5283
    %6427 = vmatpush1.bf16.msra.mxu0 %v5282
    %6428 = vmatprep.subr.bf16.mxu0 %v5267
    %6429 = vmatpush1.bf16.msra.mxu0 %v5266
    %6430 = vmatprep.subr.bf16.mxu0 %v5251
    %6431 = vmatpush1.bf16.msra.mxu0 %v5250
    %6432 = vmatprep.subr.bf16.mxu0 %v5235
    %6433 = vmatpush1.bf16.msra.mxu0 %v5234
    %6434 = vmatprep.subr.bf16.mxu0 %v5475
    %6435 = vmatpush2.bf16.msra.mxu0 %v5474
    %6436 = vmatprep.subr.bf16.mxu0 %v5459
    %6437 = vmatpush2.bf16.msra.mxu0 %v5458
    %6438 = vmatprep.subr.bf16.mxu0 %v5443
    %6439 = vmatpush2.bf16.msra.mxu0 %v5442
    %6440 = vmatprep.subr.bf16.mxu0 %v5427
    %6441 = vmatpush2.bf16.msra.mxu0 %v5426
    %6442 = vmatprep.subr.bf16.mxu0 %v5411
    %6443 = vmatpush2.bf16.msra.mxu0 %v5410
    %6444 = vmatprep.subr.bf16.mxu0 %v5395
    %6445 = vmatpush2.bf16.msra.mxu0 %v5394
    %6446 = vmatprep.subr.bf16.mxu0 %v5379
    %6447 = vmatpush2.bf16.msra.mxu0 %v5378
    %6448 = vmatprep.subr.bf16.mxu0 %v5363
    %6449 = vmatpush2.bf16.msra.mxu0 %v5362
    %6450 = vmatprep.mubr.bf16.mxu0 %v3179
    %6451 = vmatmul.mubr.bf16.gmra.mxu0 %v3178
    %v6452 = vpop.f32.mrf.mxu0
    %v6453 = vadd.f32 0.0, %v6452
    %v6454 = vpop.f32.mrf.mxu0
    %v6455 = vadd.f32 0.0, %v6454
    %v6456 = vpop.f32.mrf.mxu0
    %v6457 = vpop.f32.mrf.mxu0
    %6458 = vdwg.mxu0
    %6459 = vmatprep.subr.bf16.mxu0 %v5603
    %6460 = vmatpush1.bf16.msra.mxu0 %v5602
    %6461 = vmatprep.subr.bf16.mxu0 %v5587
    %6462 = vmatpush1.bf16.msra.mxu0 %v5586
    %6463 = vmatprep.subr.bf16.mxu0 %v5571
    %6464 = vmatpush1.bf16.msra.mxu0 %v5570
    %6465 = vmatprep.subr.bf16.mxu0 %v5555
    %6466 = vmatpush1.bf16.msra.mxu0 %v5554
    %6467 = vmatprep.subr.bf16.mxu0 %v5539
    %6468 = vmatpush1.bf16.msra.mxu0 %v5538
    %6469 = vmatprep.subr.bf16.mxu0 %v5523
    %6470 = vmatpush1.bf16.msra.mxu0 %v5522
    %6471 = vmatprep.subr.bf16.mxu0 %v5507
    %6472 = vmatpush1.bf16.msra.mxu0 %v5506
    %6473 = vmatprep.subr.bf16.mxu0 %v5491
    %6474 = vmatpush1.bf16.msra.mxu0 %v5490
    %6475 = vmatprep.subr.bf16.mxu0 %v5731
    %6476 = vmatpush2.bf16.msra.mxu0 %v5730
    %6477 = vmatprep.subr.bf16.mxu0 %v5715
    %6478 = vmatpush2.bf16.msra.mxu0 %v5714
    %6479 = vmatprep.subr.bf16.mxu0 %v5699
    %6480 = vmatpush2.bf16.msra.mxu0 %v5698
    %6481 = vmatprep.subr.bf16.mxu0 %v5683
    %6482 = vmatpush2.bf16.msra.mxu0 %v5682
    %6483 = vmatprep.subr.bf16.mxu0 %v5667
    %6484 = vmatpush2.bf16.msra.mxu0 %v5666
    %6485 = vmatprep.subr.bf16.mxu0 %v5651
    %6486 = vmatpush2.bf16.msra.mxu0 %v5650
    %6487 = vmatprep.subr.bf16.mxu0 %v5635
    %6488 = vmatpush2.bf16.msra.mxu0 %v5634
    %6489 = vmatprep.subr.bf16.mxu0 %v5619
    %6490 = vmatpush2.bf16.msra.mxu0 %v5618
    %6491 = vmatprep.mubr.bf16.mxu0 %v3181
    %6492 = vmatmul.mubr.bf16.gmra.mxu0 %v3180
    %v6493 = vpop.f32.mrf.mxu0
    %v6494 = vadd.f32 %v6453, %v6493
    %v6495 = vpop.f32.mrf.mxu0
    %v6496 = vadd.f32 %v6455, %v6495
    %v6497 = vpop.f32.mrf.mxu0
    %v6498 = vpop.f32.mrf.mxu0
    %6499 = vdwg.mxu0
    %6500 = vmatprep.subr.bf16.mxu0 %v5349
    %6501 = vmatpush1.bf16.msra.mxu0 %v5348
    %6502 = vmatprep.subr.bf16.mxu0 %v5333
    %6503 = vmatpush1.bf16.msra.mxu0 %v5332
    %6504 = vmatprep.subr.bf16.mxu0 %v5317
    %6505 = vmatpush1.bf16.msra.mxu0 %v5316
    %6506 = vmatprep.subr.bf16.mxu0 %v5301
    %6507 = vmatpush1.bf16.msra.mxu0 %v5300
    %6508 = vmatprep.subr.bf16.mxu0 %v5285
    %6509 = vmatpush1.bf16.msra.mxu0 %v5284
    %6510 = vmatprep.subr.bf16.mxu0 %v5269
    %6511 = vmatpush1.bf16.msra.mxu0 %v5268
    %6512 = vmatprep.subr.bf16.mxu0 %v5253
    %6513 = vmatpush1.bf16.msra.mxu0 %v5252
    %6514 = vmatprep.subr.bf16.mxu0 %v5237
    %6515 = vmatpush1.bf16.msra.mxu0 %v5236
    %6516 = vmatprep.subr.bf16.mxu0 %v5477
    %6517 = vmatpush2.bf16.msra.mxu0 %v5476
    %6518 = vmatprep.subr.bf16.mxu0 %v5461
    %6519 = vmatpush2.bf16.msra.mxu0 %v5460
    %6520 = vmatprep.subr.bf16.mxu0 %v5445
    %6521 = vmatpush2.bf16.msra.mxu0 %v5444
    %6522 = vmatprep.subr.bf16.mxu0 %v5429
    %6523 = vmatpush2.bf16.msra.mxu0 %v5428
    %6524 = vmatprep.subr.bf16.mxu0 %v5413
    %6525 = vmatpush2.bf16.msra.mxu0 %v5412
    %6526 = vmatprep.subr.bf16.mxu0 %v5397
    %6527 = vmatpush2.bf16.msra.mxu0 %v5396
    %6528 = vmatprep.subr.bf16.mxu0 %v5381
    %6529 = vmatpush2.bf16.msra.mxu0 %v5380
    %6530 = vmatprep.subr.bf16.mxu0 %v5365
    %6531 = vmatpush2.bf16.msra.mxu0 %v5364
    %6532 = vmatprep.mubr.bf16.mxu0 %v3179
    %6533 = vmatmul.mubr.bf16.gmra.mxu0 %v3178
    %v6534 = vpop.f32.mrf.mxu0
    %v6535 = vadd.f32 0.0, %v6534
    %v6536 = vpop.f32.mrf.mxu0
    %v6537 = vadd.f32 0.0, %v6536
    %v6538 = vpop.f32.mrf.mxu0
    %v6539 = vpop.f32.mrf.mxu0
    %6540 = vdwg.mxu0
    %6541 = vmatprep.subr.bf16.mxu0 %v5605
    %6542 = vmatpush1.bf16.msra.mxu0 %v5604
    %6543 = vmatprep.subr.bf16.mxu0 %v5589
    %6544 = vmatpush1.bf16.msra.mxu0 %v5588
    %6545 = vmatprep.subr.bf16.mxu0 %v5573
    %6546 = vmatpush1.bf16.msra.mxu0 %v5572
    %6547 = vmatprep.subr.bf16.mxu0 %v5557
    %6548 = vmatpush1.bf16.msra.mxu0 %v5556
    %6549 = vmatprep.subr.bf16.mxu0 %v5541
    %6550 = vmatpush1.bf16.msra.mxu0 %v5540
    %6551 = vmatprep.subr.bf16.mxu0 %v5525
    %6552 = vmatpush1.bf16.msra.mxu0 %v5524
    %6553 = vmatprep.subr.bf16.mxu0 %v5509
    %6554 = vmatpush1.bf16.msra.mxu0 %v5508
    %6555 = vmatprep.subr.bf16.mxu0 %v5493
    %6556 = vmatpush1.bf16.msra.mxu0 %v5492
    %6557 = vmatprep.subr.bf16.mxu0 %v5733
    %6558 = vmatpush2.bf16.msra.mxu0 %v5732
    %6559 = vmatprep.subr.bf16.mxu0 %v5717
    %6560 = vmatpush2.bf16.msra.mxu0 %v5716
    %6561 = vmatprep.subr.bf16.mxu0 %v5701
    %6562 = vmatpush2.bf16.msra.mxu0 %v5700
    %6563 = vmatprep.subr.bf16.mxu0 %v5685
    %6564 = vmatpush2.bf16.msra.mxu0 %v5684
    %6565 = vmatprep.subr.bf16.mxu0 %v5669
    %6566 = vmatpush2.bf16.msra.mxu0 %v5668
    %6567 = vmatprep.subr.bf16.mxu0 %v5653
    %6568 = vmatpush2.bf16.msra.mxu0 %v5652
    %6569 = vmatprep.subr.bf16.mxu0 %v5637
    %6570 = vmatpush2.bf16.msra.mxu0 %v5636
    %6571 = vmatprep.subr.bf16.mxu0 %v5621
    %6572 = vmatpush2.bf16.msra.mxu0 %v5620
    %6573 = vmatprep.mubr.bf16.mxu0 %v3181
    %6574 = vmatmul.mubr.bf16.gmra.mxu0 %v3180
    %v6575 = vpop.f32.mrf.mxu0
    %v6576 = vadd.f32 %v6535, %v6575
    %v6577 = vpop.f32.mrf.mxu0
    %v6578 = vadd.f32 %v6537, %v6577
    %v6579 = vpop.f32.mrf.mxu0
    %v6580 = vpop.f32.mrf.mxu0
    %6581 = vdwg.mxu0
    %6582 = vmatprep.subr.bf16.mxu0 %v5351
    %6583 = vmatpush1.bf16.msra.mxu0 %v5350
    %6584 = vmatprep.subr.bf16.mxu0 %v5335
    %6585 = vmatpush1.bf16.msra.mxu0 %v5334
    %6586 = vmatprep.subr.bf16.mxu0 %v5319
    %6587 = vmatpush1.bf16.msra.mxu0 %v5318
    %6588 = vmatprep.subr.bf16.mxu0 %v5303
    %6589 = vmatpush1.bf16.msra.mxu0 %v5302
    %6590 = vmatprep.subr.bf16.mxu0 %v5287
    %6591 = vmatpush1.bf16.msra.mxu0 %v5286
    %6592 = vmatprep.subr.bf16.mxu0 %v5271
    %6593 = vmatpush1.bf16.msra.mxu0 %v5270
    %6594 = vmatprep.subr.bf16.mxu0 %v5255
    %6595 = vmatpush1.bf16.msra.mxu0 %v5254
    %6596 = vmatprep.subr.bf16.mxu0 %v5239
    %6597 = vmatpush1.bf16.msra.mxu0 %v5238
    %6598 = vmatprep.subr.bf16.mxu0 %v5479
    %6599 = vmatpush2.bf16.msra.mxu0 %v5478
    %6600 = vmatprep.subr.bf16.mxu0 %v5463
    %6601 = vmatpush2.bf16.msra.mxu0 %v5462
    %6602 = vmatprep.subr.bf16.mxu0 %v5447
    %6603 = vmatpush2.bf16.msra.mxu0 %v5446
    %6604 = vmatprep.subr.bf16.mxu0 %v5431
    %6605 = vmatpush2.bf16.msra.mxu0 %v5430
    %6606 = vmatprep.subr.bf16.mxu0 %v5415
    %6607 = vmatpush2.bf16.msra.mxu0 %v5414
    %6608 = vmatprep.subr.bf16.mxu0 %v5399
    %6609 = vmatpush2.bf16.msra.mxu0 %v5398
    %6610 = vmatprep.subr.bf16.mxu0 %v5383
    %6611 = vmatpush2.bf16.msra.mxu0 %v5382
    %6612 = vmatprep.subr.bf16.mxu0 %v5367
    %6613 = vmatpush2.bf16.msra.mxu0 %v5366
    %6614 = vmatprep.mubr.bf16.mxu0 %v3179
    %6615 = vmatmul.mubr.bf16.gmra.mxu0 %v3178
    %v6616 = vpop.f32.mrf.mxu0
    %v6617 = vadd.f32 0.0, %v6616
    %v6618 = vpop.f32.mrf.mxu0
    %v6619 = vadd.f32 0.0, %v6618
    %v6620 = vpop.f32.mrf.mxu0
    %v6621 = vpop.f32.mrf.mxu0
    %6622 = vdwg.mxu0
    %6623 = vmatprep.subr.bf16.mxu0 %v5607
    %6624 = vmatpush1.bf16.msra.mxu0 %v5606
    %6625 = vmatprep.subr.bf16.mxu0 %v5591
    %6626 = vmatpush1.bf16.msra.mxu0 %v5590
    %6627 = vmatprep.subr.bf16.mxu0 %v5575
    %6628 = vmatpush1.bf16.msra.mxu0 %v5574
    %6629 = vmatprep.subr.bf16.mxu0 %v5559
    %6630 = vmatpush1.bf16.msra.mxu0 %v5558
    %6631 = vmatprep.subr.bf16.mxu0 %v5543
    %6632 = vmatpush1.bf16.msra.mxu0 %v5542
    %6633 = vmatprep.subr.bf16.mxu0 %v5527
    %6634 = vmatpush1.bf16.msra.mxu0 %v5526
    %6635 = vmatprep.subr.bf16.mxu0 %v5511
    %6636 = vmatpush1.bf16.msra.mxu0 %v5510
    %6637 = vmatprep.subr.bf16.mxu0 %v5495
    %6638 = vmatpush1.bf16.msra.mxu0 %v5494
    %6639 = vmatprep.subr.bf16.mxu0 %v5735
    %6640 = vmatpush2.bf16.msra.mxu0 %v5734
    %6641 = vmatprep.subr.bf16.mxu0 %v5719
    %6642 = vmatpush2.bf16.msra.mxu0 %v5718
    %6643 = vmatprep.subr.bf16.mxu0 %v5703
    %6644 = vmatpush2.bf16.msra.mxu0 %v5702
    %6645 = vmatprep.subr.bf16.mxu0 %v5687
    %6646 = vmatpush2.bf16.msra.mxu0 %v5686
    %6647 = vmatprep.subr.bf16.mxu0 %v5671
    %6648 = vmatpush2.bf16.msra.mxu0 %v5670
    %6649 = vmatprep.subr.bf16.mxu0 %v5655
    %6650 = vmatpush2.bf16.msra.mxu0 %v5654
    %6651 = vmatprep.subr.bf16.mxu0 %v5639
    %6652 = vmatpush2.bf16.msra.mxu0 %v5638
    %6653 = vmatprep.subr.bf16.mxu0 %v5623
    %6654 = vmatpush2.bf16.msra.mxu0 %v5622
    %6655 = vmatprep.mubr.bf16.mxu0 %v3181
    %6656 = vmatmul.mubr.bf16.gmra.mxu0 %v3180
    %v6657 = vpop.f32.mrf.mxu0
    %v6658 = vadd.f32 %v6617, %v6657
    %v6659 = vpop.f32.mrf.mxu0
    %v6660 = vadd.f32 %v6619, %v6659
    %v6661 = vpop.f32.mrf.mxu0
    %v6662 = vpop.f32.mrf.mxu0
    %6663 = vdwg.mxu0
    %6664 = vmatprep.subr.bf16.mxu0 %v5353
    %6665 = vmatpush1.bf16.msra.mxu0 %v5352
    %6666 = vmatprep.subr.bf16.mxu0 %v5337
    %6667 = vmatpush1.bf16.msra.mxu0 %v5336
    %6668 = vmatprep.subr.bf16.mxu0 %v5321
    %6669 = vmatpush1.bf16.msra.mxu0 %v5320
    %6670 = vmatprep.subr.bf16.mxu0 %v5305
    %6671 = vmatpush1.bf16.msra.mxu0 %v5304
    %6672 = vmatprep.subr.bf16.mxu0 %v5289
    %6673 = vmatpush1.bf16.msra.mxu0 %v5288
    %6674 = vmatprep.subr.bf16.mxu0 %v5273
    %6675 = vmatpush1.bf16.msra.mxu0 %v5272
    %6676 = vmatprep.subr.bf16.mxu0 %v5257
    %6677 = vmatpush1.bf16.msra.mxu0 %v5256
    %6678 = vmatprep.subr.bf16.mxu0 %v5241
    %6679 = vmatpush1.bf16.msra.mxu0 %v5240
    %6680 = vmatprep.subr.bf16.mxu0 %v5481
    %6681 = vmatpush2.bf16.msra.mxu0 %v5480
    %6682 = vmatprep.subr.bf16.mxu0 %v5465
    %6683 = vmatpush2.bf16.msra.mxu0 %v5464
    %6684 = vmatprep.subr.bf16.mxu0 %v5449
    %6685 = vmatpush2.bf16.msra.mxu0 %v5448
    %6686 = vmatprep.subr.bf16.mxu0 %v5433
    %6687 = vmatpush2.bf16.msra.mxu0 %v5432
    %6688 = vmatprep.subr.bf16.mxu0 %v5417
    %6689 = vmatpush2.bf16.msra.mxu0 %v5416
    %6690 = vmatprep.subr.bf16.mxu0 %v5401
    %6691 = vmatpush2.bf16.msra.mxu0 %v5400
    %6692 = vmatprep.subr.bf16.mxu0 %v5385
    %6693 = vmatpush2.bf16.msra.mxu0 %v5384
    %6694 = vmatprep.subr.bf16.mxu0 %v5369
    %6695 = vmatpush2.bf16.msra.mxu0 %v5368
    %6696 = vmatprep.mubr.bf16.mxu0 %v3179
    %6697 = vmatmul.mubr.bf16.gmra.mxu0 %v3178
    %v6698 = vpop.f32.mrf.mxu0
    %v6699 = vadd.f32 0.0, %v6698
    %v6700 = vpop.f32.mrf.mxu0
    %v6701 = vadd.f32 0.0, %v6700
    %v6702 = vpop.f32.mrf.mxu0
    %v6703 = vpop.f32.mrf.mxu0
    %6704 = vdwg.mxu0
    %6705 = vmatprep.subr.bf16.mxu0 %v5609
    %6706 = vmatpush1.bf16.msra.mxu0 %v5608
    %6707 = vmatprep.subr.bf16.mxu0 %v5593
    %6708 = vmatpush1.bf16.msra.mxu0 %v5592
    %6709 = vmatprep.subr.bf16.mxu0 %v5577
    %6710 = vmatpush1.bf16.msra.mxu0 %v5576
    %6711 = vmatprep.subr.bf16.mxu0 %v5561
    %6712 = vmatpush1.bf16.msra.mxu0 %v5560
    %6713 = vmatprep.subr.bf16.mxu0 %v5545
    %6714 = vmatpush1.bf16.msra.mxu0 %v5544
    %6715 = vmatprep.subr.bf16.mxu0 %v5529
    %6716 = vmatpush1.bf16.msra.mxu0 %v5528
    %6717 = vmatprep.subr.bf16.mxu0 %v5513
    %6718 = vmatpush1.bf16.msra.mxu0 %v5512
    %6719 = vmatprep.subr.bf16.mxu0 %v5497
    %6720 = vmatpush1.bf16.msra.mxu0 %v5496
    %6721 = vmatprep.subr.bf16.mxu0 %v5737
    %6722 = vmatpush2.bf16.msra.mxu0 %v5736
    %6723 = vmatprep.subr.bf16.mxu0 %v5721
    %6724 = vmatpush2.bf16.msra.mxu0 %v5720
    %6725 = vmatprep.subr.bf16.mxu0 %v5705
    %6726 = vmatpush2.bf16.msra.mxu0 %v5704
    %6727 = vmatprep.subr.bf16.mxu0 %v5689
    %6728 = vmatpush2.bf16.msra.mxu0 %v5688
    %6729 = vmatprep.subr.bf16.mxu0 %v5673
    %6730 = vmatpush2.bf16.msra.mxu0 %v5672
    %6731 = vmatprep.subr.bf16.mxu0 %v5657
    %6732 = vmatpush2.bf16.msra.mxu0 %v5656
    %6733 = vmatprep.subr.bf16.mxu0 %v5641
    %6734 = vmatpush2.bf16.msra.mxu0 %v5640
    %6735 = vmatprep.subr.bf16.mxu0 %v5625
    %6736 = vmatpush2.bf16.msra.mxu0 %v5624
    %6737 = vmatprep.mubr.bf16.mxu0 %v3181
    %6738 = vmatmul.mubr.bf16.gmra.mxu0 %v3180
    %v6739 = vpop.f32.mrf.mxu0
    %v6740 = vadd.f32 %v6699, %v6739
    %v6741 = vpop.f32.mrf.mxu0
    %v6742 = vadd.f32 %v6701, %v6741
    %v6743 = vpop.f32.mrf.mxu0
    %v6744 = vpop.f32.mrf.mxu0
    %6745 = vdwg.mxu0
    %6746 = vmatprep.subr.bf16.mxu0 %v5355
    %6747 = vmatpush1.bf16.msra.mxu0 %v5354
    %6748 = vmatprep.subr.bf16.mxu0 %v5339
    %6749 = vmatpush1.bf16.msra.mxu0 %v5338
    %6750 = vmatprep.subr.bf16.mxu0 %v5323
    %6751 = vmatpush1.bf16.msra.mxu0 %v5322
    %6752 = vmatprep.subr.bf16.mxu0 %v5307
    %6753 = vmatpush1.bf16.msra.mxu0 %v5306
    %6754 = vmatprep.subr.bf16.mxu0 %v5291
    %6755 = vmatpush1.bf16.msra.mxu0 %v5290
    %6756 = vmatprep.subr.bf16.mxu0 %v5275
    %6757 = vmatpush1.bf16.msra.mxu0 %v5274
    %6758 = vmatprep.subr.bf16.mxu0 %v5259
    %6759 = vmatpush1.bf16.msra.mxu0 %v5258
    %6760 = vmatprep.subr.bf16.mxu0 %v5243
    %6761 = vmatpush1.bf16.msra.mxu0 %v5242
    %6762 = vmatprep.subr.bf16.mxu0 %v5483
    %6763 = vmatpush2.bf16.msra.mxu0 %v5482
    %6764 = vmatprep.subr.bf16.mxu0 %v5467
    %6765 = vmatpush2.bf16.msra.mxu0 %v5466
    %6766 = vmatprep.subr.bf16.mxu0 %v5451
    %6767 = vmatpush2.bf16.msra.mxu0 %v5450
    %6768 = vmatprep.subr.bf16.mxu0 %v5435
    %6769 = vmatpush2.bf16.msra.mxu0 %v5434
    %6770 = vmatprep.subr.bf16.mxu0 %v5419
    %6771 = vmatpush2.bf16.msra.mxu0 %v5418
    %6772 = vmatprep.subr.bf16.mxu0 %v5403
    %6773 = vmatpush2.bf16.msra.mxu0 %v5402
    %6774 = vmatprep.subr.bf16.mxu0 %v5387
    %6775 = vmatpush2.bf16.msra.mxu0 %v5386
    %6776 = vmatprep.subr.bf16.mxu0 %v5371
    %6777 = vmatpush2.bf16.msra.mxu0 %v5370
    %6778 = vmatprep.mubr.bf16.mxu0 %v3179
    %6779 = vmatmul.mubr.bf16.gmra.mxu0 %v3178
    %v6780 = vpop.f32.mrf.mxu0
    %v6781 = vadd.f32 0.0, %v6780
    %v6782 = vpop.f32.mrf.mxu0
    %v6783 = vadd.f32 0.0, %v6782
    %v6784 = vpop.f32.mrf.mxu0
    %v6785 = vpop.f32.mrf.mxu0
    %6786 = vdwg.mxu0
    %6787 = vmatprep.subr.bf16.mxu0 %v5611
    %6788 = vmatpush1.bf16.msra.mxu0 %v5610
    %6789 = vmatprep.subr.bf16.mxu0 %v5595
    %6790 = vmatpush1.bf16.msra.mxu0 %v5594
    %6791 = vmatprep.subr.bf16.mxu0 %v5579
    %6792 = vmatpush1.bf16.msra.mxu0 %v5578
    %6793 = vmatprep.subr.bf16.mxu0 %v5563
    %6794 = vmatpush1.bf16.msra.mxu0 %v5562
    %6795 = vmatprep.subr.bf16.mxu0 %v5547
    %6796 = vmatpush1.bf16.msra.mxu0 %v5546
    %6797 = vmatprep.subr.bf16.mxu0 %v5531
    %6798 = vmatpush1.bf16.msra.mxu0 %v5530
    %6799 = vmatprep.subr.bf16.mxu0 %v5515
    %6800 = vmatpush1.bf16.msra.mxu0 %v5514
    %6801 = vmatprep.subr.bf16.mxu0 %v5499
    %6802 = vmatpush1.bf16.msra.mxu0 %v5498
    %6803 = vmatprep.subr.bf16.mxu0 %v5739
    %6804 = vmatpush2.bf16.msra.mxu0 %v5738
    %6805 = vmatprep.subr.bf16.mxu0 %v5723
    %6806 = vmatpush2.bf16.msra.mxu0 %v5722
    %6807 = vmatprep.subr.bf16.mxu0 %v5707
    %6808 = vmatpush2.bf16.msra.mxu0 %v5706
    %6809 = vmatprep.subr.bf16.mxu0 %v5691
    %6810 = vmatpush2.bf16.msra.mxu0 %v5690
    %6811 = vmatprep.subr.bf16.mxu0 %v5675
    %6812 = vmatpush2.bf16.msra.mxu0 %v5674
    %6813 = vmatprep.subr.bf16.mxu0 %v5659
    %6814 = vmatpush2.bf16.msra.mxu0 %v5658
    %6815 = vmatprep.subr.bf16.mxu0 %v5643
    %6816 = vmatpush2.bf16.msra.mxu0 %v5642
    %6817 = vmatprep.subr.bf16.mxu0 %v5627
    %6818 = vmatpush2.bf16.msra.mxu0 %v5626
    %6819 = vmatprep.mubr.bf16.mxu0 %v3181
    %6820 = vmatmul.mubr.bf16.gmra.mxu0 %v3180
    %v6821 = vpop.f32.mrf.mxu0
    %v6822 = vadd.f32 %v6781, %v6821
    %v6823 = vpop.f32.mrf.mxu0
    %v6824 = vadd.f32 %v6783, %v6823
    %v6825 = vpop.f32.mrf.mxu0
    %v6826 = vpop.f32.mrf.mxu0
    %6827 = vdwg.mxu0
    %6828 = vmatprep.subr.bf16.mxu0 %v5357
    %6829 = vmatpush1.bf16.msra.mxu0 %v5356
    %6830 = vmatprep.subr.bf16.mxu0 %v5341
    %6831 = vmatpush1.bf16.msra.mxu0 %v5340
    %6832 = vmatprep.subr.bf16.mxu0 %v5325
    %6833 = vmatpush1.bf16.msra.mxu0 %v5324
    %6834 = vmatprep.subr.bf16.mxu0 %v5309
    %6835 = vmatpush1.bf16.msra.mxu0 %v5308
    %6836 = vmatprep.subr.bf16.mxu0 %v5293
    %6837 = vmatpush1.bf16.msra.mxu0 %v5292
    %6838 = vmatprep.subr.bf16.mxu0 %v5277
    %6839 = vmatpush1.bf16.msra.mxu0 %v5276
    %6840 = vmatprep.subr.bf16.mxu0 %v5261
    %6841 = vmatpush1.bf16.msra.mxu0 %v5260
    %6842 = vmatprep.subr.bf16.mxu0 %v5245
    %6843 = vmatpush1.bf16.msra.mxu0 %v5244
    %6844 = vmatprep.subr.bf16.mxu0 %v5485
    %6845 = vmatpush2.bf16.msra.mxu0 %v5484
    %6846 = vmatprep.subr.bf16.mxu0 %v5469
    %6847 = vmatpush2.bf16.msra.mxu0 %v5468
    %6848 = vmatprep.subr.bf16.mxu0 %v5453
    %6849 = vmatpush2.bf16.msra.mxu0 %v5452
    %6850 = vmatprep.subr.bf16.mxu0 %v5437
    %6851 = vmatpush2.bf16.msra.mxu0 %v5436
    %6852 = vmatprep.subr.bf16.mxu0 %v5421
    %6853 = vmatpush2.bf16.msra.mxu0 %v5420
    %6854 = vmatprep.subr.bf16.mxu0 %v5405
    %6855 = vmatpush2.bf16.msra.mxu0 %v5404
    %6856 = vmatprep.subr.bf16.mxu0 %v5389
    %6857 = vmatpush2.bf16.msra.mxu0 %v5388
    %6858 = vmatprep.subr.bf16.mxu0 %v5373
    %6859 = vmatpush2.bf16.msra.mxu0 %v5372
    %6860 = vmatprep.mubr.bf16.mxu0 %v3179
    %6861 = vmatmul.mubr.bf16.gmra.mxu0 %v3178
    %v6862 = vpop.f32.mrf.mxu0
    %v6863 = vadd.f32 0.0, %v6862
    %v6864 = vpop.f32.mrf.mxu0
    %v6865 = vadd.f32 0.0, %v6864
    %v6866 = vpop.f32.mrf.mxu0
    %v6867 = vpop.f32.mrf.mxu0
    %6868 = vdwg.mxu0
    %6869 = vmatprep.subr.bf16.mxu0 %v5613
    %6870 = vmatpush1.bf16.msra.mxu0 %v5612
    %6871 = vmatprep.subr.bf16.mxu0 %v5597
    %6872 = vmatpush1.bf16.msra.mxu0 %v5596
    %6873 = vmatprep.subr.bf16.mxu0 %v5581
    %6874 = vmatpush1.bf16.msra.mxu0 %v5580
    %6875 = vmatprep.subr.bf16.mxu0 %v5565
    %6876 = vmatpush1.bf16.msra.mxu0 %v5564
    %6877 = vmatprep.subr.bf16.mxu0 %v5549
    %6878 = vmatpush1.bf16.msra.mxu0 %v5548
    %6879 = vmatprep.subr.bf16.mxu0 %v5533
    %6880 = vmatpush1.bf16.msra.mxu0 %v5532
    %6881 = vmatprep.subr.bf16.mxu0 %v5517
    %6882 = vmatpush1.bf16.msra.mxu0 %v5516
    %6883 = vmatprep.subr.bf16.mxu0 %v5501
    %6884 = vmatpush1.bf16.msra.mxu0 %v5500
    %6885 = vmatprep.subr.bf16.mxu0 %v5741
    %6886 = vmatpush2.bf16.msra.mxu0 %v5740
    %6887 = vmatprep.subr.bf16.mxu0 %v5725
    %6888 = vmatpush2.bf16.msra.mxu0 %v5724
    %6889 = vmatprep.subr.bf16.mxu0 %v5709
    %6890 = vmatpush2.bf16.msra.mxu0 %v5708
    %6891 = vmatprep.subr.bf16.mxu0 %v5693
    %6892 = vmatpush2.bf16.msra.mxu0 %v5692
    %6893 = vmatprep.subr.bf16.mxu0 %v5677
    %6894 = vmatpush2.bf16.msra.mxu0 %v5676
    %6895 = vmatprep.subr.bf16.mxu0 %v5661
    %6896 = vmatpush2.bf16.msra.mxu0 %v5660
    %6897 = vmatprep.subr.bf16.mxu0 %v5645
    %6898 = vmatpush2.bf16.msra.mxu0 %v5644
    %6899 = vmatprep.subr.bf16.mxu0 %v5629
    %6900 = vmatpush2.bf16.msra.mxu0 %v5628
    %6901 = vmatprep.mubr.bf16.mxu0 %v3181
    %6902 = vmatmul.mubr.bf16.gmra.mxu0 %v3180
    %v6903 = vpop.f32.mrf.mxu0
    %v6904 = vadd.f32 %v6863, %v6903
    %v6905 = vpop.f32.mrf.mxu0
    %v6906 = vadd.f32 %v6865, %v6905
    %v6907 = vpop.f32.mrf.mxu0
    %v6908 = vpop.f32.mrf.mxu0
    %6909 = vdwg.mxu0
    %v6910 = vld [vmem:[#allocation19] sm:$0xff]
    %v6911 = vld [vmem:[#allocation19 + $0x8] sm:$0xff]
    %v6914 = vlaneseq
    %v6915 = vshrl.u32 %v6914, 7
    %v6916 = vsub.s32 0, %v6915
    %v6917 = vrot.slane %v6910, %v6916
    %v6918 = vlaneseq
    %v6919 = vshrl.u32 %v6918, 7
    %v6920 = vsub.s32 1, %v6919
    %v6921 = vrot.slane %v6910, %v6920
    %v6922 = vlaneseq
    %v6923 = vshrl.u32 %v6922, 7
    %v6924 = vsub.s32 2, %v6923
    %v6925 = vrot.slane %v6910, %v6924
    %v6926 = vlaneseq
    %v6927 = vshrl.u32 %v6926, 7
    %v6928 = vsub.s32 3, %v6927
    %v6929 = vrot.slane %v6910, %v6928
    %v6930 = vlaneseq
    %v6931 = vshrl.u32 %v6930, 7
    %v6932 = vsub.s32 4, %v6931
    %v6933 = vrot.slane %v6910, %v6932
    %v6934 = vlaneseq
    %v6935 = vshrl.u32 %v6934, 7
    %v6936 = vsub.s32 5, %v6935
    %v6937 = vrot.slane %v6910, %v6936
    %v6938 = vlaneseq
    %v6939 = vshrl.u32 %v6938, 7
    %v6940 = vsub.s32 6, %v6939
    %v6941 = vrot.slane %v6910, %v6940
    %v6942 = vlaneseq
    %v6943 = vshrl.u32 %v6942, 7
    %v6944 = vsub.s32 7, %v6943
    %v6945 = vrot.slane %v6910, %v6944
    %v6946 = vlaneseq
    %v6947 = vshrl.u32 %v6946, 7
    %v6948 = vsub.s32 0, %v6947
    %v6949 = vrot.slane %v6911, %v6948
    %v6950 = vlaneseq
    %v6951 = vshrl.u32 %v6950, 7
    %v6952 = vsub.s32 1, %v6951
    %v6953 = vrot.slane %v6911, %v6952
    %v6954 = vlaneseq
    %v6955 = vshrl.u32 %v6954, 7
    %v6956 = vsub.s32 2, %v6955
    %v6957 = vrot.slane %v6911, %v6956
    %v6958 = vlaneseq
    %v6959 = vshrl.u32 %v6958, 7
    %v6960 = vsub.s32 3, %v6959
    %v6961 = vrot.slane %v6911, %v6960
    %v6962 = vlaneseq
    %v6963 = vshrl.u32 %v6962, 7
    %v6964 = vsub.s32 4, %v6963
    %v6965 = vrot.slane %v6911, %v6964
    %v6966 = vlaneseq
    %v6967 = vshrl.u32 %v6966, 7
    %v6968 = vsub.s32 5, %v6967
    %v6969 = vrot.slane %v6911, %v6968
    %v6970 = vlaneseq
    %v6971 = vshrl.u32 %v6970, 7
    %v6972 = vsub.s32 6, %v6971
    %v6973 = vrot.slane %v6911, %v6972
    %v6974 = vlaneseq
    %v6975 = vshrl.u32 %v6974, 7
    %v6976 = vsub.s32 7, %v6975
    %v6977 = vrot.slane %v6911, %v6976
    %v6994 = vmul.f32 %v6330, %v6917
    %v6995 = vmul.f32 %v6332, %v6921
    %v6996 = vmul.f32 %v6412, %v6925
    %v6997 = vmul.f32 %v6414, %v6929
    %v6998 = vmul.f32 %v6494, %v6933
    %v6999 = vmul.f32 %v6496, %v6937
    %v7000 = vmul.f32 %v6576, %v6941
    %v7001 = vmul.f32 %v6578, %v6945
    %v7002 = vmul.f32 %v6658, %v6949
    %v7003 = vmul.f32 %v6660, %v6953
    %v7004 = vmul.f32 %v6740, %v6957
    %v7005 = vmul.f32 %v6742, %v6961
    %v7006 = vmul.f32 %v6822, %v6965
    %v7007 = vmul.f32 %v6824, %v6969
    %v7008 = vmul.f32 %v6904, %v6973
    %v7009 = vmul.f32 %v6906, %v6977
    %v7010 = vld [vmem:[#allocation20] sm:$0xff]
    %v7011 = vld [vmem:[#allocation20 + $0x8] sm:$0xff]
    %v7014 = vlaneseq
    %v7015 = vshrl.u32 %v7014, 7
    %v7016 = vsub.s32 0, %v7015
    %v7017 = vrot.slane %v7010, %v7016
    %v7018 = vlaneseq
    %v7019 = vshrl.u32 %v7018, 7
    %v7020 = vsub.s32 1, %v7019
    %v7021 = vrot.slane %v7010, %v7020
    %v7022 = vlaneseq
    %v7023 = vshrl.u32 %v7022, 7
    %v7024 = vsub.s32 2, %v7023
    %v7025 = vrot.slane %v7010, %v7024
    %v7026 = vlaneseq
    %v7027 = vshrl.u32 %v7026, 7
    %v7028 = vsub.s32 3, %v7027
    %v7029 = vrot.slane %v7010, %v7028
    %v7030 = vlaneseq
    %v7031 = vshrl.u32 %v7030, 7
    %v7032 = vsub.s32 4, %v7031
    %v7033 = vrot.slane %v7010, %v7032
    %v7034 = vlaneseq
    %v7035 = vshrl.u32 %v7034, 7
    %v7036 = vsub.s32 5, %v7035
    %v7037 = vrot.slane %v7010, %v7036
    %v7038 = vlaneseq
    %v7039 = vshrl.u32 %v7038, 7
    %v7040 = vsub.s32 6, %v7039
    %v7041 = vrot.slane %v7010, %v7040
    %v7042 = vlaneseq
    %v7043 = vshrl.u32 %v7042, 7
    %v7044 = vsub.s32 7, %v7043
    %v7045 = vrot.slane %v7010, %v7044
    %v7046 = vlaneseq
    %v7047 = vshrl.u32 %v7046, 7
    %v7048 = vsub.s32 0, %v7047
    %v7049 = vrot.slane %v7011, %v7048
    %v7050 = vlaneseq
    %v7051 = vshrl.u32 %v7050, 7
    %v7052 = vsub.s32 1, %v7051
    %v7053 = vrot.slane %v7011, %v7052
    %v7054 = vlaneseq
    %v7055 = vshrl.u32 %v7054, 7
    %v7056 = vsub.s32 2, %v7055
    %v7057 = vrot.slane %v7011, %v7056
    %v7058 = vlaneseq
    %v7059 = vshrl.u32 %v7058, 7
    %v7060 = vsub.s32 3, %v7059
    %v7061 = vrot.slane %v7011, %v7060
    %v7062 = vlaneseq
    %v7063 = vshrl.u32 %v7062, 7
    %v7064 = vsub.s32 4, %v7063
    %v7065 = vrot.slane %v7011, %v7064
    %v7066 = vlaneseq
    %v7067 = vshrl.u32 %v7066, 7
    %v7068 = vsub.s32 5, %v7067
    %v7069 = vrot.slane %v7011, %v7068
    %v7070 = vlaneseq
    %v7071 = vshrl.u32 %v7070, 7
    %v7072 = vsub.s32 6, %v7071
    %v7073 = vrot.slane %v7011, %v7072
    %v7074 = vlaneseq
    %v7075 = vshrl.u32 %v7074, 7
    %v7076 = vsub.s32 7, %v7075
    %v7077 = vrot.slane %v7011, %v7076
    %v7094 = vadd.f32 %v6994, %v7017
    %v7095 = vadd.f32 %v6995, %v7021
    %v7096 = vadd.f32 %v6996, %v7025
    %v7097 = vadd.f32 %v6997, %v7029
    %v7098 = vadd.f32 %v6998, %v7033
    %v7099 = vadd.f32 %v6999, %v7037
    %v7100 = vadd.f32 %v7000, %v7041
    %v7101 = vadd.f32 %v7001, %v7045
    %v7102 = vadd.f32 %v7002, %v7049
    %v7103 = vadd.f32 %v7003, %v7053
    %v7104 = vadd.f32 %v7004, %v7057
    %v7105 = vadd.f32 %v7005, %v7061
    %v7106 = vadd.f32 %v7006, %v7065
    %v7107 = vadd.f32 %v7007, %v7069
    %v7108 = vadd.f32 %v7008, %v7073
    %v7109 = vadd.f32 %v7009, %v7077
    %v7126 = vcombine.low %v7094, %v7095
    %v7127 = vcombine.low %v7096, %v7097
    %v7128 = vcombine.low %v7098, %v7099
    %v7129 = vcombine.low %v7100, %v7101
    %v7131 = vunpack.c.l.s4 1966171168
    %v7132 = vunpack.c.0.s8 %v7131
    %v7133 = vlaneseq
    %v7134 = vshrl.u32 %v7133, 7
    %v7135 = vsub.s32 %v7132, %v7134
    %v7136 = vrot.slane %v7126, %v7135
    %v7138 = vunpack.c.l.s4 1966171168
    %v7139 = vunpack.c.0.s8 %v7138
    %v7140 = vlaneseq
    %v7141 = vshrl.u32 %v7140, 7
    %v7142 = vsub.s32 %v7139, %v7141
    %v7143 = vrot.slane %v7127, %v7142
    %v7145 = vunpack.c.l.s4 1966171168
    %v7146 = vunpack.c.0.s8 %v7145
    %v7147 = vlaneseq
    %v7148 = vshrl.u32 %v7147, 7
    %v7149 = vsub.s32 %v7146, %v7148
    %v7150 = vrot.slane %v7128, %v7149
    %v7152 = vunpack.c.l.s4 1966171168
    %v7153 = vunpack.c.0.s8 %v7152
    %v7154 = vlaneseq
    %v7155 = vshrl.u32 %v7154, 7
    %v7156 = vsub.s32 %v7153, %v7155
    %v7157 = vrot.slane %v7129, %v7156
    %v7158 = vcombine.low %v7136, %v7143
    %v7159 = vcombine.low %v7150, %v7157
    %v7161 = vunpack.c.l.s4 1966171168
    %v7162 = vunpack.c.0.s8 %v7161
    %v7163 = vlaneseq
    %v7164 = vshrl.u32 %v7163, 7
    %v7165 = vsub.s32 %v7162, %v7164
    %v7166 = vrot.slane %v7158, %v7165
    %v7168 = vunpack.c.l.s4 1966171168
    %v7169 = vunpack.c.0.s8 %v7168
    %v7170 = vlaneseq
    %v7171 = vshrl.u32 %v7170, 7
    %v7172 = vsub.s32 %v7169, %v7171
    %v7173 = vrot.slane %v7159, %v7172
    %v7174 = vcombine.low %v7166, %v7173
    %v7175 = vcombine.low %v7102, %v7103
    %v7176 = vcombine.low %v7104, %v7105
    %v7177 = vcombine.low %v7106, %v7107
    %v7178 = vcombine.low %v7108, %v7109
    %v7180 = vunpack.c.l.s4 1966171168
    %v7181 = vunpack.c.0.s8 %v7180
    %v7182 = vlaneseq
    %v7183 = vshrl.u32 %v7182, 7
    %v7184 = vsub.s32 %v7181, %v7183
    %v7185 = vrot.slane %v7175, %v7184
    %v7187 = vunpack.c.l.s4 1966171168
    %v7188 = vunpack.c.0.s8 %v7187
    %v7189 = vlaneseq
    %v7190 = vshrl.u32 %v7189, 7
    %v7191 = vsub.s32 %v7188, %v7190
    %v7192 = vrot.slane %v7176, %v7191
    %v7194 = vunpack.c.l.s4 1966171168
    %v7195 = vunpack.c.0.s8 %v7194
    %v7196 = vlaneseq
    %v7197 = vshrl.u32 %v7196, 7
    %v7198 = vsub.s32 %v7195, %v7197
    %v7199 = vrot.slane %v7177, %v7198
    %v7201 = vunpack.c.l.s4 1966171168
    %v7202 = vunpack.c.0.s8 %v7201
    %v7203 = vlaneseq
    %v7204 = vshrl.u32 %v7203, 7
    %v7205 = vsub.s32 %v7202, %v7204
    %v7206 = vrot.slane %v7178, %v7205
    %v7207 = vcombine.low %v7185, %v7192
    %v7208 = vcombine.low %v7199, %v7206
    %v7210 = vunpack.c.l.s4 1966171168
    %v7211 = vunpack.c.0.s8 %v7210
    %v7212 = vlaneseq
    %v7213 = vshrl.u32 %v7212, 7
    %v7214 = vsub.s32 %v7211, %v7213
    %v7215 = vrot.slane %v7207, %v7214
    %v7217 = vunpack.c.l.s4 1966171168
    %v7218 = vunpack.c.0.s8 %v7217
    %v7219 = vlaneseq
    %v7220 = vshrl.u32 %v7219, 7
    %v7221 = vsub.s32 %v7218, %v7220
    %v7222 = vrot.slane %v7208, %v7221
    %v7223 = vcombine.low %v7215, %v7222
    %7226 = vst [vmem:[#allocation22] sm:$0xff] %v7174
    %7227 = vst [vmem:[#allocation22 + $0x8] sm:$0xff] %v7223
    // Predicated region
    $region102: #{forward.3} parent=1 // pred_check
      _
    $region103: #{forward.3} parent=1 // pred_check_branch
      %7229 = sbr.rel (0) target = $region105
    $region104: #{forward.3} parent=1 // pred_region
      %s7231 = ssub.s32 256, 256
      %7232 = vsyncadd [#allocation4], %s7231
      %s7234 = sshll.u32 [#allocation22], 4
      %s7235 = int_to_ptr.vmem [resolvable:$true] %s7234
      %7237 = dma.vmem_to_hbm [thread:$0]  %s7235, 256, %s13, [#allocation4]
    $region105: #{forward.3} parent=1 // pred_fallthru
      _
    // Predicated region
    $region106: #{forward.3} parent=1 // pred_check
      _
    $region107: #{forward.3} parent=1 // pred_check_branch
      %7239 = sbr.rel (0) target = $region109
    $region108: #{forward.3} parent=1 // pred_region
      %7240 = dma.done [#allocation4], 256
    $region109: #{forward.3} parent=1 // pred_fallthru
      _
    %7241 = vsyncpa [#allocation3], 1
    %7242 = vsyncpa [#allocation6], 1
    %7243 = vsyncpa [#allocation9], 1
    %7244 = vsyncpa [#allocation12], 1
    %7245 = vsyncpa [#allocation15], 1
    %7246 = vsyncpa [#allocation18], 1
    %7247 = vsyncpa [#allocation21], 1
    %7248 = vsyncpa [#allocation4], 1

</llo_original>
